<compile_context>
chip_gen: v7x
topology: tpu7x:2x2x1
jax: 0.10.0
libtpu: 0.0.40
codegen_flags: <defaults>
</compile_context>

<pallas_src>
import functools

import numpy as np

import jax
import jax.numpy as jnp
from jax.experimental import pallas as pl
from jax.experimental.pallas import tpu as pltpu


def _round_up(x, m):
    return ((x + m - 1) // m) * m


# ---------------------------------------------------------------------------
# Constant 0/1 "selection" matrices: express im2col (zero padding + stride)
# for the deep layers as plain matmuls so patch gathering runs on the MXU.
# ---------------------------------------------------------------------------
def _make_selection(h_in, w_in, kh, kw, stride, pad):
    """S[k, m_out, m_in] = 1 iff input pixel m_in feeds output m_out at tap k."""
    h_out = (h_in + 2 * pad - kh) // stride + 1
    w_out = (w_in + 2 * pad - kw) // stride + 1
    sel = np.zeros((kh * kw, h_out * w_out, h_in * w_in), np.float32)
    for a in range(kh):
        for b in range(kw):
            k = a * kw + b
            for i in range(h_out):
                r = stride * i + a - pad
                if r < 0 or r >= h_in:
                    continue
                for j in range(w_out):
                    c = stride * j + b - pad
                    if c < 0 or c >= w_in:
                        continue
                    sel[k, i * w_out + j, r * w_in + c] = 1.0
    return sel, h_out, w_out


def _block_diag_sel(sel, b_tile):
    """(n_off, Mo, Mi) -> (n_off, b_tile*Mo, b_tile*Mi) = kron(I_b_tile, S_k)."""
    n_off, mo, mi = sel.shape
    eye = np.eye(b_tile, dtype=sel.dtype)
    out = np.einsum("pq,kmr->kpmqr", eye, sel)
    return out.reshape(n_off, b_tile * mo, b_tile * mi)


# ---------------------------------------------------------------------------
# Weight / bias preparation (row order = tap-major, input-channel-minor,
# matching the lane layout of the in-kernel gathered patch matrix G).
# ---------------------------------------------------------------------------
def _flatten_weight(w_oihw, cin_pad, cout_pad):
    cout, cin, kh, kw = w_oihw.shape
    w = jnp.pad(w_oihw, ((0, cout_pad - cout), (0, cin_pad - cin), (0, 0), (0, 0)))
    w = jnp.transpose(w, (2, 3, 1, 0))                    # (KH, KW, cin_pad, cout_pad)
    return w.reshape(kh * kw * cin_pad, cout_pad)


def _flatten_stem_weight(w_oihw, k_pad, cout_pad):
    cout, cin, kh, kw = w_oihw.shape
    w = jnp.pad(w_oihw, ((0, cout_pad - cout), (0, 0), (0, 0), (0, 0)))
    w = jnp.transpose(w, (2, 3, 1, 0)).reshape(kh * kw * cin, cout_pad)
    return jnp.pad(w, ((0, k_pad - kh * kw * cin), (0, 0)))


def _prep_bias(bias, cout, cout_pad):
    if bias is None:
        bias = jnp.zeros((cout,), jnp.float32)
    return jnp.pad(bias.astype(jnp.float32), (0, cout_pad - cout)).reshape(1, cout_pad)


def _im2col_stem(x_nhwc, ksz, stride, pad):
    """Wrapper-side patch extraction for the stem conv (layout plumbing only).

    Returns (B, Ho*Wo, ksz*ksz*C) with lane order tap-major / channel-minor."""
    b, h, w, c = x_nhwc.shape
    ho = (h + 2 * pad - ksz) // stride + 1
    wo = (w + 2 * pad - ksz) // stride + 1
    xp = jnp.pad(x_nhwc, ((0, 0), (pad, pad), (pad, pad), (0, 0)))
    taps = []
    for a in range(ksz):
        for bb in range(ksz):
            taps.append(xp[:, a:a + stride * ho:stride, bb:bb + stride * wo:stride, :])
    pat = jnp.concatenate(taps, axis=-1)                   # (B, Ho, Wo, ksz*ksz*C)
    return pat.reshape(b, ho * wo, ksz * ksz * c), ho, wo


# ---------------------------------------------------------------------------
# Fused kernel: one grid step == one tile of `batch_tile` images.
# ---------------------------------------------------------------------------
def _disc_fused_kernel(x0_ref, w0_ref, b0_ref, *rest,
                       deep_taps, slopes, compute_dtype):
    """refs:
      x0  : (BT*M0, K0_pad)     im2col'd stem patches for the image tile
      w0  : (K0_pad, C0_pad)    flattened stem weight
      b0  : (1, C0_pad)         stem bias (f32)
      per deep layer l:
        sel : (n_taps, BT*Mo, BT*Mi)  block-diagonal 0/1 gather constants
        w   : (n_taps*Cin_pad, Cout_pad)  tap-concatenated weight
        b   : (1, Cout_pad)     bias (zeros if absent), f32
      out : (BT*M_last, C_last_pad)  f32 (only lane 0 is real)
    """
    out_ref = rest[-1]
    deep_refs = rest[:-1]

    # ---- Stem: single lane-dense MXU pass for the whole tile ----
    acc = jnp.dot(x0_ref[...], w0_ref[...], preferred_element_type=jnp.float32)
    acc = acc + b0_ref[...]
    acc = jnp.where(acc >= 0.0, acc, slopes[0] * acc)      # LeakyReLU(0.01), f32
    x = acc.astype(compute_dtype)

    # ---- Deep layers: gather taps (block-diag sel matmuls), one weight dot ----
    for l, n_taps in enumerate(deep_taps):
        sel_ref = deep_refs[3 * l]
        w_ref = deep_refs[3 * l + 1]
        b_ref = deep_refs[3 * l + 2]

        parts = []
        for k in range(n_taps):
            # Exact 0/1 selection; request compute dtype directly (no repack).
            parts.append(jnp.dot(sel_ref[k], x, preferred_element_type=compute_dtype))
        g = jnp.concatenate(parts, axis=1) if n_taps > 1 else parts[0]

        acc = jnp.dot(g, w_ref[...], preferred_element_type=jnp.float32)
        acc = acc + b_ref[...]
        slope = slopes[l + 1]
        if slope is not None:                              # last layer: no activation
            acc = jnp.where(acc >= 0.0, acc, slope * acc)
        x = acc.astype(compute_dtype)

    out_ref[...] = acc.astype(out_ref.dtype)


# ---------------------------------------------------------------------------
# Builder: precompute constants, return a jitted forward over NCHW images.
# ---------------------------------------------------------------------------
def make_discriminator_forward(params, w_out, img_shape,
                               compute_dtype=jnp.float32, batch_tile=4):
    """params: [(w (Cout,Cin,4,4), b (Cout,))] strided blocks; w_out: (1,C,3,3)."""
    channels, img_size, _ = img_shape
    lane = 128

    # ---- stem (first strided block), im2col'd in the wrapper ----
    w0, b0 = params[0]
    c0_out = w0.shape[0]
    c0_out_pad = _round_up(c0_out, lane)
    ksz0, stride0, pad0 = 4, 2, 1
    k0 = ksz0 * ksz0 * channels
    k0_pad = _round_up(k0, lane)
    h0o = (img_size + 2 * pad0 - ksz0) // stride0 + 1
    w0o = h0o
    m0 = h0o * w0o

    w0_flat = _flatten_stem_weight(w0, k0_pad, c0_out_pad).astype(compute_dtype)
    b0_pad = _prep_bias(b0, c0_out, c0_out_pad)

    # ---- deeper strided blocks + final 3x3 conv ----
    deep_defs = [(w, b, 4, 2, 1, 0.01) for (w, b) in params[1:]]
    deep_defs.append((w_out, None, 3, 1, 1, None))         # out1: no bias, no act

    h, w_sp = h0o, w0o
    c_in_pad = c0_out_pad
    sels, wflats, biases, deep_taps = [], [], [], []
    slopes = [0.01]
    for (wgt, bias, ksz, stride, pad, slope) in deep_defs:
        c_out = wgt.shape[0]
        c_out_pad = _round_up(c_out, lane)
        sel_np, h, w_sp = _make_selection(h, w_sp, ksz, ksz, stride, pad)
        sels.append(jnp.asarray(_block_diag_sel(sel_np, batch_tile),
                                dtype=compute_dtype))
        wflats.append(_flatten_weight(wgt, c_in_pad, c_out_pad).astype(compute_dtype))
        biases.append(_prep_bias(bias, c_out, c_out_pad))
        deep_taps.append(ksz * ksz)
        slopes.append(slope)
        c_in_pad = c_out_pad

    m_last = h * w_sp
    c_last_pad = c_in_pad
    h_last, w_last = h, w_sp

    kernel = functools.partial(
        _disc_fused_kernel,
        deep_taps=tuple(deep_taps),
        slopes=tuple(slopes),
        compute_dtype=compute_dtype,
    )

    in_specs = [
        pl.BlockSpec((batch_tile * m0, k0_pad), lambda i: (i, 0)),   # stem patches
        pl.BlockSpec(w0_flat.shape, lambda i: (0, 0)),
        pl.BlockSpec(b0_pad.shape, lambda i: (0, 0)),
    ]
    const_args = [w0_flat, b0_pad]
    for sel, wf, bi in zip(sels, wflats, biases):
        in_specs.append(pl.BlockSpec(sel.shape, lambda i: (0, 0, 0)))
        in_specs.append(pl.BlockSpec(wf.shape, lambda i: (0, 0)))
        in_specs.append(pl.BlockSpec(bi.shape, lambda i: (0, 0)))
        const_args += [sel, wf, bi]
    out_spec = pl.BlockSpec((batch_tile * m_last, c_last_pad), lambda i: (i, 0))

    def forward(img_nchw):
        b = img_nchw.shape[0]
        b_pad = _round_up(b, batch_tile)
        x = jnp.transpose(img_nchw, (0, 2, 3, 1))                    # NCHW -> NHWC
        if b_pad != b:
            x = jnp.pad(x, ((0, b_pad - b), (0, 0), (0, 0), (0, 0)))
        x = x.astype(compute_dtype)

        # Stem im2col (layout plumbing): (B, M0, 48) -> pad lanes to 128.
        x0col, _, _ = _im2col_stem(x, ksz0, stride0, pad0)
        x0col = jnp.pad(x0col, ((0, 0), (0, 0), (0, k0_pad - k0)))
        x0col = x0col.reshape(b_pad * m0, k0_pad).astype(compute_dtype)

        num_tiles = b_pad // batch_tile
        out = pl.pallas_call(
            kernel,
            out_shape=jax.ShapeDtypeStruct((b_pad * m_last, c_last_pad), jnp.float32),
            grid_spec=pltpu.PrefetchScalarGridSpec(
                num_scalar_prefetch=0,
                grid=(num_tiles,),                                   # one image tile / step
                in_specs=in_specs,
                out_specs=out_spec,
            ),
            compiler_params=pltpu.CompilerParams(
                dimension_semantics=("parallel",)),                  # megacore / 2 TCs
        )(x0col, *const_args)

        out = out[:, 0].reshape(b_pad, h_last, w_last)[:b]           # real channel only
        return out[:, None, :, :]                                    # (B, 1, H, W)

    return jax.jit(forward)


# ------------------------- parameters & reference --------------------------
def init_discriminator_params(key, channels=3, n_strided=2, base_dim=64):
    """Deterministic synthetic parameters matching the PyTorch module shapes."""
    params = []
    in_c, out_c = channels, base_dim
    for _ in range(n_strided):
        key, kw_, kb_ = jax.random.split(key, 3)
        fan_in = in_c * 4 * 4
        w = jax.random.normal(kw_, (out_c, in_c, 4, 4), jnp.float32) / jnp.sqrt(fan_in)
        b = jax.random.normal(kb_, (out_c,), jnp.float32) * 0.01
        params.append((w, b))
        in_c, out_c = out_c, out_c * 2
    key, kw_ = jax.random.split(key)
    fan_in = in_c * 3 * 3
    w_out = jax.random.normal(kw_, (1, in_c, 3, 3), jnp.float32) / jnp.sqrt(fan_in)
    return params, w_out


def discriminator_reference(img_nchw, params, w_out):
    """Pure-JAX (XLA conv) reference for correctness checking."""
    x = img_nchw
    for (w, b) in params:
        x = jax.lax.conv_general_dilated(
            x, w, window_strides=(2, 2), padding=((1, 1), (1, 1)),
            dimension_numbers=("NCHW", "OIHW", "NCHW"))
        x = x + b[None, :, None, None]
        x = jnp.where(x >= 0, x, 0.01 * x)
    x = jax.lax.conv_general_dilated(
        x, w_out, window_strides=(1, 1), padding=((1, 1), (1, 1)),
        dimension_numbers=("NCHW", "OIHW", "NCHW"))
    return x


if __name__ == "__main__":
    # Small config consistent with the module: img_shape=(3, 16, 16), n_strided=2.
    # B=16 with batch_tile=4 -> grid=(4,): M per layer-matmul 256/64/64 and
    # >=2 grid steps per TensorCore on v7x.
    key = jax.random.PRNGKey(0)
    key, k_img, k_par = jax.random.split(key, 3)

    B, C, S = 16, 3, 16
    img = jax.random.normal(k_img, (B, C, S, S), jnp.float32)
    params, w_out = init_discriminator_params(k_par, channels=C, n_strided=2,
                                              base_dim=64)

    ref = jax.block_until_ready(discriminator_reference(img, params, w_out))
    assert ref.shape == (B, 1, S // 4, S // 4), ref.shape

    # f32 operands: strict tolerance vs. the XLA conv reference.
    fwd_f32 = make_discriminator_forward(params, w_out, (C, S, S),
                                         compute_dtype=jnp.float32, batch_tile=4)
    out_f32 = jax.block_until_ready(fwd_f32(img))
    assert out_f32.shape == ref.shape, out_f32.shape
    assert jnp.allclose(out_f32, ref, rtol=1e-3, atol=1e-3), (
        float(jnp.max(jnp.abs(out_f32 - ref))))

    # bf16 operands + f32 accumulation (MXU-native fast path): looser tolerance.
    fwd_bf16 = make_discriminator_forward(params, w_out, (C, S, S),
                                          compute_dtype=jnp.bfloat16, batch_tile=4)
    out_bf16 = jax.block_until_ready(fwd_bf16(img))
    assert out_bf16.shape == ref.shape, out_bf16.shape
    assert jnp.allclose(out_bf16, ref, rtol=5e-2, atol=5e-2), (
        float(jnp.max(jnp.abs(out_bf16 - ref))))

    print("KERNEL_OK")
</pallas_src>

<mosaic_0001>
module attributes {stable_mosaic.version = 11 : i64} {
  func.func @_disc_fused_kernel(%arg0: i32, %arg1: memref<256x128xf32, #tpu.memory_space<vmem>>, %arg2: memref<128x128xf32, #tpu.memory_space<vmem>>, %arg3: memref<1x128xf32, #tpu.memory_space<vmem>>, %arg4: memref<16x64x256xf32, #tpu.memory_space<vmem>>, %arg5: memref<2048x128xf32, #tpu.memory_space<vmem>>, %arg6: memref<1x128xf32, #tpu.memory_space<vmem>>, %arg7: memref<9x64x64xf32, #tpu.memory_space<vmem>>, %arg8: memref<1152x128xf32, #tpu.memory_space<vmem>>, %arg9: memref<1x128xf32, #tpu.memory_space<vmem>>, %arg10: memref<64x128xf32, #tpu.memory_space<vmem>>) attributes {dimension_semantics = [#tpu.dimension_semantics<parallel>], iteration_bounds = array<i64: 4>, scalar_prefetch = 0 : i64, scratch_operands = 0 : i64, tpu.core_type = #tpu.core_type<tc>, window_params = [{transform_indices = @transform_0, window_bounds = array<i64: 256, 128>}, {pipeline_mode = #tpu.pipeline_mode<synchronous>, transform_indices = @transform_1, window_bounds = array<i64: 128, 128>}, {pipeline_mode = #tpu.pipeline_mode<synchronous>, transform_indices = @transform_2, window_bounds = array<i64: 1, 128>}, {pipeline_mode = #tpu.pipeline_mode<synchronous>, transform_indices = @transform_3, window_bounds = array<i64: 16, 64, 256>}, {pipeline_mode = #tpu.pipeline_mode<synchronous>, transform_indices = @transform_4, window_bounds = array<i64: 2048, 128>}, {pipeline_mode = #tpu.pipeline_mode<synchronous>, transform_indices = @transform_5, window_bounds = array<i64: 1, 128>}, {pipeline_mode = #tpu.pipeline_mode<synchronous>, transform_indices = @transform_6, window_bounds = array<i64: 9, 64, 64>}, {pipeline_mode = #tpu.pipeline_mode<synchronous>, transform_indices = @transform_7, window_bounds = array<i64: 1152, 128>}, {pipeline_mode = #tpu.pipeline_mode<synchronous>, transform_indices = @transform_8, window_bounds = array<i64: 1, 128>}, {transform_indices = @transform_9, window_bounds = array<i64: 64, 128>}]} {
    %c0 = arith.constant 0 : index
    %c0_0 = arith.constant 0 : index
    %0 = vector.load %arg1[%c0, %c0_0] : memref<256x128xf32, #tpu.memory_space<vmem>>, vector<256x128xf32>
    %c0_1 = arith.constant 0 : index
    %c0_2 = arith.constant 0 : index
    %1 = vector.load %arg2[%c0_1, %c0_2] : memref<128x128xf32, #tpu.memory_space<vmem>>, vector<128x128xf32>
    %cst = arith.constant dense<0.000000e+00> : vector<256x128xf32>
    %2 = tpu.matmul %0, %1, %cst {dimension_numbers = #tpu.dot_dimension_numbers<[1], [0], [0], [1], [0, 0, 1, 1], [], []>} : vector<256x128xf32>, vector<128x128xf32>, vector<256x128xf32> -> vector<256x128xf32>
    %c0_3 = arith.constant 0 : index
    %c0_4 = arith.constant 0 : index
    %3 = vector.load %arg3[%c0_3, %c0_4] : memref<1x128xf32, #tpu.memory_space<vmem>>, vector<1x128xf32>
    %4 = vector.broadcast %3 : vector<1x128xf32> to vector<256x128xf32>
    %5 = arith.addf %2, %4 : vector<256x128xf32>
    %cst_5 = arith.constant 0.000000e+00 : f32
    %6 = vector.broadcast %cst_5 : f32 to vector<256x128xf32>
    %7 = arith.cmpf oge, %5, %6 : vector<256x128xf32>
    %cst_6 = arith.constant 0.00999999977 : f32
    %8 = vector.broadcast %cst_6 : f32 to vector<256x128xf32>
    %9 = arith.mulf %8, %5 : vector<256x128xf32>
    %10 = arith.select %7, %5, %9 : vector<256x128xi1>, vector<256x128xf32>
    %c0_7 = arith.constant 0 : index
    %c0_8 = arith.constant 0 : index
    %c0_9 = arith.constant 0 : index
    %11 = vector.load %arg4[%c0_7, %c0_8, %c0_9] : memref<16x64x256xf32, #tpu.memory_space<vmem>>, vector<1x64x256xf32>
    %12 = vector.shape_cast %11 : vector<1x64x256xf32> to vector<64x256xf32>
    %cst_10 = arith.constant dense<0.000000e+00> : vector<64x128xf32>
    %13 = tpu.matmul %12, %10, %cst_10 {dimension_numbers = #tpu.dot_dimension_numbers<[1], [0], [0], [1], [0, 0, 1, 1], [], []>} : vector<64x256xf32>, vector<256x128xf32>, vector<64x128xf32> -> vector<64x128xf32>
    %c1 = arith.constant 1 : index
    %c0_11 = arith.constant 0 : index
    %c0_12 = arith.constant 0 : index
    %14 = vector.load %arg4[%c1, %c0_11, %c0_12] : memref<16x64x256xf32, #tpu.memory_space<vmem>>, vector<1x64x256xf32>
    %15 = vector.shape_cast %14 : vector<1x64x256xf32> to vector<64x256xf32>
    %cst_13 = arith.constant dense<0.000000e+00> : vector<64x128xf32>
    %16 = tpu.matmul %15, %10, %cst_13 {dimension_numbers = #tpu.dot_dimension_numbers<[1], [0], [0], [1], [0, 0, 1, 1], [], []>} : vector<64x256xf32>, vector<256x128xf32>, vector<64x128xf32> -> vector<64x128xf32>
    %c2 = arith.constant 2 : index
    %c0_14 = arith.constant 0 : index
    %c0_15 = arith.constant 0 : index
    %17 = vector.load %arg4[%c2, %c0_14, %c0_15] : memref<16x64x256xf32, #tpu.memory_space<vmem>>, vector<1x64x256xf32>
    %18 = vector.shape_cast %17 : vector<1x64x256xf32> to vector<64x256xf32>
    %cst_16 = arith.constant dense<0.000000e+00> : vector<64x128xf32>
    %19 = tpu.matmul %18, %10, %cst_16 {dimension_numbers = #tpu.dot_dimension_numbers<[1], [0], [0], [1], [0, 0, 1, 1], [], []>} : vector<64x256xf32>, vector<256x128xf32>, vector<64x128xf32> -> vector<64x128xf32>
    %c3 = arith.constant 3 : index
    %c0_17 = arith.constant 0 : index
    %c0_18 = arith.constant 0 : index
    %20 = vector.load %arg4[%c3, %c0_17, %c0_18] : memref<16x64x256xf32, #tpu.memory_space<vmem>>, vector<1x64x256xf32>
    %21 = vector.shape_cast %20 : vector<1x64x256xf32> to vector<64x256xf32>
    %cst_19 = arith.constant dense<0.000000e+00> : vector<64x128xf32>
    %22 = tpu.matmul %21, %10, %cst_19 {dimension_numbers = #tpu.dot_dimension_numbers<[1], [0], [0], [1], [0, 0, 1, 1], [], []>} : vector<64x256xf32>, vector<256x128xf32>, vector<64x128xf32> -> vector<64x128xf32>
    %c4 = arith.constant 4 : index
    %c0_20 = arith.constant 0 : index
    %c0_21 = arith.constant 0 : index
    %23 = vector.load %arg4[%c4, %c0_20, %c0_21] : memref<16x64x256xf32, #tpu.memory_space<vmem>>, vector<1x64x256xf32>
    %24 = vector.shape_cast %23 : vector<1x64x256xf32> to vector<64x256xf32>
    %cst_22 = arith.constant dense<0.000000e+00> : vector<64x128xf32>
    %25 = tpu.matmul %24, %10, %cst_22 {dimension_numbers = #tpu.dot_dimension_numbers<[1], [0], [0], [1], [0, 0, 1, 1], [], []>} : vector<64x256xf32>, vector<256x128xf32>, vector<64x128xf32> -> vector<64x128xf32>
    %c5 = arith.constant 5 : index
    %c0_23 = arith.constant 0 : index
    %c0_24 = arith.constant 0 : index
    %26 = vector.load %arg4[%c5, %c0_23, %c0_24] : memref<16x64x256xf32, #tpu.memory_space<vmem>>, vector<1x64x256xf32>
    %27 = vector.shape_cast %26 : vector<1x64x256xf32> to vector<64x256xf32>
    %cst_25 = arith.constant dense<0.000000e+00> : vector<64x128xf32>
    %28 = tpu.matmul %27, %10, %cst_25 {dimension_numbers = #tpu.dot_dimension_numbers<[1], [0], [0], [1], [0, 0, 1, 1], [], []>} : vector<64x256xf32>, vector<256x128xf32>, vector<64x128xf32> -> vector<64x128xf32>
    %c6 = arith.constant 6 : index
    %c0_26 = arith.constant 0 : index
    %c0_27 = arith.constant 0 : index
    %29 = vector.load %arg4[%c6, %c0_26, %c0_27] : memref<16x64x256xf32, #tpu.memory_space<vmem>>, vector<1x64x256xf32>
    %30 = vector.shape_cast %29 : vector<1x64x256xf32> to vector<64x256xf32>
    %cst_28 = arith.constant dense<0.000000e+00> : vector<64x128xf32>
    %31 = tpu.matmul %30, %10, %cst_28 {dimension_numbers = #tpu.dot_dimension_numbers<[1], [0], [0], [1], [0, 0, 1, 1], [], []>} : vector<64x256xf32>, vector<256x128xf32>, vector<64x128xf32> -> vector<64x128xf32>
    %c7 = arith.constant 7 : index
    %c0_29 = arith.constant 0 : index
    %c0_30 = arith.constant 0 : index
    %32 = vector.load %arg4[%c7, %c0_29, %c0_30] : memref<16x64x256xf32, #tpu.memory_space<vmem>>, vector<1x64x256xf32>
    %33 = vector.shape_cast %32 : vector<1x64x256xf32> to vector<64x256xf32>
    %cst_31 = arith.constant dense<0.000000e+00> : vector<64x128xf32>
    %34 = tpu.matmul %33, %10, %cst_31 {dimension_numbers = #tpu.dot_dimension_numbers<[1], [0], [0], [1], [0, 0, 1, 1], [], []>} : vector<64x256xf32>, vector<256x128xf32>, vector<64x128xf32> -> vector<64x128xf32>
    %c8 = arith.constant 8 : index
    %c0_32 = arith.constant 0 : index
    %c0_33 = arith.constant 0 : index
    %35 = vector.load %arg4[%c8, %c0_32, %c0_33] : memref<16x64x256xf32, #tpu.memory_space<vmem>>, vector<1x64x256xf32>
    %36 = vector.shape_cast %35 : vector<1x64x256xf32> to vector<64x256xf32>
    %cst_34 = arith.constant dense<0.000000e+00> : vector<64x128xf32>
    %37 = tpu.matmul %36, %10, %cst_34 {dimension_numbers = #tpu.dot_dimension_numbers<[1], [0], [0], [1], [0, 0, 1, 1], [], []>} : vector<64x256xf32>, vector<256x128xf32>, vector<64x128xf32> -> vector<64x128xf32>
    %c9 = arith.constant 9 : index
    %c0_35 = arith.constant 0 : index
    %c0_36 = arith.constant 0 : index
    %38 = vector.load %arg4[%c9, %c0_35, %c0_36] : memref<16x64x256xf32, #tpu.memory_space<vmem>>, vector<1x64x256xf32>
    %39 = vector.shape_cast %38 : vector<1x64x256xf32> to vector<64x256xf32>
    %cst_37 = arith.constant dense<0.000000e+00> : vector<64x128xf32>
    %40 = tpu.matmul %39, %10, %cst_37 {dimension_numbers = #tpu.dot_dimension_numbers<[1], [0], [0], [1], [0, 0, 1, 1], [], []>} : vector<64x256xf32>, vector<256x128xf32>, vector<64x128xf32> -> vector<64x128xf32>
    %c10 = arith.constant 10 : index
    %c0_38 = arith.constant 0 : index
    %c0_39 = arith.constant 0 : index
    %41 = vector.load %arg4[%c10, %c0_38, %c0_39] : memref<16x64x256xf32, #tpu.memory_space<vmem>>, vector<1x64x256xf32>
    %42 = vector.shape_cast %41 : vector<1x64x256xf32> to vector<64x256xf32>
    %cst_40 = arith.constant dense<0.000000e+00> : vector<64x128xf32>
    %43 = tpu.matmul %42, %10, %cst_40 {dimension_numbers = #tpu.dot_dimension_numbers<[1], [0], [0], [1], [0, 0, 1, 1], [], []>} : vector<64x256xf32>, vector<256x128xf32>, vector<64x128xf32> -> vector<64x128xf32>
    %c11 = arith.constant 11 : index
    %c0_41 = arith.constant 0 : index
    %c0_42 = arith.constant 0 : index
    %44 = vector.load %arg4[%c11, %c0_41, %c0_42] : memref<16x64x256xf32, #tpu.memory_space<vmem>>, vector<1x64x256xf32>
    %45 = vector.shape_cast %44 : vector<1x64x256xf32> to vector<64x256xf32>
    %cst_43 = arith.constant dense<0.000000e+00> : vector<64x128xf32>
    %46 = tpu.matmul %45, %10, %cst_43 {dimension_numbers = #tpu.dot_dimension_numbers<[1], [0], [0], [1], [0, 0, 1, 1], [], []>} : vector<64x256xf32>, vector<256x128xf32>, vector<64x128xf32> -> vector<64x128xf32>
    %c12 = arith.constant 12 : index
    %c0_44 = arith.constant 0 : index
    %c0_45 = arith.constant 0 : index
    %47 = vector.load %arg4[%c12, %c0_44, %c0_45] : memref<16x64x256xf32, #tpu.memory_space<vmem>>, vector<1x64x256xf32>
    %48 = vector.shape_cast %47 : vector<1x64x256xf32> to vector<64x256xf32>
    %cst_46 = arith.constant dense<0.000000e+00> : vector<64x128xf32>
    %49 = tpu.matmul %48, %10, %cst_46 {dimension_numbers = #tpu.dot_dimension_numbers<[1], [0], [0], [1], [0, 0, 1, 1], [], []>} : vector<64x256xf32>, vector<256x128xf32>, vector<64x128xf32> -> vector<64x128xf32>
    %c13 = arith.constant 13 : index
    %c0_47 = arith.constant 0 : index
    %c0_48 = arith.constant 0 : index
    %50 = vector.load %arg4[%c13, %c0_47, %c0_48] : memref<16x64x256xf32, #tpu.memory_space<vmem>>, vector<1x64x256xf32>
    %51 = vector.shape_cast %50 : vector<1x64x256xf32> to vector<64x256xf32>
    %cst_49 = arith.constant dense<0.000000e+00> : vector<64x128xf32>
    %52 = tpu.matmul %51, %10, %cst_49 {dimension_numbers = #tpu.dot_dimension_numbers<[1], [0], [0], [1], [0, 0, 1, 1], [], []>} : vector<64x256xf32>, vector<256x128xf32>, vector<64x128xf32> -> vector<64x128xf32>
    %c14 = arith.constant 14 : index
    %c0_50 = arith.constant 0 : index
    %c0_51 = arith.constant 0 : index
    %53 = vector.load %arg4[%c14, %c0_50, %c0_51] : memref<16x64x256xf32, #tpu.memory_space<vmem>>, vector<1x64x256xf32>
    %54 = vector.shape_cast %53 : vector<1x64x256xf32> to vector<64x256xf32>
    %cst_52 = arith.constant dense<0.000000e+00> : vector<64x128xf32>
    %55 = tpu.matmul %54, %10, %cst_52 {dimension_numbers = #tpu.dot_dimension_numbers<[1], [0], [0], [1], [0, 0, 1, 1], [], []>} : vector<64x256xf32>, vector<256x128xf32>, vector<64x128xf32> -> vector<64x128xf32>
    %c15 = arith.constant 15 : index
    %c0_53 = arith.constant 0 : index
    %c0_54 = arith.constant 0 : index
    %56 = vector.load %arg4[%c15, %c0_53, %c0_54] : memref<16x64x256xf32, #tpu.memory_space<vmem>>, vector<1x64x256xf32>
    %57 = vector.shape_cast %56 : vector<1x64x256xf32> to vector<64x256xf32>
    %cst_55 = arith.constant dense<0.000000e+00> : vector<64x128xf32>
    %58 = tpu.matmul %57, %10, %cst_55 {dimension_numbers = #tpu.dot_dimension_numbers<[1], [0], [0], [1], [0, 0, 1, 1], [], []>} : vector<64x256xf32>, vector<256x128xf32>, vector<64x128xf32> -> vector<64x128xf32>
    %59 = tpu.concatenate %13, %16, %19, %22, %25, %28, %31, %34, %37, %40, %43, %46, %49, %52, %55, %58 in 1 : vector<64x128xf32>, vector<64x128xf32>, vector<64x128xf32>, vector<64x128xf32>, vector<64x128xf32>, vector<64x128xf32>, vector<64x128xf32>, vector<64x128xf32>, vector<64x128xf32>, vector<64x128xf32>, vector<64x128xf32>, vector<64x128xf32>, vector<64x128xf32>, vector<64x128xf32>, vector<64x128xf32>, vector<64x128xf32> -> vector<64x2048xf32>
    %c0_56 = arith.constant 0 : index
    %c0_57 = arith.constant 0 : index
    %60 = vector.load %arg5[%c0_56, %c0_57] : memref<2048x128xf32, #tpu.memory_space<vmem>>, vector<2048x128xf32>
    %cst_58 = arith.constant dense<0.000000e+00> : vector<64x128xf32>
    %61 = tpu.matmul %59, %60, %cst_58 {dimension_numbers = #tpu.dot_dimension_numbers<[1], [0], [0], [1], [0, 0, 1, 1], [], []>} : vector<64x2048xf32>, vector<2048x128xf32>, vector<64x128xf32> -> vector<64x128xf32>
    %c0_59 = arith.constant 0 : index
    %c0_60 = arith.constant 0 : index
    %62 = vector.load %arg6[%c0_59, %c0_60] : memref<1x128xf32, #tpu.memory_space<vmem>>, vector<1x128xf32>
    %63 = vector.broadcast %62 : vector<1x128xf32> to vector<64x128xf32>
    %64 = arith.addf %61, %63 : vector<64x128xf32>
    %cst_61 = arith.constant 0.000000e+00 : f32
    %65 = vector.broadcast %cst_61 : f32 to vector<64x128xf32>
    %66 = arith.cmpf oge, %64, %65 : vector<64x128xf32>
    %cst_62 = arith.constant 0.00999999977 : f32
    %67 = vector.broadcast %cst_62 : f32 to vector<64x128xf32>
    %68 = arith.mulf %67, %64 : vector<64x128xf32>
    %69 = arith.select %66, %64, %68 : vector<64x128xi1>, vector<64x128xf32>
    %c0_63 = arith.constant 0 : index
    %c0_64 = arith.constant 0 : index
    %c0_65 = arith.constant 0 : index
    %70 = vector.load %arg7[%c0_63, %c0_64, %c0_65] : memref<9x64x64xf32, #tpu.memory_space<vmem>>, vector<1x64x64xf32>
    %71 = vector.shape_cast %70 : vector<1x64x64xf32> to vector<64x64xf32>
    %cst_66 = arith.constant dense<0.000000e+00> : vector<64x128xf32>
    %72 = tpu.matmul %71, %69, %cst_66 {dimension_numbers = #tpu.dot_dimension_numbers<[1], [0], [0], [1], [0, 0, 1, 1], [], []>} : vector<64x64xf32>, vector<64x128xf32>, vector<64x128xf32> -> vector<64x128xf32>
    %c1_67 = arith.constant 1 : index
    %c0_68 = arith.constant 0 : index
    %c0_69 = arith.constant 0 : index
    %73 = vector.load %arg7[%c1_67, %c0_68, %c0_69] : memref<9x64x64xf32, #tpu.memory_space<vmem>>, vector<1x64x64xf32>
    %74 = vector.shape_cast %73 : vector<1x64x64xf32> to vector<64x64xf32>
    %cst_70 = arith.constant dense<0.000000e+00> : vector<64x128xf32>
    %75 = tpu.matmul %74, %69, %cst_70 {dimension_numbers = #tpu.dot_dimension_numbers<[1], [0], [0], [1], [0, 0, 1, 1], [], []>} : vector<64x64xf32>, vector<64x128xf32>, vector<64x128xf32> -> vector<64x128xf32>
    %c2_71 = arith.constant 2 : index
    %c0_72 = arith.constant 0 : index
    %c0_73 = arith.constant 0 : index
    %76 = vector.load %arg7[%c2_71, %c0_72, %c0_73] : memref<9x64x64xf32, #tpu.memory_space<vmem>>, vector<1x64x64xf32>
    %77 = vector.shape_cast %76 : vector<1x64x64xf32> to vector<64x64xf32>
    %cst_74 = arith.constant dense<0.000000e+00> : vector<64x128xf32>
    %78 = tpu.matmul %77, %69, %cst_74 {dimension_numbers = #tpu.dot_dimension_numbers<[1], [0], [0], [1], [0, 0, 1, 1], [], []>} : vector<64x64xf32>, vector<64x128xf32>, vector<64x128xf32> -> vector<64x128xf32>
    %c3_75 = arith.constant 3 : index
    %c0_76 = arith.constant 0 : index
    %c0_77 = arith.constant 0 : index
    %79 = vector.load %arg7[%c3_75, %c0_76, %c0_77] : memref<9x64x64xf32, #tpu.memory_space<vmem>>, vector<1x64x64xf32>
    %80 = vector.shape_cast %79 : vector<1x64x64xf32> to vector<64x64xf32>
    %cst_78 = arith.constant dense<0.000000e+00> : vector<64x128xf32>
    %81 = tpu.matmul %80, %69, %cst_78 {dimension_numbers = #tpu.dot_dimension_numbers<[1], [0], [0], [1], [0, 0, 1, 1], [], []>} : vector<64x64xf32>, vector<64x128xf32>, vector<64x128xf32> -> vector<64x128xf32>
    %c4_79 = arith.constant 4 : index
    %c0_80 = arith.constant 0 : index
    %c0_81 = arith.constant 0 : index
    %82 = vector.load %arg7[%c4_79, %c0_80, %c0_81] : memref<9x64x64xf32, #tpu.memory_space<vmem>>, vector<1x64x64xf32>
    %83 = vector.shape_cast %82 : vector<1x64x64xf32> to vector<64x64xf32>
    %cst_82 = arith.constant dense<0.000000e+00> : vector<64x128xf32>
    %84 = tpu.matmul %83, %69, %cst_82 {dimension_numbers = #tpu.dot_dimension_numbers<[1], [0], [0], [1], [0, 0, 1, 1], [], []>} : vector<64x64xf32>, vector<64x128xf32>, vector<64x128xf32> -> vector<64x128xf32>
    %c5_83 = arith.constant 5 : index
    %c0_84 = arith.constant 0 : index
    %c0_85 = arith.constant 0 : index
    %85 = vector.load %arg7[%c5_83, %c0_84, %c0_85] : memref<9x64x64xf32, #tpu.memory_space<vmem>>, vector<1x64x64xf32>
    %86 = vector.shape_cast %85 : vector<1x64x64xf32> to vector<64x64xf32>
    %cst_86 = arith.constant dense<0.000000e+00> : vector<64x128xf32>
    %87 = tpu.matmul %86, %69, %cst_86 {dimension_numbers = #tpu.dot_dimension_numbers<[1], [0], [0], [1], [0, 0, 1, 1], [], []>} : vector<64x64xf32>, vector<64x128xf32>, vector<64x128xf32> -> vector<64x128xf32>
    %c6_87 = arith.constant 6 : index
    %c0_88 = arith.constant 0 : index
    %c0_89 = arith.constant 0 : index
    %88 = vector.load %arg7[%c6_87, %c0_88, %c0_89] : memref<9x64x64xf32, #tpu.memory_space<vmem>>, vector<1x64x64xf32>
    %89 = vector.shape_cast %88 : vector<1x64x64xf32> to vector<64x64xf32>
    %cst_90 = arith.constant dense<0.000000e+00> : vector<64x128xf32>
    %90 = tpu.matmul %89, %69, %cst_90 {dimension_numbers = #tpu.dot_dimension_numbers<[1], [0], [0], [1], [0, 0, 1, 1], [], []>} : vector<64x64xf32>, vector<64x128xf32>, vector<64x128xf32> -> vector<64x128xf32>
    %c7_91 = arith.constant 7 : index
    %c0_92 = arith.constant 0 : index
    %c0_93 = arith.constant 0 : index
    %91 = vector.load %arg7[%c7_91, %c0_92, %c0_93] : memref<9x64x64xf32, #tpu.memory_space<vmem>>, vector<1x64x64xf32>
    %92 = vector.shape_cast %91 : vector<1x64x64xf32> to vector<64x64xf32>
    %cst_94 = arith.constant dense<0.000000e+00> : vector<64x128xf32>
    %93 = tpu.matmul %92, %69, %cst_94 {dimension_numbers = #tpu.dot_dimension_numbers<[1], [0], [0], [1], [0, 0, 1, 1], [], []>} : vector<64x64xf32>, vector<64x128xf32>, vector<64x128xf32> -> vector<64x128xf32>
    %c8_95 = arith.constant 8 : index
    %c0_96 = arith.constant 0 : index
    %c0_97 = arith.constant 0 : index
    %94 = vector.load %arg7[%c8_95, %c0_96, %c0_97] : memref<9x64x64xf32, #tpu.memory_space<vmem>>, vector<1x64x64xf32>
    %95 = vector.shape_cast %94 : vector<1x64x64xf32> to vector<64x64xf32>
    %cst_98 = arith.constant dense<0.000000e+00> : vector<64x128xf32>
    %96 = tpu.matmul %95, %69, %cst_98 {dimension_numbers = #tpu.dot_dimension_numbers<[1], [0], [0], [1], [0, 0, 1, 1], [], []>} : vector<64x64xf32>, vector<64x128xf32>, vector<64x128xf32> -> vector<64x128xf32>
    %97 = tpu.concatenate %72, %75, %78, %81, %84, %87, %90, %93, %96 in 1 : vector<64x128xf32>, vector<64x128xf32>, vector<64x128xf32>, vector<64x128xf32>, vector<64x128xf32>, vector<64x128xf32>, vector<64x128xf32>, vector<64x128xf32>, vector<64x128xf32> -> vector<64x1152xf32>
    %c0_99 = arith.constant 0 : index
    %c0_100 = arith.constant 0 : index
    %98 = vector.load %arg8[%c0_99, %c0_100] : memref<1152x128xf32, #tpu.memory_space<vmem>>, vector<1152x128xf32>
    %cst_101 = arith.constant dense<0.000000e+00> : vector<64x128xf32>
    %99 = tpu.matmul %97, %98, %cst_101 {dimension_numbers = #tpu.dot_dimension_numbers<[1], [0], [0], [1], [0, 0, 1, 1], [], []>} : vector<64x1152xf32>, vector<1152x128xf32>, vector<64x128xf32> -> vector<64x128xf32>
    %c0_102 = arith.constant 0 : index
    %c0_103 = arith.constant 0 : index
    %100 = vector.load %arg9[%c0_102, %c0_103] : memref<1x128xf32, #tpu.memory_space<vmem>>, vector<1x128xf32>
    %101 = vector.broadcast %100 : vector<1x128xf32> to vector<64x128xf32>
    %102 = arith.addf %99, %101 : vector<64x128xf32>
    %c0_104 = arith.constant 0 : index
    %c0_105 = arith.constant 0 : index
    %103 = vector.load %arg10[%c0_104, %c0_105] : memref<64x128xf32, #tpu.memory_space<vmem>>, vector<64x128xf32>
    tpu.vector_store %arg10[%c0_104, %c0_105], %102 {strides = array<i32>} : memref<64x128xf32, #tpu.memory_space<vmem>>, vector<64x128xf32>,
    return
  }
  func.func @transform_0(%arg0: i32) -> (i32, i32) {
    %c0_i32 = arith.constant 0 : i32
    %c0_i32_0 = arith.constant 0 : i32
    return %arg0, %c0_i32 : i32, i32
  }
  func.func @transform_1(%arg0: i32) -> (i32, i32) {
    %c0_i32 = arith.constant 0 : i32
    %c0_i32_0 = arith.constant 0 : i32
    %c0_i32_1 = arith.constant 0 : i32
    return %c0_i32, %c0_i32_0 : i32, i32
  }
  func.func @transform_2(%arg0: i32) -> (i32, i32) {
    %c0_i32 = arith.constant 0 : i32
    %c0_i32_0 = arith.constant 0 : i32
    %c0_i32_1 = arith.constant 0 : i32
    return %c0_i32, %c0_i32_0 : i32, i32
  }
  func.func @transform_3(%arg0: i32) -> (i32, i32, i32) {
    %c0_i32 = arith.constant 0 : i32
    %c0_i32_0 = arith.constant 0 : i32
    %c0_i32_1 = arith.constant 0 : i32
    %c0_i32_2 = arith.constant 0 : i32
    return %c0_i32, %c0_i32_0, %c0_i32_1 : i32, i32, i32
  }
  func.func @transform_4(%arg0: i32) -> (i32, i32) {
    %c0_i32 = arith.constant 0 : i32
    %c0_i32_0 = arith.constant 0 : i32
    %c0_i32_1 = arith.constant 0 : i32
    return %c0_i32, %c0_i32_0 : i32, i32
  }
  func.func @transform_5(%arg0: i32) -> (i32, i32) {
    %c0_i32 = arith.constant 0 : i32
    %c0_i32_0 = arith.constant 0 : i32
    %c0_i32_1 = arith.constant 0 : i32
    return %c0_i32, %c0_i32_0 : i32, i32
  }
  func.func @transform_6(%arg0: i32) -> (i32, i32, i32) {
    %c0_i32 = arith.constant 0 : i32
    %c0_i32_0 = arith.constant 0 : i32
    %c0_i32_1 = arith.constant 0 : i32
    %c0_i32_2 = arith.constant 0 : i32
    return %c0_i32, %c0_i32_0, %c0_i32_1 : i32, i32, i32
  }
  func.func @transform_7(%arg0: i32) -> (i32, i32) {
    %c0_i32 = arith.constant 0 : i32
    %c0_i32_0 = arith.constant 0 : i32
    %c0_i32_1 = arith.constant 0 : i32
    return %c0_i32, %c0_i32_0 : i32, i32
  }
  func.func @transform_8(%arg0: i32) -> (i32, i32) {
    %c0_i32 = arith.constant 0 : i32
    %c0_i32_0 = arith.constant 0 : i32
    %c0_i32_1 = arith.constant 0 : i32
    return %c0_i32, %c0_i32_0 : i32, i32
  }
  func.func @transform_9(%arg0: i32) -> (i32, i32) {
    %c0_i32 = arith.constant 0 : i32
    %c0_i32_0 = arith.constant 0 : i32
    return %arg0, %c0_i32 : i32, i32
  }
}

</mosaic_0001>

<llo_original>
// kernel: squeeze.1
$region0: #{squeeze.1}
  %s0 = inlined_call_operand.vmem [shape: f32[256], index: 0, kind: input, shape index: {}]
  %s1 = inlined_call_operand.vmem [shape: f32[16,1,4,4], index: 1, kind: output, shape index: {}]
  $region1: #{squeeze.1} parent=0
    #allocation0 [shape = 'u8[65536]{0}', space=vmem, size = 0x10000, scoped, tag = 'scoped mem for output reshape']
    #allocation1 [shape = 'u8[4096]{0}', space=vmem, size = 0x1000, scoped, tag = 'scoped mem for input reshape']
    %s3 = sshllo.u32 0, 2
    %v4 = vld [vmem:[%s0] sm:%s3]
    %5 = vst [vmem:[#allocation1] sm:%s3] %v4
    %v6 = vld [vmem:[#allocation1] sm:$0x3]
    %vm7 = vcmask 31744
    %8 = vst.msk [vmem:[#allocation0] sm:$0x1] %vm7, %v6
    %s9 = scalar_lea.vmem [#allocation0], 63
    %10 = vst.msk [vmem:[%s9] sm:$0x2] %vm7, %v6
    %v11 = vld [vmem:[#allocation1] sm:$0x3]
    %12 = vrot.lane.b32.xlu0 %v11, 124
    %v13 = vpop.permute.xlu0 %12
    %vm14 = vcmask 31744
    %s15 = scalar_lea.vmem [#allocation0], 1
    %16 = vst.msk [vmem:[%s15] sm:$0x1] %vm14, %v13
    %s17 = scalar_lea.vmem [#allocation0], 64
    %18 = vst.msk [vmem:[%s17] sm:$0x2] %vm14, %v13
    %v19 = vld [vmem:[#allocation1] sm:$0x3]
    %20 = vrot.lane.b32.xlu0 %v19, 120
    %v21 = vpop.permute.xlu0 %20
    %vm22 = vcmask 31744
    %s23 = scalar_lea.vmem [#allocation0], 2
    %24 = vst.msk [vmem:[%s23] sm:$0x1] %vm22, %v21
    %s25 = scalar_lea.vmem [#allocation0], 65
    %26 = vst.msk [vmem:[%s25] sm:$0x2] %vm22, %v21
    %v27 = vld [vmem:[#allocation1] sm:$0x3]
    %28 = vrot.lane.b32.xlu0 %v27, 116
    %v29 = vpop.permute.xlu0 %28
    %vm30 = vcmask 31744
    %s31 = scalar_lea.vmem [#allocation0], 3
    %32 = vst.msk [vmem:[%s31] sm:$0x1] %vm30, %v29
    %s33 = scalar_lea.vmem [#allocation0], 66
    %34 = vst.msk [vmem:[%s33] sm:$0x2] %vm30, %v29
    %v35 = vld [vmem:[#allocation1] sm:$0x3]
    %36 = vrot.lane.b32.xlu0 %v35, 112
    %v37 = vpop.permute.xlu0 %36
    %vm38 = vcmask 31744
    %s39 = scalar_lea.vmem [#allocation0], 8
    %40 = vst.msk [vmem:[%s39] sm:$0x1] %vm38, %v37
    %s41 = scalar_lea.vmem [#allocation0], 71
    %42 = vst.msk [vmem:[%s41] sm:$0x2] %vm38, %v37
    %v43 = vld [vmem:[#allocation1] sm:$0x3]
    %44 = vrot.lane.b32.xlu0 %v43, 108
    %v45 = vpop.permute.xlu0 %44
    %vm46 = vcmask 31744
    %s47 = scalar_lea.vmem [#allocation0], 9
    %48 = vst.msk [vmem:[%s47] sm:$0x1] %vm46, %v45
    %s49 = scalar_lea.vmem [#allocation0], 72
    %50 = vst.msk [vmem:[%s49] sm:$0x2] %vm46, %v45
    %v51 = vld [vmem:[#allocation1] sm:$0x3]
    %52 = vrot.lane.b32.xlu0 %v51, 104
    %v53 = vpop.permute.xlu0 %52
    %vm54 = vcmask 31744
    %s55 = scalar_lea.vmem [#allocation0], 10
    %56 = vst.msk [vmem:[%s55] sm:$0x1] %vm54, %v53
    %s57 = scalar_lea.vmem [#allocation0], 73
    %58 = vst.msk [vmem:[%s57] sm:$0x2] %vm54, %v53
    %v59 = vld [vmem:[#allocation1] sm:$0x3]
    %60 = vrot.lane.b32.xlu0 %v59, 100
    %v61 = vpop.permute.xlu0 %60
    %vm62 = vcmask 31744
    %s63 = scalar_lea.vmem [#allocation0], 11
    %64 = vst.msk [vmem:[%s63] sm:$0x1] %vm62, %v61
    %s65 = scalar_lea.vmem [#allocation0], 74
    %66 = vst.msk [vmem:[%s65] sm:$0x2] %vm62, %v61
    %v67 = vld [vmem:[#allocation1] sm:$0x3]
    %68 = vrot.lane.b32.xlu0 %v67, 96
    %v69 = vpop.permute.xlu0 %68
    %vm70 = vcmask 31744
    %s71 = scalar_lea.vmem [#allocation0], 16
    %72 = vst.msk [vmem:[%s71] sm:$0x1] %vm70, %v69
    %s73 = scalar_lea.vmem [#allocation0], 79
    %74 = vst.msk [vmem:[%s73] sm:$0x2] %vm70, %v69
    %v75 = vld [vmem:[#allocation1] sm:$0x3]
    %76 = vrot.lane.b32.xlu0 %v75, 92
    %v77 = vpop.permute.xlu0 %76
    %vm78 = vcmask 31744
    %s79 = scalar_lea.vmem [#allocation0], 17
    %80 = vst.msk [vmem:[%s79] sm:$0x1] %vm78, %v77
    %s81 = scalar_lea.vmem [#allocation0], 80
    %82 = vst.msk [vmem:[%s81] sm:$0x2] %vm78, %v77
    %v83 = vld [vmem:[#allocation1] sm:$0x3]
    %84 = vrot.lane.b32.xlu0 %v83, 88
    %v85 = vpop.permute.xlu0 %84
    %vm86 = vcmask 31744
    %s87 = scalar_lea.vmem [#allocation0], 18
    %88 = vst.msk [vmem:[%s87] sm:$0x1] %vm86, %v85
    %s89 = scalar_lea.vmem [#allocation0], 81
    %90 = vst.msk [vmem:[%s89] sm:$0x2] %vm86, %v85
    %v91 = vld [vmem:[#allocation1] sm:$0x3]
    %92 = vrot.lane.b32.xlu0 %v91, 84
    %v93 = vpop.permute.xlu0 %92
    %vm94 = vcmask 31744
    %s95 = scalar_lea.vmem [#allocation0], 19
    %96 = vst.msk [vmem:[%s95] sm:$0x1] %vm94, %v93
    %s97 = scalar_lea.vmem [#allocation0], 82
    %98 = vst.msk [vmem:[%s97] sm:$0x2] %vm94, %v93
    %v99 = vld [vmem:[#allocation1] sm:$0x3]
    %100 = vrot.lane.b32.xlu0 %v99, 80
    %v101 = vpop.permute.xlu0 %100
    %vm102 = vcmask 31744
    %s103 = scalar_lea.vmem [#allocation0], 24
    %104 = vst.msk [vmem:[%s103] sm:$0x1] %vm102, %v101
    %s105 = scalar_lea.vmem [#allocation0], 87
    %106 = vst.msk [vmem:[%s105] sm:$0x2] %vm102, %v101
    %v107 = vld [vmem:[#allocation1] sm:$0x3]
    %108 = vrot.lane.b32.xlu0 %v107, 76
    %v109 = vpop.permute.xlu0 %108
    %vm110 = vcmask 31744
    %s111 = scalar_lea.vmem [#allocation0], 25
    %112 = vst.msk [vmem:[%s111] sm:$0x1] %vm110, %v109
    %s113 = scalar_lea.vmem [#allocation0], 88
    %114 = vst.msk [vmem:[%s113] sm:$0x2] %vm110, %v109
    %v115 = vld [vmem:[#allocation1] sm:$0x3]
    %116 = vrot.lane.b32.xlu0 %v115, 72
    %v117 = vpop.permute.xlu0 %116
    %vm118 = vcmask 31744
    %s119 = scalar_lea.vmem [#allocation0], 26
    %120 = vst.msk [vmem:[%s119] sm:$0x1] %vm118, %v117
    %s121 = scalar_lea.vmem [#allocation0], 89
    %122 = vst.msk [vmem:[%s121] sm:$0x2] %vm118, %v117
    %v123 = vld [vmem:[#allocation1] sm:$0x3]
    %124 = vrot.lane.b32.xlu0 %v123, 68
    %v125 = vpop.permute.xlu0 %124
    %vm126 = vcmask 31744
    %s127 = scalar_lea.vmem [#allocation0], 27
    %128 = vst.msk [vmem:[%s127] sm:$0x1] %vm126, %v125
    %s129 = scalar_lea.vmem [#allocation0], 90
    %130 = vst.msk [vmem:[%s129] sm:$0x2] %vm126, %v125
    %v131 = vld [vmem:[#allocation1] sm:$0x3]
    %132 = vrot.lane.b32.xlu0 %v131, 64
    %v133 = vpop.permute.xlu0 %132
    %vm134 = vcmask 31744
    %s135 = scalar_lea.vmem [#allocation0], 32
    %136 = vst.msk [vmem:[%s135] sm:$0x1] %vm134, %v133
    %s137 = scalar_lea.vmem [#allocation0], 95
    %138 = vst.msk [vmem:[%s137] sm:$0x2] %vm134, %v133
    %v139 = vld [vmem:[#allocation1] sm:$0x3]
    %140 = vrot.lane.b32.xlu0 %v139, 60
    %v141 = vpop.permute.xlu0 %140
    %vm142 = vcmask 31744
    %s143 = scalar_lea.vmem [#allocation0], 33
    %144 = vst.msk [vmem:[%s143] sm:$0x1] %vm142, %v141
    %s145 = scalar_lea.vmem [#allocation0], 96
    %146 = vst.msk [vmem:[%s145] sm:$0x2] %vm142, %v141
    %v147 = vld [vmem:[#allocation1] sm:$0x3]
    %148 = vrot.lane.b32.xlu0 %v147, 56
    %v149 = vpop.permute.xlu0 %148
    %vm150 = vcmask 31744
    %s151 = scalar_lea.vmem [#allocation0], 34
    %152 = vst.msk [vmem:[%s151] sm:$0x1] %vm150, %v149
    %s153 = scalar_lea.vmem [#allocation0], 97
    %154 = vst.msk [vmem:[%s153] sm:$0x2] %vm150, %v149
    %v155 = vld [vmem:[#allocation1] sm:$0x3]
    %156 = vrot.lane.b32.xlu0 %v155, 52
    %v157 = vpop.permute.xlu0 %156
    %vm158 = vcmask 31744
    %s159 = scalar_lea.vmem [#allocation0], 35
    %160 = vst.msk [vmem:[%s159] sm:$0x1] %vm158, %v157
    %s161 = scalar_lea.vmem [#allocation0], 98
    %162 = vst.msk [vmem:[%s161] sm:$0x2] %vm158, %v157
    %v163 = vld [vmem:[#allocation1] sm:$0x3]
    %164 = vrot.lane.b32.xlu0 %v163, 48
    %v165 = vpop.permute.xlu0 %164
    %vm166 = vcmask 31744
    %s167 = scalar_lea.vmem [#allocation0], 40
    %168 = vst.msk [vmem:[%s167] sm:$0x1] %vm166, %v165
    %s169 = scalar_lea.vmem [#allocation0], 103
    %170 = vst.msk [vmem:[%s169] sm:$0x2] %vm166, %v165
    %v171 = vld [vmem:[#allocation1] sm:$0x3]
    %172 = vrot.lane.b32.xlu0 %v171, 44
    %v173 = vpop.permute.xlu0 %172
    %vm174 = vcmask 31744
    %s175 = scalar_lea.vmem [#allocation0], 41
    %176 = vst.msk [vmem:[%s175] sm:$0x1] %vm174, %v173
    %s177 = scalar_lea.vmem [#allocation0], 104
    %178 = vst.msk [vmem:[%s177] sm:$0x2] %vm174, %v173
    %v179 = vld [vmem:[#allocation1] sm:$0x3]
    %180 = vrot.lane.b32.xlu0 %v179, 40
    %v181 = vpop.permute.xlu0 %180
    %vm182 = vcmask 31744
    %s183 = scalar_lea.vmem [#allocation0], 42
    %184 = vst.msk [vmem:[%s183] sm:$0x1] %vm182, %v181
    %s185 = scalar_lea.vmem [#allocation0], 105
    %186 = vst.msk [vmem:[%s185] sm:$0x2] %vm182, %v181
    %v187 = vld [vmem:[#allocation1] sm:$0x3]
    %188 = vrot.lane.b32.xlu0 %v187, 36
    %v189 = vpop.permute.xlu0 %188
    %vm190 = vcmask 31744
    %s191 = scalar_lea.vmem [#allocation0], 43
    %192 = vst.msk [vmem:[%s191] sm:$0x1] %vm190, %v189
    %s193 = scalar_lea.vmem [#allocation0], 106
    %194 = vst.msk [vmem:[%s193] sm:$0x2] %vm190, %v189
    %v195 = vld [vmem:[#allocation1] sm:$0x3]
    %196 = vrot.lane.b32.xlu0 %v195, 32
    %v197 = vpop.permute.xlu0 %196
    %vm198 = vcmask 31744
    %s199 = scalar_lea.vmem [#allocation0], 48
    %200 = vst.msk [vmem:[%s199] sm:$0x1] %vm198, %v197
    %s201 = scalar_lea.vmem [#allocation0], 111
    %202 = vst.msk [vmem:[%s201] sm:$0x2] %vm198, %v197
    %v203 = vld [vmem:[#allocation1] sm:$0x3]
    %204 = vrot.lane.b32.xlu0 %v203, 28
    %v205 = vpop.permute.xlu0 %204
    %vm206 = vcmask 31744
    %s207 = scalar_lea.vmem [#allocation0], 49
    %208 = vst.msk [vmem:[%s207] sm:$0x1] %vm206, %v205
    %s209 = scalar_lea.vmem [#allocation0], 112
    %210 = vst.msk [vmem:[%s209] sm:$0x2] %vm206, %v205
    %v211 = vld [vmem:[#allocation1] sm:$0x3]
    %212 = vrot.lane.b32.xlu0 %v211, 24
    %v213 = vpop.permute.xlu0 %212
    %vm214 = vcmask 31744
    %s215 = scalar_lea.vmem [#allocation0], 50
    %216 = vst.msk [vmem:[%s215] sm:$0x1] %vm214, %v213
    %s217 = scalar_lea.vmem [#allocation0], 113
    %218 = vst.msk [vmem:[%s217] sm:$0x2] %vm214, %v213
    %v219 = vld [vmem:[#allocation1] sm:$0x3]
    %220 = vrot.lane.b32.xlu0 %v219, 20
    %v221 = vpop.permute.xlu0 %220
    %vm222 = vcmask 31744
    %s223 = scalar_lea.vmem [#allocation0], 51
    %224 = vst.msk [vmem:[%s223] sm:$0x1] %vm222, %v221
    %s225 = scalar_lea.vmem [#allocation0], 114
    %226 = vst.msk [vmem:[%s225] sm:$0x2] %vm222, %v221
    %v227 = vld [vmem:[#allocation1] sm:$0x3]
    %228 = vrot.lane.b32.xlu0 %v227, 16
    %v229 = vpop.permute.xlu0 %228
    %vm230 = vcmask 31744
    %s231 = scalar_lea.vmem [#allocation0], 56
    %232 = vst.msk [vmem:[%s231] sm:$0x1] %vm230, %v229
    %s233 = scalar_lea.vmem [#allocation0], 119
    %234 = vst.msk [vmem:[%s233] sm:$0x2] %vm230, %v229
    %v235 = vld [vmem:[#allocation1] sm:$0x3]
    %236 = vrot.lane.b32.xlu0 %v235, 12
    %v237 = vpop.permute.xlu0 %236
    %vm238 = vcmask 31744
    %s239 = scalar_lea.vmem [#allocation0], 57
    %240 = vst.msk [vmem:[%s239] sm:$0x1] %vm238, %v237
    %s241 = scalar_lea.vmem [#allocation0], 120
    %242 = vst.msk [vmem:[%s241] sm:$0x2] %vm238, %v237
    %v243 = vld [vmem:[#allocation1] sm:$0x3]
    %244 = vrot.lane.b32.xlu0 %v243, 8
    %v245 = vpop.permute.xlu0 %244
    %vm246 = vcmask 31744
    %s247 = scalar_lea.vmem [#allocation0], 58
    %248 = vst.msk [vmem:[%s247] sm:$0x1] %vm246, %v245
    %s249 = scalar_lea.vmem [#allocation0], 121
    %250 = vst.msk [vmem:[%s249] sm:$0x2] %vm246, %v245
    %v251 = vld [vmem:[#allocation1] sm:$0x3]
    %252 = vrot.lane.b32.xlu0 %v251, 4
    %v253 = vpop.permute.xlu0 %252
    %vm254 = vcmask 31744
    %s255 = scalar_lea.vmem [#allocation0], 59
    %256 = vst.msk [vmem:[%s255] sm:$0x1] %vm254, %v253
    %s257 = scalar_lea.vmem [#allocation0], 122
    %258 = vst.msk [vmem:[%s257] sm:$0x2] %vm254, %v253
    %s260 = sshllo.u32 0, 4
    %v262 = vld [vmem:[#allocation0] sm:%s260]
    %s263 = sshllo.u32 0, 4
    %264 = vst [vmem:[%s1] sm:%s263] %v262
    %s265 = scalar_lea.vmem [#allocation0], 8
    %v266 = vld [vmem:[%s265] sm:%s260]
    %s267 = sshllo.u32 0, 4
    %s268 = scalar_lea.vmem %s1, 4
    %269 = vst [vmem:[%s268] sm:%s267] %v266
    %s270 = scalar_lea.vmem [#allocation0], 16
    %v271 = vld [vmem:[%s270] sm:%s260]
    %s272 = sshllo.u32 0, 4
    %s273 = smul.addr 4, 2
    %s274 = scalar_lea.vmem %s1, %s273
    %275 = vst [vmem:[%s274] sm:%s272] %v271
    %s276 = scalar_lea.vmem [#allocation0], 24
    %v277 = vld [vmem:[%s276] sm:%s260]
    %s278 = sshllo.u32 0, 4
    %s279 = smul.addr 4, 3
    %s280 = scalar_lea.vmem %s1, %s279
    %281 = vst [vmem:[%s280] sm:%s278] %v277
    %s282 = scalar_lea.vmem [#allocation0], 32
    %v283 = vld [vmem:[%s282] sm:%s260]
    %s284 = sshllo.u32 0, 4
    %s285 = smul.addr 4, 4
    %s286 = scalar_lea.vmem %s1, %s285
    %287 = vst [vmem:[%s286] sm:%s284] %v283
    %s288 = scalar_lea.vmem [#allocation0], 40
    %v289 = vld [vmem:[%s288] sm:%s260]
    %s290 = sshllo.u32 0, 4
    %s291 = smul.addr 4, 5
    %s292 = scalar_lea.vmem %s1, %s291
    %293 = vst [vmem:[%s292] sm:%s290] %v289
    %s294 = scalar_lea.vmem [#allocation0], 48
    %v295 = vld [vmem:[%s294] sm:%s260]
    %s296 = sshllo.u32 0, 4
    %s297 = smul.addr 4, 6
    %s298 = scalar_lea.vmem %s1, %s297
    %299 = vst [vmem:[%s298] sm:%s296] %v295
    %s300 = scalar_lea.vmem [#allocation0], 56
    %v301 = vld [vmem:[%s300] sm:%s260]
    %s302 = sshllo.u32 0, 4
    %s303 = smul.addr 4, 7
    %s304 = scalar_lea.vmem %s1, %s303
    %305 = vst [vmem:[%s304] sm:%s302] %v301
    %s306 = scalar_lea.vmem [#allocation0], 64
    %v307 = vld [vmem:[%s306] sm:%s260]
    %s308 = sshllo.u32 0, 4
    %s309 = smul.addr 4, 8
    %s310 = scalar_lea.vmem %s1, %s309
    %311 = vst [vmem:[%s310] sm:%s308] %v307
    %s312 = scalar_lea.vmem [#allocation0], 72
    %v313 = vld [vmem:[%s312] sm:%s260]
    %s314 = sshllo.u32 0, 4
    %s315 = smul.addr 4, 9
    %s316 = scalar_lea.vmem %s1, %s315
    %317 = vst [vmem:[%s316] sm:%s314] %v313
    %s318 = scalar_lea.vmem [#allocation0], 80
    %v319 = vld [vmem:[%s318] sm:%s260]
    %s320 = sshllo.u32 0, 4
    %s321 = smul.addr 4, 10
    %s322 = scalar_lea.vmem %s1, %s321
    %323 = vst [vmem:[%s322] sm:%s320] %v319
    %s324 = scalar_lea.vmem [#allocation0], 88
    %v325 = vld [vmem:[%s324] sm:%s260]
    %s326 = sshllo.u32 0, 4
    %s327 = smul.addr 4, 11
    %s328 = scalar_lea.vmem %s1, %s327
    %329 = vst [vmem:[%s328] sm:%s326] %v325
    %s330 = scalar_lea.vmem [#allocation0], 96
    %v331 = vld [vmem:[%s330] sm:%s260]
    %s332 = sshllo.u32 0, 4
    %s333 = smul.addr 4, 12
    %s334 = scalar_lea.vmem %s1, %s333
    %335 = vst [vmem:[%s334] sm:%s332] %v331
    %s336 = scalar_lea.vmem [#allocation0], 104
    %v337 = vld [vmem:[%s336] sm:%s260]
    %s338 = sshllo.u32 0, 4
    %s339 = smul.addr 4, 13
    %s340 = scalar_lea.vmem %s1, %s339
    %341 = vst [vmem:[%s340] sm:%s338] %v337
    %s342 = scalar_lea.vmem [#allocation0], 112
    %v343 = vld [vmem:[%s342] sm:%s260]
    %s344 = sshllo.u32 0, 4
    %s345 = smul.addr 4, 14
    %s346 = scalar_lea.vmem %s1, %s345
    %347 = vst [vmem:[%s346] sm:%s344] %v343
    %s348 = scalar_lea.vmem [#allocation0], 120
    %v349 = vld [vmem:[%s348] sm:%s260]
    %s350 = sshllo.u32 0, 4
    %s351 = smul.addr 4, 15
    %s352 = scalar_lea.vmem %s1, %s351
    %353 = vst [vmem:[%s352] sm:%s350] %v349

// kernel: forward.1
$region0: #{forward.1}
  #allocation0 [shape = 'u32[]', space=smem, size = 0x4, offset = 0x4, fixed_abs, tag = 'smem constant byte address 0x4 - core index']
  #allocation1 [shape = 'u32[144,128]{1,0:T(1,128)}', space=vmem, size = 0x12000, scoped, tag = 'internal scratch']
  %s0 = inlined_call_operand.vmem [shape: f32[1024,128], index: 0, kind: input, shape index: {}]
  %s1 = inlined_call_operand.vmem [shape: f32[128,128], index: 1, kind: input, shape index: {}]
  %s2 = inlined_call_operand.vmem [shape: f32[1,128], index: 2, kind: input, shape index: {}]
  %s3 = inlined_call_operand.vmem [shape: f32[16,64,256], index: 3, kind: input, shape index: {}]
  %s4 = inlined_call_operand.vmem [shape: f32[2048,128], index: 4, kind: input, shape index: {}]
  %s5 = inlined_call_operand.vmem [shape: f32[1,128], index: 5, kind: input, shape index: {}]
  %s6 = inlined_call_operand.vmem [shape: f32[9,64,64], index: 6, kind: input, shape index: {}]
  %s7 = inlined_call_operand.vmem [shape: f32[1152,128], index: 7, kind: input, shape index: {}]
  %s8 = inlined_call_operand.vmem [shape: f32[1,128], index: 8, kind: input, shape index: {}]
  %s9 = inlined_call_operand.vmem [shape: f32[256,128], index: 9, kind: output, shape index: {}]
  %s10 = sld [smem:[#allocation0]]
  $region69: #{forward.1} parent=0
    _
  %s12 = ssub.s32 1, %s10
  %s13 = scalar_select 0, %s12, %s10
  loop: start=0, step=1, limit=6
  $region2: #{forward.1} parent=0 // loop_pre_header
    _
  $region3: #{forward.1} parent=0 // loop_header
    %s15 = sphi 0, %s19
    %p16 = scmp.ge.s32.totalorder %s15, 6
    %s25 = sphi 0, %s27
    %s28 = sphi 0, %s25
    %s29 = sphi 0, %s28
    %s45 = sphi 0, %s29
    %s49 = sphi 0, %s49
    %s51 = sphi 0, %s49
    %s52 = sphi 0, %s51
    %s66 = sphi 0, %s52
    %s70 = sphi 0, %s70
    %s72 = sphi 0, %s70
    %s73 = sphi 0, %s72
    %s87 = sphi 0, %s73
    %s91 = sphi 0, %s91
    %s93 = sphi 0, %s91
    %s94 = sphi 0, %s93
    %s108 = sphi 0, %s94
    %s112 = sphi 0, %s112
    %s114 = sphi 0, %s112
    %s115 = sphi 0, %s114
    %s129 = sphi 0, %s115
    %s133 = sphi 0, %s133
    %s135 = sphi 0, %s133
    %s136 = sphi 0, %s135
    %s150 = sphi 0, %s136
    %s154 = sphi 0, %s154
    %s156 = sphi 0, %s154
    %s157 = sphi 0, %s156
    %s171 = sphi 0, %s157
    %s175 = sphi 0, %s175
    %s177 = sphi 0, %s175
    %s178 = sphi 0, %s177
    %s192 = sphi 0, %s178
    %s196 = sphi 0, %s196
    %s198 = sphi 0, %s196
    %s199 = sphi 0, %s198
    %s213 = sphi 0, %s199
    %s219 = sphi 0, %s221
    %s222 = sphi 0, %s219
    %s223 = sphi 0, %s222
    %s239 = sphi 0, %s223
  $region4: #{forward.1} parent=0 // loop_header_branch
    %18 = sbr.rel (%p16) target = $region8
  $region5: #{forward.1} parent=0 // loop_body
    %s20 = ssub.s32 %s15, 1
    %s21 = ssub.s32 %s15, 2
    %s22 = sadd.s32 %s15, 1
    %s23 = ssub.s32 %s15, %s22
    %p24 = scmp.eq.s32.totalorder %s23, 0
    %s26 = sadd.s32 %s25, 1
    %s27 = scalar_select %p24, %s25, %s26
    %p30 = pneg %p24
    %p31 = scmp.eq.s32.totalorder %s15, 3
    %p32 = por %p30, %p31
    %p33 = scmp.ne.s32.totalorder %s25, %s28
    %p34 = scmp.eq.s32.totalorder %s15, 0
    %p35 = por %p33, %p34
    %p36 = scmp.ne.s32.totalorder %s25, %s28
    %p37 = scmp.eq.s32.totalorder %s20, 3
    %p38 = por %p36, %p37
    %p39 = scmp.ne.s32.totalorder %s28, %s29
    %p40 = scmp.eq.s32.totalorder %s20, 0
    %p41 = por %p39, %p40
    %p42 = scmp.ne.s32.totalorder %s28, %s29
    %p43 = scmp.eq.s32.totalorder %s21, 3
    %p44 = por %p42, %p43
    %p46 = scmp.ne.s32.totalorder %s29, %s45
    %p47 = scmp.eq.s32.totalorder %s21, 0
    %p48 = por %p46, %p47
    %s50 = sadd.s32 %s49, 1
    %p53 = scmp.eq.s32.totalorder %s15, 3
    %p54 = scmp.ne.s32.totalorder %s49, %s51
    %p55 = scmp.eq.s32.totalorder %s15, 0
    %p56 = por %p54, %p55
    %p57 = scmp.ne.s32.totalorder %s49, %s51
    %p58 = scmp.eq.s32.totalorder %s20, 3
    %p59 = por %p57, %p58
    %p60 = scmp.ne.s32.totalorder %s51, %s52
    %p61 = scmp.eq.s32.totalorder %s20, 0
    %p62 = por %p60, %p61
    %p63 = scmp.ne.s32.totalorder %s51, %s52
    %p64 = scmp.eq.s32.totalorder %s21, 3
    %p65 = por %p63, %p64
    %p67 = scmp.ne.s32.totalorder %s52, %s66
    %p68 = scmp.eq.s32.totalorder %s21, 0
    %p69 = por %p67, %p68
    %s71 = sadd.s32 %s70, 1
    %p74 = scmp.eq.s32.totalorder %s15, 3
    %p75 = scmp.ne.s32.totalorder %s70, %s72
    %p76 = scmp.eq.s32.totalorder %s15, 0
    %p77 = por %p75, %p76
    %p78 = scmp.ne.s32.totalorder %s70, %s72
    %p79 = scmp.eq.s32.totalorder %s20, 3
    %p80 = por %p78, %p79
    %p81 = scmp.ne.s32.totalorder %s72, %s73
    %p82 = scmp.eq.s32.totalorder %s20, 0
    %p83 = por %p81, %p82
    %p84 = scmp.ne.s32.totalorder %s72, %s73
    %p85 = scmp.eq.s32.totalorder %s21, 3
    %p86 = por %p84, %p85
    %p88 = scmp.ne.s32.totalorder %s73, %s87
    %p89 = scmp.eq.s32.totalorder %s21, 0
    %p90 = por %p88, %p89
    %s92 = sadd.s32 %s91, 1
    %p95 = scmp.eq.s32.totalorder %s15, 3
    %p96 = scmp.ne.s32.totalorder %s91, %s93
    %p97 = scmp.eq.s32.totalorder %s15, 0
    %p98 = por %p96, %p97
    %p99 = scmp.ne.s32.totalorder %s91, %s93
    %p100 = scmp.eq.s32.totalorder %s20, 3
    %p101 = por %p99, %p100
    %p102 = scmp.ne.s32.totalorder %s93, %s94
    %p103 = scmp.eq.s32.totalorder %s20, 0
    %p104 = por %p102, %p103
    %p105 = scmp.ne.s32.totalorder %s93, %s94
    %p106 = scmp.eq.s32.totalorder %s21, 3
    %p107 = por %p105, %p106
    %p109 = scmp.ne.s32.totalorder %s94, %s108
    %p110 = scmp.eq.s32.totalorder %s21, 0
    %p111 = por %p109, %p110
    %s113 = sadd.s32 %s112, 1
    %p116 = scmp.eq.s32.totalorder %s15, 3
    %p117 = scmp.ne.s32.totalorder %s112, %s114
    %p118 = scmp.eq.s32.totalorder %s15, 0
    %p119 = por %p117, %p118
    %p120 = scmp.ne.s32.totalorder %s112, %s114
    %p121 = scmp.eq.s32.totalorder %s20, 3
    %p122 = por %p120, %p121
    %p123 = scmp.ne.s32.totalorder %s114, %s115
    %p124 = scmp.eq.s32.totalorder %s20, 0
    %p125 = por %p123, %p124
    %p126 = scmp.ne.s32.totalorder %s114, %s115
    %p127 = scmp.eq.s32.totalorder %s21, 3
    %p128 = por %p126, %p127
    %p130 = scmp.ne.s32.totalorder %s115, %s129
    %p131 = scmp.eq.s32.totalorder %s21, 0
    %p132 = por %p130, %p131
    %s134 = sadd.s32 %s133, 1
    %p137 = scmp.eq.s32.totalorder %s15, 3
    %p138 = scmp.ne.s32.totalorder %s133, %s135
    %p139 = scmp.eq.s32.totalorder %s15, 0
    %p140 = por %p138, %p139
    %p141 = scmp.ne.s32.totalorder %s133, %s135
    %p142 = scmp.eq.s32.totalorder %s20, 3
    %p143 = por %p141, %p142
    %p144 = scmp.ne.s32.totalorder %s135, %s136
    %p145 = scmp.eq.s32.totalorder %s20, 0
    %p146 = por %p144, %p145
    %p147 = scmp.ne.s32.totalorder %s135, %s136
    %p148 = scmp.eq.s32.totalorder %s21, 3
    %p149 = por %p147, %p148
    %p151 = scmp.ne.s32.totalorder %s136, %s150
    %p152 = scmp.eq.s32.totalorder %s21, 0
    %p153 = por %p151, %p152
    %s155 = sadd.s32 %s154, 1
    %p158 = scmp.eq.s32.totalorder %s15, 3
    %p159 = scmp.ne.s32.totalorder %s154, %s156
    %p160 = scmp.eq.s32.totalorder %s15, 0
    %p161 = por %p159, %p160
    %p162 = scmp.ne.s32.totalorder %s154, %s156
    %p163 = scmp.eq.s32.totalorder %s20, 3
    %p164 = por %p162, %p163
    %p165 = scmp.ne.s32.totalorder %s156, %s157
    %p166 = scmp.eq.s32.totalorder %s20, 0
    %p167 = por %p165, %p166
    %p168 = scmp.ne.s32.totalorder %s156, %s157
    %p169 = scmp.eq.s32.totalorder %s21, 3
    %p170 = por %p168, %p169
    %p172 = scmp.ne.s32.totalorder %s157, %s171
    %p173 = scmp.eq.s32.totalorder %s21, 0
    %p174 = por %p172, %p173
    %s176 = sadd.s32 %s175, 1
    %p179 = scmp.eq.s32.totalorder %s15, 3
    %p180 = scmp.ne.s32.totalorder %s175, %s177
    %p181 = scmp.eq.s32.totalorder %s15, 0
    %p182 = por %p180, %p181
    %p183 = scmp.ne.s32.totalorder %s175, %s177
    %p184 = scmp.eq.s32.totalorder %s20, 3
    %p185 = por %p183, %p184
    %p186 = scmp.ne.s32.totalorder %s177, %s178
    %p187 = scmp.eq.s32.totalorder %s20, 0
    %p188 = por %p186, %p187
    %p189 = scmp.ne.s32.totalorder %s177, %s178
    %p190 = scmp.eq.s32.totalorder %s21, 3
    %p191 = por %p189, %p190
    %p193 = scmp.ne.s32.totalorder %s178, %s192
    %p194 = scmp.eq.s32.totalorder %s21, 0
    %p195 = por %p193, %p194
    %s197 = sadd.s32 %s196, 1
    %p200 = scmp.eq.s32.totalorder %s15, 3
    %p201 = scmp.ne.s32.totalorder %s196, %s198
    %p202 = scmp.eq.s32.totalorder %s15, 0
    %p203 = por %p201, %p202
    %p204 = scmp.ne.s32.totalorder %s196, %s198
    %p205 = scmp.eq.s32.totalorder %s20, 3
    %p206 = por %p204, %p205
    %p207 = scmp.ne.s32.totalorder %s198, %s199
    %p208 = scmp.eq.s32.totalorder %s20, 0
    %p209 = por %p207, %p208
    %p210 = scmp.ne.s32.totalorder %s198, %s199
    %p211 = scmp.eq.s32.totalorder %s21, 3
    %p212 = por %p210, %p211
    %p214 = scmp.ne.s32.totalorder %s199, %s213
    %p215 = scmp.eq.s32.totalorder %s21, 0
    %p216 = por %p214, %p215
    %s217 = ssub.s32 %s15, %s22
    %p218 = scmp.eq.s32.totalorder %s217, 0
    %s220 = sadd.s32 %s219, 1
    %s221 = scalar_select %p218, %s219, %s220
    %p224 = pneg %p218
    %p225 = scmp.eq.s32.totalorder %s15, 3
    %p226 = por %p224, %p225
    %p227 = scmp.ne.s32.totalorder %s219, %s222
    %p228 = scmp.eq.s32.totalorder %s15, 0
    %p229 = por %p227, %p228
    %p230 = scmp.ne.s32.totalorder %s219, %s222
    %p231 = scmp.eq.s32.totalorder %s20, 3
    %p232 = por %p230, %p231
    %p233 = scmp.ne.s32.totalorder %s222, %s223
    %p234 = scmp.eq.s32.totalorder %s20, 0
    %p235 = por %p233, %p234
    %p236 = scmp.ne.s32.totalorder %s222, %s223
    %p237 = scmp.eq.s32.totalorder %s21, 3
    %p238 = por %p236, %p237
    %p240 = scmp.ne.s32.totalorder %s223, %s239
    %p241 = scmp.eq.s32.totalorder %s21, 0
    %p242 = por %p240, %p241
    %p243 = scmp.le.s32.totalorder 1, %s15
    %p244 = scmp.lt.s32.totalorder %s15, 5
    %p245 = pnand %p243, %p244
    %p246 = pneg %p245
    // Predicated region
    $region9: #{forward.1} parent=5 // pred_check
      _
    $region10: #{forward.1} parent=5 // pred_check_branch
      %248 = sbr.rel (%p245) target = $region12
    $region11: #{forward.1} parent=5 // pred_region
      %s249 = ssub.s32 %s15, 1
      // Predicated region
      $region13: #{forward.1} parent=11 // pred_check
        %p250 = pneg %p62
      $region14: #{forward.1} parent=11 // pred_check_branch
        %252 = sbr.rel (%p250) target = $region16
      $region15: #{forward.1} parent=11 // pred_region
        _
      $region16: #{forward.1} parent=11 // pred_fallthru
        _
      // Predicated region
      $region17: #{forward.1} parent=11 // pred_check
        %p253 = pneg %p83
      $region18: #{forward.1} parent=11 // pred_check_branch
        %255 = sbr.rel (%p253) target = $region20
      $region19: #{forward.1} parent=11 // pred_region
        _
      $region20: #{forward.1} parent=11 // pred_fallthru
        _
      // Predicated region
      $region21: #{forward.1} parent=11 // pred_check
        %p256 = pneg %p104
      $region22: #{forward.1} parent=11 // pred_check_branch
        %258 = sbr.rel (%p256) target = $region24
      $region23: #{forward.1} parent=11 // pred_region
        _
      $region24: #{forward.1} parent=11 // pred_fallthru
        _
      // Predicated region
      $region25: #{forward.1} parent=11 // pred_check
        %p259 = pneg %p125
      $region26: #{forward.1} parent=11 // pred_check_branch
        %261 = sbr.rel (%p259) target = $region28
      $region27: #{forward.1} parent=11 // pred_region
        _
      $region28: #{forward.1} parent=11 // pred_fallthru
        _
      // Predicated region
      $region29: #{forward.1} parent=11 // pred_check
        %p262 = pneg %p146
      $region30: #{forward.1} parent=11 // pred_check_branch
        %264 = sbr.rel (%p262) target = $region32
      $region31: #{forward.1} parent=11 // pred_region
        _
      $region32: #{forward.1} parent=11 // pred_fallthru
        _
      // Predicated region
      $region33: #{forward.1} parent=11 // pred_check
        %p265 = pneg %p167
      $region34: #{forward.1} parent=11 // pred_check_branch
        %267 = sbr.rel (%p265) target = $region36
      $region35: #{forward.1} parent=11 // pred_region
        _
      $region36: #{forward.1} parent=11 // pred_fallthru
        _
      // Predicated region
      $region37: #{forward.1} parent=11 // pred_check
        %p268 = pneg %p188
      $region38: #{forward.1} parent=11 // pred_check_branch
        %270 = sbr.rel (%p268) target = $region40
      $region39: #{forward.1} parent=11 // pred_region
        _
      $region40: #{forward.1} parent=11 // pred_fallthru
        _
      // Predicated region
      $region41: #{forward.1} parent=11 // pred_check
        %p271 = pneg %p209
      $region42: #{forward.1} parent=11 // pred_check_branch
        %273 = sbr.rel (%p271) target = $region44
      $region43: #{forward.1} parent=11 // pred_region
        _
      $region44: #{forward.1} parent=11 // pred_fallthru
        _
    $region12: #{forward.1} parent=5 // pred_fallthru
      _
    %p274 = scmp.lt.s32.totalorder %s15, 4
    // Predicated region
    $region45: #{forward.1} parent=5 // pred_check
      %p275 = pneg %p274
    $region46: #{forward.1} parent=5 // pred_check_branch
      %277 = sbr.rel (%p275) target = $region48
    $region47: #{forward.1} parent=5 // pred_region
      // Predicated region
      $region49: #{forward.1} parent=47 // pred_check
        %p278 = pneg %p35
      $region50: #{forward.1} parent=47 // pred_check_branch
        %280 = sbr.rel (%p278) target = $region52
      $region51: #{forward.1} parent=47 // pred_region
        %s281 = smul.u32 32, %s15
        %p282 = scmp.lt.s32.totalorder %s281, 127
        %s283 = scalar_select %p282, %s281, 127
        %s284 = smul.addr %s283, 8
        %s285 = scalar_lea.vmem %s0, %s284
        %s286 = smul.u32 32, %s15
      $region52: #{forward.1} parent=47 // pred_fallthru
        _
    $region48: #{forward.1} parent=5 // pred_fallthru
      _
    %p287 = scmp.le.s32.totalorder 1, %s15
    %p288 = scmp.lt.s32.totalorder %s15, 5
    %p289 = pnand %p287, %p288
    %p290 = pneg %p289
    // Predicated region
    $region53: #{forward.1} parent=5 // pred_check
      _
    $region54: #{forward.1} parent=5 // pred_check_branch
      %292 = sbr.rel (%p289) target = $region56
    $region55: #{forward.1} parent=5 // pred_region
      %s293 = ssub.s32 %s15, 1
      %s294 = smul.u32 32, %s20
      %p295 = scmp.lt.s32.totalorder %s294, 127
      %s296 = scalar_select %p295, %s294, 127
      %s297 = smul.addr %s296, 8
      %s298 = scalar_lea.vmem %s0, %s297
      %p299 = pneg %p41
      %p300 = pneg %p38
      %p301 = pneg %p62
      %p302 = pneg %p59
      %p303 = pneg %p83
      %p304 = pneg %p80
      %p305 = pneg %p104
      %p306 = pneg %p101
      %p307 = pneg %p125
      %p308 = pneg %p122
      %p309 = pneg %p146
      %p310 = pneg %p143
      %p311 = pneg %p167
      %p312 = pneg %p164
      %p313 = pneg %p188
      %p314 = pneg %p185
      %p315 = pneg %p209
      %p316 = pneg %p206
      %p317 = pneg %p235
      %p318 = pneg %p232
      %s319 = smul.u32 8, %s20
      %p320 = scmp.lt.s32.totalorder %s319, 31
      %s321 = scalar_select %p320, %s319, 31
      %s322 = smul.addr %s321, 8
      %s323 = scalar_lea.vmem %s9, %s322
      %s324 = smul.u32 32, %s20
      %p325 = scmp.lt.s32.totalorder %s324, 127
      %s326 = scalar_select %p325, %s324, 127
      %s327 = smul.addr %s326, 8
      %s328 = scalar_lea.vmem %s0, %s327
      %s329 = smul.u32 32, %s20
      %s330 = smul.u32 8, %s20
      %p331 = scmp.lt.s32.totalorder %s330, 31
      %s332 = scalar_select %p331, %s330, 31
      %s333 = smul.addr %s332, 8
      %s334 = scalar_lea.vmem %s9, %s333
      %s335 = smul.u32 8, %s20
      %v336 = vld [vmem:[%s328] sm:$0xff]
      %v337 = vld [vmem:[%s328 + $0x8] sm:$0xff]
      %v338 = vld [vmem:[%s328 + $0x10] sm:$0xff]
      %v339 = vld [vmem:[%s328 + $0x18] sm:$0xff]
      %v340 = vld [vmem:[%s328 + $0x20] sm:$0xff]
      %v341 = vld [vmem:[%s328 + $0x28] sm:$0xff]
      %v342 = vld [vmem:[%s328 + $0x30] sm:$0xff]
      %v343 = vld [vmem:[%s328 + $0x38] sm:$0xff]
      %v344 = vld [vmem:[%s328 + $0x40] sm:$0xff]
      %v345 = vld [vmem:[%s328 + $0x48] sm:$0xff]
      %v346 = vld [vmem:[%s328 + $0x50] sm:$0xff]
      %v347 = vld [vmem:[%s328 + $0x58] sm:$0xff]
      %v348 = vld [vmem:[%s328 + $0x60] sm:$0xff]
      %v349 = vld [vmem:[%s328 + $0x68] sm:$0xff]
      %v350 = vld [vmem:[%s328 + $0x70] sm:$0xff]
      %v351 = vld [vmem:[%s328 + $0x78] sm:$0xff]
      %v352 = vld [vmem:[%s328 + $0x80] sm:$0xff]
      %v353 = vld [vmem:[%s328 + $0x88] sm:$0xff]
      %v354 = vld [vmem:[%s328 + $0x90] sm:$0xff]
      %v355 = vld [vmem:[%s328 + $0x98] sm:$0xff]
      %v356 = vld [vmem:[%s328 + $0xa0] sm:$0xff]
      %v357 = vld [vmem:[%s328 + $0xa8] sm:$0xff]
      %v358 = vld [vmem:[%s328 + $0xb0] sm:$0xff]
      %v359 = vld [vmem:[%s328 + $0xb8] sm:$0xff]
      %v360 = vld [vmem:[%s328 + $0xc0] sm:$0xff]
      %v361 = vld [vmem:[%s328 + $0xc8] sm:$0xff]
      %v362 = vld [vmem:[%s328 + $0xd0] sm:$0xff]
      %v363 = vld [vmem:[%s328 + $0xd8] sm:$0xff]
      %v364 = vld [vmem:[%s328 + $0xe0] sm:$0xff]
      %v365 = vld [vmem:[%s328 + $0xe8] sm:$0xff]
      %v366 = vld [vmem:[%s328 + $0xf0] sm:$0xff]
      %v367 = vld [vmem:[%s328 + $0xf8] sm:$0xff]
      %v368 = vld [vmem:[%s1] sm:$0xff]
      %v369 = vld [vmem:[%s1 + $0x8] sm:$0xff]
      %v370 = vld [vmem:[%s1 + $0x10] sm:$0xff]
      %v371 = vld [vmem:[%s1 + $0x18] sm:$0xff]
      %v372 = vld [vmem:[%s1 + $0x20] sm:$0xff]
      %v373 = vld [vmem:[%s1 + $0x28] sm:$0xff]
      %v374 = vld [vmem:[%s1 + $0x30] sm:$0xff]
      %v375 = vld [vmem:[%s1 + $0x38] sm:$0xff]
      %v376 = vld [vmem:[%s1 + $0x40] sm:$0xff]
      %v377 = vld [vmem:[%s1 + $0x48] sm:$0xff]
      %v378 = vld [vmem:[%s1 + $0x50] sm:$0xff]
      %v379 = vld [vmem:[%s1 + $0x58] sm:$0xff]
      %v380 = vld [vmem:[%s1 + $0x60] sm:$0xff]
      %v381 = vld [vmem:[%s1 + $0x68] sm:$0xff]
      %v382 = vld [vmem:[%s1 + $0x70] sm:$0xff]
      %v383 = vld [vmem:[%s1 + $0x78] sm:$0xff]
      %v384 = vld [vmem:[%s2] sm:$0x1]
      %v386 = vlaneseq
      %v387 = vshrl.u32 %v386, 7
      %v388 = vsub.s32 0, %v387
      %v389 = vrot.slane %v384, %v388
      %391 = vmatprep.subr.mxu0 0.0
      %392 = vmatpush1.msra.mxu0 %v368
      %393 = vmatprep.subr.mxu0 0.0
      %394 = vmatpush1.msra.mxu0 %v369
      %395 = vmatprep.subr.mxu0 0.0
      %396 = vmatpush1.msra.mxu0 %v370
      %397 = vmatprep.subr.mxu0 0.0
      %398 = vmatpush1.msra.mxu0 %v371
      %399 = vmatprep.subr.mxu0 0.0
      %400 = vmatpush1.msra.mxu0 %v372
      %401 = vmatprep.subr.mxu0 0.0
      %402 = vmatpush1.msra.mxu0 %v373
      %403 = vmatprep.subr.mxu0 0.0
      %404 = vmatpush1.msra.mxu0 %v374
      %405 = vmatprep.subr.mxu0 0.0
      %406 = vmatpush1.msra.mxu0 %v375
      %407 = vmatprep.subr.mxu0 0.0
      %408 = vmatpush1.msra.mxu0 %v376
      %409 = vmatprep.subr.mxu0 0.0
      %410 = vmatpush1.msra.mxu0 %v377
      %411 = vmatprep.subr.mxu0 0.0
      %412 = vmatpush1.msra.mxu0 %v378
      %413 = vmatprep.subr.mxu0 0.0
      %414 = vmatpush1.msra.mxu0 %v379
      %415 = vmatprep.subr.mxu0 0.0
      %416 = vmatpush1.msra.mxu0 %v380
      %417 = vmatprep.subr.mxu0 0.0
      %418 = vmatpush1.msra.mxu0 %v381
      %419 = vmatprep.subr.mxu0 0.0
      %420 = vmatpush1.msra.mxu0 %v382
      %421 = vmatprep.subr.mxu0 0.0
      %422 = vmatpush1.msra.mxu0 %v383
      %423 = vmatprep.subr.mxu0 0.0
      %424 = vmatpush1.msra.mxu0 0.0
      %425 = vmatprep.subr.mxu0 0.0
      %426 = vmatpush1.msra.mxu0 0.0
      %427 = vmatprep.subr.mxu0 0.0
      %428 = vmatpush1.msra.mxu0 0.0
      %429 = vmatprep.subr.mxu0 0.0
      %430 = vmatpush1.msra.mxu0 0.0
      %431 = vmatprep.subr.mxu0 0.0
      %432 = vmatpush1.msra.mxu0 0.0
      %433 = vmatprep.subr.mxu0 0.0
      %434 = vmatpush1.msra.mxu0 0.0
      %435 = vmatprep.subr.mxu0 0.0
      %436 = vmatpush1.msra.mxu0 0.0
      %437 = vmatprep.subr.mxu0 0.0
      %438 = vmatpush1.msra.mxu0 0.0
      %439 = vmatprep.subr.mxu0 0.0
      %440 = vmatpush1.msra.mxu0 0.0
      %441 = vmatprep.subr.mxu0 0.0
      %442 = vmatpush1.msra.mxu0 0.0
      %443 = vmatprep.subr.mxu0 0.0
      %444 = vmatpush1.msra.mxu0 0.0
      %445 = vmatprep.subr.mxu0 0.0
      %446 = vmatpush1.msra.mxu0 0.0
      %447 = vmatprep.subr.mxu0 0.0
      %448 = vmatpush1.msra.mxu0 0.0
      %449 = vmatprep.subr.mxu0 0.0
      %450 = vmatpush1.msra.mxu0 0.0
      %451 = vmatprep.subr.mxu0 0.0
      %452 = vmatpush1.msra.mxu0 0.0
      %453 = vmatprep.subr.mxu0 0.0
      %454 = vmatpush1.msra.mxu0 0.0
      %455 = vmatprep.mubr.f32.mxu0 0.0
      %456 = vmatmul.mubr.f32.gmra.mrb[0].mxu0 %v336
      %v457 = vpop.f32.mrb[0].mxu0
      %v458 = vadd.f32 %v389, %v457
      %v459 = vpop.f32.mrb[0].mxu0
      %460 = vmatprep.mubr.f32.mxu0 0.0
      %461 = vmatmul.mubr.f32.gmra.mrb[0].mxu0 %v337
      %v462 = vpop.f32.mrb[0].mxu0
      %v463 = vadd.f32 %v389, %v462
      %v464 = vpop.f32.mrb[0].mxu0
      %465 = vmatprep.mubr.f32.mxu0 0.0
      %466 = vmatmul.mubr.f32.gmra.mrb[0].mxu0 %v338
      %v467 = vpop.f32.mrb[0].mxu0
      %v468 = vadd.f32 %v389, %v467
      %v469 = vpop.f32.mrb[0].mxu0
      %470 = vmatprep.mubr.f32.mxu0 0.0
      %471 = vmatmul.mubr.f32.gmra.mrb[0].mxu0 %v339
      %v472 = vpop.f32.mrb[0].mxu0
      %v473 = vadd.f32 %v389, %v472
      %v474 = vpop.f32.mrb[0].mxu0
      %475 = vmatprep.mubr.f32.mxu0 0.0
      %476 = vmatmul.mubr.f32.gmra.mrb[0].mxu0 %v340
      %v477 = vpop.f32.mrb[0].mxu0
      %v478 = vadd.f32 %v389, %v477
      %v479 = vpop.f32.mrb[0].mxu0
      %480 = vmatprep.mubr.f32.mxu0 0.0
      %481 = vmatmul.mubr.f32.gmra.mrb[0].mxu0 %v341
      %v482 = vpop.f32.mrb[0].mxu0
      %v483 = vadd.f32 %v389, %v482
      %v484 = vpop.f32.mrb[0].mxu0
      %485 = vmatprep.mubr.f32.mxu0 0.0
      %486 = vmatmul.mubr.f32.gmra.mrb[0].mxu0 %v342
      %v487 = vpop.f32.mrb[0].mxu0
      %v488 = vadd.f32 %v389, %v487
      %v489 = vpop.f32.mrb[0].mxu0
      %490 = vmatprep.mubr.f32.mxu0 0.0
      %491 = vmatmul.mubr.f32.gmra.mrb[0].mxu0 %v343
      %v492 = vpop.f32.mrb[0].mxu0
      %v493 = vadd.f32 %v389, %v492
      %v494 = vpop.f32.mrb[0].mxu0
      %495 = vmatprep.mubr.f32.mxu0 0.0
      %496 = vmatmul.mubr.f32.gmra.mrb[0].mxu0 %v344
      %v497 = vpop.f32.mrb[0].mxu0
      %v498 = vadd.f32 %v389, %v497
      %v499 = vpop.f32.mrb[0].mxu0
      %500 = vmatprep.mubr.f32.mxu0 0.0
      %501 = vmatmul.mubr.f32.gmra.mrb[0].mxu0 %v345
      %v502 = vpop.f32.mrb[0].mxu0
      %v503 = vadd.f32 %v389, %v502
      %v504 = vpop.f32.mrb[0].mxu0
      %505 = vmatprep.mubr.f32.mxu0 0.0
      %506 = vmatmul.mubr.f32.gmra.mrb[0].mxu0 %v346
      %v507 = vpop.f32.mrb[0].mxu0
      %v508 = vadd.f32 %v389, %v507
      %v509 = vpop.f32.mrb[0].mxu0
      %510 = vmatprep.mubr.f32.mxu0 0.0
      %511 = vmatmul.mubr.f32.gmra.mrb[0].mxu0 %v347
      %v512 = vpop.f32.mrb[0].mxu0
      %v513 = vadd.f32 %v389, %v512
      %v514 = vpop.f32.mrb[0].mxu0
      %515 = vmatprep.mubr.f32.mxu0 0.0
      %516 = vmatmul.mubr.f32.gmra.mrb[0].mxu0 %v348
      %v517 = vpop.f32.mrb[0].mxu0
      %v518 = vadd.f32 %v389, %v517
      %v519 = vpop.f32.mrb[0].mxu0
      %520 = vmatprep.mubr.f32.mxu0 0.0
      %521 = vmatmul.mubr.f32.gmra.mrb[0].mxu0 %v349
      %v522 = vpop.f32.mrb[0].mxu0
      %v523 = vadd.f32 %v389, %v522
      %v524 = vpop.f32.mrb[0].mxu0
      %525 = vmatprep.mubr.f32.mxu0 0.0
      %526 = vmatmul.mubr.f32.gmra.mrb[0].mxu0 %v350
      %v527 = vpop.f32.mrb[0].mxu0
      %v528 = vadd.f32 %v389, %v527
      %v529 = vpop.f32.mrb[0].mxu0
      %530 = vmatprep.mubr.f32.mxu0 0.0
      %531 = vmatmul.mubr.f32.gmra.mrb[0].mxu0 %v351
      %v532 = vpop.f32.mrb[0].mxu0
      %v533 = vadd.f32 %v389, %v532
      %v534 = vpop.f32.mrb[0].mxu0
      %535 = vmatprep.mubr.f32.mxu0 0.0
      %536 = vmatmul.mubr.f32.gmra.mrb[0].mxu0 %v352
      %v537 = vpop.f32.mrb[0].mxu0
      %v538 = vadd.f32 %v389, %v537
      %v539 = vpop.f32.mrb[0].mxu0
      %540 = vmatprep.mubr.f32.mxu0 0.0
      %541 = vmatmul.mubr.f32.gmra.mrb[0].mxu0 %v353
      %v542 = vpop.f32.mrb[0].mxu0
      %v543 = vadd.f32 %v389, %v542
      %v544 = vpop.f32.mrb[0].mxu0
      %545 = vmatprep.mubr.f32.mxu0 0.0
      %546 = vmatmul.mubr.f32.gmra.mrb[0].mxu0 %v354
      %v547 = vpop.f32.mrb[0].mxu0
      %v548 = vadd.f32 %v389, %v547
      %v549 = vpop.f32.mrb[0].mxu0
      %550 = vmatprep.mubr.f32.mxu0 0.0
      %551 = vmatmul.mubr.f32.gmra.mrb[0].mxu0 %v355
      %v552 = vpop.f32.mrb[0].mxu0
      %v553 = vadd.f32 %v389, %v552
      %v554 = vpop.f32.mrb[0].mxu0
      %555 = vmatprep.mubr.f32.mxu0 0.0
      %556 = vmatmul.mubr.f32.gmra.mrb[0].mxu0 %v356
      %v557 = vpop.f32.mrb[0].mxu0
      %v558 = vadd.f32 %v389, %v557
      %v559 = vpop.f32.mrb[0].mxu0
      %560 = vmatprep.mubr.f32.mxu0 0.0
      %561 = vmatmul.mubr.f32.gmra.mrb[0].mxu0 %v357
      %v562 = vpop.f32.mrb[0].mxu0
      %v563 = vadd.f32 %v389, %v562
      %v564 = vpop.f32.mrb[0].mxu0
      %565 = vmatprep.mubr.f32.mxu0 0.0
      %566 = vmatmul.mubr.f32.gmra.mrb[0].mxu0 %v358
      %v567 = vpop.f32.mrb[0].mxu0
      %v568 = vadd.f32 %v389, %v567
      %v569 = vpop.f32.mrb[0].mxu0
      %570 = vmatprep.mubr.f32.mxu0 0.0
      %571 = vmatmul.mubr.f32.gmra.mrb[0].mxu0 %v359
      %v572 = vpop.f32.mrb[0].mxu0
      %v573 = vadd.f32 %v389, %v572
      %v574 = vpop.f32.mrb[0].mxu0
      %575 = vmatprep.mubr.f32.mxu0 0.0
      %576 = vmatmul.mubr.f32.gmra.mrb[0].mxu0 %v360
      %v577 = vpop.f32.mrb[0].mxu0
      %v578 = vadd.f32 %v389, %v577
      %v579 = vpop.f32.mrb[0].mxu0
      %580 = vmatprep.mubr.f32.mxu0 0.0
      %581 = vmatmul.mubr.f32.gmra.mrb[0].mxu0 %v361
      %v582 = vpop.f32.mrb[0].mxu0
      %v583 = vadd.f32 %v389, %v582
      %v584 = vpop.f32.mrb[0].mxu0
      %585 = vmatprep.mubr.f32.mxu0 0.0
      %586 = vmatmul.mubr.f32.gmra.mrb[0].mxu0 %v362
      %v587 = vpop.f32.mrb[0].mxu0
      %v588 = vadd.f32 %v389, %v587
      %v589 = vpop.f32.mrb[0].mxu0
      %590 = vmatprep.mubr.f32.mxu0 0.0
      %591 = vmatmul.mubr.f32.gmra.mrb[0].mxu0 %v363
      %v592 = vpop.f32.mrb[0].mxu0
      %v593 = vadd.f32 %v389, %v592
      %v594 = vpop.f32.mrb[0].mxu0
      %595 = vmatprep.mubr.f32.mxu0 0.0
      %596 = vmatmul.mubr.f32.gmra.mrb[0].mxu0 %v364
      %v597 = vpop.f32.mrb[0].mxu0
      %v598 = vadd.f32 %v389, %v597
      %v599 = vpop.f32.mrb[0].mxu0
      %600 = vmatprep.mubr.f32.mxu0 0.0
      %601 = vmatmul.mubr.f32.gmra.mrb[0].mxu0 %v365
      %v602 = vpop.f32.mrb[0].mxu0
      %v603 = vadd.f32 %v389, %v602
      %v604 = vpop.f32.mrb[0].mxu0
      %605 = vmatprep.mubr.f32.mxu0 0.0
      %606 = vmatmul.mubr.f32.gmra.mrb[0].mxu0 %v366
      %v607 = vpop.f32.mrb[0].mxu0
      %v608 = vadd.f32 %v389, %v607
      %v609 = vpop.f32.mrb[0].mxu0
      %610 = vmatprep.mubr.f32.mxu0 0.0
      %611 = vmatmul.mubr.f32.gmra.mrb[0].mxu0 %v367
      %v612 = vpop.f32.mrb[0].mxu0
      %v613 = vadd.f32 %v389, %v612
      %v614 = vpop.f32.mrb[0].mxu0
      %615 = vdwg.mxu0
      %vm616 = vcmp.ge.f32.partialorder %v458, 0.0
      %vm617 = vcmp.ge.f32.partialorder %v463, 0.0
      %vm618 = vcmp.ge.f32.partialorder %v468, 0.0
      %vm619 = vcmp.ge.f32.partialorder %v473, 0.0
      %vm620 = vcmp.ge.f32.partialorder %v478, 0.0
      %vm621 = vcmp.ge.f32.partialorder %v483, 0.0
      %vm622 = vcmp.ge.f32.partialorder %v488, 0.0
      %vm623 = vcmp.ge.f32.partialorder %v493, 0.0
      %vm624 = vcmp.ge.f32.partialorder %v498, 0.0
      %vm625 = vcmp.ge.f32.partialorder %v503, 0.0
      %vm626 = vcmp.ge.f32.partialorder %v508, 0.0
      %vm627 = vcmp.ge.f32.partialorder %v513, 0.0
      %vm628 = vcmp.ge.f32.partialorder %v518, 0.0
      %vm629 = vcmp.ge.f32.partialorder %v523, 0.0
      %vm630 = vcmp.ge.f32.partialorder %v528, 0.0
      %vm631 = vcmp.ge.f32.partialorder %v533, 0.0
      %vm632 = vcmp.ge.f32.partialorder %v538, 0.0
      %vm633 = vcmp.ge.f32.partialorder %v543, 0.0
      %vm634 = vcmp.ge.f32.partialorder %v548, 0.0
      %vm635 = vcmp.ge.f32.partialorder %v553, 0.0
      %vm636 = vcmp.ge.f32.partialorder %v558, 0.0
      %vm637 = vcmp.ge.f32.partialorder %v563, 0.0
      %vm638 = vcmp.ge.f32.partialorder %v568, 0.0
      %vm639 = vcmp.ge.f32.partialorder %v573, 0.0
      %vm640 = vcmp.ge.f32.partialorder %v578, 0.0
      %vm641 = vcmp.ge.f32.partialorder %v583, 0.0
      %vm642 = vcmp.ge.f32.partialorder %v588, 0.0
      %vm643 = vcmp.ge.f32.partialorder %v593, 0.0
      %vm644 = vcmp.ge.f32.partialorder %v598, 0.0
      %vm645 = vcmp.ge.f32.partialorder %v603, 0.0
      %vm646 = vcmp.ge.f32.partialorder %v608, 0.0
      %vm647 = vcmp.ge.f32.partialorder %v613, 0.0
      %v648 = vmul.f32 %v458, 0.01
      %v649 = vmul.f32 %v463, 0.01
      %v650 = vmul.f32 %v468, 0.01
      %v651 = vmul.f32 %v473, 0.01
      %v652 = vmul.f32 %v478, 0.01
      %v653 = vmul.f32 %v483, 0.01
      %v654 = vmul.f32 %v488, 0.01
      %v655 = vmul.f32 %v493, 0.01
      %v656 = vmul.f32 %v498, 0.01
      %v657 = vmul.f32 %v503, 0.01
      %v658 = vmul.f32 %v508, 0.01
      %v659 = vmul.f32 %v513, 0.01
      %v660 = vmul.f32 %v518, 0.01
      %v661 = vmul.f32 %v523, 0.01
      %v662 = vmul.f32 %v528, 0.01
      %v663 = vmul.f32 %v533, 0.01
      %v664 = vmul.f32 %v538, 0.01
      %v665 = vmul.f32 %v543, 0.01
      %v666 = vmul.f32 %v548, 0.01
      %v667 = vmul.f32 %v553, 0.01
      %v668 = vmul.f32 %v558, 0.01
      %v669 = vmul.f32 %v563, 0.01
      %v670 = vmul.f32 %v568, 0.01
      %v671 = vmul.f32 %v573, 0.01
      %v672 = vmul.f32 %v578, 0.01
      %v673 = vmul.f32 %v583, 0.01
      %v674 = vmul.f32 %v588, 0.01
      %v675 = vmul.f32 %v593, 0.01
      %v676 = vmul.f32 %v598, 0.01
      %v677 = vmul.f32 %v603, 0.01
      %v678 = vmul.f32 %v608, 0.01
      %v679 = vmul.f32 %v613, 0.01
      %v680 = vsel %vm616, %v458, %v648
      %v681 = vsel %vm617, %v463, %v649
      %v682 = vsel %vm618, %v468, %v650
      %v683 = vsel %vm619, %v473, %v651
      %v684 = vsel %vm620, %v478, %v652
      %v685 = vsel %vm621, %v483, %v653
      %v686 = vsel %vm622, %v488, %v654
      %v687 = vsel %vm623, %v493, %v655
      %v688 = vsel %vm624, %v498, %v656
      %v689 = vsel %vm625, %v503, %v657
      %v690 = vsel %vm626, %v508, %v658
      %v691 = vsel %vm627, %v513, %v659
      %v692 = vsel %vm628, %v518, %v660
      %v693 = vsel %vm629, %v523, %v661
      %v694 = vsel %vm630, %v528, %v662
      %v695 = vsel %vm631, %v533, %v663
      %v696 = vsel %vm632, %v538, %v664
      %v697 = vsel %vm633, %v543, %v665
      %v698 = vsel %vm634, %v548, %v666
      %v699 = vsel %vm635, %v553, %v667
      %v700 = vsel %vm636, %v558, %v668
      %v701 = vsel %vm637, %v563, %v669
      %v702 = vsel %vm638, %v568, %v670
      %v703 = vsel %vm639, %v573, %v671
      %v704 = vsel %vm640, %v578, %v672
      %v705 = vsel %vm641, %v583, %v673
      %v706 = vsel %vm642, %v588, %v674
      %v707 = vsel %vm643, %v593, %v675
      %v708 = vsel %vm644, %v598, %v676
      %v709 = vsel %vm645, %v603, %v677
      %v710 = vsel %vm646, %v608, %v678
      %v711 = vsel %vm647, %v613, %v679
      %v712 = vld [vmem:[%s3] sm:$0xff]
      %v713 = vld [vmem:[%s3 + $0x8] sm:$0xff]
      %v714 = vld [vmem:[%s3 + $0x10] sm:$0xff]
      %v715 = vld [vmem:[%s3 + $0x18] sm:$0xff]
      %v716 = vld [vmem:[%s3 + $0x20] sm:$0xff]
      %v717 = vld [vmem:[%s3 + $0x28] sm:$0xff]
      %v718 = vld [vmem:[%s3 + $0x30] sm:$0xff]
      %v719 = vld [vmem:[%s3 + $0x38] sm:$0xff]
      %v720 = vld [vmem:[%s3 + $0x40] sm:$0xff]
      %v721 = vld [vmem:[%s3 + $0x48] sm:$0xff]
      %v722 = vld [vmem:[%s3 + $0x50] sm:$0xff]
      %v723 = vld [vmem:[%s3 + $0x58] sm:$0xff]
      %v724 = vld [vmem:[%s3 + $0x60] sm:$0xff]
      %v725 = vld [vmem:[%s3 + $0x68] sm:$0xff]
      %v726 = vld [vmem:[%s3 + $0x70] sm:$0xff]
      %v727 = vld [vmem:[%s3 + $0x78] sm:$0xff]
      %728 = vmatprep.subr.mxu0 0.0
      %729 = vmatpush1.msra.mxu0 %v680
      %730 = vmatprep.subr.mxu0 0.0
      %731 = vmatpush1.msra.mxu0 %v681
      %732 = vmatprep.subr.mxu0 0.0
      %733 = vmatpush1.msra.mxu0 %v682
      %734 = vmatprep.subr.mxu0 0.0
      %735 = vmatpush1.msra.mxu0 %v683
      %736 = vmatprep.subr.mxu0 0.0
      %737 = vmatpush1.msra.mxu0 %v684
      %738 = vmatprep.subr.mxu0 0.0
      %739 = vmatpush1.msra.mxu0 %v685
      %740 = vmatprep.subr.mxu0 0.0
      %741 = vmatpush1.msra.mxu0 %v686
      %742 = vmatprep.subr.mxu0 0.0
      %743 = vmatpush1.msra.mxu0 %v687
      %744 = vmatprep.subr.mxu0 0.0
      %745 = vmatpush1.msra.mxu0 %v688
      %746 = vmatprep.subr.mxu0 0.0
      %747 = vmatpush1.msra.mxu0 %v689
      %748 = vmatprep.subr.mxu0 0.0
      %749 = vmatpush1.msra.mxu0 %v690
      %750 = vmatprep.subr.mxu0 0.0
      %751 = vmatpush1.msra.mxu0 %v691
      %752 = vmatprep.subr.mxu0 0.0
      %753 = vmatpush1.msra.mxu0 %v692
      %754 = vmatprep.subr.mxu0 0.0
      %755 = vmatpush1.msra.mxu0 %v693
      %756 = vmatprep.subr.mxu0 0.0
      %757 = vmatpush1.msra.mxu0 %v694
      %758 = vmatprep.subr.mxu0 0.0
      %759 = vmatpush1.msra.mxu0 %v695
      %760 = vmatprep.subr.mxu0 0.0
      %761 = vmatpush1.msra.mxu0 %v696
      %762 = vmatprep.subr.mxu0 0.0
      %763 = vmatpush1.msra.mxu0 %v697
      %764 = vmatprep.subr.mxu0 0.0
      %765 = vmatpush1.msra.mxu0 %v698
      %766 = vmatprep.subr.mxu0 0.0
      %767 = vmatpush1.msra.mxu0 %v699
      %768 = vmatprep.subr.mxu0 0.0
      %769 = vmatpush1.msra.mxu0 %v700
      %770 = vmatprep.subr.mxu0 0.0
      %771 = vmatpush1.msra.mxu0 %v701
      %772 = vmatprep.subr.mxu0 0.0
      %773 = vmatpush1.msra.mxu0 %v702
      %774 = vmatprep.subr.mxu0 0.0
      %775 = vmatpush1.msra.mxu0 %v703
      %776 = vmatprep.subr.mxu0 0.0
      %777 = vmatpush1.msra.mxu0 %v704
      %778 = vmatprep.subr.mxu0 0.0
      %779 = vmatpush1.msra.mxu0 %v705
      %780 = vmatprep.subr.mxu0 0.0
      %781 = vmatpush1.msra.mxu0 %v706
      %782 = vmatprep.subr.mxu0 0.0
      %783 = vmatpush1.msra.mxu0 %v707
      %784 = vmatprep.subr.mxu0 0.0
      %785 = vmatpush1.msra.mxu0 %v708
      %786 = vmatprep.subr.mxu0 0.0
      %787 = vmatpush1.msra.mxu0 %v709
      %788 = vmatprep.subr.mxu0 0.0
      %789 = vmatpush1.msra.mxu0 %v710
      %790 = vmatprep.subr.mxu0 0.0
      %791 = vmatpush1.msra.mxu0 %v711
      %792 = vmatprep.mubr.f32.mxu0 %v713
      %793 = vmatmul.mubr.f32.gmra.mrb[0].mxu0 %v712
      %v794 = vpop.f32.mrb[0].mxu0
      %v795 = vadd.f32 0.0, %v794
      %v796 = vpop.f32.mrb[0].mxu0
      %797 = vmatprep.mubr.f32.mxu0 %v715
      %798 = vmatmul.mubr.f32.gmra.mrb[0].mxu0 %v714
      %v799 = vpop.f32.mrb[0].mxu0
      %v800 = vadd.f32 0.0, %v799
      %v801 = vpop.f32.mrb[0].mxu0
      %802 = vmatprep.mubr.f32.mxu0 %v717
      %803 = vmatmul.mubr.f32.gmra.mrb[0].mxu0 %v716
      %v804 = vpop.f32.mrb[0].mxu0
      %v805 = vadd.f32 0.0, %v804
      %v806 = vpop.f32.mrb[0].mxu0
      %807 = vmatprep.mubr.f32.mxu0 %v719
      %808 = vmatmul.mubr.f32.gmra.mrb[0].mxu0 %v718
      %v809 = vpop.f32.mrb[0].mxu0
      %v810 = vadd.f32 0.0, %v809
      %v811 = vpop.f32.mrb[0].mxu0
      %812 = vmatprep.mubr.f32.mxu0 %v721
      %813 = vmatmul.mubr.f32.gmra.mrb[0].mxu0 %v720
      %v814 = vpop.f32.mrb[0].mxu0
      %v815 = vadd.f32 0.0, %v814
      %v816 = vpop.f32.mrb[0].mxu0
      %817 = vmatprep.mubr.f32.mxu0 %v723
      %818 = vmatmul.mubr.f32.gmra.mrb[0].mxu0 %v722
      %v819 = vpop.f32.mrb[0].mxu0
      %v820 = vadd.f32 0.0, %v819
      %v821 = vpop.f32.mrb[0].mxu0
      %822 = vmatprep.mubr.f32.mxu0 %v725
      %823 = vmatmul.mubr.f32.gmra.mrb[0].mxu0 %v724
      %v824 = vpop.f32.mrb[0].mxu0
      %v825 = vadd.f32 0.0, %v824
      %v826 = vpop.f32.mrb[0].mxu0
      %827 = vmatprep.mubr.f32.mxu0 %v727
      %828 = vmatmul.mubr.f32.gmra.mrb[0].mxu0 %v726
      %v829 = vpop.f32.mrb[0].mxu0
      %v830 = vadd.f32 0.0, %v829
      %v831 = vpop.f32.mrb[0].mxu0
      %832 = vdwg.mxu0
      %s833 = scalar_lea.vmem %s3, 128
      %v834 = vld [vmem:[%s833] sm:$0xff]
      %v835 = vld [vmem:[%s833 + $0x8] sm:$0xff]
      %v836 = vld [vmem:[%s833 + $0x10] sm:$0xff]
      %v837 = vld [vmem:[%s833 + $0x18] sm:$0xff]
      %v838 = vld [vmem:[%s833 + $0x20] sm:$0xff]
      %v839 = vld [vmem:[%s833 + $0x28] sm:$0xff]
      %v840 = vld [vmem:[%s833 + $0x30] sm:$0xff]
      %v841 = vld [vmem:[%s833 + $0x38] sm:$0xff]
      %v842 = vld [vmem:[%s833 + $0x40] sm:$0xff]
      %v843 = vld [vmem:[%s833 + $0x48] sm:$0xff]
      %v844 = vld [vmem:[%s833 + $0x50] sm:$0xff]
      %v845 = vld [vmem:[%s833 + $0x58] sm:$0xff]
      %v846 = vld [vmem:[%s833 + $0x60] sm:$0xff]
      %v847 = vld [vmem:[%s833 + $0x68] sm:$0xff]
      %v848 = vld [vmem:[%s833 + $0x70] sm:$0xff]
      %v849 = vld [vmem:[%s833 + $0x78] sm:$0xff]
      %850 = vmatprep.subr.mxu0 0.0
      %851 = vmatpush1.msra.mxu0 %v680
      %852 = vmatprep.subr.mxu0 0.0
      %853 = vmatpush1.msra.mxu0 %v681
      %854 = vmatprep.subr.mxu0 0.0
      %855 = vmatpush1.msra.mxu0 %v682
      %856 = vmatprep.subr.mxu0 0.0
      %857 = vmatpush1.msra.mxu0 %v683
      %858 = vmatprep.subr.mxu0 0.0
      %859 = vmatpush1.msra.mxu0 %v684
      %860 = vmatprep.subr.mxu0 0.0
      %861 = vmatpush1.msra.mxu0 %v685
      %862 = vmatprep.subr.mxu0 0.0
      %863 = vmatpush1.msra.mxu0 %v686
      %864 = vmatprep.subr.mxu0 0.0
      %865 = vmatpush1.msra.mxu0 %v687
      %866 = vmatprep.subr.mxu0 0.0
      %867 = vmatpush1.msra.mxu0 %v688
      %868 = vmatprep.subr.mxu0 0.0
      %869 = vmatpush1.msra.mxu0 %v689
      %870 = vmatprep.subr.mxu0 0.0
      %871 = vmatpush1.msra.mxu0 %v690
      %872 = vmatprep.subr.mxu0 0.0
      %873 = vmatpush1.msra.mxu0 %v691
      %874 = vmatprep.subr.mxu0 0.0
      %875 = vmatpush1.msra.mxu0 %v692
      %876 = vmatprep.subr.mxu0 0.0
      %877 = vmatpush1.msra.mxu0 %v693
      %878 = vmatprep.subr.mxu0 0.0
      %879 = vmatpush1.msra.mxu0 %v694
      %880 = vmatprep.subr.mxu0 0.0
      %881 = vmatpush1.msra.mxu0 %v695
      %882 = vmatprep.subr.mxu0 0.0
      %883 = vmatpush1.msra.mxu0 %v696
      %884 = vmatprep.subr.mxu0 0.0
      %885 = vmatpush1.msra.mxu0 %v697
      %886 = vmatprep.subr.mxu0 0.0
      %887 = vmatpush1.msra.mxu0 %v698
      %888 = vmatprep.subr.mxu0 0.0
      %889 = vmatpush1.msra.mxu0 %v699
      %890 = vmatprep.subr.mxu0 0.0
      %891 = vmatpush1.msra.mxu0 %v700
      %892 = vmatprep.subr.mxu0 0.0
      %893 = vmatpush1.msra.mxu0 %v701
      %894 = vmatprep.subr.mxu0 0.0
      %895 = vmatpush1.msra.mxu0 %v702
      %896 = vmatprep.subr.mxu0 0.0
      %897 = vmatpush1.msra.mxu0 %v703
      %898 = vmatprep.subr.mxu0 0.0
      %899 = vmatpush1.msra.mxu0 %v704
      %900 = vmatprep.subr.mxu0 0.0
      %901 = vmatpush1.msra.mxu0 %v705
      %902 = vmatprep.subr.mxu0 0.0
      %903 = vmatpush1.msra.mxu0 %v706
      %904 = vmatprep.subr.mxu0 0.0
      %905 = vmatpush1.msra.mxu0 %v707
      %906 = vmatprep.subr.mxu0 0.0
      %907 = vmatpush1.msra.mxu0 %v708
      %908 = vmatprep.subr.mxu0 0.0
      %909 = vmatpush1.msra.mxu0 %v709
      %910 = vmatprep.subr.mxu0 0.0
      %911 = vmatpush1.msra.mxu0 %v710
      %912 = vmatprep.subr.mxu0 0.0
      %913 = vmatpush1.msra.mxu0 %v711
      %914 = vmatprep.mubr.f32.mxu0 %v835
      %915 = vmatmul.mubr.f32.gmra.mrb[0].mxu0 %v834
      %v916 = vpop.f32.mrb[0].mxu0
      %v917 = vadd.f32 0.0, %v916
      %v918 = vpop.f32.mrb[0].mxu0
      %919 = vmatprep.mubr.f32.mxu0 %v837
      %920 = vmatmul.mubr.f32.gmra.mrb[0].mxu0 %v836
      %v921 = vpop.f32.mrb[0].mxu0
      %v922 = vadd.f32 0.0, %v921
      %v923 = vpop.f32.mrb[0].mxu0
      %924 = vmatprep.mubr.f32.mxu0 %v839
      %925 = vmatmul.mubr.f32.gmra.mrb[0].mxu0 %v838
      %v926 = vpop.f32.mrb[0].mxu0
      %v927 = vadd.f32 0.0, %v926
      %v928 = vpop.f32.mrb[0].mxu0
      %929 = vmatprep.mubr.f32.mxu0 %v841
      %930 = vmatmul.mubr.f32.gmra.mrb[0].mxu0 %v840
      %v931 = vpop.f32.mrb[0].mxu0
      %v932 = vadd.f32 0.0, %v931
      %v933 = vpop.f32.mrb[0].mxu0
      %934 = vmatprep.mubr.f32.mxu0 %v843
      %935 = vmatmul.mubr.f32.gmra.mrb[0].mxu0 %v842
      %v936 = vpop.f32.mrb[0].mxu0
      %v937 = vadd.f32 0.0, %v936
      %v938 = vpop.f32.mrb[0].mxu0
      %939 = vmatprep.mubr.f32.mxu0 %v845
      %940 = vmatmul.mubr.f32.gmra.mrb[0].mxu0 %v844
      %v941 = vpop.f32.mrb[0].mxu0
      %v942 = vadd.f32 0.0, %v941
      %v943 = vpop.f32.mrb[0].mxu0
      %944 = vmatprep.mubr.f32.mxu0 %v847
      %945 = vmatmul.mubr.f32.gmra.mrb[0].mxu0 %v846
      %v946 = vpop.f32.mrb[0].mxu0
      %v947 = vadd.f32 0.0, %v946
      %v948 = vpop.f32.mrb[0].mxu0
      %949 = vmatprep.mubr.f32.mxu0 %v849
      %950 = vmatmul.mubr.f32.gmra.mrb[0].mxu0 %v848
      %v951 = vpop.f32.mrb[0].mxu0
      %v952 = vadd.f32 0.0, %v951
      %v953 = vpop.f32.mrb[0].mxu0
      %954 = vdwg.mxu0
      %s955 = scalar_lea.vmem %s3, 256
      %v956 = vld [vmem:[%s955] sm:$0xff]
      %v957 = vld [vmem:[%s955 + $0x8] sm:$0xff]
      %v958 = vld [vmem:[%s955 + $0x10] sm:$0xff]
      %v959 = vld [vmem:[%s955 + $0x18] sm:$0xff]
      %v960 = vld [vmem:[%s955 + $0x20] sm:$0xff]
      %v961 = vld [vmem:[%s955 + $0x28] sm:$0xff]
      %v962 = vld [vmem:[%s955 + $0x30] sm:$0xff]
      %v963 = vld [vmem:[%s955 + $0x38] sm:$0xff]
      %v964 = vld [vmem:[%s955 + $0x40] sm:$0xff]
      %v965 = vld [vmem:[%s955 + $0x48] sm:$0xff]
      %v966 = vld [vmem:[%s955 + $0x50] sm:$0xff]
      %v967 = vld [vmem:[%s955 + $0x58] sm:$0xff]
      %v968 = vld [vmem:[%s955 + $0x60] sm:$0xff]
      %v969 = vld [vmem:[%s955 + $0x68] sm:$0xff]
      %v970 = vld [vmem:[%s955 + $0x70] sm:$0xff]
      %v971 = vld [vmem:[%s955 + $0x78] sm:$0xff]
      %972 = vmatprep.subr.mxu0 0.0
      %973 = vmatpush1.msra.mxu0 %v680
      %974 = vmatprep.subr.mxu0 0.0
      %975 = vmatpush1.msra.mxu0 %v681
      %976 = vmatprep.subr.mxu0 0.0
      %977 = vmatpush1.msra.mxu0 %v682
      %978 = vmatprep.subr.mxu0 0.0
      %979 = vmatpush1.msra.mxu0 %v683
      %980 = vmatprep.subr.mxu0 0.0
      %981 = vmatpush1.msra.mxu0 %v684
      %982 = vmatprep.subr.mxu0 0.0
      %983 = vmatpush1.msra.mxu0 %v685
      %984 = vmatprep.subr.mxu0 0.0
      %985 = vmatpush1.msra.mxu0 %v686
      %986 = vmatprep.subr.mxu0 0.0
      %987 = vmatpush1.msra.mxu0 %v687
      %988 = vmatprep.subr.mxu0 0.0
      %989 = vmatpush1.msra.mxu0 %v688
      %990 = vmatprep.subr.mxu0 0.0
      %991 = vmatpush1.msra.mxu0 %v689
      %992 = vmatprep.subr.mxu0 0.0
      %993 = vmatpush1.msra.mxu0 %v690
      %994 = vmatprep.subr.mxu0 0.0
      %995 = vmatpush1.msra.mxu0 %v691
      %996 = vmatprep.subr.mxu0 0.0
      %997 = vmatpush1.msra.mxu0 %v692
      %998 = vmatprep.subr.mxu0 0.0
      %999 = vmatpush1.msra.mxu0 %v693
      %1000 = vmatprep.subr.mxu0 0.0
      %1001 = vmatpush1.msra.mxu0 %v694
      %1002 = vmatprep.subr.mxu0 0.0
      %1003 = vmatpush1.msra.mxu0 %v695
      %1004 = vmatprep.subr.mxu0 0.0
      %1005 = vmatpush1.msra.mxu0 %v696
      %1006 = vmatprep.subr.mxu0 0.0
      %1007 = vmatpush1.msra.mxu0 %v697
      %1008 = vmatprep.subr.mxu0 0.0
      %1009 = vmatpush1.msra.mxu0 %v698
      %1010 = vmatprep.subr.mxu0 0.0
      %1011 = vmatpush1.msra.mxu0 %v699
      %1012 = vmatprep.subr.mxu0 0.0
      %1013 = vmatpush1.msra.mxu0 %v700
      %1014 = vmatprep.subr.mxu0 0.0
      %1015 = vmatpush1.msra.mxu0 %v701
      %1016 = vmatprep.subr.mxu0 0.0
      %1017 = vmatpush1.msra.mxu0 %v702
      %1018 = vmatprep.subr.mxu0 0.0
      %1019 = vmatpush1.msra.mxu0 %v703
      %1020 = vmatprep.subr.mxu0 0.0
      %1021 = vmatpush1.msra.mxu0 %v704
      %1022 = vmatprep.subr.mxu0 0.0
      %1023 = vmatpush1.msra.mxu0 %v705
      %1024 = vmatprep.subr.mxu0 0.0
      %1025 = vmatpush1.msra.mxu0 %v706
      %1026 = vmatprep.subr.mxu0 0.0
      %1027 = vmatpush1.msra.mxu0 %v707
      %1028 = vmatprep.subr.mxu0 0.0
      %1029 = vmatpush1.msra.mxu0 %v708
      %1030 = vmatprep.subr.mxu0 0.0
      %1031 = vmatpush1.msra.mxu0 %v709
      %1032 = vmatprep.subr.mxu0 0.0
      %1033 = vmatpush1.msra.mxu0 %v710
      %1034 = vmatprep.subr.mxu0 0.0
      %1035 = vmatpush1.msra.mxu0 %v711
      %1036 = vmatprep.mubr.f32.mxu0 %v957
      %1037 = vmatmul.mubr.f32.gmra.mrb[0].mxu0 %v956
      %v1038 = vpop.f32.mrb[0].mxu0
      %v1039 = vadd.f32 0.0, %v1038
      %v1040 = vpop.f32.mrb[0].mxu0
      %1041 = vmatprep.mubr.f32.mxu0 %v959
      %1042 = vmatmul.mubr.f32.gmra.mrb[0].mxu0 %v958
      %v1043 = vpop.f32.mrb[0].mxu0
      %v1044 = vadd.f32 0.0, %v1043
      %v1045 = vpop.f32.mrb[0].mxu0
      %1046 = vmatprep.mubr.f32.mxu0 %v961
      %1047 = vmatmul.mubr.f32.gmra.mrb[0].mxu0 %v960
      %v1048 = vpop.f32.mrb[0].mxu0
      %v1049 = vadd.f32 0.0, %v1048
      %v1050 = vpop.f32.mrb[0].mxu0
      %1051 = vmatprep.mubr.f32.mxu0 %v963
      %1052 = vmatmul.mubr.f32.gmra.mrb[0].mxu0 %v962
      %v1053 = vpop.f32.mrb[0].mxu0
      %v1054 = vadd.f32 0.0, %v1053
      %v1055 = vpop.f32.mrb[0].mxu0
      %1056 = vmatprep.mubr.f32.mxu0 %v965
      %1057 = vmatmul.mubr.f32.gmra.mrb[0].mxu0 %v964
      %v1058 = vpop.f32.mrb[0].mxu0
      %v1059 = vadd.f32 0.0, %v1058
      %v1060 = vpop.f32.mrb[0].mxu0
      %1061 = vmatprep.mubr.f32.mxu0 %v967
      %1062 = vmatmul.mubr.f32.gmra.mrb[0].mxu0 %v966
      %v1063 = vpop.f32.mrb[0].mxu0
      %v1064 = vadd.f32 0.0, %v1063
      %v1065 = vpop.f32.mrb[0].mxu0
      %1066 = vmatprep.mubr.f32.mxu0 %v969
      %1067 = vmatmul.mubr.f32.gmra.mrb[0].mxu0 %v968
      %v1068 = vpop.f32.mrb[0].mxu0
      %v1069 = vadd.f32 0.0, %v1068
      %v1070 = vpop.f32.mrb[0].mxu0
      %1071 = vmatprep.mubr.f32.mxu0 %v971
      %1072 = vmatmul.mubr.f32.gmra.mrb[0].mxu0 %v970
      %v1073 = vpop.f32.mrb[0].mxu0
      %v1074 = vadd.f32 0.0, %v1073
      %v1075 = vpop.f32.mrb[0].mxu0
      %1076 = vdwg.mxu0
      %s1077 = scalar_lea.vmem %s3, 384
      %v1078 = vld [vmem:[%s1077] sm:$0xff]
      %v1079 = vld [vmem:[%s1077 + $0x8] sm:$0xff]
      %v1080 = vld [vmem:[%s1077 + $0x10] sm:$0xff]
      %v1081 = vld [vmem:[%s1077 + $0x18] sm:$0xff]
      %v1082 = vld [vmem:[%s1077 + $0x20] sm:$0xff]
      %v1083 = vld [vmem:[%s1077 + $0x28] sm:$0xff]
      %v1084 = vld [vmem:[%s1077 + $0x30] sm:$0xff]
      %v1085 = vld [vmem:[%s1077 + $0x38] sm:$0xff]
      %v1086 = vld [vmem:[%s1077 + $0x40] sm:$0xff]
      %v1087 = vld [vmem:[%s1077 + $0x48] sm:$0xff]
      %v1088 = vld [vmem:[%s1077 + $0x50] sm:$0xff]
      %v1089 = vld [vmem:[%s1077 + $0x58] sm:$0xff]
      %v1090 = vld [vmem:[%s1077 + $0x60] sm:$0xff]
      %v1091 = vld [vmem:[%s1077 + $0x68] sm:$0xff]
      %v1092 = vld [vmem:[%s1077 + $0x70] sm:$0xff]
      %v1093 = vld [vmem:[%s1077 + $0x78] sm:$0xff]
      %1094 = vmatprep.subr.mxu0 0.0
      %1095 = vmatpush1.msra.mxu0 %v680
      %1096 = vmatprep.subr.mxu0 0.0
      %1097 = vmatpush1.msra.mxu0 %v681
      %1098 = vmatprep.subr.mxu0 0.0
      %1099 = vmatpush1.msra.mxu0 %v682
      %1100 = vmatprep.subr.mxu0 0.0
      %1101 = vmatpush1.msra.mxu0 %v683
      %1102 = vmatprep.subr.mxu0 0.0
      %1103 = vmatpush1.msra.mxu0 %v684
      %1104 = vmatprep.subr.mxu0 0.0
      %1105 = vmatpush1.msra.mxu0 %v685
      %1106 = vmatprep.subr.mxu0 0.0
      %1107 = vmatpush1.msra.mxu0 %v686
      %1108 = vmatprep.subr.mxu0 0.0
      %1109 = vmatpush1.msra.mxu0 %v687
      %1110 = vmatprep.subr.mxu0 0.0
      %1111 = vmatpush1.msra.mxu0 %v688
      %1112 = vmatprep.subr.mxu0 0.0
      %1113 = vmatpush1.msra.mxu0 %v689
      %1114 = vmatprep.subr.mxu0 0.0
      %1115 = vmatpush1.msra.mxu0 %v690
      %1116 = vmatprep.subr.mxu0 0.0
      %1117 = vmatpush1.msra.mxu0 %v691
      %1118 = vmatprep.subr.mxu0 0.0
      %1119 = vmatpush1.msra.mxu0 %v692
      %1120 = vmatprep.subr.mxu0 0.0
      %1121 = vmatpush1.msra.mxu0 %v693
      %1122 = vmatprep.subr.mxu0 0.0
      %1123 = vmatpush1.msra.mxu0 %v694
      %1124 = vmatprep.subr.mxu0 0.0
      %1125 = vmatpush1.msra.mxu0 %v695
      %1126 = vmatprep.subr.mxu0 0.0
      %1127 = vmatpush1.msra.mxu0 %v696
      %1128 = vmatprep.subr.mxu0 0.0
      %1129 = vmatpush1.msra.mxu0 %v697
      %1130 = vmatprep.subr.mxu0 0.0
      %1131 = vmatpush1.msra.mxu0 %v698
      %1132 = vmatprep.subr.mxu0 0.0
      %1133 = vmatpush1.msra.mxu0 %v699
      %1134 = vmatprep.subr.mxu0 0.0
      %1135 = vmatpush1.msra.mxu0 %v700
      %1136 = vmatprep.subr.mxu0 0.0
      %1137 = vmatpush1.msra.mxu0 %v701
      %1138 = vmatprep.subr.mxu0 0.0
      %1139 = vmatpush1.msra.mxu0 %v702
      %1140 = vmatprep.subr.mxu0 0.0
      %1141 = vmatpush1.msra.mxu0 %v703
      %1142 = vmatprep.subr.mxu0 0.0
      %1143 = vmatpush1.msra.mxu0 %v704
      %1144 = vmatprep.subr.mxu0 0.0
      %1145 = vmatpush1.msra.mxu0 %v705
      %1146 = vmatprep.subr.mxu0 0.0
      %1147 = vmatpush1.msra.mxu0 %v706
      %1148 = vmatprep.subr.mxu0 0.0
      %1149 = vmatpush1.msra.mxu0 %v707
      %1150 = vmatprep.subr.mxu0 0.0
      %1151 = vmatpush1.msra.mxu0 %v708
      %1152 = vmatprep.subr.mxu0 0.0
      %1153 = vmatpush1.msra.mxu0 %v709
      %1154 = vmatprep.subr.mxu0 0.0
      %1155 = vmatpush1.msra.mxu0 %v710
      %1156 = vmatprep.subr.mxu0 0.0
      %1157 = vmatpush1.msra.mxu0 %v711
      %1158 = vmatprep.mubr.f32.mxu0 %v1079
      %1159 = vmatmul.mubr.f32.gmra.mrb[0].mxu0 %v1078
      %v1160 = vpop.f32.mrb[0].mxu0
      %v1161 = vadd.f32 0.0, %v1160
      %v1162 = vpop.f32.mrb[0].mxu0
      %1163 = vmatprep.mubr.f32.mxu0 %v1081
      %1164 = vmatmul.mubr.f32.gmra.mrb[0].mxu0 %v1080
      %v1165 = vpop.f32.mrb[0].mxu0
      %v1166 = vadd.f32 0.0, %v1165
      %v1167 = vpop.f32.mrb[0].mxu0
      %1168 = vmatprep.mubr.f32.mxu0 %v1083
      %1169 = vmatmul.mubr.f32.gmra.mrb[0].mxu0 %v1082
      %v1170 = vpop.f32.mrb[0].mxu0
      %v1171 = vadd.f32 0.0, %v1170
      %v1172 = vpop.f32.mrb[0].mxu0
      %1173 = vmatprep.mubr.f32.mxu0 %v1085
      %1174 = vmatmul.mubr.f32.gmra.mrb[0].mxu0 %v1084
      %v1175 = vpop.f32.mrb[0].mxu0
      %v1176 = vadd.f32 0.0, %v1175
      %v1177 = vpop.f32.mrb[0].mxu0
      %1178 = vmatprep.mubr.f32.mxu0 %v1087
      %1179 = vmatmul.mubr.f32.gmra.mrb[0].mxu0 %v1086
      %v1180 = vpop.f32.mrb[0].mxu0
      %v1181 = vadd.f32 0.0, %v1180
      %v1182 = vpop.f32.mrb[0].mxu0
      %1183 = vmatprep.mubr.f32.mxu0 %v1089
      %1184 = vmatmul.mubr.f32.gmra.mrb[0].mxu0 %v1088
      %v1185 = vpop.f32.mrb[0].mxu0
      %v1186 = vadd.f32 0.0, %v1185
      %v1187 = vpop.f32.mrb[0].mxu0
      %1188 = vmatprep.mubr.f32.mxu0 %v1091
      %1189 = vmatmul.mubr.f32.gmra.mrb[0].mxu0 %v1090
      %v1190 = vpop.f32.mrb[0].mxu0
      %v1191 = vadd.f32 0.0, %v1190
      %v1192 = vpop.f32.mrb[0].mxu0
      %1193 = vmatprep.mubr.f32.mxu0 %v1093
      %1194 = vmatmul.mubr.f32.gmra.mrb[0].mxu0 %v1092
      %v1195 = vpop.f32.mrb[0].mxu0
      %v1196 = vadd.f32 0.0, %v1195
      %v1197 = vpop.f32.mrb[0].mxu0
      %1198 = vdwg.mxu0
      %s1199 = scalar_lea.vmem %s3, 512
      %v1200 = vld [vmem:[%s1199] sm:$0xff]
      %v1201 = vld [vmem:[%s1199 + $0x8] sm:$0xff]
      %v1202 = vld [vmem:[%s1199 + $0x10] sm:$0xff]
      %v1203 = vld [vmem:[%s1199 + $0x18] sm:$0xff]
      %v1204 = vld [vmem:[%s1199 + $0x20] sm:$0xff]
      %v1205 = vld [vmem:[%s1199 + $0x28] sm:$0xff]
      %v1206 = vld [vmem:[%s1199 + $0x30] sm:$0xff]
      %v1207 = vld [vmem:[%s1199 + $0x38] sm:$0xff]
      %v1208 = vld [vmem:[%s1199 + $0x40] sm:$0xff]
      %v1209 = vld [vmem:[%s1199 + $0x48] sm:$0xff]
      %v1210 = vld [vmem:[%s1199 + $0x50] sm:$0xff]
      %v1211 = vld [vmem:[%s1199 + $0x58] sm:$0xff]
      %v1212 = vld [vmem:[%s1199 + $0x60] sm:$0xff]
      %v1213 = vld [vmem:[%s1199 + $0x68] sm:$0xff]
      %v1214 = vld [vmem:[%s1199 + $0x70] sm:$0xff]
      %v1215 = vld [vmem:[%s1199 + $0x78] sm:$0xff]
      %1216 = vmatprep.subr.mxu0 0.0
      %1217 = vmatpush1.msra.mxu0 %v680
      %1218 = vmatprep.subr.mxu0 0.0
      %1219 = vmatpush1.msra.mxu0 %v681
      %1220 = vmatprep.subr.mxu0 0.0
      %1221 = vmatpush1.msra.mxu0 %v682
      %1222 = vmatprep.subr.mxu0 0.0
      %1223 = vmatpush1.msra.mxu0 %v683
      %1224 = vmatprep.subr.mxu0 0.0
      %1225 = vmatpush1.msra.mxu0 %v684
      %1226 = vmatprep.subr.mxu0 0.0
      %1227 = vmatpush1.msra.mxu0 %v685
      %1228 = vmatprep.subr.mxu0 0.0
      %1229 = vmatpush1.msra.mxu0 %v686
      %1230 = vmatprep.subr.mxu0 0.0
      %1231 = vmatpush1.msra.mxu0 %v687
      %1232 = vmatprep.subr.mxu0 0.0
      %1233 = vmatpush1.msra.mxu0 %v688
      %1234 = vmatprep.subr.mxu0 0.0
      %1235 = vmatpush1.msra.mxu0 %v689
      %1236 = vmatprep.subr.mxu0 0.0
      %1237 = vmatpush1.msra.mxu0 %v690
      %1238 = vmatprep.subr.mxu0 0.0
      %1239 = vmatpush1.msra.mxu0 %v691
      %1240 = vmatprep.subr.mxu0 0.0
      %1241 = vmatpush1.msra.mxu0 %v692
      %1242 = vmatprep.subr.mxu0 0.0
      %1243 = vmatpush1.msra.mxu0 %v693
      %1244 = vmatprep.subr.mxu0 0.0
      %1245 = vmatpush1.msra.mxu0 %v694
      %1246 = vmatprep.subr.mxu0 0.0
      %1247 = vmatpush1.msra.mxu0 %v695
      %1248 = vmatprep.subr.mxu0 0.0
      %1249 = vmatpush1.msra.mxu0 %v696
      %1250 = vmatprep.subr.mxu0 0.0
      %1251 = vmatpush1.msra.mxu0 %v697
      %1252 = vmatprep.subr.mxu0 0.0
      %1253 = vmatpush1.msra.mxu0 %v698
      %1254 = vmatprep.subr.mxu0 0.0
      %1255 = vmatpush1.msra.mxu0 %v699
      %1256 = vmatprep.subr.mxu0 0.0
      %1257 = vmatpush1.msra.mxu0 %v700
      %1258 = vmatprep.subr.mxu0 0.0
      %1259 = vmatpush1.msra.mxu0 %v701
      %1260 = vmatprep.subr.mxu0 0.0
      %1261 = vmatpush1.msra.mxu0 %v702
      %1262 = vmatprep.subr.mxu0 0.0
      %1263 = vmatpush1.msra.mxu0 %v703
      %1264 = vmatprep.subr.mxu0 0.0
      %1265 = vmatpush1.msra.mxu0 %v704
      %1266 = vmatprep.subr.mxu0 0.0
      %1267 = vmatpush1.msra.mxu0 %v705
      %1268 = vmatprep.subr.mxu0 0.0
      %1269 = vmatpush1.msra.mxu0 %v706
      %1270 = vmatprep.subr.mxu0 0.0
      %1271 = vmatpush1.msra.mxu0 %v707
      %1272 = vmatprep.subr.mxu0 0.0
      %1273 = vmatpush1.msra.mxu0 %v708
      %1274 = vmatprep.subr.mxu0 0.0
      %1275 = vmatpush1.msra.mxu0 %v709
      %1276 = vmatprep.subr.mxu0 0.0
      %1277 = vmatpush1.msra.mxu0 %v710
      %1278 = vmatprep.subr.mxu0 0.0
      %1279 = vmatpush1.msra.mxu0 %v711
      %1280 = vmatprep.mubr.f32.mxu0 %v1201
      %1281 = vmatmul.mubr.f32.gmra.mrb[0].mxu0 %v1200
      %v1282 = vpop.f32.mrb[0].mxu0
      %v1283 = vadd.f32 0.0, %v1282
      %v1284 = vpop.f32.mrb[0].mxu0
      %1285 = vmatprep.mubr.f32.mxu0 %v1203
      %1286 = vmatmul.mubr.f32.gmra.mrb[0].mxu0 %v1202
      %v1287 = vpop.f32.mrb[0].mxu0
      %v1288 = vadd.f32 0.0, %v1287
      %v1289 = vpop.f32.mrb[0].mxu0
      %1290 = vmatprep.mubr.f32.mxu0 %v1205
      %1291 = vmatmul.mubr.f32.gmra.mrb[0].mxu0 %v1204
      %v1292 = vpop.f32.mrb[0].mxu0
      %v1293 = vadd.f32 0.0, %v1292
      %v1294 = vpop.f32.mrb[0].mxu0
      %1295 = vmatprep.mubr.f32.mxu0 %v1207
      %1296 = vmatmul.mubr.f32.gmra.mrb[0].mxu0 %v1206
      %v1297 = vpop.f32.mrb[0].mxu0
      %v1298 = vadd.f32 0.0, %v1297
      %v1299 = vpop.f32.mrb[0].mxu0
      %1300 = vmatprep.mubr.f32.mxu0 %v1209
      %1301 = vmatmul.mubr.f32.gmra.mrb[0].mxu0 %v1208
      %v1302 = vpop.f32.mrb[0].mxu0
      %v1303 = vadd.f32 0.0, %v1302
      %v1304 = vpop.f32.mrb[0].mxu0
      %1305 = vmatprep.mubr.f32.mxu0 %v1211
      %1306 = vmatmul.mubr.f32.gmra.mrb[0].mxu0 %v1210
      %v1307 = vpop.f32.mrb[0].mxu0
      %v1308 = vadd.f32 0.0, %v1307
      %v1309 = vpop.f32.mrb[0].mxu0
      %1310 = vmatprep.mubr.f32.mxu0 %v1213
      %1311 = vmatmul.mubr.f32.gmra.mrb[0].mxu0 %v1212
      %v1312 = vpop.f32.mrb[0].mxu0
      %v1313 = vadd.f32 0.0, %v1312
      %v1314 = vpop.f32.mrb[0].mxu0
      %1315 = vmatprep.mubr.f32.mxu0 %v1215
      %1316 = vmatmul.mubr.f32.gmra.mrb[0].mxu0 %v1214
      %v1317 = vpop.f32.mrb[0].mxu0
      %v1318 = vadd.f32 0.0, %v1317
      %v1319 = vpop.f32.mrb[0].mxu0
      %1320 = vdwg.mxu0
      %s1321 = scalar_lea.vmem %s3, 640
      %v1322 = vld [vmem:[%s1321] sm:$0xff]
      %v1323 = vld [vmem:[%s1321 + $0x8] sm:$0xff]
      %v1324 = vld [vmem:[%s1321 + $0x10] sm:$0xff]
      %v1325 = vld [vmem:[%s1321 + $0x18] sm:$0xff]
      %v1326 = vld [vmem:[%s1321 + $0x20] sm:$0xff]
      %v1327 = vld [vmem:[%s1321 + $0x28] sm:$0xff]
      %v1328 = vld [vmem:[%s1321 + $0x30] sm:$0xff]
      %v1329 = vld [vmem:[%s1321 + $0x38] sm:$0xff]
      %v1330 = vld [vmem:[%s1321 + $0x40] sm:$0xff]
      %v1331 = vld [vmem:[%s1321 + $0x48] sm:$0xff]
      %v1332 = vld [vmem:[%s1321 + $0x50] sm:$0xff]
      %v1333 = vld [vmem:[%s1321 + $0x58] sm:$0xff]
      %v1334 = vld [vmem:[%s1321 + $0x60] sm:$0xff]
      %v1335 = vld [vmem:[%s1321 + $0x68] sm:$0xff]
      %v1336 = vld [vmem:[%s1321 + $0x70] sm:$0xff]
      %v1337 = vld [vmem:[%s1321 + $0x78] sm:$0xff]
      %1338 = vmatprep.subr.mxu0 0.0
      %1339 = vmatpush1.msra.mxu0 %v680
      %1340 = vmatprep.subr.mxu0 0.0
      %1341 = vmatpush1.msra.mxu0 %v681
      %1342 = vmatprep.subr.mxu0 0.0
      %1343 = vmatpush1.msra.mxu0 %v682
      %1344 = vmatprep.subr.mxu0 0.0
      %1345 = vmatpush1.msra.mxu0 %v683
      %1346 = vmatprep.subr.mxu0 0.0
      %1347 = vmatpush1.msra.mxu0 %v684
      %1348 = vmatprep.subr.mxu0 0.0
      %1349 = vmatpush1.msra.mxu0 %v685
      %1350 = vmatprep.subr.mxu0 0.0
      %1351 = vmatpush1.msra.mxu0 %v686
      %1352 = vmatprep.subr.mxu0 0.0
      %1353 = vmatpush1.msra.mxu0 %v687
      %1354 = vmatprep.subr.mxu0 0.0
      %1355 = vmatpush1.msra.mxu0 %v688
      %1356 = vmatprep.subr.mxu0 0.0
      %1357 = vmatpush1.msra.mxu0 %v689
      %1358 = vmatprep.subr.mxu0 0.0
      %1359 = vmatpush1.msra.mxu0 %v690
      %1360 = vmatprep.subr.mxu0 0.0
      %1361 = vmatpush1.msra.mxu0 %v691
      %1362 = vmatprep.subr.mxu0 0.0
      %1363 = vmatpush1.msra.mxu0 %v692
      %1364 = vmatprep.subr.mxu0 0.0
      %1365 = vmatpush1.msra.mxu0 %v693
      %1366 = vmatprep.subr.mxu0 0.0
      %1367 = vmatpush1.msra.mxu0 %v694
      %1368 = vmatprep.subr.mxu0 0.0
      %1369 = vmatpush1.msra.mxu0 %v695
      %1370 = vmatprep.subr.mxu0 0.0
      %1371 = vmatpush1.msra.mxu0 %v696
      %1372 = vmatprep.subr.mxu0 0.0
      %1373 = vmatpush1.msra.mxu0 %v697
      %1374 = vmatprep.subr.mxu0 0.0
      %1375 = vmatpush1.msra.mxu0 %v698
      %1376 = vmatprep.subr.mxu0 0.0
      %1377 = vmatpush1.msra.mxu0 %v699
      %1378 = vmatprep.subr.mxu0 0.0
      %1379 = vmatpush1.msra.mxu0 %v700
      %1380 = vmatprep.subr.mxu0 0.0
      %1381 = vmatpush1.msra.mxu0 %v701
      %1382 = vmatprep.subr.mxu0 0.0
      %1383 = vmatpush1.msra.mxu0 %v702
      %1384 = vmatprep.subr.mxu0 0.0
      %1385 = vmatpush1.msra.mxu0 %v703
      %1386 = vmatprep.subr.mxu0 0.0
      %1387 = vmatpush1.msra.mxu0 %v704
      %1388 = vmatprep.subr.mxu0 0.0
      %1389 = vmatpush1.msra.mxu0 %v705
      %1390 = vmatprep.subr.mxu0 0.0
      %1391 = vmatpush1.msra.mxu0 %v706
      %1392 = vmatprep.subr.mxu0 0.0
      %1393 = vmatpush1.msra.mxu0 %v707
      %1394 = vmatprep.subr.mxu0 0.0
      %1395 = vmatpush1.msra.mxu0 %v708
      %1396 = vmatprep.subr.mxu0 0.0
      %1397 = vmatpush1.msra.mxu0 %v709
      %1398 = vmatprep.subr.mxu0 0.0
      %1399 = vmatpush1.msra.mxu0 %v710
      %1400 = vmatprep.subr.mxu0 0.0
      %1401 = vmatpush1.msra.mxu0 %v711
      %1402 = vmatprep.mubr.f32.mxu0 %v1323
      %1403 = vmatmul.mubr.f32.gmra.mrb[0].mxu0 %v1322
      %v1404 = vpop.f32.mrb[0].mxu0
      %v1405 = vadd.f32 0.0, %v1404
      %v1406 = vpop.f32.mrb[0].mxu0
      %1407 = vmatprep.mubr.f32.mxu0 %v1325
      %1408 = vmatmul.mubr.f32.gmra.mrb[0].mxu0 %v1324
      %v1409 = vpop.f32.mrb[0].mxu0
      %v1410 = vadd.f32 0.0, %v1409
      %v1411 = vpop.f32.mrb[0].mxu0
      %1412 = vmatprep.mubr.f32.mxu0 %v1327
      %1413 = vmatmul.mubr.f32.gmra.mrb[0].mxu0 %v1326
      %v1414 = vpop.f32.mrb[0].mxu0
      %v1415 = vadd.f32 0.0, %v1414
      %v1416 = vpop.f32.mrb[0].mxu0
      %1417 = vmatprep.mubr.f32.mxu0 %v1329
      %1418 = vmatmul.mubr.f32.gmra.mrb[0].mxu0 %v1328
      %v1419 = vpop.f32.mrb[0].mxu0
      %v1420 = vadd.f32 0.0, %v1419
      %v1421 = vpop.f32.mrb[0].mxu0
      %1422 = vmatprep.mubr.f32.mxu0 %v1331
      %1423 = vmatmul.mubr.f32.gmra.mrb[0].mxu0 %v1330
      %v1424 = vpop.f32.mrb[0].mxu0
      %v1425 = vadd.f32 0.0, %v1424
      %v1426 = vpop.f32.mrb[0].mxu0
      %1427 = vmatprep.mubr.f32.mxu0 %v1333
      %1428 = vmatmul.mubr.f32.gmra.mrb[0].mxu0 %v1332
      %v1429 = vpop.f32.mrb[0].mxu0
      %v1430 = vadd.f32 0.0, %v1429
      %v1431 = vpop.f32.mrb[0].mxu0
      %1432 = vmatprep.mubr.f32.mxu0 %v1335
      %1433 = vmatmul.mubr.f32.gmra.mrb[0].mxu0 %v1334
      %v1434 = vpop.f32.mrb[0].mxu0
      %v1435 = vadd.f32 0.0, %v1434
      %v1436 = vpop.f32.mrb[0].mxu0
      %1437 = vmatprep.mubr.f32.mxu0 %v1337
      %1438 = vmatmul.mubr.f32.gmra.mrb[0].mxu0 %v1336
      %v1439 = vpop.f32.mrb[0].mxu0
      %v1440 = vadd.f32 0.0, %v1439
      %v1441 = vpop.f32.mrb[0].mxu0
      %1442 = vdwg.mxu0
      %s1443 = scalar_lea.vmem %s3, 768
      %v1444 = vld [vmem:[%s1443] sm:$0xff]
      %v1445 = vld [vmem:[%s1443 + $0x8] sm:$0xff]
      %v1446 = vld [vmem:[%s1443 + $0x10] sm:$0xff]
      %v1447 = vld [vmem:[%s1443 + $0x18] sm:$0xff]
      %v1448 = vld [vmem:[%s1443 + $0x20] sm:$0xff]
      %v1449 = vld [vmem:[%s1443 + $0x28] sm:$0xff]
      %v1450 = vld [vmem:[%s1443 + $0x30] sm:$0xff]
      %v1451 = vld [vmem:[%s1443 + $0x38] sm:$0xff]
      %v1452 = vld [vmem:[%s1443 + $0x40] sm:$0xff]
      %v1453 = vld [vmem:[%s1443 + $0x48] sm:$0xff]
      %v1454 = vld [vmem:[%s1443 + $0x50] sm:$0xff]
      %v1455 = vld [vmem:[%s1443 + $0x58] sm:$0xff]
      %v1456 = vld [vmem:[%s1443 + $0x60] sm:$0xff]
      %v1457 = vld [vmem:[%s1443 + $0x68] sm:$0xff]
      %v1458 = vld [vmem:[%s1443 + $0x70] sm:$0xff]
      %v1459 = vld [vmem:[%s1443 + $0x78] sm:$0xff]
      %1460 = vmatprep.subr.mxu0 0.0
      %1461 = vmatpush1.msra.mxu0 %v680
      %1462 = vmatprep.subr.mxu0 0.0
      %1463 = vmatpush1.msra.mxu0 %v681
      %1464 = vmatprep.subr.mxu0 0.0
      %1465 = vmatpush1.msra.mxu0 %v682
      %1466 = vmatprep.subr.mxu0 0.0
      %1467 = vmatpush1.msra.mxu0 %v683
      %1468 = vmatprep.subr.mxu0 0.0
      %1469 = vmatpush1.msra.mxu0 %v684
      %1470 = vmatprep.subr.mxu0 0.0
      %1471 = vmatpush1.msra.mxu0 %v685
      %1472 = vmatprep.subr.mxu0 0.0
      %1473 = vmatpush1.msra.mxu0 %v686
      %1474 = vmatprep.subr.mxu0 0.0
      %1475 = vmatpush1.msra.mxu0 %v687
      %1476 = vmatprep.subr.mxu0 0.0
      %1477 = vmatpush1.msra.mxu0 %v688
      %1478 = vmatprep.subr.mxu0 0.0
      %1479 = vmatpush1.msra.mxu0 %v689
      %1480 = vmatprep.subr.mxu0 0.0
      %1481 = vmatpush1.msra.mxu0 %v690
      %1482 = vmatprep.subr.mxu0 0.0
      %1483 = vmatpush1.msra.mxu0 %v691
      %1484 = vmatprep.subr.mxu0 0.0
      %1485 = vmatpush1.msra.mxu0 %v692
      %1486 = vmatprep.subr.mxu0 0.0
      %1487 = vmatpush1.msra.mxu0 %v693
      %1488 = vmatprep.subr.mxu0 0.0
      %1489 = vmatpush1.msra.mxu0 %v694
      %1490 = vmatprep.subr.mxu0 0.0
      %1491 = vmatpush1.msra.mxu0 %v695
      %1492 = vmatprep.subr.mxu0 0.0
      %1493 = vmatpush1.msra.mxu0 %v696
      %1494 = vmatprep.subr.mxu0 0.0
      %1495 = vmatpush1.msra.mxu0 %v697
      %1496 = vmatprep.subr.mxu0 0.0
      %1497 = vmatpush1.msra.mxu0 %v698
      %1498 = vmatprep.subr.mxu0 0.0
      %1499 = vmatpush1.msra.mxu0 %v699
      %1500 = vmatprep.subr.mxu0 0.0
      %1501 = vmatpush1.msra.mxu0 %v700
      %1502 = vmatprep.subr.mxu0 0.0
      %1503 = vmatpush1.msra.mxu0 %v701
      %1504 = vmatprep.subr.mxu0 0.0
      %1505 = vmatpush1.msra.mxu0 %v702
      %1506 = vmatprep.subr.mxu0 0.0
      %1507 = vmatpush1.msra.mxu0 %v703
      %1508 = vmatprep.subr.mxu0 0.0
      %1509 = vmatpush1.msra.mxu0 %v704
      %1510 = vmatprep.subr.mxu0 0.0
      %1511 = vmatpush1.msra.mxu0 %v705
      %1512 = vmatprep.subr.mxu0 0.0
      %1513 = vmatpush1.msra.mxu0 %v706
      %1514 = vmatprep.subr.mxu0 0.0
      %1515 = vmatpush1.msra.mxu0 %v707
      %1516 = vmatprep.subr.mxu0 0.0
      %1517 = vmatpush1.msra.mxu0 %v708
      %1518 = vmatprep.subr.mxu0 0.0
      %1519 = vmatpush1.msra.mxu0 %v709
      %1520 = vmatprep.subr.mxu0 0.0
      %1521 = vmatpush1.msra.mxu0 %v710
      %1522 = vmatprep.subr.mxu0 0.0
      %1523 = vmatpush1.msra.mxu0 %v711
      %1524 = vmatprep.mubr.f32.mxu0 %v1445
      %1525 = vmatmul.mubr.f32.gmra.mrb[0].mxu0 %v1444
      %v1526 = vpop.f32.mrb[0].mxu0
      %v1527 = vadd.f32 0.0, %v1526
      %v1528 = vpop.f32.mrb[0].mxu0
      %1529 = vmatprep.mubr.f32.mxu0 %v1447
      %1530 = vmatmul.mubr.f32.gmra.mrb[0].mxu0 %v1446
      %v1531 = vpop.f32.mrb[0].mxu0
      %v1532 = vadd.f32 0.0, %v1531
      %v1533 = vpop.f32.mrb[0].mxu0
      %1534 = vmatprep.mubr.f32.mxu0 %v1449
      %1535 = vmatmul.mubr.f32.gmra.mrb[0].mxu0 %v1448
      %v1536 = vpop.f32.mrb[0].mxu0
      %v1537 = vadd.f32 0.0, %v1536
      %v1538 = vpop.f32.mrb[0].mxu0
      %1539 = vmatprep.mubr.f32.mxu0 %v1451
      %1540 = vmatmul.mubr.f32.gmra.mrb[0].mxu0 %v1450
      %v1541 = vpop.f32.mrb[0].mxu0
      %v1542 = vadd.f32 0.0, %v1541
      %v1543 = vpop.f32.mrb[0].mxu0
      %1544 = vmatprep.mubr.f32.mxu0 %v1453
      %1545 = vmatmul.mubr.f32.gmra.mrb[0].mxu0 %v1452
      %v1546 = vpop.f32.mrb[0].mxu0
      %v1547 = vadd.f32 0.0, %v1546
      %v1548 = vpop.f32.mrb[0].mxu0
      %1549 = vmatprep.mubr.f32.mxu0 %v1455
      %1550 = vmatmul.mubr.f32.gmra.mrb[0].mxu0 %v1454
      %v1551 = vpop.f32.mrb[0].mxu0
      %v1552 = vadd.f32 0.0, %v1551
      %v1553 = vpop.f32.mrb[0].mxu0
      %1554 = vmatprep.mubr.f32.mxu0 %v1457
      %1555 = vmatmul.mubr.f32.gmra.mrb[0].mxu0 %v1456
      %v1556 = vpop.f32.mrb[0].mxu0
      %v1557 = vadd.f32 0.0, %v1556
      %v1558 = vpop.f32.mrb[0].mxu0
      %1559 = vmatprep.mubr.f32.mxu0 %v1459
      %1560 = vmatmul.mubr.f32.gmra.mrb[0].mxu0 %v1458
      %v1561 = vpop.f32.mrb[0].mxu0
      %v1562 = vadd.f32 0.0, %v1561
      %v1563 = vpop.f32.mrb[0].mxu0
      %1564 = vdwg.mxu0
      %s1565 = scalar_lea.vmem %s3, 896
      %v1566 = vld [vmem:[%s1565] sm:$0xff]
      %v1567 = vld [vmem:[%s1565 + $0x8] sm:$0xff]
      %v1568 = vld [vmem:[%s1565 + $0x10] sm:$0xff]
      %v1569 = vld [vmem:[%s1565 + $0x18] sm:$0xff]
      %v1570 = vld [vmem:[%s1565 + $0x20] sm:$0xff]
      %v1571 = vld [vmem:[%s1565 + $0x28] sm:$0xff]
      %v1572 = vld [vmem:[%s1565 + $0x30] sm:$0xff]
      %v1573 = vld [vmem:[%s1565 + $0x38] sm:$0xff]
      %v1574 = vld [vmem:[%s1565 + $0x40] sm:$0xff]
      %v1575 = vld [vmem:[%s1565 + $0x48] sm:$0xff]
      %v1576 = vld [vmem:[%s1565 + $0x50] sm:$0xff]
      %v1577 = vld [vmem:[%s1565 + $0x58] sm:$0xff]
      %v1578 = vld [vmem:[%s1565 + $0x60] sm:$0xff]
      %v1579 = vld [vmem:[%s1565 + $0x68] sm:$0xff]
      %v1580 = vld [vmem:[%s1565 + $0x70] sm:$0xff]
      %v1581 = vld [vmem:[%s1565 + $0x78] sm:$0xff]
      %1582 = vmatprep.subr.mxu0 0.0
      %1583 = vmatpush1.msra.mxu0 %v680
      %1584 = vmatprep.subr.mxu0 0.0
      %1585 = vmatpush1.msra.mxu0 %v681
      %1586 = vmatprep.subr.mxu0 0.0
      %1587 = vmatpush1.msra.mxu0 %v682
      %1588 = vmatprep.subr.mxu0 0.0
      %1589 = vmatpush1.msra.mxu0 %v683
      %1590 = vmatprep.subr.mxu0 0.0
      %1591 = vmatpush1.msra.mxu0 %v684
      %1592 = vmatprep.subr.mxu0 0.0
      %1593 = vmatpush1.msra.mxu0 %v685
      %1594 = vmatprep.subr.mxu0 0.0
      %1595 = vmatpush1.msra.mxu0 %v686
      %1596 = vmatprep.subr.mxu0 0.0
      %1597 = vmatpush1.msra.mxu0 %v687
      %1598 = vmatprep.subr.mxu0 0.0
      %1599 = vmatpush1.msra.mxu0 %v688
      %1600 = vmatprep.subr.mxu0 0.0
      %1601 = vmatpush1.msra.mxu0 %v689
      %1602 = vmatprep.subr.mxu0 0.0
      %1603 = vmatpush1.msra.mxu0 %v690
      %1604 = vmatprep.subr.mxu0 0.0
      %1605 = vmatpush1.msra.mxu0 %v691
      %1606 = vmatprep.subr.mxu0 0.0
      %1607 = vmatpush1.msra.mxu0 %v692
      %1608 = vmatprep.subr.mxu0 0.0
      %1609 = vmatpush1.msra.mxu0 %v693
      %1610 = vmatprep.subr.mxu0 0.0
      %1611 = vmatpush1.msra.mxu0 %v694
      %1612 = vmatprep.subr.mxu0 0.0
      %1613 = vmatpush1.msra.mxu0 %v695
      %1614 = vmatprep.subr.mxu0 0.0
      %1615 = vmatpush1.msra.mxu0 %v696
      %1616 = vmatprep.subr.mxu0 0.0
      %1617 = vmatpush1.msra.mxu0 %v697
      %1618 = vmatprep.subr.mxu0 0.0
      %1619 = vmatpush1.msra.mxu0 %v698
      %1620 = vmatprep.subr.mxu0 0.0
      %1621 = vmatpush1.msra.mxu0 %v699
      %1622 = vmatprep.subr.mxu0 0.0
      %1623 = vmatpush1.msra.mxu0 %v700
      %1624 = vmatprep.subr.mxu0 0.0
      %1625 = vmatpush1.msra.mxu0 %v701
      %1626 = vmatprep.subr.mxu0 0.0
      %1627 = vmatpush1.msra.mxu0 %v702
      %1628 = vmatprep.subr.mxu0 0.0
      %1629 = vmatpush1.msra.mxu0 %v703
      %1630 = vmatprep.subr.mxu0 0.0
      %1631 = vmatpush1.msra.mxu0 %v704
      %1632 = vmatprep.subr.mxu0 0.0
      %1633 = vmatpush1.msra.mxu0 %v705
      %1634 = vmatprep.subr.mxu0 0.0
      %1635 = vmatpush1.msra.mxu0 %v706
      %1636 = vmatprep.subr.mxu0 0.0
      %1637 = vmatpush1.msra.mxu0 %v707
      %1638 = vmatprep.subr.mxu0 0.0
      %1639 = vmatpush1.msra.mxu0 %v708
      %1640 = vmatprep.subr.mxu0 0.0
      %1641 = vmatpush1.msra.mxu0 %v709
      %1642 = vmatprep.subr.mxu0 0.0
      %1643 = vmatpush1.msra.mxu0 %v710
      %1644 = vmatprep.subr.mxu0 0.0
      %1645 = vmatpush1.msra.mxu0 %v711
      %1646 = vmatprep.mubr.f32.mxu0 %v1567
      %1647 = vmatmul.mubr.f32.gmra.mrb[0].mxu0 %v1566
      %v1648 = vpop.f32.mrb[0].mxu0
      %v1649 = vadd.f32 0.0, %v1648
      %v1650 = vpop.f32.mrb[0].mxu0
      %1651 = vmatprep.mubr.f32.mxu0 %v1569
      %1652 = vmatmul.mubr.f32.gmra.mrb[0].mxu0 %v1568
      %v1653 = vpop.f32.mrb[0].mxu0
      %v1654 = vadd.f32 0.0, %v1653
      %v1655 = vpop.f32.mrb[0].mxu0
      %1656 = vmatprep.mubr.f32.mxu0 %v1571
      %1657 = vmatmul.mubr.f32.gmra.mrb[0].mxu0 %v1570
      %v1658 = vpop.f32.mrb[0].mxu0
      %v1659 = vadd.f32 0.0, %v1658
      %v1660 = vpop.f32.mrb[0].mxu0
      %1661 = vmatprep.mubr.f32.mxu0 %v1573
      %1662 = vmatmul.mubr.f32.gmra.mrb[0].mxu0 %v1572
      %v1663 = vpop.f32.mrb[0].mxu0
      %v1664 = vadd.f32 0.0, %v1663
      %v1665 = vpop.f32.mrb[0].mxu0
      %1666 = vmatprep.mubr.f32.mxu0 %v1575
      %1667 = vmatmul.mubr.f32.gmra.mrb[0].mxu0 %v1574
      %v1668 = vpop.f32.mrb[0].mxu0
      %v1669 = vadd.f32 0.0, %v1668
      %v1670 = vpop.f32.mrb[0].mxu0
      %1671 = vmatprep.mubr.f32.mxu0 %v1577
      %1672 = vmatmul.mubr.f32.gmra.mrb[0].mxu0 %v1576
      %v1673 = vpop.f32.mrb[0].mxu0
      %v1674 = vadd.f32 0.0, %v1673
      %v1675 = vpop.f32.mrb[0].mxu0
      %1676 = vmatprep.mubr.f32.mxu0 %v1579
      %1677 = vmatmul.mubr.f32.gmra.mrb[0].mxu0 %v1578
      %v1678 = vpop.f32.mrb[0].mxu0
      %v1679 = vadd.f32 0.0, %v1678
      %v1680 = vpop.f32.mrb[0].mxu0
      %1681 = vmatprep.mubr.f32.mxu0 %v1581
      %1682 = vmatmul.mubr.f32.gmra.mrb[0].mxu0 %v1580
      %v1683 = vpop.f32.mrb[0].mxu0
      %v1684 = vadd.f32 0.0, %v1683
      %v1685 = vpop.f32.mrb[0].mxu0
      %1686 = vdwg.mxu0
      %s1687 = scalar_lea.vmem %s3, 1024
      %v1688 = vld [vmem:[%s1687] sm:$0xff]
      %v1689 = vld [vmem:[%s1687 + $0x8] sm:$0xff]
      %v1690 = vld [vmem:[%s1687 + $0x10] sm:$0xff]
      %v1691 = vld [vmem:[%s1687 + $0x18] sm:$0xff]
      %v1692 = vld [vmem:[%s1687 + $0x20] sm:$0xff]
      %v1693 = vld [vmem:[%s1687 + $0x28] sm:$0xff]
      %v1694 = vld [vmem:[%s1687 + $0x30] sm:$0xff]
      %v1695 = vld [vmem:[%s1687 + $0x38] sm:$0xff]
      %v1696 = vld [vmem:[%s1687 + $0x40] sm:$0xff]
      %v1697 = vld [vmem:[%s1687 + $0x48] sm:$0xff]
      %v1698 = vld [vmem:[%s1687 + $0x50] sm:$0xff]
      %v1699 = vld [vmem:[%s1687 + $0x58] sm:$0xff]
      %v1700 = vld [vmem:[%s1687 + $0x60] sm:$0xff]
      %v1701 = vld [vmem:[%s1687 + $0x68] sm:$0xff]
      %v1702 = vld [vmem:[%s1687 + $0x70] sm:$0xff]
      %v1703 = vld [vmem:[%s1687 + $0x78] sm:$0xff]
      %1704 = vmatprep.subr.mxu0 0.0
      %1705 = vmatpush1.msra.mxu0 %v680
      %1706 = vmatprep.subr.mxu0 0.0
      %1707 = vmatpush1.msra.mxu0 %v681
      %1708 = vmatprep.subr.mxu0 0.0
      %1709 = vmatpush1.msra.mxu0 %v682
      %1710 = vmatprep.subr.mxu0 0.0
      %1711 = vmatpush1.msra.mxu0 %v683
      %1712 = vmatprep.subr.mxu0 0.0
      %1713 = vmatpush1.msra.mxu0 %v684
      %1714 = vmatprep.subr.mxu0 0.0
      %1715 = vmatpush1.msra.mxu0 %v685
      %1716 = vmatprep.subr.mxu0 0.0
      %1717 = vmatpush1.msra.mxu0 %v686
      %1718 = vmatprep.subr.mxu0 0.0
      %1719 = vmatpush1.msra.mxu0 %v687
      %1720 = vmatprep.subr.mxu0 0.0
      %1721 = vmatpush1.msra.mxu0 %v688
      %1722 = vmatprep.subr.mxu0 0.0
      %1723 = vmatpush1.msra.mxu0 %v689
      %1724 = vmatprep.subr.mxu0 0.0
      %1725 = vmatpush1.msra.mxu0 %v690
      %1726 = vmatprep.subr.mxu0 0.0
      %1727 = vmatpush1.msra.mxu0 %v691
      %1728 = vmatprep.subr.mxu0 0.0
      %1729 = vmatpush1.msra.mxu0 %v692
      %1730 = vmatprep.subr.mxu0 0.0
      %1731 = vmatpush1.msra.mxu0 %v693
      %1732 = vmatprep.subr.mxu0 0.0
      %1733 = vmatpush1.msra.mxu0 %v694
      %1734 = vmatprep.subr.mxu0 0.0
      %1735 = vmatpush1.msra.mxu0 %v695
      %1736 = vmatprep.subr.mxu0 0.0
      %1737 = vmatpush1.msra.mxu0 %v696
      %1738 = vmatprep.subr.mxu0 0.0
      %1739 = vmatpush1.msra.mxu0 %v697
      %1740 = vmatprep.subr.mxu0 0.0
      %1741 = vmatpush1.msra.mxu0 %v698
      %1742 = vmatprep.subr.mxu0 0.0
      %1743 = vmatpush1.msra.mxu0 %v699
      %1744 = vmatprep.subr.mxu0 0.0
      %1745 = vmatpush1.msra.mxu0 %v700
      %1746 = vmatprep.subr.mxu0 0.0
      %1747 = vmatpush1.msra.mxu0 %v701
      %1748 = vmatprep.subr.mxu0 0.0
      %1749 = vmatpush1.msra.mxu0 %v702
      %1750 = vmatprep.subr.mxu0 0.0
      %1751 = vmatpush1.msra.mxu0 %v703
      %1752 = vmatprep.subr.mxu0 0.0
      %1753 = vmatpush1.msra.mxu0 %v704
      %1754 = vmatprep.subr.mxu0 0.0
      %1755 = vmatpush1.msra.mxu0 %v705
      %1756 = vmatprep.subr.mxu0 0.0
      %1757 = vmatpush1.msra.mxu0 %v706
      %1758 = vmatprep.subr.mxu0 0.0
      %1759 = vmatpush1.msra.mxu0 %v707
      %1760 = vmatprep.subr.mxu0 0.0
      %1761 = vmatpush1.msra.mxu0 %v708
      %1762 = vmatprep.subr.mxu0 0.0
      %1763 = vmatpush1.msra.mxu0 %v709
      %1764 = vmatprep.subr.mxu0 0.0
      %1765 = vmatpush1.msra.mxu0 %v710
      %1766 = vmatprep.subr.mxu0 0.0
      %1767 = vmatpush1.msra.mxu0 %v711
      %1768 = vmatprep.mubr.f32.mxu0 %v1689
      %1769 = vmatmul.mubr.f32.gmra.mrb[0].mxu0 %v1688
      %v1770 = vpop.f32.mrb[0].mxu0
      %v1771 = vadd.f32 0.0, %v1770
      %v1772 = vpop.f32.mrb[0].mxu0
      %1773 = vmatprep.mubr.f32.mxu0 %v1691
      %1774 = vmatmul.mubr.f32.gmra.mrb[0].mxu0 %v1690
      %v1775 = vpop.f32.mrb[0].mxu0
      %v1776 = vadd.f32 0.0, %v1775
      %v1777 = vpop.f32.mrb[0].mxu0
      %1778 = vmatprep.mubr.f32.mxu0 %v1693
      %1779 = vmatmul.mubr.f32.gmra.mrb[0].mxu0 %v1692
      %v1780 = vpop.f32.mrb[0].mxu0
      %v1781 = vadd.f32 0.0, %v1780
      %v1782 = vpop.f32.mrb[0].mxu0
      %1783 = vmatprep.mubr.f32.mxu0 %v1695
      %1784 = vmatmul.mubr.f32.gmra.mrb[0].mxu0 %v1694
      %v1785 = vpop.f32.mrb[0].mxu0
      %v1786 = vadd.f32 0.0, %v1785
      %v1787 = vpop.f32.mrb[0].mxu0
      %1788 = vmatprep.mubr.f32.mxu0 %v1697
      %1789 = vmatmul.mubr.f32.gmra.mrb[0].mxu0 %v1696
      %v1790 = vpop.f32.mrb[0].mxu0
      %v1791 = vadd.f32 0.0, %v1790
      %v1792 = vpop.f32.mrb[0].mxu0
      %1793 = vmatprep.mubr.f32.mxu0 %v1699
      %1794 = vmatmul.mubr.f32.gmra.mrb[0].mxu0 %v1698
      %v1795 = vpop.f32.mrb[0].mxu0
      %v1796 = vadd.f32 0.0, %v1795
      %v1797 = vpop.f32.mrb[0].mxu0
      %1798 = vmatprep.mubr.f32.mxu0 %v1701
      %1799 = vmatmul.mubr.f32.gmra.mrb[0].mxu0 %v1700
      %v1800 = vpop.f32.mrb[0].mxu0
      %v1801 = vadd.f32 0.0, %v1800
      %v1802 = vpop.f32.mrb[0].mxu0
      %1803 = vmatprep.mubr.f32.mxu0 %v1703
      %1804 = vmatmul.mubr.f32.gmra.mrb[0].mxu0 %v1702
      %v1805 = vpop.f32.mrb[0].mxu0
      %v1806 = vadd.f32 0.0, %v1805
      %v1807 = vpop.f32.mrb[0].mxu0
      %1808 = vdwg.mxu0
      %s1809 = scalar_lea.vmem %s3, 1152
      %v1810 = vld [vmem:[%s1809] sm:$0xff]
      %v1811 = vld [vmem:[%s1809 + $0x8] sm:$0xff]
      %v1812 = vld [vmem:[%s1809 + $0x10] sm:$0xff]
      %v1813 = vld [vmem:[%s1809 + $0x18] sm:$0xff]
      %v1814 = vld [vmem:[%s1809 + $0x20] sm:$0xff]
      %v1815 = vld [vmem:[%s1809 + $0x28] sm:$0xff]
      %v1816 = vld [vmem:[%s1809 + $0x30] sm:$0xff]
      %v1817 = vld [vmem:[%s1809 + $0x38] sm:$0xff]
      %v1818 = vld [vmem:[%s1809 + $0x40] sm:$0xff]
      %v1819 = vld [vmem:[%s1809 + $0x48] sm:$0xff]
      %v1820 = vld [vmem:[%s1809 + $0x50] sm:$0xff]
      %v1821 = vld [vmem:[%s1809 + $0x58] sm:$0xff]
      %v1822 = vld [vmem:[%s1809 + $0x60] sm:$0xff]
      %v1823 = vld [vmem:[%s1809 + $0x68] sm:$0xff]
      %v1824 = vld [vmem:[%s1809 + $0x70] sm:$0xff]
      %v1825 = vld [vmem:[%s1809 + $0x78] sm:$0xff]
      %1826 = vmatprep.subr.mxu0 0.0
      %1827 = vmatpush1.msra.mxu0 %v680
      %1828 = vmatprep.subr.mxu0 0.0
      %1829 = vmatpush1.msra.mxu0 %v681
      %1830 = vmatprep.subr.mxu0 0.0
      %1831 = vmatpush1.msra.mxu0 %v682
      %1832 = vmatprep.subr.mxu0 0.0
      %1833 = vmatpush1.msra.mxu0 %v683
      %1834 = vmatprep.subr.mxu0 0.0
      %1835 = vmatpush1.msra.mxu0 %v684
      %1836 = vmatprep.subr.mxu0 0.0
      %1837 = vmatpush1.msra.mxu0 %v685
      %1838 = vmatprep.subr.mxu0 0.0
      %1839 = vmatpush1.msra.mxu0 %v686
      %1840 = vmatprep.subr.mxu0 0.0
      %1841 = vmatpush1.msra.mxu0 %v687
      %1842 = vmatprep.subr.mxu0 0.0
      %1843 = vmatpush1.msra.mxu0 %v688
      %1844 = vmatprep.subr.mxu0 0.0
      %1845 = vmatpush1.msra.mxu0 %v689
      %1846 = vmatprep.subr.mxu0 0.0
      %1847 = vmatpush1.msra.mxu0 %v690
      %1848 = vmatprep.subr.mxu0 0.0
      %1849 = vmatpush1.msra.mxu0 %v691
      %1850 = vmatprep.subr.mxu0 0.0
      %1851 = vmatpush1.msra.mxu0 %v692
      %1852 = vmatprep.subr.mxu0 0.0
      %1853 = vmatpush1.msra.mxu0 %v693
      %1854 = vmatprep.subr.mxu0 0.0
      %1855 = vmatpush1.msra.mxu0 %v694
      %1856 = vmatprep.subr.mxu0 0.0
      %1857 = vmatpush1.msra.mxu0 %v695
      %1858 = vmatprep.subr.mxu0 0.0
      %1859 = vmatpush1.msra.mxu0 %v696
      %1860 = vmatprep.subr.mxu0 0.0
      %1861 = vmatpush1.msra.mxu0 %v697
      %1862 = vmatprep.subr.mxu0 0.0
      %1863 = vmatpush1.msra.mxu0 %v698
      %1864 = vmatprep.subr.mxu0 0.0
      %1865 = vmatpush1.msra.mxu0 %v699
      %1866 = vmatprep.subr.mxu0 0.0
      %1867 = vmatpush1.msra.mxu0 %v700
      %1868 = vmatprep.subr.mxu0 0.0
      %1869 = vmatpush1.msra.mxu0 %v701
      %1870 = vmatprep.subr.mxu0 0.0
      %1871 = vmatpush1.msra.mxu0 %v702
      %1872 = vmatprep.subr.mxu0 0.0
      %1873 = vmatpush1.msra.mxu0 %v703
      %1874 = vmatprep.subr.mxu0 0.0
      %1875 = vmatpush1.msra.mxu0 %v704
      %1876 = vmatprep.subr.mxu0 0.0
      %1877 = vmatpush1.msra.mxu0 %v705
      %1878 = vmatprep.subr.mxu0 0.0
      %1879 = vmatpush1.msra.mxu0 %v706
      %1880 = vmatprep.subr.mxu0 0.0
      %1881 = vmatpush1.msra.mxu0 %v707
      %1882 = vmatprep.subr.mxu0 0.0
      %1883 = vmatpush1.msra.mxu0 %v708
      %1884 = vmatprep.subr.mxu0 0.0
      %1885 = vmatpush1.msra.mxu0 %v709
      %1886 = vmatprep.subr.mxu0 0.0
      %1887 = vmatpush1.msra.mxu0 %v710
      %1888 = vmatprep.subr.mxu0 0.0
      %1889 = vmatpush1.msra.mxu0 %v711
      %1890 = vmatprep.mubr.f32.mxu0 %v1811
      %1891 = vmatmul.mubr.f32.gmra.mrb[0].mxu0 %v1810
      %v1892 = vpop.f32.mrb[0].mxu0
      %v1893 = vadd.f32 0.0, %v1892
      %v1894 = vpop.f32.mrb[0].mxu0
      %1895 = vmatprep.mubr.f32.mxu0 %v1813
      %1896 = vmatmul.mubr.f32.gmra.mrb[0].mxu0 %v1812
      %v1897 = vpop.f32.mrb[0].mxu0
      %v1898 = vadd.f32 0.0, %v1897
      %v1899 = vpop.f32.mrb[0].mxu0
      %1900 = vmatprep.mubr.f32.mxu0 %v1815
      %1901 = vmatmul.mubr.f32.gmra.mrb[0].mxu0 %v1814
      %v1902 = vpop.f32.mrb[0].mxu0
      %v1903 = vadd.f32 0.0, %v1902
      %v1904 = vpop.f32.mrb[0].mxu0
      %1905 = vmatprep.mubr.f32.mxu0 %v1817
      %1906 = vmatmul.mubr.f32.gmra.mrb[0].mxu0 %v1816
      %v1907 = vpop.f32.mrb[0].mxu0
      %v1908 = vadd.f32 0.0, %v1907
      %v1909 = vpop.f32.mrb[0].mxu0
      %1910 = vmatprep.mubr.f32.mxu0 %v1819
      %1911 = vmatmul.mubr.f32.gmra.mrb[0].mxu0 %v1818
      %v1912 = vpop.f32.mrb[0].mxu0
      %v1913 = vadd.f32 0.0, %v1912
      %v1914 = vpop.f32.mrb[0].mxu0
      %1915 = vmatprep.mubr.f32.mxu0 %v1821
      %1916 = vmatmul.mubr.f32.gmra.mrb[0].mxu0 %v1820
      %v1917 = vpop.f32.mrb[0].mxu0
      %v1918 = vadd.f32 0.0, %v1917
      %v1919 = vpop.f32.mrb[0].mxu0
      %1920 = vmatprep.mubr.f32.mxu0 %v1823
      %1921 = vmatmul.mubr.f32.gmra.mrb[0].mxu0 %v1822
      %v1922 = vpop.f32.mrb[0].mxu0
      %v1923 = vadd.f32 0.0, %v1922
      %v1924 = vpop.f32.mrb[0].mxu0
      %1925 = vmatprep.mubr.f32.mxu0 %v1825
      %1926 = vmatmul.mubr.f32.gmra.mrb[0].mxu0 %v1824
      %v1927 = vpop.f32.mrb[0].mxu0
      %v1928 = vadd.f32 0.0, %v1927
      %v1929 = vpop.f32.mrb[0].mxu0
      %1930 = vdwg.mxu0
      %s1931 = scalar_lea.vmem %s3, 1280
      %v1932 = vld [vmem:[%s1931] sm:$0xff]
      %v1933 = vld [vmem:[%s1931 + $0x8] sm:$0xff]
      %v1934 = vld [vmem:[%s1931 + $0x10] sm:$0xff]
      %v1935 = vld [vmem:[%s1931 + $0x18] sm:$0xff]
      %v1936 = vld [vmem:[%s1931 + $0x20] sm:$0xff]
      %v1937 = vld [vmem:[%s1931 + $0x28] sm:$0xff]
      %v1938 = vld [vmem:[%s1931 + $0x30] sm:$0xff]
      %v1939 = vld [vmem:[%s1931 + $0x38] sm:$0xff]
      %v1940 = vld [vmem:[%s1931 + $0x40] sm:$0xff]
      %v1941 = vld [vmem:[%s1931 + $0x48] sm:$0xff]
      %v1942 = vld [vmem:[%s1931 + $0x50] sm:$0xff]
      %v1943 = vld [vmem:[%s1931 + $0x58] sm:$0xff]
      %v1944 = vld [vmem:[%s1931 + $0x60] sm:$0xff]
      %v1945 = vld [vmem:[%s1931 + $0x68] sm:$0xff]
      %v1946 = vld [vmem:[%s1931 + $0x70] sm:$0xff]
      %v1947 = vld [vmem:[%s1931 + $0x78] sm:$0xff]
      %1948 = vmatprep.subr.mxu0 0.0
      %1949 = vmatpush1.msra.mxu0 %v680
      %1950 = vmatprep.subr.mxu0 0.0
      %1951 = vmatpush1.msra.mxu0 %v681
      %1952 = vmatprep.subr.mxu0 0.0
      %1953 = vmatpush1.msra.mxu0 %v682
      %1954 = vmatprep.subr.mxu0 0.0
      %1955 = vmatpush1.msra.mxu0 %v683
      %1956 = vmatprep.subr.mxu0 0.0
      %1957 = vmatpush1.msra.mxu0 %v684
      %1958 = vmatprep.subr.mxu0 0.0
      %1959 = vmatpush1.msra.mxu0 %v685
      %1960 = vmatprep.subr.mxu0 0.0
      %1961 = vmatpush1.msra.mxu0 %v686
      %1962 = vmatprep.subr.mxu0 0.0
      %1963 = vmatpush1.msra.mxu0 %v687
      %1964 = vmatprep.subr.mxu0 0.0
      %1965 = vmatpush1.msra.mxu0 %v688
      %1966 = vmatprep.subr.mxu0 0.0
      %1967 = vmatpush1.msra.mxu0 %v689
      %1968 = vmatprep.subr.mxu0 0.0
      %1969 = vmatpush1.msra.mxu0 %v690
      %1970 = vmatprep.subr.mxu0 0.0
      %1971 = vmatpush1.msra.mxu0 %v691
      %1972 = vmatprep.subr.mxu0 0.0
      %1973 = vmatpush1.msra.mxu0 %v692
      %1974 = vmatprep.subr.mxu0 0.0
      %1975 = vmatpush1.msra.mxu0 %v693
      %1976 = vmatprep.subr.mxu0 0.0
      %1977 = vmatpush1.msra.mxu0 %v694
      %1978 = vmatprep.subr.mxu0 0.0
      %1979 = vmatpush1.msra.mxu0 %v695
      %1980 = vmatprep.subr.mxu0 0.0
      %1981 = vmatpush1.msra.mxu0 %v696
      %1982 = vmatprep.subr.mxu0 0.0
      %1983 = vmatpush1.msra.mxu0 %v697
      %1984 = vmatprep.subr.mxu0 0.0
      %1985 = vmatpush1.msra.mxu0 %v698
      %1986 = vmatprep.subr.mxu0 0.0
      %1987 = vmatpush1.msra.mxu0 %v699
      %1988 = vmatprep.subr.mxu0 0.0
      %1989 = vmatpush1.msra.mxu0 %v700
      %1990 = vmatprep.subr.mxu0 0.0
      %1991 = vmatpush1.msra.mxu0 %v701
      %1992 = vmatprep.subr.mxu0 0.0
      %1993 = vmatpush1.msra.mxu0 %v702
      %1994 = vmatprep.subr.mxu0 0.0
      %1995 = vmatpush1.msra.mxu0 %v703
      %1996 = vmatprep.subr.mxu0 0.0
      %1997 = vmatpush1.msra.mxu0 %v704
      %1998 = vmatprep.subr.mxu0 0.0
      %1999 = vmatpush1.msra.mxu0 %v705
      %2000 = vmatprep.subr.mxu0 0.0
      %2001 = vmatpush1.msra.mxu0 %v706
      %2002 = vmatprep.subr.mxu0 0.0
      %2003 = vmatpush1.msra.mxu0 %v707
      %2004 = vmatprep.subr.mxu0 0.0
      %2005 = vmatpush1.msra.mxu0 %v708
      %2006 = vmatprep.subr.mxu0 0.0
      %2007 = vmatpush1.msra.mxu0 %v709
      %2008 = vmatprep.subr.mxu0 0.0
      %2009 = vmatpush1.msra.mxu0 %v710
      %2010 = vmatprep.subr.mxu0 0.0
      %2011 = vmatpush1.msra.mxu0 %v711
      %2012 = vmatprep.mubr.f32.mxu0 %v1933
      %2013 = vmatmul.mubr.f32.gmra.mrb[0].mxu0 %v1932
      %v2014 = vpop.f32.mrb[0].mxu0
      %v2015 = vadd.f32 0.0, %v2014
      %v2016 = vpop.f32.mrb[0].mxu0
      %2017 = vmatprep.mubr.f32.mxu0 %v1935
      %2018 = vmatmul.mubr.f32.gmra.mrb[0].mxu0 %v1934
      %v2019 = vpop.f32.mrb[0].mxu0
      %v2020 = vadd.f32 0.0, %v2019
      %v2021 = vpop.f32.mrb[0].mxu0
      %2022 = vmatprep.mubr.f32.mxu0 %v1937
      %2023 = vmatmul.mubr.f32.gmra.mrb[0].mxu0 %v1936
      %v2024 = vpop.f32.mrb[0].mxu0
      %v2025 = vadd.f32 0.0, %v2024
      %v2026 = vpop.f32.mrb[0].mxu0
      %2027 = vmatprep.mubr.f32.mxu0 %v1939
      %2028 = vmatmul.mubr.f32.gmra.mrb[0].mxu0 %v1938
      %v2029 = vpop.f32.mrb[0].mxu0
      %v2030 = vadd.f32 0.0, %v2029
      %v2031 = vpop.f32.mrb[0].mxu0
      %2032 = vmatprep.mubr.f32.mxu0 %v1941
      %2033 = vmatmul.mubr.f32.gmra.mrb[0].mxu0 %v1940
      %v2034 = vpop.f32.mrb[0].mxu0
      %v2035 = vadd.f32 0.0, %v2034
      %v2036 = vpop.f32.mrb[0].mxu0
      %2037 = vmatprep.mubr.f32.mxu0 %v1943
      %2038 = vmatmul.mubr.f32.gmra.mrb[0].mxu0 %v1942
      %v2039 = vpop.f32.mrb[0].mxu0
      %v2040 = vadd.f32 0.0, %v2039
      %v2041 = vpop.f32.mrb[0].mxu0
      %2042 = vmatprep.mubr.f32.mxu0 %v1945
      %2043 = vmatmul.mubr.f32.gmra.mrb[0].mxu0 %v1944
      %v2044 = vpop.f32.mrb[0].mxu0
      %v2045 = vadd.f32 0.0, %v2044
      %v2046 = vpop.f32.mrb[0].mxu0
      %2047 = vmatprep.mubr.f32.mxu0 %v1947
      %2048 = vmatmul.mubr.f32.gmra.mrb[0].mxu0 %v1946
      %v2049 = vpop.f32.mrb[0].mxu0
      %v2050 = vadd.f32 0.0, %v2049
      %v2051 = vpop.f32.mrb[0].mxu0
      %2052 = vdwg.mxu0
      %s2053 = scalar_lea.vmem %s3, 1408
      %v2054 = vld [vmem:[%s2053] sm:$0xff]
      %v2055 = vld [vmem:[%s2053 + $0x8] sm:$0xff]
      %v2056 = vld [vmem:[%s2053 + $0x10] sm:$0xff]
      %v2057 = vld [vmem:[%s2053 + $0x18] sm:$0xff]
      %v2058 = vld [vmem:[%s2053 + $0x20] sm:$0xff]
      %v2059 = vld [vmem:[%s2053 + $0x28] sm:$0xff]
      %v2060 = vld [vmem:[%s2053 + $0x30] sm:$0xff]
      %v2061 = vld [vmem:[%s2053 + $0x38] sm:$0xff]
      %v2062 = vld [vmem:[%s2053 + $0x40] sm:$0xff]
      %v2063 = vld [vmem:[%s2053 + $0x48] sm:$0xff]
      %v2064 = vld [vmem:[%s2053 + $0x50] sm:$0xff]
      %v2065 = vld [vmem:[%s2053 + $0x58] sm:$0xff]
      %v2066 = vld [vmem:[%s2053 + $0x60] sm:$0xff]
      %v2067 = vld [vmem:[%s2053 + $0x68] sm:$0xff]
      %v2068 = vld [vmem:[%s2053 + $0x70] sm:$0xff]
      %v2069 = vld [vmem:[%s2053 + $0x78] sm:$0xff]
      %2070 = vmatprep.subr.mxu0 0.0
      %2071 = vmatpush1.msra.mxu0 %v680
      %2072 = vmatprep.subr.mxu0 0.0
      %2073 = vmatpush1.msra.mxu0 %v681
      %2074 = vmatprep.subr.mxu0 0.0
      %2075 = vmatpush1.msra.mxu0 %v682
      %2076 = vmatprep.subr.mxu0 0.0
      %2077 = vmatpush1.msra.mxu0 %v683
      %2078 = vmatprep.subr.mxu0 0.0
      %2079 = vmatpush1.msra.mxu0 %v684
      %2080 = vmatprep.subr.mxu0 0.0
      %2081 = vmatpush1.msra.mxu0 %v685
      %2082 = vmatprep.subr.mxu0 0.0
      %2083 = vmatpush1.msra.mxu0 %v686
      %2084 = vmatprep.subr.mxu0 0.0
      %2085 = vmatpush1.msra.mxu0 %v687
      %2086 = vmatprep.subr.mxu0 0.0
      %2087 = vmatpush1.msra.mxu0 %v688
      %2088 = vmatprep.subr.mxu0 0.0
      %2089 = vmatpush1.msra.mxu0 %v689
      %2090 = vmatprep.subr.mxu0 0.0
      %2091 = vmatpush1.msra.mxu0 %v690
      %2092 = vmatprep.subr.mxu0 0.0
      %2093 = vmatpush1.msra.mxu0 %v691
      %2094 = vmatprep.subr.mxu0 0.0
      %2095 = vmatpush1.msra.mxu0 %v692
      %2096 = vmatprep.subr.mxu0 0.0
      %2097 = vmatpush1.msra.mxu0 %v693
      %2098 = vmatprep.subr.mxu0 0.0
      %2099 = vmatpush1.msra.mxu0 %v694
      %2100 = vmatprep.subr.mxu0 0.0
      %2101 = vmatpush1.msra.mxu0 %v695
      %2102 = vmatprep.subr.mxu0 0.0
      %2103 = vmatpush1.msra.mxu0 %v696
      %2104 = vmatprep.subr.mxu0 0.0
      %2105 = vmatpush1.msra.mxu0 %v697
      %2106 = vmatprep.subr.mxu0 0.0
      %2107 = vmatpush1.msra.mxu0 %v698
      %2108 = vmatprep.subr.mxu0 0.0
      %2109 = vmatpush1.msra.mxu0 %v699
      %2110 = vmatprep.subr.mxu0 0.0
      %2111 = vmatpush1.msra.mxu0 %v700
      %2112 = vmatprep.subr.mxu0 0.0
      %2113 = vmatpush1.msra.mxu0 %v701
      %2114 = vmatprep.subr.mxu0 0.0
      %2115 = vmatpush1.msra.mxu0 %v702
      %2116 = vmatprep.subr.mxu0 0.0
      %2117 = vmatpush1.msra.mxu0 %v703
      %2118 = vmatprep.subr.mxu0 0.0
      %2119 = vmatpush1.msra.mxu0 %v704
      %2120 = vmatprep.subr.mxu0 0.0
      %2121 = vmatpush1.msra.mxu0 %v705
      %2122 = vmatprep.subr.mxu0 0.0
      %2123 = vmatpush1.msra.mxu0 %v706
      %2124 = vmatprep.subr.mxu0 0.0
      %2125 = vmatpush1.msra.mxu0 %v707
      %2126 = vmatprep.subr.mxu0 0.0
      %2127 = vmatpush1.msra.mxu0 %v708
      %2128 = vmatprep.subr.mxu0 0.0
      %2129 = vmatpush1.msra.mxu0 %v709
      %2130 = vmatprep.subr.mxu0 0.0
      %2131 = vmatpush1.msra.mxu0 %v710
      %2132 = vmatprep.subr.mxu0 0.0
      %2133 = vmatpush1.msra.mxu0 %v711
      %2134 = vmatprep.mubr.f32.mxu0 %v2055
      %2135 = vmatmul.mubr.f32.gmra.mrb[0].mxu0 %v2054
      %v2136 = vpop.f32.mrb[0].mxu0
      %v2137 = vadd.f32 0.0, %v2136
      %v2138 = vpop.f32.mrb[0].mxu0
      %2139 = vmatprep.mubr.f32.mxu0 %v2057
      %2140 = vmatmul.mubr.f32.gmra.mrb[0].mxu0 %v2056
      %v2141 = vpop.f32.mrb[0].mxu0
      %v2142 = vadd.f32 0.0, %v2141
      %v2143 = vpop.f32.mrb[0].mxu0
      %2144 = vmatprep.mubr.f32.mxu0 %v2059
      %2145 = vmatmul.mubr.f32.gmra.mrb[0].mxu0 %v2058
      %v2146 = vpop.f32.mrb[0].mxu0
      %v2147 = vadd.f32 0.0, %v2146
      %v2148 = vpop.f32.mrb[0].mxu0
      %2149 = vmatprep.mubr.f32.mxu0 %v2061
      %2150 = vmatmul.mubr.f32.gmra.mrb[0].mxu0 %v2060
      %v2151 = vpop.f32.mrb[0].mxu0
      %v2152 = vadd.f32 0.0, %v2151
      %v2153 = vpop.f32.mrb[0].mxu0
      %2154 = vmatprep.mubr.f32.mxu0 %v2063
      %2155 = vmatmul.mubr.f32.gmra.mrb[0].mxu0 %v2062
      %v2156 = vpop.f32.mrb[0].mxu0
      %v2157 = vadd.f32 0.0, %v2156
      %v2158 = vpop.f32.mrb[0].mxu0
      %2159 = vmatprep.mubr.f32.mxu0 %v2065
      %2160 = vmatmul.mubr.f32.gmra.mrb[0].mxu0 %v2064
      %v2161 = vpop.f32.mrb[0].mxu0
      %v2162 = vadd.f32 0.0, %v2161
      %v2163 = vpop.f32.mrb[0].mxu0
      %2164 = vmatprep.mubr.f32.mxu0 %v2067
      %2165 = vmatmul.mubr.f32.gmra.mrb[0].mxu0 %v2066
      %v2166 = vpop.f32.mrb[0].mxu0
      %v2167 = vadd.f32 0.0, %v2166
      %v2168 = vpop.f32.mrb[0].mxu0
      %2169 = vmatprep.mubr.f32.mxu0 %v2069
      %2170 = vmatmul.mubr.f32.gmra.mrb[0].mxu0 %v2068
      %v2171 = vpop.f32.mrb[0].mxu0
      %v2172 = vadd.f32 0.0, %v2171
      %v2173 = vpop.f32.mrb[0].mxu0
      %2174 = vdwg.mxu0
      %s2175 = scalar_lea.vmem %s3, 1536
      %v2176 = vld [vmem:[%s2175] sm:$0xff]
      %v2177 = vld [vmem:[%s2175 + $0x8] sm:$0xff]
      %v2178 = vld [vmem:[%s2175 + $0x10] sm:$0xff]
      %v2179 = vld [vmem:[%s2175 + $0x18] sm:$0xff]
      %v2180 = vld [vmem:[%s2175 + $0x20] sm:$0xff]
      %v2181 = vld [vmem:[%s2175 + $0x28] sm:$0xff]
      %v2182 = vld [vmem:[%s2175 + $0x30] sm:$0xff]
      %v2183 = vld [vmem:[%s2175 + $0x38] sm:$0xff]
      %v2184 = vld [vmem:[%s2175 + $0x40] sm:$0xff]
      %v2185 = vld [vmem:[%s2175 + $0x48] sm:$0xff]
      %v2186 = vld [vmem:[%s2175 + $0x50] sm:$0xff]
      %v2187 = vld [vmem:[%s2175 + $0x58] sm:$0xff]
      %v2188 = vld [vmem:[%s2175 + $0x60] sm:$0xff]
      %v2189 = vld [vmem:[%s2175 + $0x68] sm:$0xff]
      %v2190 = vld [vmem:[%s2175 + $0x70] sm:$0xff]
      %v2191 = vld [vmem:[%s2175 + $0x78] sm:$0xff]
      %2192 = vmatprep.subr.mxu0 0.0
      %2193 = vmatpush1.msra.mxu0 %v680
      %2194 = vmatprep.subr.mxu0 0.0
      %2195 = vmatpush1.msra.mxu0 %v681
      %2196 = vmatprep.subr.mxu0 0.0
      %2197 = vmatpush1.msra.mxu0 %v682
      %2198 = vmatprep.subr.mxu0 0.0
      %2199 = vmatpush1.msra.mxu0 %v683
      %2200 = vmatprep.subr.mxu0 0.0
      %2201 = vmatpush1.msra.mxu0 %v684
      %2202 = vmatprep.subr.mxu0 0.0
      %2203 = vmatpush1.msra.mxu0 %v685
      %2204 = vmatprep.subr.mxu0 0.0
      %2205 = vmatpush1.msra.mxu0 %v686
      %2206 = vmatprep.subr.mxu0 0.0
      %2207 = vmatpush1.msra.mxu0 %v687
      %2208 = vmatprep.subr.mxu0 0.0
      %2209 = vmatpush1.msra.mxu0 %v688
      %2210 = vmatprep.subr.mxu0 0.0
      %2211 = vmatpush1.msra.mxu0 %v689
      %2212 = vmatprep.subr.mxu0 0.0
      %2213 = vmatpush1.msra.mxu0 %v690
      %2214 = vmatprep.subr.mxu0 0.0
      %2215 = vmatpush1.msra.mxu0 %v691
      %2216 = vmatprep.subr.mxu0 0.0
      %2217 = vmatpush1.msra.mxu0 %v692
      %2218 = vmatprep.subr.mxu0 0.0
      %2219 = vmatpush1.msra.mxu0 %v693
      %2220 = vmatprep.subr.mxu0 0.0
      %2221 = vmatpush1.msra.mxu0 %v694
      %2222 = vmatprep.subr.mxu0 0.0
      %2223 = vmatpush1.msra.mxu0 %v695
      %2224 = vmatprep.subr.mxu0 0.0
      %2225 = vmatpush1.msra.mxu0 %v696
      %2226 = vmatprep.subr.mxu0 0.0
      %2227 = vmatpush1.msra.mxu0 %v697
      %2228 = vmatprep.subr.mxu0 0.0
      %2229 = vmatpush1.msra.mxu0 %v698
      %2230 = vmatprep.subr.mxu0 0.0
      %2231 = vmatpush1.msra.mxu0 %v699
      %2232 = vmatprep.subr.mxu0 0.0
      %2233 = vmatpush1.msra.mxu0 %v700
      %2234 = vmatprep.subr.mxu0 0.0
      %2235 = vmatpush1.msra.mxu0 %v701
      %2236 = vmatprep.subr.mxu0 0.0
      %2237 = vmatpush1.msra.mxu0 %v702
      %2238 = vmatprep.subr.mxu0 0.0
      %2239 = vmatpush1.msra.mxu0 %v703
      %2240 = vmatprep.subr.mxu0 0.0
      %2241 = vmatpush1.msra.mxu0 %v704
      %2242 = vmatprep.subr.mxu0 0.0
      %2243 = vmatpush1.msra.mxu0 %v705
      %2244 = vmatprep.subr.mxu0 0.0
      %2245 = vmatpush1.msra.mxu0 %v706
      %2246 = vmatprep.subr.mxu0 0.0
      %2247 = vmatpush1.msra.mxu0 %v707
      %2248 = vmatprep.subr.mxu0 0.0
      %2249 = vmatpush1.msra.mxu0 %v708
      %2250 = vmatprep.subr.mxu0 0.0
      %2251 = vmatpush1.msra.mxu0 %v709
      %2252 = vmatprep.subr.mxu0 0.0
      %2253 = vmatpush1.msra.mxu0 %v710
      %2254 = vmatprep.subr.mxu0 0.0
      %2255 = vmatpush1.msra.mxu0 %v711
      %2256 = vmatprep.mubr.f32.mxu0 %v2177
      %2257 = vmatmul.mubr.f32.gmra.mrb[0].mxu0 %v2176
      %v2258 = vpop.f32.mrb[0].mxu0
      %v2259 = vadd.f32 0.0, %v2258
      %v2260 = vpop.f32.mrb[0].mxu0
      %2261 = vmatprep.mubr.f32.mxu0 %v2179
      %2262 = vmatmul.mubr.f32.gmra.mrb[0].mxu0 %v2178
      %v2263 = vpop.f32.mrb[0].mxu0
      %v2264 = vadd.f32 0.0, %v2263
      %v2265 = vpop.f32.mrb[0].mxu0
      %2266 = vmatprep.mubr.f32.mxu0 %v2181
      %2267 = vmatmul.mubr.f32.gmra.mrb[0].mxu0 %v2180
      %v2268 = vpop.f32.mrb[0].mxu0
      %v2269 = vadd.f32 0.0, %v2268
      %v2270 = vpop.f32.mrb[0].mxu0
      %2271 = vmatprep.mubr.f32.mxu0 %v2183
      %2272 = vmatmul.mubr.f32.gmra.mrb[0].mxu0 %v2182
      %v2273 = vpop.f32.mrb[0].mxu0
      %v2274 = vadd.f32 0.0, %v2273
      %v2275 = vpop.f32.mrb[0].mxu0
      %2276 = vmatprep.mubr.f32.mxu0 %v2185
      %2277 = vmatmul.mubr.f32.gmra.mrb[0].mxu0 %v2184
      %v2278 = vpop.f32.mrb[0].mxu0
      %v2279 = vadd.f32 0.0, %v2278
      %v2280 = vpop.f32.mrb[0].mxu0
      %2281 = vmatprep.mubr.f32.mxu0 %v2187
      %2282 = vmatmul.mubr.f32.gmra.mrb[0].mxu0 %v2186
      %v2283 = vpop.f32.mrb[0].mxu0
      %v2284 = vadd.f32 0.0, %v2283
      %v2285 = vpop.f32.mrb[0].mxu0
      %2286 = vmatprep.mubr.f32.mxu0 %v2189
      %2287 = vmatmul.mubr.f32.gmra.mrb[0].mxu0 %v2188
      %v2288 = vpop.f32.mrb[0].mxu0
      %v2289 = vadd.f32 0.0, %v2288
      %v2290 = vpop.f32.mrb[0].mxu0
      %2291 = vmatprep.mubr.f32.mxu0 %v2191
      %2292 = vmatmul.mubr.f32.gmra.mrb[0].mxu0 %v2190
      %v2293 = vpop.f32.mrb[0].mxu0
      %v2294 = vadd.f32 0.0, %v2293
      %v2295 = vpop.f32.mrb[0].mxu0
      %2296 = vdwg.mxu0
      %s2297 = scalar_lea.vmem %s3, 1664
      %v2298 = vld [vmem:[%s2297] sm:$0xff]
      %v2299 = vld [vmem:[%s2297 + $0x8] sm:$0xff]
      %v2300 = vld [vmem:[%s2297 + $0x10] sm:$0xff]
      %v2301 = vld [vmem:[%s2297 + $0x18] sm:$0xff]
      %v2302 = vld [vmem:[%s2297 + $0x20] sm:$0xff]
      %v2303 = vld [vmem:[%s2297 + $0x28] sm:$0xff]
      %v2304 = vld [vmem:[%s2297 + $0x30] sm:$0xff]
      %v2305 = vld [vmem:[%s2297 + $0x38] sm:$0xff]
      %v2306 = vld [vmem:[%s2297 + $0x40] sm:$0xff]
      %v2307 = vld [vmem:[%s2297 + $0x48] sm:$0xff]
      %v2308 = vld [vmem:[%s2297 + $0x50] sm:$0xff]
      %v2309 = vld [vmem:[%s2297 + $0x58] sm:$0xff]
      %v2310 = vld [vmem:[%s2297 + $0x60] sm:$0xff]
      %v2311 = vld [vmem:[%s2297 + $0x68] sm:$0xff]
      %v2312 = vld [vmem:[%s2297 + $0x70] sm:$0xff]
      %v2313 = vld [vmem:[%s2297 + $0x78] sm:$0xff]
      %2314 = vmatprep.subr.mxu0 0.0
      %2315 = vmatpush1.msra.mxu0 %v680
      %2316 = vmatprep.subr.mxu0 0.0
      %2317 = vmatpush1.msra.mxu0 %v681
      %2318 = vmatprep.subr.mxu0 0.0
      %2319 = vmatpush1.msra.mxu0 %v682
      %2320 = vmatprep.subr.mxu0 0.0
      %2321 = vmatpush1.msra.mxu0 %v683
      %2322 = vmatprep.subr.mxu0 0.0
      %2323 = vmatpush1.msra.mxu0 %v684
      %2324 = vmatprep.subr.mxu0 0.0
      %2325 = vmatpush1.msra.mxu0 %v685
      %2326 = vmatprep.subr.mxu0 0.0
      %2327 = vmatpush1.msra.mxu0 %v686
      %2328 = vmatprep.subr.mxu0 0.0
      %2329 = vmatpush1.msra.mxu0 %v687
      %2330 = vmatprep.subr.mxu0 0.0
      %2331 = vmatpush1.msra.mxu0 %v688
      %2332 = vmatprep.subr.mxu0 0.0
      %2333 = vmatpush1.msra.mxu0 %v689
      %2334 = vmatprep.subr.mxu0 0.0
      %2335 = vmatpush1.msra.mxu0 %v690
      %2336 = vmatprep.subr.mxu0 0.0
      %2337 = vmatpush1.msra.mxu0 %v691
      %2338 = vmatprep.subr.mxu0 0.0
      %2339 = vmatpush1.msra.mxu0 %v692
      %2340 = vmatprep.subr.mxu0 0.0
      %2341 = vmatpush1.msra.mxu0 %v693
      %2342 = vmatprep.subr.mxu0 0.0
      %2343 = vmatpush1.msra.mxu0 %v694
      %2344 = vmatprep.subr.mxu0 0.0
      %2345 = vmatpush1.msra.mxu0 %v695
      %2346 = vmatprep.subr.mxu0 0.0
      %2347 = vmatpush1.msra.mxu0 %v696
      %2348 = vmatprep.subr.mxu0 0.0
      %2349 = vmatpush1.msra.mxu0 %v697
      %2350 = vmatprep.subr.mxu0 0.0
      %2351 = vmatpush1.msra.mxu0 %v698
      %2352 = vmatprep.subr.mxu0 0.0
      %2353 = vmatpush1.msra.mxu0 %v699
      %2354 = vmatprep.subr.mxu0 0.0
      %2355 = vmatpush1.msra.mxu0 %v700
      %2356 = vmatprep.subr.mxu0 0.0
      %2357 = vmatpush1.msra.mxu0 %v701
      %2358 = vmatprep.subr.mxu0 0.0
      %2359 = vmatpush1.msra.mxu0 %v702
      %2360 = vmatprep.subr.mxu0 0.0
      %2361 = vmatpush1.msra.mxu0 %v703
      %2362 = vmatprep.subr.mxu0 0.0
      %2363 = vmatpush1.msra.mxu0 %v704
      %2364 = vmatprep.subr.mxu0 0.0
      %2365 = vmatpush1.msra.mxu0 %v705
      %2366 = vmatprep.subr.mxu0 0.0
      %2367 = vmatpush1.msra.mxu0 %v706
      %2368 = vmatprep.subr.mxu0 0.0
      %2369 = vmatpush1.msra.mxu0 %v707
      %2370 = vmatprep.subr.mxu0 0.0
      %2371 = vmatpush1.msra.mxu0 %v708
      %2372 = vmatprep.subr.mxu0 0.0
      %2373 = vmatpush1.msra.mxu0 %v709
      %2374 = vmatprep.subr.mxu0 0.0
      %2375 = vmatpush1.msra.mxu0 %v710
      %2376 = vmatprep.subr.mxu0 0.0
      %2377 = vmatpush1.msra.mxu0 %v711
      %2378 = vmatprep.mubr.f32.mxu0 %v2299
      %2379 = vmatmul.mubr.f32.gmra.mrb[0].mxu0 %v2298
      %v2380 = vpop.f32.mrb[0].mxu0
      %v2381 = vadd.f32 0.0, %v2380
      %v2382 = vpop.f32.mrb[0].mxu0
      %2383 = vmatprep.mubr.f32.mxu0 %v2301
      %2384 = vmatmul.mubr.f32.gmra.mrb[0].mxu0 %v2300
      %v2385 = vpop.f32.mrb[0].mxu0
      %v2386 = vadd.f32 0.0, %v2385
      %v2387 = vpop.f32.mrb[0].mxu0
      %2388 = vmatprep.mubr.f32.mxu0 %v2303
      %2389 = vmatmul.mubr.f32.gmra.mrb[0].mxu0 %v2302
      %v2390 = vpop.f32.mrb[0].mxu0
      %v2391 = vadd.f32 0.0, %v2390
      %v2392 = vpop.f32.mrb[0].mxu0
      %2393 = vmatprep.mubr.f32.mxu0 %v2305
      %2394 = vmatmul.mubr.f32.gmra.mrb[0].mxu0 %v2304
      %v2395 = vpop.f32.mrb[0].mxu0
      %v2396 = vadd.f32 0.0, %v2395
      %v2397 = vpop.f32.mrb[0].mxu0
      %2398 = vmatprep.mubr.f32.mxu0 %v2307
      %2399 = vmatmul.mubr.f32.gmra.mrb[0].mxu0 %v2306
      %v2400 = vpop.f32.mrb[0].mxu0
      %v2401 = vadd.f32 0.0, %v2400
      %v2402 = vpop.f32.mrb[0].mxu0
      %2403 = vmatprep.mubr.f32.mxu0 %v2309
      %2404 = vmatmul.mubr.f32.gmra.mrb[0].mxu0 %v2308
      %v2405 = vpop.f32.mrb[0].mxu0
      %v2406 = vadd.f32 0.0, %v2405
      %v2407 = vpop.f32.mrb[0].mxu0
      %2408 = vmatprep.mubr.f32.mxu0 %v2311
      %2409 = vmatmul.mubr.f32.gmra.mrb[0].mxu0 %v2310
      %v2410 = vpop.f32.mrb[0].mxu0
      %v2411 = vadd.f32 0.0, %v2410
      %v2412 = vpop.f32.mrb[0].mxu0
      %2413 = vmatprep.mubr.f32.mxu0 %v2313
      %2414 = vmatmul.mubr.f32.gmra.mrb[0].mxu0 %v2312
      %v2415 = vpop.f32.mrb[0].mxu0
      %v2416 = vadd.f32 0.0, %v2415
      %v2417 = vpop.f32.mrb[0].mxu0
      %2418 = vdwg.mxu0
      %s2419 = scalar_lea.vmem %s3, 1792
      %v2420 = vld [vmem:[%s2419] sm:$0xff]
      %v2421 = vld [vmem:[%s2419 + $0x8] sm:$0xff]
      %v2422 = vld [vmem:[%s2419 + $0x10] sm:$0xff]
      %v2423 = vld [vmem:[%s2419 + $0x18] sm:$0xff]
      %v2424 = vld [vmem:[%s2419 + $0x20] sm:$0xff]
      %v2425 = vld [vmem:[%s2419 + $0x28] sm:$0xff]
      %v2426 = vld [vmem:[%s2419 + $0x30] sm:$0xff]
      %v2427 = vld [vmem:[%s2419 + $0x38] sm:$0xff]
      %v2428 = vld [vmem:[%s2419 + $0x40] sm:$0xff]
      %v2429 = vld [vmem:[%s2419 + $0x48] sm:$0xff]
      %v2430 = vld [vmem:[%s2419 + $0x50] sm:$0xff]
      %v2431 = vld [vmem:[%s2419 + $0x58] sm:$0xff]
      %v2432 = vld [vmem:[%s2419 + $0x60] sm:$0xff]
      %v2433 = vld [vmem:[%s2419 + $0x68] sm:$0xff]
      %v2434 = vld [vmem:[%s2419 + $0x70] sm:$0xff]
      %v2435 = vld [vmem:[%s2419 + $0x78] sm:$0xff]
      %2436 = vmatprep.subr.mxu0 0.0
      %2437 = vmatpush1.msra.mxu0 %v680
      %2438 = vmatprep.subr.mxu0 0.0
      %2439 = vmatpush1.msra.mxu0 %v681
      %2440 = vmatprep.subr.mxu0 0.0
      %2441 = vmatpush1.msra.mxu0 %v682
      %2442 = vmatprep.subr.mxu0 0.0
      %2443 = vmatpush1.msra.mxu0 %v683
      %2444 = vmatprep.subr.mxu0 0.0
      %2445 = vmatpush1.msra.mxu0 %v684
      %2446 = vmatprep.subr.mxu0 0.0
      %2447 = vmatpush1.msra.mxu0 %v685
      %2448 = vmatprep.subr.mxu0 0.0
      %2449 = vmatpush1.msra.mxu0 %v686
      %2450 = vmatprep.subr.mxu0 0.0
      %2451 = vmatpush1.msra.mxu0 %v687
      %2452 = vmatprep.subr.mxu0 0.0
      %2453 = vmatpush1.msra.mxu0 %v688
      %2454 = vmatprep.subr.mxu0 0.0
      %2455 = vmatpush1.msra.mxu0 %v689
      %2456 = vmatprep.subr.mxu0 0.0
      %2457 = vmatpush1.msra.mxu0 %v690
      %2458 = vmatprep.subr.mxu0 0.0
      %2459 = vmatpush1.msra.mxu0 %v691
      %2460 = vmatprep.subr.mxu0 0.0
      %2461 = vmatpush1.msra.mxu0 %v692
      %2462 = vmatprep.subr.mxu0 0.0
      %2463 = vmatpush1.msra.mxu0 %v693
      %2464 = vmatprep.subr.mxu0 0.0
      %2465 = vmatpush1.msra.mxu0 %v694
      %2466 = vmatprep.subr.mxu0 0.0
      %2467 = vmatpush1.msra.mxu0 %v695
      %2468 = vmatprep.subr.mxu0 0.0
      %2469 = vmatpush1.msra.mxu0 %v696
      %2470 = vmatprep.subr.mxu0 0.0
      %2471 = vmatpush1.msra.mxu0 %v697
      %2472 = vmatprep.subr.mxu0 0.0
      %2473 = vmatpush1.msra.mxu0 %v698
      %2474 = vmatprep.subr.mxu0 0.0
      %2475 = vmatpush1.msra.mxu0 %v699
      %2476 = vmatprep.subr.mxu0 0.0
      %2477 = vmatpush1.msra.mxu0 %v700
      %2478 = vmatprep.subr.mxu0 0.0
      %2479 = vmatpush1.msra.mxu0 %v701
      %2480 = vmatprep.subr.mxu0 0.0
      %2481 = vmatpush1.msra.mxu0 %v702
      %2482 = vmatprep.subr.mxu0 0.0
      %2483 = vmatpush1.msra.mxu0 %v703
      %2484 = vmatprep.subr.mxu0 0.0
      %2485 = vmatpush1.msra.mxu0 %v704
      %2486 = vmatprep.subr.mxu0 0.0
      %2487 = vmatpush1.msra.mxu0 %v705
      %2488 = vmatprep.subr.mxu0 0.0
      %2489 = vmatpush1.msra.mxu0 %v706
      %2490 = vmatprep.subr.mxu0 0.0
      %2491 = vmatpush1.msra.mxu0 %v707
      %2492 = vmatprep.subr.mxu0 0.0
      %2493 = vmatpush1.msra.mxu0 %v708
      %2494 = vmatprep.subr.mxu0 0.0
      %2495 = vmatpush1.msra.mxu0 %v709
      %2496 = vmatprep.subr.mxu0 0.0
      %2497 = vmatpush1.msra.mxu0 %v710
      %2498 = vmatprep.subr.mxu0 0.0
      %2499 = vmatpush1.msra.mxu0 %v711
      %2500 = vmatprep.mubr.f32.mxu0 %v2421
      %2501 = vmatmul.mubr.f32.gmra.mrb[0].mxu0 %v2420
      %v2502 = vpop.f32.mrb[0].mxu0
      %v2503 = vadd.f32 0.0, %v2502
      %v2504 = vpop.f32.mrb[0].mxu0
      %2505 = vmatprep.mubr.f32.mxu0 %v2423
      %2506 = vmatmul.mubr.f32.gmra.mrb[0].mxu0 %v2422
      %v2507 = vpop.f32.mrb[0].mxu0
      %v2508 = vadd.f32 0.0, %v2507
      %v2509 = vpop.f32.mrb[0].mxu0
      %2510 = vmatprep.mubr.f32.mxu0 %v2425
      %2511 = vmatmul.mubr.f32.gmra.mrb[0].mxu0 %v2424
      %v2512 = vpop.f32.mrb[0].mxu0
      %v2513 = vadd.f32 0.0, %v2512
      %v2514 = vpop.f32.mrb[0].mxu0
      %2515 = vmatprep.mubr.f32.mxu0 %v2427
      %2516 = vmatmul.mubr.f32.gmra.mrb[0].mxu0 %v2426
      %v2517 = vpop.f32.mrb[0].mxu0
      %v2518 = vadd.f32 0.0, %v2517
      %v2519 = vpop.f32.mrb[0].mxu0
      %2520 = vmatprep.mubr.f32.mxu0 %v2429
      %2521 = vmatmul.mubr.f32.gmra.mrb[0].mxu0 %v2428
      %v2522 = vpop.f32.mrb[0].mxu0
      %v2523 = vadd.f32 0.0, %v2522
      %v2524 = vpop.f32.mrb[0].mxu0
      %2525 = vmatprep.mubr.f32.mxu0 %v2431
      %2526 = vmatmul.mubr.f32.gmra.mrb[0].mxu0 %v2430
      %v2527 = vpop.f32.mrb[0].mxu0
      %v2528 = vadd.f32 0.0, %v2527
      %v2529 = vpop.f32.mrb[0].mxu0
      %2530 = vmatprep.mubr.f32.mxu0 %v2433
      %2531 = vmatmul.mubr.f32.gmra.mrb[0].mxu0 %v2432
      %v2532 = vpop.f32.mrb[0].mxu0
      %v2533 = vadd.f32 0.0, %v2532
      %v2534 = vpop.f32.mrb[0].mxu0
      %2535 = vmatprep.mubr.f32.mxu0 %v2435
      %2536 = vmatmul.mubr.f32.gmra.mrb[0].mxu0 %v2434
      %v2537 = vpop.f32.mrb[0].mxu0
      %v2538 = vadd.f32 0.0, %v2537
      %v2539 = vpop.f32.mrb[0].mxu0
      %2540 = vdwg.mxu0
      %s2541 = scalar_lea.vmem %s3, 1920
      %v2542 = vld [vmem:[%s2541] sm:$0xff]
      %v2543 = vld [vmem:[%s2541 + $0x8] sm:$0xff]
      %v2544 = vld [vmem:[%s2541 + $0x10] sm:$0xff]
      %v2545 = vld [vmem:[%s2541 + $0x18] sm:$0xff]
      %v2546 = vld [vmem:[%s2541 + $0x20] sm:$0xff]
      %v2547 = vld [vmem:[%s2541 + $0x28] sm:$0xff]
      %v2548 = vld [vmem:[%s2541 + $0x30] sm:$0xff]
      %v2549 = vld [vmem:[%s2541 + $0x38] sm:$0xff]
      %v2550 = vld [vmem:[%s2541 + $0x40] sm:$0xff]
      %v2551 = vld [vmem:[%s2541 + $0x48] sm:$0xff]
      %v2552 = vld [vmem:[%s2541 + $0x50] sm:$0xff]
      %v2553 = vld [vmem:[%s2541 + $0x58] sm:$0xff]
      %v2554 = vld [vmem:[%s2541 + $0x60] sm:$0xff]
      %v2555 = vld [vmem:[%s2541 + $0x68] sm:$0xff]
      %v2556 = vld [vmem:[%s2541 + $0x70] sm:$0xff]
      %v2557 = vld [vmem:[%s2541 + $0x78] sm:$0xff]
      %2558 = vmatprep.subr.mxu0 0.0
      %2559 = vmatpush1.msra.mxu0 %v680
      %2560 = vmatprep.subr.mxu0 0.0
      %2561 = vmatpush1.msra.mxu0 %v681
      %2562 = vmatprep.subr.mxu0 0.0
      %2563 = vmatpush1.msra.mxu0 %v682
      %2564 = vmatprep.subr.mxu0 0.0
      %2565 = vmatpush1.msra.mxu0 %v683
      %2566 = vmatprep.subr.mxu0 0.0
      %2567 = vmatpush1.msra.mxu0 %v684
      %2568 = vmatprep.subr.mxu0 0.0
      %2569 = vmatpush1.msra.mxu0 %v685
      %2570 = vmatprep.subr.mxu0 0.0
      %2571 = vmatpush1.msra.mxu0 %v686
      %2572 = vmatprep.subr.mxu0 0.0
      %2573 = vmatpush1.msra.mxu0 %v687
      %2574 = vmatprep.subr.mxu0 0.0
      %2575 = vmatpush1.msra.mxu0 %v688
      %2576 = vmatprep.subr.mxu0 0.0
      %2577 = vmatpush1.msra.mxu0 %v689
      %2578 = vmatprep.subr.mxu0 0.0
      %2579 = vmatpush1.msra.mxu0 %v690
      %2580 = vmatprep.subr.mxu0 0.0
      %2581 = vmatpush1.msra.mxu0 %v691
      %2582 = vmatprep.subr.mxu0 0.0
      %2583 = vmatpush1.msra.mxu0 %v692
      %2584 = vmatprep.subr.mxu0 0.0
      %2585 = vmatpush1.msra.mxu0 %v693
      %2586 = vmatprep.subr.mxu0 0.0
      %2587 = vmatpush1.msra.mxu0 %v694
      %2588 = vmatprep.subr.mxu0 0.0
      %2589 = vmatpush1.msra.mxu0 %v695
      %2590 = vmatprep.subr.mxu0 0.0
      %2591 = vmatpush1.msra.mxu0 %v696
      %2592 = vmatprep.subr.mxu0 0.0
      %2593 = vmatpush1.msra.mxu0 %v697
      %2594 = vmatprep.subr.mxu0 0.0
      %2595 = vmatpush1.msra.mxu0 %v698
      %2596 = vmatprep.subr.mxu0 0.0
      %2597 = vmatpush1.msra.mxu0 %v699
      %2598 = vmatprep.subr.mxu0 0.0
      %2599 = vmatpush1.msra.mxu0 %v700
      %2600 = vmatprep.subr.mxu0 0.0
      %2601 = vmatpush1.msra.mxu0 %v701
      %2602 = vmatprep.subr.mxu0 0.0
      %2603 = vmatpush1.msra.mxu0 %v702
      %2604 = vmatprep.subr.mxu0 0.0
      %2605 = vmatpush1.msra.mxu0 %v703
      %2606 = vmatprep.subr.mxu0 0.0
      %2607 = vmatpush1.msra.mxu0 %v704
      %2608 = vmatprep.subr.mxu0 0.0
      %2609 = vmatpush1.msra.mxu0 %v705
      %2610 = vmatprep.subr.mxu0 0.0
      %2611 = vmatpush1.msra.mxu0 %v706
      %2612 = vmatprep.subr.mxu0 0.0
      %2613 = vmatpush1.msra.mxu0 %v707
      %2614 = vmatprep.subr.mxu0 0.0
      %2615 = vmatpush1.msra.mxu0 %v708
      %2616 = vmatprep.subr.mxu0 0.0
      %2617 = vmatpush1.msra.mxu0 %v709
      %2618 = vmatprep.subr.mxu0 0.0
      %2619 = vmatpush1.msra.mxu0 %v710
      %2620 = vmatprep.subr.mxu0 0.0
      %2621 = vmatpush1.msra.mxu0 %v711
      %2622 = vmatprep.mubr.f32.mxu0 %v2543
      %2623 = vmatmul.mubr.f32.gmra.mrb[0].mxu0 %v2542
      %v2624 = vpop.f32.mrb[0].mxu0
      %v2625 = vadd.f32 0.0, %v2624
      %v2626 = vpop.f32.mrb[0].mxu0
      %2627 = vmatprep.mubr.f32.mxu0 %v2545
      %2628 = vmatmul.mubr.f32.gmra.mrb[0].mxu0 %v2544
      %v2629 = vpop.f32.mrb[0].mxu0
      %v2630 = vadd.f32 0.0, %v2629
      %v2631 = vpop.f32.mrb[0].mxu0
      %2632 = vmatprep.mubr.f32.mxu0 %v2547
      %2633 = vmatmul.mubr.f32.gmra.mrb[0].mxu0 %v2546
      %v2634 = vpop.f32.mrb[0].mxu0
      %v2635 = vadd.f32 0.0, %v2634
      %v2636 = vpop.f32.mrb[0].mxu0
      %2637 = vmatprep.mubr.f32.mxu0 %v2549
      %2638 = vmatmul.mubr.f32.gmra.mrb[0].mxu0 %v2548
      %v2639 = vpop.f32.mrb[0].mxu0
      %v2640 = vadd.f32 0.0, %v2639
      %v2641 = vpop.f32.mrb[0].mxu0
      %2642 = vmatprep.mubr.f32.mxu0 %v2551
      %2643 = vmatmul.mubr.f32.gmra.mrb[0].mxu0 %v2550
      %v2644 = vpop.f32.mrb[0].mxu0
      %v2645 = vadd.f32 0.0, %v2644
      %v2646 = vpop.f32.mrb[0].mxu0
      %2647 = vmatprep.mubr.f32.mxu0 %v2553
      %2648 = vmatmul.mubr.f32.gmra.mrb[0].mxu0 %v2552
      %v2649 = vpop.f32.mrb[0].mxu0
      %v2650 = vadd.f32 0.0, %v2649
      %v2651 = vpop.f32.mrb[0].mxu0
      %2652 = vmatprep.mubr.f32.mxu0 %v2555
      %2653 = vmatmul.mubr.f32.gmra.mrb[0].mxu0 %v2554
      %v2654 = vpop.f32.mrb[0].mxu0
      %v2655 = vadd.f32 0.0, %v2654
      %v2656 = vpop.f32.mrb[0].mxu0
      %2657 = vmatprep.mubr.f32.mxu0 %v2557
      %2658 = vmatmul.mubr.f32.gmra.mrb[0].mxu0 %v2556
      %v2659 = vpop.f32.mrb[0].mxu0
      %v2660 = vadd.f32 0.0, %v2659
      %v2661 = vpop.f32.mrb[0].mxu0
      %2662 = vdwg.mxu0
      %v2663 = vld [vmem:[%s4] sm:$0xff]
      %v2664 = vld [vmem:[%s4 + $0x8] sm:$0xff]
      %v2665 = vld [vmem:[%s4 + $0x10] sm:$0xff]
      %v2666 = vld [vmem:[%s4 + $0x18] sm:$0xff]
      %v2667 = vld [vmem:[%s4 + $0x20] sm:$0xff]
      %v2668 = vld [vmem:[%s4 + $0x28] sm:$0xff]
      %v2669 = vld [vmem:[%s4 + $0x30] sm:$0xff]
      %v2670 = vld [vmem:[%s4 + $0x38] sm:$0xff]
      %v2671 = vld [vmem:[%s4 + $0x40] sm:$0xff]
      %v2672 = vld [vmem:[%s4 + $0x48] sm:$0xff]
      %v2673 = vld [vmem:[%s4 + $0x50] sm:$0xff]
      %v2674 = vld [vmem:[%s4 + $0x58] sm:$0xff]
      %v2675 = vld [vmem:[%s4 + $0x60] sm:$0xff]
      %v2676 = vld [vmem:[%s4 + $0x68] sm:$0xff]
      %v2677 = vld [vmem:[%s4 + $0x70] sm:$0xff]
      %v2678 = vld [vmem:[%s4 + $0x78] sm:$0xff]
      %v2679 = vld [vmem:[%s4 + $0x80] sm:$0xff]
      %v2680 = vld [vmem:[%s4 + $0x88] sm:$0xff]
      %v2681 = vld [vmem:[%s4 + $0x90] sm:$0xff]
      %v2682 = vld [vmem:[%s4 + $0x98] sm:$0xff]
      %v2683 = vld [vmem:[%s4 + $0xa0] sm:$0xff]
      %v2684 = vld [vmem:[%s4 + $0xa8] sm:$0xff]
      %v2685 = vld [vmem:[%s4 + $0xb0] sm:$0xff]
      %v2686 = vld [vmem:[%s4 + $0xb8] sm:$0xff]
      %v2687 = vld [vmem:[%s4 + $0xc0] sm:$0xff]
      %v2688 = vld [vmem:[%s4 + $0xc8] sm:$0xff]
      %v2689 = vld [vmem:[%s4 + $0xd0] sm:$0xff]
      %v2690 = vld [vmem:[%s4 + $0xd8] sm:$0xff]
      %v2691 = vld [vmem:[%s4 + $0xe0] sm:$0xff]
      %v2692 = vld [vmem:[%s4 + $0xe8] sm:$0xff]
      %v2693 = vld [vmem:[%s4 + $0xf0] sm:$0xff]
      %v2694 = vld [vmem:[%s4 + $0xf8] sm:$0xff]
      %v2695 = vld [vmem:[%s4 + $0x100] sm:$0xff]
      %v2696 = vld [vmem:[%s4 + $0x108] sm:$0xff]
      %v2697 = vld [vmem:[%s4 + $0x110] sm:$0xff]
      %v2698 = vld [vmem:[%s4 + $0x118] sm:$0xff]
      %v2699 = vld [vmem:[%s4 + $0x120] sm:$0xff]
      %v2700 = vld [vmem:[%s4 + $0x128] sm:$0xff]
      %v2701 = vld [vmem:[%s4 + $0x130] sm:$0xff]
      %v2702 = vld [vmem:[%s4 + $0x138] sm:$0xff]
      %v2703 = vld [vmem:[%s4 + $0x140] sm:$0xff]
      %v2704 = vld [vmem:[%s4 + $0x148] sm:$0xff]
      %v2705 = vld [vmem:[%s4 + $0x150] sm:$0xff]
      %v2706 = vld [vmem:[%s4 + $0x158] sm:$0xff]
      %v2707 = vld [vmem:[%s4 + $0x160] sm:$0xff]
      %v2708 = vld [vmem:[%s4 + $0x168] sm:$0xff]
      %v2709 = vld [vmem:[%s4 + $0x170] sm:$0xff]
      %v2710 = vld [vmem:[%s4 + $0x178] sm:$0xff]
      %v2711 = vld [vmem:[%s4 + $0x180] sm:$0xff]
      %v2712 = vld [vmem:[%s4 + $0x188] sm:$0xff]
      %v2713 = vld [vmem:[%s4 + $0x190] sm:$0xff]
      %v2714 = vld [vmem:[%s4 + $0x198] sm:$0xff]
      %v2715 = vld [vmem:[%s4 + $0x1a0] sm:$0xff]
      %v2716 = vld [vmem:[%s4 + $0x1a8] sm:$0xff]
      %v2717 = vld [vmem:[%s4 + $0x1b0] sm:$0xff]
      %v2718 = vld [vmem:[%s4 + $0x1b8] sm:$0xff]
      %v2719 = vld [vmem:[%s4 + $0x1c0] sm:$0xff]
      %v2720 = vld [vmem:[%s4 + $0x1c8] sm:$0xff]
      %v2721 = vld [vmem:[%s4 + $0x1d0] sm:$0xff]
      %v2722 = vld [vmem:[%s4 + $0x1d8] sm:$0xff]
      %v2723 = vld [vmem:[%s4 + $0x1e0] sm:$0xff]
      %v2724 = vld [vmem:[%s4 + $0x1e8] sm:$0xff]
      %v2725 = vld [vmem:[%s4 + $0x1f0] sm:$0xff]
      %v2726 = vld [vmem:[%s4 + $0x1f8] sm:$0xff]
      %v2727 = vld [vmem:[%s4 + $0x200] sm:$0xff]
      %v2728 = vld [vmem:[%s4 + $0x208] sm:$0xff]
      %v2729 = vld [vmem:[%s4 + $0x210] sm:$0xff]
      %v2730 = vld [vmem:[%s4 + $0x218] sm:$0xff]
      %v2731 = vld [vmem:[%s4 + $0x220] sm:$0xff]
      %v2732 = vld [vmem:[%s4 + $0x228] sm:$0xff]
      %v2733 = vld [vmem:[%s4 + $0x230] sm:$0xff]
      %v2734 = vld [vmem:[%s4 + $0x238] sm:$0xff]
      %v2735 = vld [vmem:[%s4 + $0x240] sm:$0xff]
      %v2736 = vld [vmem:[%s4 + $0x248] sm:$0xff]
      %v2737 = vld [vmem:[%s4 + $0x250] sm:$0xff]
      %v2738 = vld [vmem:[%s4 + $0x258] sm:$0xff]
      %v2739 = vld [vmem:[%s4 + $0x260] sm:$0xff]
      %v2740 = vld [vmem:[%s4 + $0x268] sm:$0xff]
      %v2741 = vld [vmem:[%s4 + $0x270] sm:$0xff]
      %v2742 = vld [vmem:[%s4 + $0x278] sm:$0xff]
      %v2743 = vld [vmem:[%s4 + $0x280] sm:$0xff]
      %v2744 = vld [vmem:[%s4 + $0x288] sm:$0xff]
      %v2745 = vld [vmem:[%s4 + $0x290] sm:$0xff]
      %v2746 = vld [vmem:[%s4 + $0x298] sm:$0xff]
      %v2747 = vld [vmem:[%s4 + $0x2a0] sm:$0xff]
      %v2748 = vld [vmem:[%s4 + $0x2a8] sm:$0xff]
      %v2749 = vld [vmem:[%s4 + $0x2b0] sm:$0xff]
      %v2750 = vld [vmem:[%s4 + $0x2b8] sm:$0xff]
      %v2751 = vld [vmem:[%s4 + $0x2c0] sm:$0xff]
      %v2752 = vld [vmem:[%s4 + $0x2c8] sm:$0xff]
      %v2753 = vld [vmem:[%s4 + $0x2d0] sm:$0xff]
      %v2754 = vld [vmem:[%s4 + $0x2d8] sm:$0xff]
      %v2755 = vld [vmem:[%s4 + $0x2e0] sm:$0xff]
      %v2756 = vld [vmem:[%s4 + $0x2e8] sm:$0xff]
      %v2757 = vld [vmem:[%s4 + $0x2f0] sm:$0xff]
      %v2758 = vld [vmem:[%s4 + $0x2f8] sm:$0xff]
      %v2759 = vld [vmem:[%s4 + $0x300] sm:$0xff]
      %v2760 = vld [vmem:[%s4 + $0x308] sm:$0xff]
      %v2761 = vld [vmem:[%s4 + $0x310] sm:$0xff]
      %v2762 = vld [vmem:[%s4 + $0x318] sm:$0xff]
      %v2763 = vld [vmem:[%s4 + $0x320] sm:$0xff]
      %v2764 = vld [vmem:[%s4 + $0x328] sm:$0xff]
      %v2765 = vld [vmem:[%s4 + $0x330] sm:$0xff]
      %v2766 = vld [vmem:[%s4 + $0x338] sm:$0xff]
      %v2767 = vld [vmem:[%s4 + $0x340] sm:$0xff]
      %v2768 = vld [vmem:[%s4 + $0x348] sm:$0xff]
      %v2769 = vld [vmem:[%s4 + $0x350] sm:$0xff]
      %v2770 = vld [vmem:[%s4 + $0x358] sm:$0xff]
      %v2771 = vld [vmem:[%s4 + $0x360] sm:$0xff]
      %v2772 = vld [vmem:[%s4 + $0x368] sm:$0xff]
      %v2773 = vld [vmem:[%s4 + $0x370] sm:$0xff]
      %v2774 = vld [vmem:[%s4 + $0x378] sm:$0xff]
      %v2775 = vld [vmem:[%s4 + $0x380] sm:$0xff]
      %v2776 = vld [vmem:[%s4 + $0x388] sm:$0xff]
      %v2777 = vld [vmem:[%s4 + $0x390] sm:$0xff]
      %v2778 = vld [vmem:[%s4 + $0x398] sm:$0xff]
      %v2779 = vld [vmem:[%s4 + $0x3a0] sm:$0xff]
      %v2780 = vld [vmem:[%s4 + $0x3a8] sm:$0xff]
      %v2781 = vld [vmem:[%s4 + $0x3b0] sm:$0xff]
      %v2782 = vld [vmem:[%s4 + $0x3b8] sm:$0xff]
      %v2783 = vld [vmem:[%s4 + $0x3c0] sm:$0xff]
      %v2784 = vld [vmem:[%s4 + $0x3c8] sm:$0xff]
      %v2785 = vld [vmem:[%s4 + $0x3d0] sm:$0xff]
      %v2786 = vld [vmem:[%s4 + $0x3d8] sm:$0xff]
      %v2787 = vld [vmem:[%s4 + $0x3e0] sm:$0xff]
      %v2788 = vld [vmem:[%s4 + $0x3e8] sm:$0xff]
      %v2789 = vld [vmem:[%s4 + $0x3f0] sm:$0xff]
      %v2790 = vld [vmem:[%s4 + $0x3f8] sm:$0xff]
      %v2791 = vld [vmem:[%s4 + $0x400] sm:$0xff]
      %v2792 = vld [vmem:[%s4 + $0x408] sm:$0xff]
      %v2793 = vld [vmem:[%s4 + $0x410] sm:$0xff]
      %v2794 = vld [vmem:[%s4 + $0x418] sm:$0xff]
      %v2795 = vld [vmem:[%s4 + $0x420] sm:$0xff]
      %v2796 = vld [vmem:[%s4 + $0x428] sm:$0xff]
      %v2797 = vld [vmem:[%s4 + $0x430] sm:$0xff]
      %v2798 = vld [vmem:[%s4 + $0x438] sm:$0xff]
      %v2799 = vld [vmem:[%s4 + $0x440] sm:$0xff]
      %v2800 = vld [vmem:[%s4 + $0x448] sm:$0xff]
      %v2801 = vld [vmem:[%s4 + $0x450] sm:$0xff]
      %v2802 = vld [vmem:[%s4 + $0x458] sm:$0xff]
      %v2803 = vld [vmem:[%s4 + $0x460] sm:$0xff]
      %v2804 = vld [vmem:[%s4 + $0x468] sm:$0xff]
      %v2805 = vld [vmem:[%s4 + $0x470] sm:$0xff]
      %v2806 = vld [vmem:[%s4 + $0x478] sm:$0xff]
      %v2807 = vld [vmem:[%s4 + $0x480] sm:$0xff]
      %v2808 = vld [vmem:[%s4 + $0x488] sm:$0xff]
      %v2809 = vld [vmem:[%s4 + $0x490] sm:$0xff]
      %v2810 = vld [vmem:[%s4 + $0x498] sm:$0xff]
      %v2811 = vld [vmem:[%s4 + $0x4a0] sm:$0xff]
      %v2812 = vld [vmem:[%s4 + $0x4a8] sm:$0xff]
      %v2813 = vld [vmem:[%s4 + $0x4b0] sm:$0xff]
      %v2814 = vld [vmem:[%s4 + $0x4b8] sm:$0xff]
      %v2815 = vld [vmem:[%s4 + $0x4c0] sm:$0xff]
      %v2816 = vld [vmem:[%s4 + $0x4c8] sm:$0xff]
      %v2817 = vld [vmem:[%s4 + $0x4d0] sm:$0xff]
      %v2818 = vld [vmem:[%s4 + $0x4d8] sm:$0xff]
      %v2819 = vld [vmem:[%s4 + $0x4e0] sm:$0xff]
      %v2820 = vld [vmem:[%s4 + $0x4e8] sm:$0xff]
      %v2821 = vld [vmem:[%s4 + $0x4f0] sm:$0xff]
      %v2822 = vld [vmem:[%s4 + $0x4f8] sm:$0xff]
      %v2823 = vld [vmem:[%s4 + $0x500] sm:$0xff]
      %v2824 = vld [vmem:[%s4 + $0x508] sm:$0xff]
      %v2825 = vld [vmem:[%s4 + $0x510] sm:$0xff]
      %v2826 = vld [vmem:[%s4 + $0x518] sm:$0xff]
      %v2827 = vld [vmem:[%s4 + $0x520] sm:$0xff]
      %v2828 = vld [vmem:[%s4 + $0x528] sm:$0xff]
      %v2829 = vld [vmem:[%s4 + $0x530] sm:$0xff]
      %v2830 = vld [vmem:[%s4 + $0x538] sm:$0xff]
      %v2831 = vld [vmem:[%s4 + $0x540] sm:$0xff]
      %v2832 = vld [vmem:[%s4 + $0x548] sm:$0xff]
      %v2833 = vld [vmem:[%s4 + $0x550] sm:$0xff]
      %v2834 = vld [vmem:[%s4 + $0x558] sm:$0xff]
      %v2835 = vld [vmem:[%s4 + $0x560] sm:$0xff]
      %v2836 = vld [vmem:[%s4 + $0x568] sm:$0xff]
      %v2837 = vld [vmem:[%s4 + $0x570] sm:$0xff]
      %v2838 = vld [vmem:[%s4 + $0x578] sm:$0xff]
      %v2839 = vld [vmem:[%s4 + $0x580] sm:$0xff]
      %v2840 = vld [vmem:[%s4 + $0x588] sm:$0xff]
      %v2841 = vld [vmem:[%s4 + $0x590] sm:$0xff]
      %v2842 = vld [vmem:[%s4 + $0x598] sm:$0xff]
      %v2843 = vld [vmem:[%s4 + $0x5a0] sm:$0xff]
      %v2844 = vld [vmem:[%s4 + $0x5a8] sm:$0xff]
      %v2845 = vld [vmem:[%s4 + $0x5b0] sm:$0xff]
      %v2846 = vld [vmem:[%s4 + $0x5b8] sm:$0xff]
      %v2847 = vld [vmem:[%s4 + $0x5c0] sm:$0xff]
      %v2848 = vld [vmem:[%s4 + $0x5c8] sm:$0xff]
      %v2849 = vld [vmem:[%s4 + $0x5d0] sm:$0xff]
      %v2850 = vld [vmem:[%s4 + $0x5d8] sm:$0xff]
      %v2851 = vld [vmem:[%s4 + $0x5e0] sm:$0xff]
      %v2852 = vld [vmem:[%s4 + $0x5e8] sm:$0xff]
      %v2853 = vld [vmem:[%s4 + $0x5f0] sm:$0xff]
      %v2854 = vld [vmem:[%s4 + $0x5f8] sm:$0xff]
      %v2855 = vld [vmem:[%s4 + $0x600] sm:$0xff]
      %v2856 = vld [vmem:[%s4 + $0x608] sm:$0xff]
      %v2857 = vld [vmem:[%s4 + $0x610] sm:$0xff]
      %v2858 = vld [vmem:[%s4 + $0x618] sm:$0xff]
      %v2859 = vld [vmem:[%s4 + $0x620] sm:$0xff]
      %v2860 = vld [vmem:[%s4 + $0x628] sm:$0xff]
      %v2861 = vld [vmem:[%s4 + $0x630] sm:$0xff]
      %v2862 = vld [vmem:[%s4 + $0x638] sm:$0xff]
      %v2863 = vld [vmem:[%s4 + $0x640] sm:$0xff]
      %v2864 = vld [vmem:[%s4 + $0x648] sm:$0xff]
      %v2865 = vld [vmem:[%s4 + $0x650] sm:$0xff]
      %v2866 = vld [vmem:[%s4 + $0x658] sm:$0xff]
      %v2867 = vld [vmem:[%s4 + $0x660] sm:$0xff]
      %v2868 = vld [vmem:[%s4 + $0x668] sm:$0xff]
      %v2869 = vld [vmem:[%s4 + $0x670] sm:$0xff]
      %v2870 = vld [vmem:[%s4 + $0x678] sm:$0xff]
      %v2871 = vld [vmem:[%s4 + $0x680] sm:$0xff]
      %v2872 = vld [vmem:[%s4 + $0x688] sm:$0xff]
      %v2873 = vld [vmem:[%s4 + $0x690] sm:$0xff]
      %v2874 = vld [vmem:[%s4 + $0x698] sm:$0xff]
      %v2875 = vld [vmem:[%s4 + $0x6a0] sm:$0xff]
      %v2876 = vld [vmem:[%s4 + $0x6a8] sm:$0xff]
      %v2877 = vld [vmem:[%s4 + $0x6b0] sm:$0xff]
      %v2878 = vld [vmem:[%s4 + $0x6b8] sm:$0xff]
      %v2879 = vld [vmem:[%s4 + $0x6c0] sm:$0xff]
      %v2880 = vld [vmem:[%s4 + $0x6c8] sm:$0xff]
      %v2881 = vld [vmem:[%s4 + $0x6d0] sm:$0xff]
      %v2882 = vld [vmem:[%s4 + $0x6d8] sm:$0xff]
      %v2883 = vld [vmem:[%s4 + $0x6e0] sm:$0xff]
      %v2884 = vld [vmem:[%s4 + $0x6e8] sm:$0xff]
      %v2885 = vld [vmem:[%s4 + $0x6f0] sm:$0xff]
      %v2886 = vld [vmem:[%s4 + $0x6f8] sm:$0xff]
      %v2887 = vld [vmem:[%s4 + $0x700] sm:$0xff]
      %v2888 = vld [vmem:[%s4 + $0x708] sm:$0xff]
      %v2889 = vld [vmem:[%s4 + $0x710] sm:$0xff]
      %v2890 = vld [vmem:[%s4 + $0x718] sm:$0xff]
      %v2891 = vld [vmem:[%s4 + $0x720] sm:$0xff]
      %v2892 = vld [vmem:[%s4 + $0x728] sm:$0xff]
      %v2893 = vld [vmem:[%s4 + $0x730] sm:$0xff]
      %v2894 = vld [vmem:[%s4 + $0x738] sm:$0xff]
      %v2895 = vld [vmem:[%s4 + $0x740] sm:$0xff]
      %v2896 = vld [vmem:[%s4 + $0x748] sm:$0xff]
      %v2897 = vld [vmem:[%s4 + $0x750] sm:$0xff]
      %v2898 = vld [vmem:[%s4 + $0x758] sm:$0xff]
      %v2899 = vld [vmem:[%s4 + $0x760] sm:$0xff]
      %v2900 = vld [vmem:[%s4 + $0x768] sm:$0xff]
      %v2901 = vld [vmem:[%s4 + $0x770] sm:$0xff]
      %v2902 = vld [vmem:[%s4 + $0x778] sm:$0xff]
      %v2903 = vld [vmem:[%s4 + $0x780] sm:$0xff]
      %v2904 = vld [vmem:[%s4 + $0x788] sm:$0xff]
      %v2905 = vld [vmem:[%s4 + $0x790] sm:$0xff]
      %v2906 = vld [vmem:[%s4 + $0x798] sm:$0xff]
      %v2907 = vld [vmem:[%s4 + $0x7a0] sm:$0xff]
      %v2908 = vld [vmem:[%s4 + $0x7a8] sm:$0xff]
      %v2909 = vld [vmem:[%s4 + $0x7b0] sm:$0xff]
      %v2910 = vld [vmem:[%s4 + $0x7b8] sm:$0xff]
      %v2911 = vld [vmem:[%s4 + $0x7c0] sm:$0xff]
      %v2912 = vld [vmem:[%s4 + $0x7c8] sm:$0xff]
      %v2913 = vld [vmem:[%s4 + $0x7d0] sm:$0xff]
      %v2914 = vld [vmem:[%s4 + $0x7d8] sm:$0xff]
      %v2915 = vld [vmem:[%s4 + $0x7e0] sm:$0xff]
      %v2916 = vld [vmem:[%s4 + $0x7e8] sm:$0xff]
      %v2917 = vld [vmem:[%s4 + $0x7f0] sm:$0xff]
      %v2918 = vld [vmem:[%s4 + $0x7f8] sm:$0xff]
      %v2919 = vld [vmem:[%s5] sm:$0x1]
      %v2921 = vlaneseq
      %v2922 = vshrl.u32 %v2921, 7
      %v2923 = vsub.s32 0, %v2922
      %v2924 = vrot.slane %v2919, %v2923
      %2926 = vmatprep.subr.mxu0 0.0
      %2927 = vmatpush1.msra.mxu0 %v2663
      %2928 = vmatprep.subr.mxu0 0.0
      %2929 = vmatpush1.msra.mxu0 %v2664
      %2930 = vmatprep.subr.mxu0 0.0
      %2931 = vmatpush1.msra.mxu0 %v2665
      %2932 = vmatprep.subr.mxu0 0.0
      %2933 = vmatpush1.msra.mxu0 %v2666
      %2934 = vmatprep.subr.mxu0 0.0
      %2935 = vmatpush1.msra.mxu0 %v2667
      %2936 = vmatprep.subr.mxu0 0.0
      %2937 = vmatpush1.msra.mxu0 %v2668
      %2938 = vmatprep.subr.mxu0 0.0
      %2939 = vmatpush1.msra.mxu0 %v2669
      %2940 = vmatprep.subr.mxu0 0.0
      %2941 = vmatpush1.msra.mxu0 %v2670
      %2942 = vmatprep.subr.mxu0 0.0
      %2943 = vmatpush1.msra.mxu0 %v2671
      %2944 = vmatprep.subr.mxu0 0.0
      %2945 = vmatpush1.msra.mxu0 %v2672
      %2946 = vmatprep.subr.mxu0 0.0
      %2947 = vmatpush1.msra.mxu0 %v2673
      %2948 = vmatprep.subr.mxu0 0.0
      %2949 = vmatpush1.msra.mxu0 %v2674
      %2950 = vmatprep.subr.mxu0 0.0
      %2951 = vmatpush1.msra.mxu0 %v2675
      %2952 = vmatprep.subr.mxu0 0.0
      %2953 = vmatpush1.msra.mxu0 %v2676
      %2954 = vmatprep.subr.mxu0 0.0
      %2955 = vmatpush1.msra.mxu0 %v2677
      %2956 = vmatprep.subr.mxu0 0.0
      %2957 = vmatpush1.msra.mxu0 %v2678
      %2958 = vmatprep.subr.mxu0 0.0
      %2959 = vmatpush1.msra.mxu0 %v2679
      %2960 = vmatprep.subr.mxu0 0.0
      %2961 = vmatpush1.msra.mxu0 %v2680
      %2962 = vmatprep.subr.mxu0 0.0
      %2963 = vmatpush1.msra.mxu0 %v2681
      %2964 = vmatprep.subr.mxu0 0.0
      %2965 = vmatpush1.msra.mxu0 %v2682
      %2966 = vmatprep.subr.mxu0 0.0
      %2967 = vmatpush1.msra.mxu0 %v2683
      %2968 = vmatprep.subr.mxu0 0.0
      %2969 = vmatpush1.msra.mxu0 %v2684
      %2970 = vmatprep.subr.mxu0 0.0
      %2971 = vmatpush1.msra.mxu0 %v2685
      %2972 = vmatprep.subr.mxu0 0.0
      %2973 = vmatpush1.msra.mxu0 %v2686
      %2974 = vmatprep.subr.mxu0 0.0
      %2975 = vmatpush1.msra.mxu0 %v2687
      %2976 = vmatprep.subr.mxu0 0.0
      %2977 = vmatpush1.msra.mxu0 %v2688
      %2978 = vmatprep.subr.mxu0 0.0
      %2979 = vmatpush1.msra.mxu0 %v2689
      %2980 = vmatprep.subr.mxu0 0.0
      %2981 = vmatpush1.msra.mxu0 %v2690
      %2982 = vmatprep.subr.mxu0 0.0
      %2983 = vmatpush1.msra.mxu0 %v2691
      %2984 = vmatprep.subr.mxu0 0.0
      %2985 = vmatpush1.msra.mxu0 %v2692
      %2986 = vmatprep.subr.mxu0 0.0
      %2987 = vmatpush1.msra.mxu0 %v2693
      %2988 = vmatprep.subr.mxu0 0.0
      %2989 = vmatpush1.msra.mxu0 %v2694
      %2990 = vmatprep.mubr.f32.mxu0 %v917
      %2991 = vmatmul.mubr.f32.gmra.mrb[0].mxu0 %v795
      %v2992 = vpop.f32.mrb[0].mxu0
      %v2993 = vadd.f32 %v2924, %v2992
      %v2994 = vpop.f32.mrb[0].mxu0
      %2995 = vmatprep.mubr.f32.mxu0 %v922
      %2996 = vmatmul.mubr.f32.gmra.mrb[0].mxu0 %v800
      %v2997 = vpop.f32.mrb[0].mxu0
      %v2998 = vadd.f32 %v2924, %v2997
      %v2999 = vpop.f32.mrb[0].mxu0
      %3000 = vmatprep.mubr.f32.mxu0 %v927
      %3001 = vmatmul.mubr.f32.gmra.mrb[0].mxu0 %v805
      %v3002 = vpop.f32.mrb[0].mxu0
      %v3003 = vadd.f32 %v2924, %v3002
      %v3004 = vpop.f32.mrb[0].mxu0
      %3005 = vmatprep.mubr.f32.mxu0 %v932
      %3006 = vmatmul.mubr.f32.gmra.mrb[0].mxu0 %v810
      %v3007 = vpop.f32.mrb[0].mxu0
      %v3008 = vadd.f32 %v2924, %v3007
      %v3009 = vpop.f32.mrb[0].mxu0
      %3010 = vmatprep.mubr.f32.mxu0 %v937
      %3011 = vmatmul.mubr.f32.gmra.mrb[0].mxu0 %v815
      %v3012 = vpop.f32.mrb[0].mxu0
      %v3013 = vadd.f32 %v2924, %v3012
      %v3014 = vpop.f32.mrb[0].mxu0
      %3015 = vmatprep.mubr.f32.mxu0 %v942
      %3016 = vmatmul.mubr.f32.gmra.mrb[0].mxu0 %v820
      %v3017 = vpop.f32.mrb[0].mxu0
      %v3018 = vadd.f32 %v2924, %v3017
      %v3019 = vpop.f32.mrb[0].mxu0
      %3020 = vmatprep.mubr.f32.mxu0 %v947
      %3021 = vmatmul.mubr.f32.gmra.mrb[0].mxu0 %v825
      %v3022 = vpop.f32.mrb[0].mxu0
      %v3023 = vadd.f32 %v2924, %v3022
      %v3024 = vpop.f32.mrb[0].mxu0
      %3025 = vmatprep.mubr.f32.mxu0 %v952
      %3026 = vmatmul.mubr.f32.gmra.mrb[0].mxu0 %v830
      %v3027 = vpop.f32.mrb[0].mxu0
      %v3028 = vadd.f32 %v2924, %v3027
      %v3029 = vpop.f32.mrb[0].mxu0
      %3030 = vdwg.mxu0
      %3031 = vmatprep.subr.mxu0 0.0
      %3032 = vmatpush1.msra.mxu0 %v2695
      %3033 = vmatprep.subr.mxu0 0.0
      %3034 = vmatpush1.msra.mxu0 %v2696
      %3035 = vmatprep.subr.mxu0 0.0
      %3036 = vmatpush1.msra.mxu0 %v2697
      %3037 = vmatprep.subr.mxu0 0.0
      %3038 = vmatpush1.msra.mxu0 %v2698
      %3039 = vmatprep.subr.mxu0 0.0
      %3040 = vmatpush1.msra.mxu0 %v2699
      %3041 = vmatprep.subr.mxu0 0.0
      %3042 = vmatpush1.msra.mxu0 %v2700
      %3043 = vmatprep.subr.mxu0 0.0
      %3044 = vmatpush1.msra.mxu0 %v2701
      %3045 = vmatprep.subr.mxu0 0.0
      %3046 = vmatpush1.msra.mxu0 %v2702
      %3047 = vmatprep.subr.mxu0 0.0
      %3048 = vmatpush1.msra.mxu0 %v2703
      %3049 = vmatprep.subr.mxu0 0.0
      %3050 = vmatpush1.msra.mxu0 %v2704
      %3051 = vmatprep.subr.mxu0 0.0
      %3052 = vmatpush1.msra.mxu0 %v2705
      %3053 = vmatprep.subr.mxu0 0.0
      %3054 = vmatpush1.msra.mxu0 %v2706
      %3055 = vmatprep.subr.mxu0 0.0
      %3056 = vmatpush1.msra.mxu0 %v2707
      %3057 = vmatprep.subr.mxu0 0.0
      %3058 = vmatpush1.msra.mxu0 %v2708
      %3059 = vmatprep.subr.mxu0 0.0
      %3060 = vmatpush1.msra.mxu0 %v2709
      %3061 = vmatprep.subr.mxu0 0.0
      %3062 = vmatpush1.msra.mxu0 %v2710
      %3063 = vmatprep.subr.mxu0 0.0
      %3064 = vmatpush1.msra.mxu0 %v2711
      %3065 = vmatprep.subr.mxu0 0.0
      %3066 = vmatpush1.msra.mxu0 %v2712
      %3067 = vmatprep.subr.mxu0 0.0
      %3068 = vmatpush1.msra.mxu0 %v2713
      %3069 = vmatprep.subr.mxu0 0.0
      %3070 = vmatpush1.msra.mxu0 %v2714
      %3071 = vmatprep.subr.mxu0 0.0
      %3072 = vmatpush1.msra.mxu0 %v2715
      %3073 = vmatprep.subr.mxu0 0.0
      %3074 = vmatpush1.msra.mxu0 %v2716
      %3075 = vmatprep.subr.mxu0 0.0
      %3076 = vmatpush1.msra.mxu0 %v2717
      %3077 = vmatprep.subr.mxu0 0.0
      %3078 = vmatpush1.msra.mxu0 %v2718
      %3079 = vmatprep.subr.mxu0 0.0
      %3080 = vmatpush1.msra.mxu0 %v2719
      %3081 = vmatprep.subr.mxu0 0.0
      %3082 = vmatpush1.msra.mxu0 %v2720
      %3083 = vmatprep.subr.mxu0 0.0
      %3084 = vmatpush1.msra.mxu0 %v2721
      %3085 = vmatprep.subr.mxu0 0.0
      %3086 = vmatpush1.msra.mxu0 %v2722
      %3087 = vmatprep.subr.mxu0 0.0
      %3088 = vmatpush1.msra.mxu0 %v2723
      %3089 = vmatprep.subr.mxu0 0.0
      %3090 = vmatpush1.msra.mxu0 %v2724
      %3091 = vmatprep.subr.mxu0 0.0
      %3092 = vmatpush1.msra.mxu0 %v2725
      %3093 = vmatprep.subr.mxu0 0.0
      %3094 = vmatpush1.msra.mxu0 %v2726
      %3095 = vmatprep.mubr.f32.mxu0 %v1161
      %3096 = vmatmul.mubr.f32.gmra.mrb[0].mxu0 %v1039
      %v3097 = vpop.f32.mrb[0].mxu0
      %v3098 = vadd.f32 %v2993, %v3097
      %v3099 = vpop.f32.mrb[0].mxu0
      %3100 = vmatprep.mubr.f32.mxu0 %v1166
      %3101 = vmatmul.mubr.f32.gmra.mrb[0].mxu0 %v1044
      %v3102 = vpop.f32.mrb[0].mxu0
      %v3103 = vadd.f32 %v2998, %v3102
      %v3104 = vpop.f32.mrb[0].mxu0
      %3105 = vmatprep.mubr.f32.mxu0 %v1171
      %3106 = vmatmul.mubr.f32.gmra.mrb[0].mxu0 %v1049
      %v3107 = vpop.f32.mrb[0].mxu0
      %v3108 = vadd.f32 %v3003, %v3107
      %v3109 = vpop.f32.mrb[0].mxu0
      %3110 = vmatprep.mubr.f32.mxu0 %v1176
      %3111 = vmatmul.mubr.f32.gmra.mrb[0].mxu0 %v1054
      %v3112 = vpop.f32.mrb[0].mxu0
      %v3113 = vadd.f32 %v3008, %v3112
      %v3114 = vpop.f32.mrb[0].mxu0
      %3115 = vmatprep.mubr.f32.mxu0 %v1181
      %3116 = vmatmul.mubr.f32.gmra.mrb[0].mxu0 %v1059
      %v3117 = vpop.f32.mrb[0].mxu0
      %v3118 = vadd.f32 %v3013, %v3117
      %v3119 = vpop.f32.mrb[0].mxu0
      %3120 = vmatprep.mubr.f32.mxu0 %v1186
      %3121 = vmatmul.mubr.f32.gmra.mrb[0].mxu0 %v1064
      %v3122 = vpop.f32.mrb[0].mxu0
      %v3123 = vadd.f32 %v3018, %v3122
      %v3124 = vpop.f32.mrb[0].mxu0
      %3125 = vmatprep.mubr.f32.mxu0 %v1191
      %3126 = vmatmul.mubr.f32.gmra.mrb[0].mxu0 %v1069
      %v3127 = vpop.f32.mrb[0].mxu0
      %v3128 = vadd.f32 %v3023, %v3127
      %v3129 = vpop.f32.mrb[0].mxu0
      %3130 = vmatprep.mubr.f32.mxu0 %v1196
      %3131 = vmatmul.mubr.f32.gmra.mrb[0].mxu0 %v1074
      %v3132 = vpop.f32.mrb[0].mxu0
      %v3133 = vadd.f32 %v3028, %v3132
      %v3134 = vpop.f32.mrb[0].mxu0
      %3135 = vdwg.mxu0
      %3136 = vmatprep.subr.mxu0 0.0
      %3137 = vmatpush1.msra.mxu0 %v2727
      %3138 = vmatprep.subr.mxu0 0.0
      %3139 = vmatpush1.msra.mxu0 %v2728
      %3140 = vmatprep.subr.mxu0 0.0
      %3141 = vmatpush1.msra.mxu0 %v2729
      %3142 = vmatprep.subr.mxu0 0.0
      %3143 = vmatpush1.msra.mxu0 %v2730
      %3144 = vmatprep.subr.mxu0 0.0
      %3145 = vmatpush1.msra.mxu0 %v2731
      %3146 = vmatprep.subr.mxu0 0.0
      %3147 = vmatpush1.msra.mxu0 %v2732
      %3148 = vmatprep.subr.mxu0 0.0
      %3149 = vmatpush1.msra.mxu0 %v2733
      %3150 = vmatprep.subr.mxu0 0.0
      %3151 = vmatpush1.msra.mxu0 %v2734
      %3152 = vmatprep.subr.mxu0 0.0
      %3153 = vmatpush1.msra.mxu0 %v2735
      %3154 = vmatprep.subr.mxu0 0.0
      %3155 = vmatpush1.msra.mxu0 %v2736
      %3156 = vmatprep.subr.mxu0 0.0
      %3157 = vmatpush1.msra.mxu0 %v2737
      %3158 = vmatprep.subr.mxu0 0.0
      %3159 = vmatpush1.msra.mxu0 %v2738
      %3160 = vmatprep.subr.mxu0 0.0
      %3161 = vmatpush1.msra.mxu0 %v2739
      %3162 = vmatprep.subr.mxu0 0.0
      %3163 = vmatpush1.msra.mxu0 %v2740
      %3164 = vmatprep.subr.mxu0 0.0
      %3165 = vmatpush1.msra.mxu0 %v2741
      %3166 = vmatprep.subr.mxu0 0.0
      %3167 = vmatpush1.msra.mxu0 %v2742
      %3168 = vmatprep.subr.mxu0 0.0
      %3169 = vmatpush1.msra.mxu0 %v2743
      %3170 = vmatprep.subr.mxu0 0.0
      %3171 = vmatpush1.msra.mxu0 %v2744
      %3172 = vmatprep.subr.mxu0 0.0
      %3173 = vmatpush1.msra.mxu0 %v2745
      %3174 = vmatprep.subr.mxu0 0.0
      %3175 = vmatpush1.msra.mxu0 %v2746
      %3176 = vmatprep.subr.mxu0 0.0
      %3177 = vmatpush1.msra.mxu0 %v2747
      %3178 = vmatprep.subr.mxu0 0.0
      %3179 = vmatpush1.msra.mxu0 %v2748
      %3180 = vmatprep.subr.mxu0 0.0
      %3181 = vmatpush1.msra.mxu0 %v2749
      %3182 = vmatprep.subr.mxu0 0.0
      %3183 = vmatpush1.msra.mxu0 %v2750
      %3184 = vmatprep.subr.mxu0 0.0
      %3185 = vmatpush1.msra.mxu0 %v2751
      %3186 = vmatprep.subr.mxu0 0.0
      %3187 = vmatpush1.msra.mxu0 %v2752
      %3188 = vmatprep.subr.mxu0 0.0
      %3189 = vmatpush1.msra.mxu0 %v2753
      %3190 = vmatprep.subr.mxu0 0.0
      %3191 = vmatpush1.msra.mxu0 %v2754
      %3192 = vmatprep.subr.mxu0 0.0
      %3193 = vmatpush1.msra.mxu0 %v2755
      %3194 = vmatprep.subr.mxu0 0.0
      %3195 = vmatpush1.msra.mxu0 %v2756
      %3196 = vmatprep.subr.mxu0 0.0
      %3197 = vmatpush1.msra.mxu0 %v2757
      %3198 = vmatprep.subr.mxu0 0.0
      %3199 = vmatpush1.msra.mxu0 %v2758
      %3200 = vmatprep.mubr.f32.mxu0 %v1405
      %3201 = vmatmul.mubr.f32.gmra.mrb[0].mxu0 %v1283
      %v3202 = vpop.f32.mrb[0].mxu0
      %v3203 = vadd.f32 %v3098, %v3202
      %v3204 = vpop.f32.mrb[0].mxu0
      %3205 = vmatprep.mubr.f32.mxu0 %v1410
      %3206 = vmatmul.mubr.f32.gmra.mrb[0].mxu0 %v1288
      %v3207 = vpop.f32.mrb[0].mxu0
      %v3208 = vadd.f32 %v3103, %v3207
      %v3209 = vpop.f32.mrb[0].mxu0
      %3210 = vmatprep.mubr.f32.mxu0 %v1415
      %3211 = vmatmul.mubr.f32.gmra.mrb[0].mxu0 %v1293
      %v3212 = vpop.f32.mrb[0].mxu0
      %v3213 = vadd.f32 %v3108, %v3212
      %v3214 = vpop.f32.mrb[0].mxu0
      %3215 = vmatprep.mubr.f32.mxu0 %v1420
      %3216 = vmatmul.mubr.f32.gmra.mrb[0].mxu0 %v1298
      %v3217 = vpop.f32.mrb[0].mxu0
      %v3218 = vadd.f32 %v3113, %v3217
      %v3219 = vpop.f32.mrb[0].mxu0
      %3220 = vmatprep.mubr.f32.mxu0 %v1425
      %3221 = vmatmul.mubr.f32.gmra.mrb[0].mxu0 %v1303
      %v3222 = vpop.f32.mrb[0].mxu0
      %v3223 = vadd.f32 %v3118, %v3222
      %v3224 = vpop.f32.mrb[0].mxu0
      %3225 = vmatprep.mubr.f32.mxu0 %v1430
      %3226 = vmatmul.mubr.f32.gmra.mrb[0].mxu0 %v1308
      %v3227 = vpop.f32.mrb[0].mxu0
      %v3228 = vadd.f32 %v3123, %v3227
      %v3229 = vpop.f32.mrb[0].mxu0
      %3230 = vmatprep.mubr.f32.mxu0 %v1435
      %3231 = vmatmul.mubr.f32.gmra.mrb[0].mxu0 %v1313
      %v3232 = vpop.f32.mrb[0].mxu0
      %v3233 = vadd.f32 %v3128, %v3232
      %v3234 = vpop.f32.mrb[0].mxu0
      %3235 = vmatprep.mubr.f32.mxu0 %v1440
      %3236 = vmatmul.mubr.f32.gmra.mrb[0].mxu0 %v1318
      %v3237 = vpop.f32.mrb[0].mxu0
      %v3238 = vadd.f32 %v3133, %v3237
      %v3239 = vpop.f32.mrb[0].mxu0
      %3240 = vdwg.mxu0
      %3241 = vmatprep.subr.mxu0 0.0
      %3242 = vmatpush1.msra.mxu0 %v2759
      %3243 = vmatprep.subr.mxu0 0.0
      %3244 = vmatpush1.msra.mxu0 %v2760
      %3245 = vmatprep.subr.mxu0 0.0
      %3246 = vmatpush1.msra.mxu0 %v2761
      %3247 = vmatprep.subr.mxu0 0.0
      %3248 = vmatpush1.msra.mxu0 %v2762
      %3249 = vmatprep.subr.mxu0 0.0
      %3250 = vmatpush1.msra.mxu0 %v2763
      %3251 = vmatprep.subr.mxu0 0.0
      %3252 = vmatpush1.msra.mxu0 %v2764
      %3253 = vmatprep.subr.mxu0 0.0
      %3254 = vmatpush1.msra.mxu0 %v2765
      %3255 = vmatprep.subr.mxu0 0.0
      %3256 = vmatpush1.msra.mxu0 %v2766
      %3257 = vmatprep.subr.mxu0 0.0
      %3258 = vmatpush1.msra.mxu0 %v2767
      %3259 = vmatprep.subr.mxu0 0.0
      %3260 = vmatpush1.msra.mxu0 %v2768
      %3261 = vmatprep.subr.mxu0 0.0
      %3262 = vmatpush1.msra.mxu0 %v2769
      %3263 = vmatprep.subr.mxu0 0.0
      %3264 = vmatpush1.msra.mxu0 %v2770
      %3265 = vmatprep.subr.mxu0 0.0
      %3266 = vmatpush1.msra.mxu0 %v2771
      %3267 = vmatprep.subr.mxu0 0.0
      %3268 = vmatpush1.msra.mxu0 %v2772
      %3269 = vmatprep.subr.mxu0 0.0
      %3270 = vmatpush1.msra.mxu0 %v2773
      %3271 = vmatprep.subr.mxu0 0.0
      %3272 = vmatpush1.msra.mxu0 %v2774
      %3273 = vmatprep.subr.mxu0 0.0
      %3274 = vmatpush1.msra.mxu0 %v2775
      %3275 = vmatprep.subr.mxu0 0.0
      %3276 = vmatpush1.msra.mxu0 %v2776
      %3277 = vmatprep.subr.mxu0 0.0
      %3278 = vmatpush1.msra.mxu0 %v2777
      %3279 = vmatprep.subr.mxu0 0.0
      %3280 = vmatpush1.msra.mxu0 %v2778
      %3281 = vmatprep.subr.mxu0 0.0
      %3282 = vmatpush1.msra.mxu0 %v2779
      %3283 = vmatprep.subr.mxu0 0.0
      %3284 = vmatpush1.msra.mxu0 %v2780
      %3285 = vmatprep.subr.mxu0 0.0
      %3286 = vmatpush1.msra.mxu0 %v2781
      %3287 = vmatprep.subr.mxu0 0.0
      %3288 = vmatpush1.msra.mxu0 %v2782
      %3289 = vmatprep.subr.mxu0 0.0
      %3290 = vmatpush1.msra.mxu0 %v2783
      %3291 = vmatprep.subr.mxu0 0.0
      %3292 = vmatpush1.msra.mxu0 %v2784
      %3293 = vmatprep.subr.mxu0 0.0
      %3294 = vmatpush1.msra.mxu0 %v2785
      %3295 = vmatprep.subr.mxu0 0.0
      %3296 = vmatpush1.msra.mxu0 %v2786
      %3297 = vmatprep.subr.mxu0 0.0
      %3298 = vmatpush1.msra.mxu0 %v2787
      %3299 = vmatprep.subr.mxu0 0.0
      %3300 = vmatpush1.msra.mxu0 %v2788
      %3301 = vmatprep.subr.mxu0 0.0
      %3302 = vmatpush1.msra.mxu0 %v2789
      %3303 = vmatprep.subr.mxu0 0.0
      %3304 = vmatpush1.msra.mxu0 %v2790
      %3305 = vmatprep.mubr.f32.mxu0 %v1649
      %3306 = vmatmul.mubr.f32.gmra.mrb[0].mxu0 %v1527
      %v3307 = vpop.f32.mrb[0].mxu0
      %v3308 = vadd.f32 %v3203, %v3307
      %v3309 = vpop.f32.mrb[0].mxu0
      %3310 = vmatprep.mubr.f32.mxu0 %v1654
      %3311 = vmatmul.mubr.f32.gmra.mrb[0].mxu0 %v1532
      %v3312 = vpop.f32.mrb[0].mxu0
      %v3313 = vadd.f32 %v3208, %v3312
      %v3314 = vpop.f32.mrb[0].mxu0
      %3315 = vmatprep.mubr.f32.mxu0 %v1659
      %3316 = vmatmul.mubr.f32.gmra.mrb[0].mxu0 %v1537
      %v3317 = vpop.f32.mrb[0].mxu0
      %v3318 = vadd.f32 %v3213, %v3317
      %v3319 = vpop.f32.mrb[0].mxu0
      %3320 = vmatprep.mubr.f32.mxu0 %v1664
      %3321 = vmatmul.mubr.f32.gmra.mrb[0].mxu0 %v1542
      %v3322 = vpop.f32.mrb[0].mxu0
      %v3323 = vadd.f32 %v3218, %v3322
      %v3324 = vpop.f32.mrb[0].mxu0
      %3325 = vmatprep.mubr.f32.mxu0 %v1669
      %3326 = vmatmul.mubr.f32.gmra.mrb[0].mxu0 %v1547
      %v3327 = vpop.f32.mrb[0].mxu0
      %v3328 = vadd.f32 %v3223, %v3327
      %v3329 = vpop.f32.mrb[0].mxu0
      %3330 = vmatprep.mubr.f32.mxu0 %v1674
      %3331 = vmatmul.mubr.f32.gmra.mrb[0].mxu0 %v1552
      %v3332 = vpop.f32.mrb[0].mxu0
      %v3333 = vadd.f32 %v3228, %v3332
      %v3334 = vpop.f32.mrb[0].mxu0
      %3335 = vmatprep.mubr.f32.mxu0 %v1679
      %3336 = vmatmul.mubr.f32.gmra.mrb[0].mxu0 %v1557
      %v3337 = vpop.f32.mrb[0].mxu0
      %v3338 = vadd.f32 %v3233, %v3337
      %v3339 = vpop.f32.mrb[0].mxu0
      %3340 = vmatprep.mubr.f32.mxu0 %v1684
      %3341 = vmatmul.mubr.f32.gmra.mrb[0].mxu0 %v1562
      %v3342 = vpop.f32.mrb[0].mxu0
      %v3343 = vadd.f32 %v3238, %v3342
      %v3344 = vpop.f32.mrb[0].mxu0
      %3345 = vdwg.mxu0
      %3346 = vmatprep.subr.mxu0 0.0
      %3347 = vmatpush1.msra.mxu0 %v2791
      %3348 = vmatprep.subr.mxu0 0.0
      %3349 = vmatpush1.msra.mxu0 %v2792
      %3350 = vmatprep.subr.mxu0 0.0
      %3351 = vmatpush1.msra.mxu0 %v2793
      %3352 = vmatprep.subr.mxu0 0.0
      %3353 = vmatpush1.msra.mxu0 %v2794
      %3354 = vmatprep.subr.mxu0 0.0
      %3355 = vmatpush1.msra.mxu0 %v2795
      %3356 = vmatprep.subr.mxu0 0.0
      %3357 = vmatpush1.msra.mxu0 %v2796
      %3358 = vmatprep.subr.mxu0 0.0
      %3359 = vmatpush1.msra.mxu0 %v2797
      %3360 = vmatprep.subr.mxu0 0.0
      %3361 = vmatpush1.msra.mxu0 %v2798
      %3362 = vmatprep.subr.mxu0 0.0
      %3363 = vmatpush1.msra.mxu0 %v2799
      %3364 = vmatprep.subr.mxu0 0.0
      %3365 = vmatpush1.msra.mxu0 %v2800
      %3366 = vmatprep.subr.mxu0 0.0
      %3367 = vmatpush1.msra.mxu0 %v2801
      %3368 = vmatprep.subr.mxu0 0.0
      %3369 = vmatpush1.msra.mxu0 %v2802
      %3370 = vmatprep.subr.mxu0 0.0
      %3371 = vmatpush1.msra.mxu0 %v2803
      %3372 = vmatprep.subr.mxu0 0.0
      %3373 = vmatpush1.msra.mxu0 %v2804
      %3374 = vmatprep.subr.mxu0 0.0
      %3375 = vmatpush1.msra.mxu0 %v2805
      %3376 = vmatprep.subr.mxu0 0.0
      %3377 = vmatpush1.msra.mxu0 %v2806
      %3378 = vmatprep.subr.mxu0 0.0
      %3379 = vmatpush1.msra.mxu0 %v2807
      %3380 = vmatprep.subr.mxu0 0.0
      %3381 = vmatpush1.msra.mxu0 %v2808
      %3382 = vmatprep.subr.mxu0 0.0
      %3383 = vmatpush1.msra.mxu0 %v2809
      %3384 = vmatprep.subr.mxu0 0.0
      %3385 = vmatpush1.msra.mxu0 %v2810
      %3386 = vmatprep.subr.mxu0 0.0
      %3387 = vmatpush1.msra.mxu0 %v2811
      %3388 = vmatprep.subr.mxu0 0.0
      %3389 = vmatpush1.msra.mxu0 %v2812
      %3390 = vmatprep.subr.mxu0 0.0
      %3391 = vmatpush1.msra.mxu0 %v2813
      %3392 = vmatprep.subr.mxu0 0.0
      %3393 = vmatpush1.msra.mxu0 %v2814
      %3394 = vmatprep.subr.mxu0 0.0
      %3395 = vmatpush1.msra.mxu0 %v2815
      %3396 = vmatprep.subr.mxu0 0.0
      %3397 = vmatpush1.msra.mxu0 %v2816
      %3398 = vmatprep.subr.mxu0 0.0
      %3399 = vmatpush1.msra.mxu0 %v2817
      %3400 = vmatprep.subr.mxu0 0.0
      %3401 = vmatpush1.msra.mxu0 %v2818
      %3402 = vmatprep.subr.mxu0 0.0
      %3403 = vmatpush1.msra.mxu0 %v2819
      %3404 = vmatprep.subr.mxu0 0.0
      %3405 = vmatpush1.msra.mxu0 %v2820
      %3406 = vmatprep.subr.mxu0 0.0
      %3407 = vmatpush1.msra.mxu0 %v2821
      %3408 = vmatprep.subr.mxu0 0.0
      %3409 = vmatpush1.msra.mxu0 %v2822
      %3410 = vmatprep.mubr.f32.mxu0 %v1893
      %3411 = vmatmul.mubr.f32.gmra.mrb[0].mxu0 %v1771
      %v3412 = vpop.f32.mrb[0].mxu0
      %v3413 = vadd.f32 %v3308, %v3412
      %v3414 = vpop.f32.mrb[0].mxu0
      %3415 = vmatprep.mubr.f32.mxu0 %v1898
      %3416 = vmatmul.mubr.f32.gmra.mrb[0].mxu0 %v1776
      %v3417 = vpop.f32.mrb[0].mxu0
      %v3418 = vadd.f32 %v3313, %v3417
      %v3419 = vpop.f32.mrb[0].mxu0
      %3420 = vmatprep.mubr.f32.mxu0 %v1903
      %3421 = vmatmul.mubr.f32.gmra.mrb[0].mxu0 %v1781
      %v3422 = vpop.f32.mrb[0].mxu0
      %v3423 = vadd.f32 %v3318, %v3422
      %v3424 = vpop.f32.mrb[0].mxu0
      %3425 = vmatprep.mubr.f32.mxu0 %v1908
      %3426 = vmatmul.mubr.f32.gmra.mrb[0].mxu0 %v1786
      %v3427 = vpop.f32.mrb[0].mxu0
      %v3428 = vadd.f32 %v3323, %v3427
      %v3429 = vpop.f32.mrb[0].mxu0
      %3430 = vmatprep.mubr.f32.mxu0 %v1913
      %3431 = vmatmul.mubr.f32.gmra.mrb[0].mxu0 %v1791
      %v3432 = vpop.f32.mrb[0].mxu0
      %v3433 = vadd.f32 %v3328, %v3432
      %v3434 = vpop.f32.mrb[0].mxu0
      %3435 = vmatprep.mubr.f32.mxu0 %v1918
      %3436 = vmatmul.mubr.f32.gmra.mrb[0].mxu0 %v1796
      %v3437 = vpop.f32.mrb[0].mxu0
      %v3438 = vadd.f32 %v3333, %v3437
      %v3439 = vpop.f32.mrb[0].mxu0
      %3440 = vmatprep.mubr.f32.mxu0 %v1923
      %3441 = vmatmul.mubr.f32.gmra.mrb[0].mxu0 %v1801
      %v3442 = vpop.f32.mrb[0].mxu0
      %v3443 = vadd.f32 %v3338, %v3442
      %v3444 = vpop.f32.mrb[0].mxu0
      %3445 = vmatprep.mubr.f32.mxu0 %v1928
      %3446 = vmatmul.mubr.f32.gmra.mrb[0].mxu0 %v1806
      %v3447 = vpop.f32.mrb[0].mxu0
      %v3448 = vadd.f32 %v3343, %v3447
      %v3449 = vpop.f32.mrb[0].mxu0
      %3450 = vdwg.mxu0
      %3451 = vmatprep.subr.mxu0 0.0
      %3452 = vmatpush1.msra.mxu0 %v2823
      %3453 = vmatprep.subr.mxu0 0.0
      %3454 = vmatpush1.msra.mxu0 %v2824
      %3455 = vmatprep.subr.mxu0 0.0
      %3456 = vmatpush1.msra.mxu0 %v2825
      %3457 = vmatprep.subr.mxu0 0.0
      %3458 = vmatpush1.msra.mxu0 %v2826
      %3459 = vmatprep.subr.mxu0 0.0
      %3460 = vmatpush1.msra.mxu0 %v2827
      %3461 = vmatprep.subr.mxu0 0.0
      %3462 = vmatpush1.msra.mxu0 %v2828
      %3463 = vmatprep.subr.mxu0 0.0
      %3464 = vmatpush1.msra.mxu0 %v2829
      %3465 = vmatprep.subr.mxu0 0.0
      %3466 = vmatpush1.msra.mxu0 %v2830
      %3467 = vmatprep.subr.mxu0 0.0
      %3468 = vmatpush1.msra.mxu0 %v2831
      %3469 = vmatprep.subr.mxu0 0.0
      %3470 = vmatpush1.msra.mxu0 %v2832
      %3471 = vmatprep.subr.mxu0 0.0
      %3472 = vmatpush1.msra.mxu0 %v2833
      %3473 = vmatprep.subr.mxu0 0.0
      %3474 = vmatpush1.msra.mxu0 %v2834
      %3475 = vmatprep.subr.mxu0 0.0
      %3476 = vmatpush1.msra.mxu0 %v2835
      %3477 = vmatprep.subr.mxu0 0.0
      %3478 = vmatpush1.msra.mxu0 %v2836
      %3479 = vmatprep.subr.mxu0 0.0
      %3480 = vmatpush1.msra.mxu0 %v2837
      %3481 = vmatprep.subr.mxu0 0.0
      %3482 = vmatpush1.msra.mxu0 %v2838
      %3483 = vmatprep.subr.mxu0 0.0
      %3484 = vmatpush1.msra.mxu0 %v2839
      %3485 = vmatprep.subr.mxu0 0.0
      %3486 = vmatpush1.msra.mxu0 %v2840
      %3487 = vmatprep.subr.mxu0 0.0
      %3488 = vmatpush1.msra.mxu0 %v2841
      %3489 = vmatprep.subr.mxu0 0.0
      %3490 = vmatpush1.msra.mxu0 %v2842
      %3491 = vmatprep.subr.mxu0 0.0
      %3492 = vmatpush1.msra.mxu0 %v2843
      %3493 = vmatprep.subr.mxu0 0.0
      %3494 = vmatpush1.msra.mxu0 %v2844
      %3495 = vmatprep.subr.mxu0 0.0
      %3496 = vmatpush1.msra.mxu0 %v2845
      %3497 = vmatprep.subr.mxu0 0.0
      %3498 = vmatpush1.msra.mxu0 %v2846
      %3499 = vmatprep.subr.mxu0 0.0
      %3500 = vmatpush1.msra.mxu0 %v2847
      %3501 = vmatprep.subr.mxu0 0.0
      %3502 = vmatpush1.msra.mxu0 %v2848
      %3503 = vmatprep.subr.mxu0 0.0
      %3504 = vmatpush1.msra.mxu0 %v2849
      %3505 = vmatprep.subr.mxu0 0.0
      %3506 = vmatpush1.msra.mxu0 %v2850
      %3507 = vmatprep.subr.mxu0 0.0
      %3508 = vmatpush1.msra.mxu0 %v2851
      %3509 = vmatprep.subr.mxu0 0.0
      %3510 = vmatpush1.msra.mxu0 %v2852
      %3511 = vmatprep.subr.mxu0 0.0
      %3512 = vmatpush1.msra.mxu0 %v2853
      %3513 = vmatprep.subr.mxu0 0.0
      %3514 = vmatpush1.msra.mxu0 %v2854
      %3515 = vmatprep.mubr.f32.mxu0 %v2137
      %3516 = vmatmul.mubr.f32.gmra.mrb[0].mxu0 %v2015
      %v3517 = vpop.f32.mrb[0].mxu0
      %v3518 = vadd.f32 %v3413, %v3517
      %v3519 = vpop.f32.mrb[0].mxu0
      %3520 = vmatprep.mubr.f32.mxu0 %v2142
      %3521 = vmatmul.mubr.f32.gmra.mrb[0].mxu0 %v2020
      %v3522 = vpop.f32.mrb[0].mxu0
      %v3523 = vadd.f32 %v3418, %v3522
      %v3524 = vpop.f32.mrb[0].mxu0
      %3525 = vmatprep.mubr.f32.mxu0 %v2147
      %3526 = vmatmul.mubr.f32.gmra.mrb[0].mxu0 %v2025
      %v3527 = vpop.f32.mrb[0].mxu0
      %v3528 = vadd.f32 %v3423, %v3527
      %v3529 = vpop.f32.mrb[0].mxu0
      %3530 = vmatprep.mubr.f32.mxu0 %v2152
      %3531 = vmatmul.mubr.f32.gmra.mrb[0].mxu0 %v2030
      %v3532 = vpop.f32.mrb[0].mxu0
      %v3533 = vadd.f32 %v3428, %v3532
      %v3534 = vpop.f32.mrb[0].mxu0
      %3535 = vmatprep.mubr.f32.mxu0 %v2157
      %3536 = vmatmul.mubr.f32.gmra.mrb[0].mxu0 %v2035
      %v3537 = vpop.f32.mrb[0].mxu0
      %v3538 = vadd.f32 %v3433, %v3537
      %v3539 = vpop.f32.mrb[0].mxu0
      %3540 = vmatprep.mubr.f32.mxu0 %v2162
      %3541 = vmatmul.mubr.f32.gmra.mrb[0].mxu0 %v2040
      %v3542 = vpop.f32.mrb[0].mxu0
      %v3543 = vadd.f32 %v3438, %v3542
      %v3544 = vpop.f32.mrb[0].mxu0
      %3545 = vmatprep.mubr.f32.mxu0 %v2167
      %3546 = vmatmul.mubr.f32.gmra.mrb[0].mxu0 %v2045
      %v3547 = vpop.f32.mrb[0].mxu0
      %v3548 = vadd.f32 %v3443, %v3547
      %v3549 = vpop.f32.mrb[0].mxu0
      %3550 = vmatprep.mubr.f32.mxu0 %v2172
      %3551 = vmatmul.mubr.f32.gmra.mrb[0].mxu0 %v2050
      %v3552 = vpop.f32.mrb[0].mxu0
      %v3553 = vadd.f32 %v3448, %v3552
      %v3554 = vpop.f32.mrb[0].mxu0
      %3555 = vdwg.mxu0
      %3556 = vmatprep.subr.mxu0 0.0
      %3557 = vmatpush1.msra.mxu0 %v2855
      %3558 = vmatprep.subr.mxu0 0.0
      %3559 = vmatpush1.msra.mxu0 %v2856
      %3560 = vmatprep.subr.mxu0 0.0
      %3561 = vmatpush1.msra.mxu0 %v2857
      %3562 = vmatprep.subr.mxu0 0.0
      %3563 = vmatpush1.msra.mxu0 %v2858
      %3564 = vmatprep.subr.mxu0 0.0
      %3565 = vmatpush1.msra.mxu0 %v2859
      %3566 = vmatprep.subr.mxu0 0.0
      %3567 = vmatpush1.msra.mxu0 %v2860
      %3568 = vmatprep.subr.mxu0 0.0
      %3569 = vmatpush1.msra.mxu0 %v2861
      %3570 = vmatprep.subr.mxu0 0.0
      %3571 = vmatpush1.msra.mxu0 %v2862
      %3572 = vmatprep.subr.mxu0 0.0
      %3573 = vmatpush1.msra.mxu0 %v2863
      %3574 = vmatprep.subr.mxu0 0.0
      %3575 = vmatpush1.msra.mxu0 %v2864
      %3576 = vmatprep.subr.mxu0 0.0
      %3577 = vmatpush1.msra.mxu0 %v2865
      %3578 = vmatprep.subr.mxu0 0.0
      %3579 = vmatpush1.msra.mxu0 %v2866
      %3580 = vmatprep.subr.mxu0 0.0
      %3581 = vmatpush1.msra.mxu0 %v2867
      %3582 = vmatprep.subr.mxu0 0.0
      %3583 = vmatpush1.msra.mxu0 %v2868
      %3584 = vmatprep.subr.mxu0 0.0
      %3585 = vmatpush1.msra.mxu0 %v2869
      %3586 = vmatprep.subr.mxu0 0.0
      %3587 = vmatpush1.msra.mxu0 %v2870
      %3588 = vmatprep.subr.mxu0 0.0
      %3589 = vmatpush1.msra.mxu0 %v2871
      %3590 = vmatprep.subr.mxu0 0.0
      %3591 = vmatpush1.msra.mxu0 %v2872
      %3592 = vmatprep.subr.mxu0 0.0
      %3593 = vmatpush1.msra.mxu0 %v2873
      %3594 = vmatprep.subr.mxu0 0.0
      %3595 = vmatpush1.msra.mxu0 %v2874
      %3596 = vmatprep.subr.mxu0 0.0
      %3597 = vmatpush1.msra.mxu0 %v2875
      %3598 = vmatprep.subr.mxu0 0.0
      %3599 = vmatpush1.msra.mxu0 %v2876
      %3600 = vmatprep.subr.mxu0 0.0
      %3601 = vmatpush1.msra.mxu0 %v2877
      %3602 = vmatprep.subr.mxu0 0.0
      %3603 = vmatpush1.msra.mxu0 %v2878
      %3604 = vmatprep.subr.mxu0 0.0
      %3605 = vmatpush1.msra.mxu0 %v2879
      %3606 = vmatprep.subr.mxu0 0.0
      %3607 = vmatpush1.msra.mxu0 %v2880
      %3608 = vmatprep.subr.mxu0 0.0
      %3609 = vmatpush1.msra.mxu0 %v2881
      %3610 = vmatprep.subr.mxu0 0.0
      %3611 = vmatpush1.msra.mxu0 %v2882
      %3612 = vmatprep.subr.mxu0 0.0
      %3613 = vmatpush1.msra.mxu0 %v2883
      %3614 = vmatprep.subr.mxu0 0.0
      %3615 = vmatpush1.msra.mxu0 %v2884
      %3616 = vmatprep.subr.mxu0 0.0
      %3617 = vmatpush1.msra.mxu0 %v2885
      %3618 = vmatprep.subr.mxu0 0.0
      %3619 = vmatpush1.msra.mxu0 %v2886
      %3620 = vmatprep.mubr.f32.mxu0 %v2381
      %3621 = vmatmul.mubr.f32.gmra.mrb[0].mxu0 %v2259
      %v3622 = vpop.f32.mrb[0].mxu0
      %v3623 = vadd.f32 %v3518, %v3622
      %v3624 = vpop.f32.mrb[0].mxu0
      %3625 = vmatprep.mubr.f32.mxu0 %v2386
      %3626 = vmatmul.mubr.f32.gmra.mrb[0].mxu0 %v2264
      %v3627 = vpop.f32.mrb[0].mxu0
      %v3628 = vadd.f32 %v3523, %v3627
      %v3629 = vpop.f32.mrb[0].mxu0
      %3630 = vmatprep.mubr.f32.mxu0 %v2391
      %3631 = vmatmul.mubr.f32.gmra.mrb[0].mxu0 %v2269
      %v3632 = vpop.f32.mrb[0].mxu0
      %v3633 = vadd.f32 %v3528, %v3632
      %v3634 = vpop.f32.mrb[0].mxu0
      %3635 = vmatprep.mubr.f32.mxu0 %v2396
      %3636 = vmatmul.mubr.f32.gmra.mrb[0].mxu0 %v2274
      %v3637 = vpop.f32.mrb[0].mxu0
      %v3638 = vadd.f32 %v3533, %v3637
      %v3639 = vpop.f32.mrb[0].mxu0
      %3640 = vmatprep.mubr.f32.mxu0 %v2401
      %3641 = vmatmul.mubr.f32.gmra.mrb[0].mxu0 %v2279
      %v3642 = vpop.f32.mrb[0].mxu0
      %v3643 = vadd.f32 %v3538, %v3642
      %v3644 = vpop.f32.mrb[0].mxu0
      %3645 = vmatprep.mubr.f32.mxu0 %v2406
      %3646 = vmatmul.mubr.f32.gmra.mrb[0].mxu0 %v2284
      %v3647 = vpop.f32.mrb[0].mxu0
      %v3648 = vadd.f32 %v3543, %v3647
      %v3649 = vpop.f32.mrb[0].mxu0
      %3650 = vmatprep.mubr.f32.mxu0 %v2411
      %3651 = vmatmul.mubr.f32.gmra.mrb[0].mxu0 %v2289
      %v3652 = vpop.f32.mrb[0].mxu0
      %v3653 = vadd.f32 %v3548, %v3652
      %v3654 = vpop.f32.mrb[0].mxu0
      %3655 = vmatprep.mubr.f32.mxu0 %v2416
      %3656 = vmatmul.mubr.f32.gmra.mrb[0].mxu0 %v2294
      %v3657 = vpop.f32.mrb[0].mxu0
      %v3658 = vadd.f32 %v3553, %v3657
      %v3659 = vpop.f32.mrb[0].mxu0
      %3660 = vdwg.mxu0
      %3661 = vmatprep.subr.mxu0 0.0
      %3662 = vmatpush1.msra.mxu0 %v2887
      %3663 = vmatprep.subr.mxu0 0.0
      %3664 = vmatpush1.msra.mxu0 %v2888
      %3665 = vmatprep.subr.mxu0 0.0
      %3666 = vmatpush1.msra.mxu0 %v2889
      %3667 = vmatprep.subr.mxu0 0.0
      %3668 = vmatpush1.msra.mxu0 %v2890
      %3669 = vmatprep.subr.mxu0 0.0
      %3670 = vmatpush1.msra.mxu0 %v2891
      %3671 = vmatprep.subr.mxu0 0.0
      %3672 = vmatpush1.msra.mxu0 %v2892
      %3673 = vmatprep.subr.mxu0 0.0
      %3674 = vmatpush1.msra.mxu0 %v2893
      %3675 = vmatprep.subr.mxu0 0.0
      %3676 = vmatpush1.msra.mxu0 %v2894
      %3677 = vmatprep.subr.mxu0 0.0
      %3678 = vmatpush1.msra.mxu0 %v2895
      %3679 = vmatprep.subr.mxu0 0.0
      %3680 = vmatpush1.msra.mxu0 %v2896
      %3681 = vmatprep.subr.mxu0 0.0
      %3682 = vmatpush1.msra.mxu0 %v2897
      %3683 = vmatprep.subr.mxu0 0.0
      %3684 = vmatpush1.msra.mxu0 %v2898
      %3685 = vmatprep.subr.mxu0 0.0
      %3686 = vmatpush1.msra.mxu0 %v2899
      %3687 = vmatprep.subr.mxu0 0.0
      %3688 = vmatpush1.msra.mxu0 %v2900
      %3689 = vmatprep.subr.mxu0 0.0
      %3690 = vmatpush1.msra.mxu0 %v2901
      %3691 = vmatprep.subr.mxu0 0.0
      %3692 = vmatpush1.msra.mxu0 %v2902
      %3693 = vmatprep.subr.mxu0 0.0
      %3694 = vmatpush1.msra.mxu0 %v2903
      %3695 = vmatprep.subr.mxu0 0.0
      %3696 = vmatpush1.msra.mxu0 %v2904
      %3697 = vmatprep.subr.mxu0 0.0
      %3698 = vmatpush1.msra.mxu0 %v2905
      %3699 = vmatprep.subr.mxu0 0.0
      %3700 = vmatpush1.msra.mxu0 %v2906
      %3701 = vmatprep.subr.mxu0 0.0
      %3702 = vmatpush1.msra.mxu0 %v2907
      %3703 = vmatprep.subr.mxu0 0.0
      %3704 = vmatpush1.msra.mxu0 %v2908
      %3705 = vmatprep.subr.mxu0 0.0
      %3706 = vmatpush1.msra.mxu0 %v2909
      %3707 = vmatprep.subr.mxu0 0.0
      %3708 = vmatpush1.msra.mxu0 %v2910
      %3709 = vmatprep.subr.mxu0 0.0
      %3710 = vmatpush1.msra.mxu0 %v2911
      %3711 = vmatprep.subr.mxu0 0.0
      %3712 = vmatpush1.msra.mxu0 %v2912
      %3713 = vmatprep.subr.mxu0 0.0
      %3714 = vmatpush1.msra.mxu0 %v2913
      %3715 = vmatprep.subr.mxu0 0.0
      %3716 = vmatpush1.msra.mxu0 %v2914
      %3717 = vmatprep.subr.mxu0 0.0
      %3718 = vmatpush1.msra.mxu0 %v2915
      %3719 = vmatprep.subr.mxu0 0.0
      %3720 = vmatpush1.msra.mxu0 %v2916
      %3721 = vmatprep.subr.mxu0 0.0
      %3722 = vmatpush1.msra.mxu0 %v2917
      %3723 = vmatprep.subr.mxu0 0.0
      %3724 = vmatpush1.msra.mxu0 %v2918
      %3725 = vmatprep.mubr.f32.mxu0 %v2625
      %3726 = vmatmul.mubr.f32.gmra.mrb[0].mxu0 %v2503
      %v3727 = vpop.f32.mrb[0].mxu0
      %v3728 = vadd.f32 %v3623, %v3727
      %v3729 = vpop.f32.mrb[0].mxu0
      %3730 = vmatprep.mubr.f32.mxu0 %v2630
      %3731 = vmatmul.mubr.f32.gmra.mrb[0].mxu0 %v2508
      %v3732 = vpop.f32.mrb[0].mxu0
      %v3733 = vadd.f32 %v3628, %v3732
      %v3734 = vpop.f32.mrb[0].mxu0
      %3735 = vmatprep.mubr.f32.mxu0 %v2635
      %3736 = vmatmul.mubr.f32.gmra.mrb[0].mxu0 %v2513
      %v3737 = vpop.f32.mrb[0].mxu0
      %v3738 = vadd.f32 %v3633, %v3737
      %v3739 = vpop.f32.mrb[0].mxu0
      %3740 = vmatprep.mubr.f32.mxu0 %v2640
      %3741 = vmatmul.mubr.f32.gmra.mrb[0].mxu0 %v2518
      %v3742 = vpop.f32.mrb[0].mxu0
      %v3743 = vadd.f32 %v3638, %v3742
      %v3744 = vpop.f32.mrb[0].mxu0
      %3745 = vmatprep.mubr.f32.mxu0 %v2645
      %3746 = vmatmul.mubr.f32.gmra.mrb[0].mxu0 %v2523
      %v3747 = vpop.f32.mrb[0].mxu0
      %v3748 = vadd.f32 %v3643, %v3747
      %v3749 = vpop.f32.mrb[0].mxu0
      %3750 = vmatprep.mubr.f32.mxu0 %v2650
      %3751 = vmatmul.mubr.f32.gmra.mrb[0].mxu0 %v2528
      %v3752 = vpop.f32.mrb[0].mxu0
      %v3753 = vadd.f32 %v3648, %v3752
      %v3754 = vpop.f32.mrb[0].mxu0
      %3755 = vmatprep.mubr.f32.mxu0 %v2655
      %3756 = vmatmul.mubr.f32.gmra.mrb[0].mxu0 %v2533
      %v3757 = vpop.f32.mrb[0].mxu0
      %v3758 = vadd.f32 %v3653, %v3757
      %v3759 = vpop.f32.mrb[0].mxu0
      %3760 = vmatprep.mubr.f32.mxu0 %v2660
      %3761 = vmatmul.mubr.f32.gmra.mrb[0].mxu0 %v2538
      %v3762 = vpop.f32.mrb[0].mxu0
      %v3763 = vadd.f32 %v3658, %v3762
      %v3764 = vpop.f32.mrb[0].mxu0
      %3765 = vdwg.mxu0
      %vm3766 = vcmp.ge.f32.partialorder %v3728, 0.0
      %vm3767 = vcmp.ge.f32.partialorder %v3733, 0.0
      %vm3768 = vcmp.ge.f32.partialorder %v3738, 0.0
      %vm3769 = vcmp.ge.f32.partialorder %v3743, 0.0
      %vm3770 = vcmp.ge.f32.partialorder %v3748, 0.0
      %vm3771 = vcmp.ge.f32.partialorder %v3753, 0.0
      %vm3772 = vcmp.ge.f32.partialorder %v3758, 0.0
      %vm3773 = vcmp.ge.f32.partialorder %v3763, 0.0
      %v3774 = vmul.f32 %v3728, 0.01
      %v3775 = vmul.f32 %v3733, 0.01
      %v3776 = vmul.f32 %v3738, 0.01
      %v3777 = vmul.f32 %v3743, 0.01
      %v3778 = vmul.f32 %v3748, 0.01
      %v3779 = vmul.f32 %v3753, 0.01
      %v3780 = vmul.f32 %v3758, 0.01
      %v3781 = vmul.f32 %v3763, 0.01
      %v3782 = vsel %vm3766, %v3728, %v3774
      %v3783 = vsel %vm3767, %v3733, %v3775
      %v3784 = vsel %vm3768, %v3738, %v3776
      %v3785 = vsel %vm3769, %v3743, %v3777
      %v3786 = vsel %vm3770, %v3748, %v3778
      %v3787 = vsel %vm3771, %v3753, %v3779
      %v3788 = vsel %vm3772, %v3758, %v3780
      %v3789 = vsel %vm3773, %v3763, %v3781
      %v3790 = vld [vmem:[%s6] sm:$0xff]
      %v3791 = vld [vmem:[%s6 + $0x8] sm:$0xff]
      %v3792 = vld [vmem:[%s6 + $0x10] sm:$0xff]
      %v3793 = vld [vmem:[%s6 + $0x18] sm:$0xff]
      %v3794 = vld [vmem:[%s6 + $0x20] sm:$0xff]
      %v3795 = vld [vmem:[%s6 + $0x28] sm:$0xff]
      %v3796 = vld [vmem:[%s6 + $0x30] sm:$0xff]
      %v3797 = vld [vmem:[%s6 + $0x38] sm:$0xff]
      %vm3798 = vcmask 523264
      %v3800 = vsel %vm3798, %v3790, 0
      %v3803 = vsel %vm3798, %v3791, 0
      %v3806 = vsel %vm3798, %v3792, 0
      %v3809 = vsel %vm3798, %v3793, 0
      %v3812 = vsel %vm3798, %v3794, 0
      %v3815 = vsel %vm3798, %v3795, 0
      %v3818 = vsel %vm3798, %v3796, 0
      %v3821 = vsel %vm3798, %v3797, 0
      %3823 = vmatprep.subr.mxu0 0.0
      %3824 = vmatpush1.msra.mxu0 %v3782
      %3825 = vmatprep.subr.mxu0 0.0
      %3826 = vmatpush1.msra.mxu0 %v3783
      %3827 = vmatprep.subr.mxu0 0.0
      %3828 = vmatpush1.msra.mxu0 %v3784
      %3829 = vmatprep.subr.mxu0 0.0
      %3830 = vmatpush1.msra.mxu0 %v3785
      %3831 = vmatprep.subr.mxu0 0.0
      %3832 = vmatpush1.msra.mxu0 %v3786
      %3833 = vmatprep.subr.mxu0 0.0
      %3834 = vmatpush1.msra.mxu0 %v3787
      %3835 = vmatprep.subr.mxu0 0.0
      %3836 = vmatpush1.msra.mxu0 %v3788
      %3837 = vmatprep.subr.mxu0 0.0
      %3838 = vmatpush1.msra.mxu0 %v3789
      %3839 = vmatprep.subr.mxu0 0.0
      %3840 = vmatpush1.msra.mxu0 0.0
      %3841 = vmatprep.subr.mxu0 0.0
      %3842 = vmatpush1.msra.mxu0 0.0
      %3843 = vmatprep.subr.mxu0 0.0
      %3844 = vmatpush1.msra.mxu0 0.0
      %3845 = vmatprep.subr.mxu0 0.0
      %3846 = vmatpush1.msra.mxu0 0.0
      %3847 = vmatprep.subr.mxu0 0.0
      %3848 = vmatpush1.msra.mxu0 0.0
      %3849 = vmatprep.subr.mxu0 0.0
      %3850 = vmatpush1.msra.mxu0 0.0
      %3851 = vmatprep.subr.mxu0 0.0
      %3852 = vmatpush1.msra.mxu0 0.0
      %3853 = vmatprep.subr.mxu0 0.0
      %3854 = vmatpush1.msra.mxu0 0.0
      %3855 = vmatprep.subr.mxu0 0.0
      %3856 = vmatpush1.msra.mxu0 0.0
      %3857 = vmatprep.subr.mxu0 0.0
      %3858 = vmatpush1.msra.mxu0 0.0
      %3859 = vmatprep.subr.mxu0 0.0
      %3860 = vmatpush1.msra.mxu0 0.0
      %3861 = vmatprep.subr.mxu0 0.0
      %3862 = vmatpush1.msra.mxu0 0.0
      %3863 = vmatprep.subr.mxu0 0.0
      %3864 = vmatpush1.msra.mxu0 0.0
      %3865 = vmatprep.subr.mxu0 0.0
      %3866 = vmatpush1.msra.mxu0 0.0
      %3867 = vmatprep.subr.mxu0 0.0
      %3868 = vmatpush1.msra.mxu0 0.0
      %3869 = vmatprep.subr.mxu0 0.0
      %3870 = vmatpush1.msra.mxu0 0.0
      %3871 = vmatprep.subr.mxu0 0.0
      %3872 = vmatpush1.msra.mxu0 0.0
      %3873 = vmatprep.subr.mxu0 0.0
      %3874 = vmatpush1.msra.mxu0 0.0
      %3875 = vmatprep.subr.mxu0 0.0
      %3876 = vmatpush1.msra.mxu0 0.0
      %3877 = vmatprep.subr.mxu0 0.0
      %3878 = vmatpush1.msra.mxu0 0.0
      %3879 = vmatprep.subr.mxu0 0.0
      %3880 = vmatpush1.msra.mxu0 0.0
      %3881 = vmatprep.subr.mxu0 0.0
      %3882 = vmatpush1.msra.mxu0 0.0
      %3883 = vmatprep.subr.mxu0 0.0
      %3884 = vmatpush1.msra.mxu0 0.0
      %3885 = vmatprep.subr.mxu0 0.0
      %3886 = vmatpush1.msra.mxu0 0.0
      %3887 = vmatprep.mubr.f32.mxu0 0.0
      %3888 = vmatmul.mubr.f32.gmra.mrb[0].mxu0 %v3800
      %v3889 = vpop.f32.mrb[0].mxu0
      %v3890 = vadd.f32 0.0, %v3889
      %v3891 = vpop.f32.mrb[0].mxu0
      %3892 = vmatprep.mubr.f32.mxu0 0.0
      %3893 = vmatmul.mubr.f32.gmra.mrb[0].mxu0 %v3803
      %v3894 = vpop.f32.mrb[0].mxu0
      %v3895 = vadd.f32 0.0, %v3894
      %v3896 = vpop.f32.mrb[0].mxu0
      %3897 = vmatprep.mubr.f32.mxu0 0.0
      %3898 = vmatmul.mubr.f32.gmra.mrb[0].mxu0 %v3806
      %v3899 = vpop.f32.mrb[0].mxu0
      %v3900 = vadd.f32 0.0, %v3899
      %v3901 = vpop.f32.mrb[0].mxu0
      %3902 = vmatprep.mubr.f32.mxu0 0.0
      %3903 = vmatmul.mubr.f32.gmra.mrb[0].mxu0 %v3809
      %v3904 = vpop.f32.mrb[0].mxu0
      %v3905 = vadd.f32 0.0, %v3904
      %v3906 = vpop.f32.mrb[0].mxu0
      %3907 = vmatprep.mubr.f32.mxu0 0.0
      %3908 = vmatmul.mubr.f32.gmra.mrb[0].mxu0 %v3812
      %v3909 = vpop.f32.mrb[0].mxu0
      %v3910 = vadd.f32 0.0, %v3909
      %v3911 = vpop.f32.mrb[0].mxu0
      %3912 = vmatprep.mubr.f32.mxu0 0.0
      %3913 = vmatmul.mubr.f32.gmra.mrb[0].mxu0 %v3815
      %v3914 = vpop.f32.mrb[0].mxu0
      %v3915 = vadd.f32 0.0, %v3914
      %v3916 = vpop.f32.mrb[0].mxu0
      %3917 = vmatprep.mubr.f32.mxu0 0.0
      %3918 = vmatmul.mubr.f32.gmra.mrb[0].mxu0 %v3818
      %v3919 = vpop.f32.mrb[0].mxu0
      %v3920 = vadd.f32 0.0, %v3919
      %v3921 = vpop.f32.mrb[0].mxu0
      %3922 = vmatprep.mubr.f32.mxu0 0.0
      %3923 = vmatmul.mubr.f32.gmra.mrb[0].mxu0 %v3821
      %v3924 = vpop.f32.mrb[0].mxu0
      %v3925 = vadd.f32 0.0, %v3924
      %v3926 = vpop.f32.mrb[0].mxu0
      %3927 = vdwg.mxu0
      %s3928 = scalar_lea.vmem %s6, 64
      %v3929 = vld [vmem:[%s3928] sm:$0xff]
      %v3930 = vld [vmem:[%s3928 + $0x8] sm:$0xff]
      %v3931 = vld [vmem:[%s3928 + $0x10] sm:$0xff]
      %v3932 = vld [vmem:[%s3928 + $0x18] sm:$0xff]
      %v3933 = vld [vmem:[%s3928 + $0x20] sm:$0xff]
      %v3934 = vld [vmem:[%s3928 + $0x28] sm:$0xff]
      %v3935 = vld [vmem:[%s3928 + $0x30] sm:$0xff]
      %v3936 = vld [vmem:[%s3928 + $0x38] sm:$0xff]
      %v3938 = vsel %vm3798, %v3929, 0
      %v3941 = vsel %vm3798, %v3930, 0
      %v3944 = vsel %vm3798, %v3931, 0
      %v3947 = vsel %vm3798, %v3932, 0
      %v3950 = vsel %vm3798, %v3933, 0
      %v3953 = vsel %vm3798, %v3934, 0
      %v3956 = vsel %vm3798, %v3935, 0
      %v3959 = vsel %vm3798, %v3936, 0
      %3961 = vmatprep.subr.mxu0 0.0
      %3962 = vmatpush1.msra.mxu0 %v3782
      %3963 = vmatprep.subr.mxu0 0.0
      %3964 = vmatpush1.msra.mxu0 %v3783
      %3965 = vmatprep.subr.mxu0 0.0
      %3966 = vmatpush1.msra.mxu0 %v3784
      %3967 = vmatprep.subr.mxu0 0.0
      %3968 = vmatpush1.msra.mxu0 %v3785
      %3969 = vmatprep.subr.mxu0 0.0
      %3970 = vmatpush1.msra.mxu0 %v3786
      %3971 = vmatprep.subr.mxu0 0.0
      %3972 = vmatpush1.msra.mxu0 %v3787
      %3973 = vmatprep.subr.mxu0 0.0
      %3974 = vmatpush1.msra.mxu0 %v3788
      %3975 = vmatprep.subr.mxu0 0.0
      %3976 = vmatpush1.msra.mxu0 %v3789
      %3977 = vmatprep.subr.mxu0 0.0
      %3978 = vmatpush1.msra.mxu0 0.0
      %3979 = vmatprep.subr.mxu0 0.0
      %3980 = vmatpush1.msra.mxu0 0.0
      %3981 = vmatprep.subr.mxu0 0.0
      %3982 = vmatpush1.msra.mxu0 0.0
      %3983 = vmatprep.subr.mxu0 0.0
      %3984 = vmatpush1.msra.mxu0 0.0
      %3985 = vmatprep.subr.mxu0 0.0
      %3986 = vmatpush1.msra.mxu0 0.0
      %3987 = vmatprep.subr.mxu0 0.0
      %3988 = vmatpush1.msra.mxu0 0.0
      %3989 = vmatprep.subr.mxu0 0.0
      %3990 = vmatpush1.msra.mxu0 0.0
      %3991 = vmatprep.subr.mxu0 0.0
      %3992 = vmatpush1.msra.mxu0 0.0
      %3993 = vmatprep.subr.mxu0 0.0
      %3994 = vmatpush1.msra.mxu0 0.0
      %3995 = vmatprep.subr.mxu0 0.0
      %3996 = vmatpush1.msra.mxu0 0.0
      %3997 = vmatprep.subr.mxu0 0.0
      %3998 = vmatpush1.msra.mxu0 0.0
      %3999 = vmatprep.subr.mxu0 0.0
      %4000 = vmatpush1.msra.mxu0 0.0
      %4001 = vmatprep.subr.mxu0 0.0
      %4002 = vmatpush1.msra.mxu0 0.0
      %4003 = vmatprep.subr.mxu0 0.0
      %4004 = vmatpush1.msra.mxu0 0.0
      %4005 = vmatprep.subr.mxu0 0.0
      %4006 = vmatpush1.msra.mxu0 0.0
      %4007 = vmatprep.subr.mxu0 0.0
      %4008 = vmatpush1.msra.mxu0 0.0
      %4009 = vmatprep.subr.mxu0 0.0
      %4010 = vmatpush1.msra.mxu0 0.0
      %4011 = vmatprep.subr.mxu0 0.0
      %4012 = vmatpush1.msra.mxu0 0.0
      %4013 = vmatprep.subr.mxu0 0.0
      %4014 = vmatpush1.msra.mxu0 0.0
      %4015 = vmatprep.subr.mxu0 0.0
      %4016 = vmatpush1.msra.mxu0 0.0
      %4017 = vmatprep.subr.mxu0 0.0
      %4018 = vmatpush1.msra.mxu0 0.0
      %4019 = vmatprep.subr.mxu0 0.0
      %4020 = vmatpush1.msra.mxu0 0.0
      %4021 = vmatprep.subr.mxu0 0.0
      %4022 = vmatpush1.msra.mxu0 0.0
      %4023 = vmatprep.subr.mxu0 0.0
      %4024 = vmatpush1.msra.mxu0 0.0
      %4025 = vmatprep.mubr.f32.mxu0 0.0
      %4026 = vmatmul.mubr.f32.gmra.mrb[0].mxu0 %v3938
      %v4027 = vpop.f32.mrb[0].mxu0
      %v4028 = vadd.f32 0.0, %v4027
      %v4029 = vpop.f32.mrb[0].mxu0
      %4030 = vmatprep.mubr.f32.mxu0 0.0
      %4031 = vmatmul.mubr.f32.gmra.mrb[0].mxu0 %v3941
      %v4032 = vpop.f32.mrb[0].mxu0
      %v4033 = vadd.f32 0.0, %v4032
      %v4034 = vpop.f32.mrb[0].mxu0
      %4035 = vmatprep.mubr.f32.mxu0 0.0
      %4036 = vmatmul.mubr.f32.gmra.mrb[0].mxu0 %v3944
      %v4037 = vpop.f32.mrb[0].mxu0
      %v4038 = vadd.f32 0.0, %v4037
      %v4039 = vpop.f32.mrb[0].mxu0
      %4040 = vmatprep.mubr.f32.mxu0 0.0
      %4041 = vmatmul.mubr.f32.gmra.mrb[0].mxu0 %v3947
      %v4042 = vpop.f32.mrb[0].mxu0
      %v4043 = vadd.f32 0.0, %v4042
      %v4044 = vpop.f32.mrb[0].mxu0
      %4045 = vmatprep.mubr.f32.mxu0 0.0
      %4046 = vmatmul.mubr.f32.gmra.mrb[0].mxu0 %v3950
      %v4047 = vpop.f32.mrb[0].mxu0
      %v4048 = vadd.f32 0.0, %v4047
      %v4049 = vpop.f32.mrb[0].mxu0
      %4050 = vmatprep.mubr.f32.mxu0 0.0
      %4051 = vmatmul.mubr.f32.gmra.mrb[0].mxu0 %v3953
      %v4052 = vpop.f32.mrb[0].mxu0
      %v4053 = vadd.f32 0.0, %v4052
      %v4054 = vpop.f32.mrb[0].mxu0
      %4055 = vmatprep.mubr.f32.mxu0 0.0
      %4056 = vmatmul.mubr.f32.gmra.mrb[0].mxu0 %v3956
      %v4057 = vpop.f32.mrb[0].mxu0
      %v4058 = vadd.f32 0.0, %v4057
      %v4059 = vpop.f32.mrb[0].mxu0
      %4060 = vmatprep.mubr.f32.mxu0 0.0
      %4061 = vmatmul.mubr.f32.gmra.mrb[0].mxu0 %v3959
      %v4062 = vpop.f32.mrb[0].mxu0
      %v4063 = vadd.f32 0.0, %v4062
      %v4064 = vpop.f32.mrb[0].mxu0
      %4065 = vdwg.mxu0
      %s4066 = scalar_lea.vmem %s6, 128
      %v4067 = vld [vmem:[%s4066] sm:$0xff]
      %v4068 = vld [vmem:[%s4066 + $0x8] sm:$0xff]
      %v4069 = vld [vmem:[%s4066 + $0x10] sm:$0xff]
      %v4070 = vld [vmem:[%s4066 + $0x18] sm:$0xff]
      %v4071 = vld [vmem:[%s4066 + $0x20] sm:$0xff]
      %v4072 = vld [vmem:[%s4066 + $0x28] sm:$0xff]
      %v4073 = vld [vmem:[%s4066 + $0x30] sm:$0xff]
      %v4074 = vld [vmem:[%s4066 + $0x38] sm:$0xff]
      %v4076 = vsel %vm3798, %v4067, 0
      %v4079 = vsel %vm3798, %v4068, 0
      %v4082 = vsel %vm3798, %v4069, 0
      %v4085 = vsel %vm3798, %v4070, 0
      %v4088 = vsel %vm3798, %v4071, 0
      %v4091 = vsel %vm3798, %v4072, 0
      %v4094 = vsel %vm3798, %v4073, 0
      %v4097 = vsel %vm3798, %v4074, 0
      %4099 = vmatprep.subr.mxu0 0.0
      %4100 = vmatpush1.msra.mxu0 %v3782
      %4101 = vmatprep.subr.mxu0 0.0
      %4102 = vmatpush1.msra.mxu0 %v3783
      %4103 = vmatprep.subr.mxu0 0.0
      %4104 = vmatpush1.msra.mxu0 %v3784
      %4105 = vmatprep.subr.mxu0 0.0
      %4106 = vmatpush1.msra.mxu0 %v3785
      %4107 = vmatprep.subr.mxu0 0.0
      %4108 = vmatpush1.msra.mxu0 %v3786
      %4109 = vmatprep.subr.mxu0 0.0
      %4110 = vmatpush1.msra.mxu0 %v3787
      %4111 = vmatprep.subr.mxu0 0.0
      %4112 = vmatpush1.msra.mxu0 %v3788
      %4113 = vmatprep.subr.mxu0 0.0
      %4114 = vmatpush1.msra.mxu0 %v3789
      %4115 = vmatprep.subr.mxu0 0.0
      %4116 = vmatpush1.msra.mxu0 0.0
      %4117 = vmatprep.subr.mxu0 0.0
      %4118 = vmatpush1.msra.mxu0 0.0
      %4119 = vmatprep.subr.mxu0 0.0
      %4120 = vmatpush1.msra.mxu0 0.0
      %4121 = vmatprep.subr.mxu0 0.0
      %4122 = vmatpush1.msra.mxu0 0.0
      %4123 = vmatprep.subr.mxu0 0.0
      %4124 = vmatpush1.msra.mxu0 0.0
      %4125 = vmatprep.subr.mxu0 0.0
      %4126 = vmatpush1.msra.mxu0 0.0
      %4127 = vmatprep.subr.mxu0 0.0
      %4128 = vmatpush1.msra.mxu0 0.0
      %4129 = vmatprep.subr.mxu0 0.0
      %4130 = vmatpush1.msra.mxu0 0.0
      %4131 = vmatprep.subr.mxu0 0.0
      %4132 = vmatpush1.msra.mxu0 0.0
      %4133 = vmatprep.subr.mxu0 0.0
      %4134 = vmatpush1.msra.mxu0 0.0
      %4135 = vmatprep.subr.mxu0 0.0
      %4136 = vmatpush1.msra.mxu0 0.0
      %4137 = vmatprep.subr.mxu0 0.0
      %4138 = vmatpush1.msra.mxu0 0.0
      %4139 = vmatprep.subr.mxu0 0.0
      %4140 = vmatpush1.msra.mxu0 0.0
      %4141 = vmatprep.subr.mxu0 0.0
      %4142 = vmatpush1.msra.mxu0 0.0
      %4143 = vmatprep.subr.mxu0 0.0
      %4144 = vmatpush1.msra.mxu0 0.0
      %4145 = vmatprep.subr.mxu0 0.0
      %4146 = vmatpush1.msra.mxu0 0.0
      %4147 = vmatprep.subr.mxu0 0.0
      %4148 = vmatpush1.msra.mxu0 0.0
      %4149 = vmatprep.subr.mxu0 0.0
      %4150 = vmatpush1.msra.mxu0 0.0
      %4151 = vmatprep.subr.mxu0 0.0
      %4152 = vmatpush1.msra.mxu0 0.0
      %4153 = vmatprep.subr.mxu0 0.0
      %4154 = vmatpush1.msra.mxu0 0.0
      %4155 = vmatprep.subr.mxu0 0.0
      %4156 = vmatpush1.msra.mxu0 0.0
      %4157 = vmatprep.subr.mxu0 0.0
      %4158 = vmatpush1.msra.mxu0 0.0
      %4159 = vmatprep.subr.mxu0 0.0
      %4160 = vmatpush1.msra.mxu0 0.0
      %4161 = vmatprep.subr.mxu0 0.0
      %4162 = vmatpush1.msra.mxu0 0.0
      %4163 = vmatprep.mubr.f32.mxu0 0.0
      %4164 = vmatmul.mubr.f32.gmra.mrb[0].mxu0 %v4076
      %v4165 = vpop.f32.mrb[0].mxu0
      %v4166 = vadd.f32 0.0, %v4165
      %v4167 = vpop.f32.mrb[0].mxu0
      %4168 = vmatprep.mubr.f32.mxu0 0.0
      %4169 = vmatmul.mubr.f32.gmra.mrb[0].mxu0 %v4079
      %v4170 = vpop.f32.mrb[0].mxu0
      %v4171 = vadd.f32 0.0, %v4170
      %v4172 = vpop.f32.mrb[0].mxu0
      %4173 = vmatprep.mubr.f32.mxu0 0.0
      %4174 = vmatmul.mubr.f32.gmra.mrb[0].mxu0 %v4082
      %v4175 = vpop.f32.mrb[0].mxu0
      %v4176 = vadd.f32 0.0, %v4175
      %v4177 = vpop.f32.mrb[0].mxu0
      %4178 = vmatprep.mubr.f32.mxu0 0.0
      %4179 = vmatmul.mubr.f32.gmra.mrb[0].mxu0 %v4085
      %v4180 = vpop.f32.mrb[0].mxu0
      %v4181 = vadd.f32 0.0, %v4180
      %v4182 = vpop.f32.mrb[0].mxu0
      %4183 = vmatprep.mubr.f32.mxu0 0.0
      %4184 = vmatmul.mubr.f32.gmra.mrb[0].mxu0 %v4088
      %v4185 = vpop.f32.mrb[0].mxu0
      %v4186 = vadd.f32 0.0, %v4185
      %v4187 = vpop.f32.mrb[0].mxu0
      %4188 = vmatprep.mubr.f32.mxu0 0.0
      %4189 = vmatmul.mubr.f32.gmra.mrb[0].mxu0 %v4091
      %v4190 = vpop.f32.mrb[0].mxu0
      %v4191 = vadd.f32 0.0, %v4190
      %v4192 = vpop.f32.mrb[0].mxu0
      %4193 = vmatprep.mubr.f32.mxu0 0.0
      %4194 = vmatmul.mubr.f32.gmra.mrb[0].mxu0 %v4094
      %v4195 = vpop.f32.mrb[0].mxu0
      %v4196 = vadd.f32 0.0, %v4195
      %v4197 = vpop.f32.mrb[0].mxu0
      %4198 = vmatprep.mubr.f32.mxu0 0.0
      %4199 = vmatmul.mubr.f32.gmra.mrb[0].mxu0 %v4097
      %v4200 = vpop.f32.mrb[0].mxu0
      %v4201 = vadd.f32 0.0, %v4200
      %v4202 = vpop.f32.mrb[0].mxu0
      %4203 = vdwg.mxu0
      %s4204 = scalar_lea.vmem %s6, 192
      %v4205 = vld [vmem:[%s4204] sm:$0xff]
      %v4206 = vld [vmem:[%s4204 + $0x8] sm:$0xff]
      %v4207 = vld [vmem:[%s4204 + $0x10] sm:$0xff]
      %v4208 = vld [vmem:[%s4204 + $0x18] sm:$0xff]
      %v4209 = vld [vmem:[%s4204 + $0x20] sm:$0xff]
      %v4210 = vld [vmem:[%s4204 + $0x28] sm:$0xff]
      %v4211 = vld [vmem:[%s4204 + $0x30] sm:$0xff]
      %v4212 = vld [vmem:[%s4204 + $0x38] sm:$0xff]
      %v4214 = vsel %vm3798, %v4205, 0
      %v4217 = vsel %vm3798, %v4206, 0
      %v4220 = vsel %vm3798, %v4207, 0
      %v4223 = vsel %vm3798, %v4208, 0
      %v4226 = vsel %vm3798, %v4209, 0
      %v4229 = vsel %vm3798, %v4210, 0
      %v4232 = vsel %vm3798, %v4211, 0
      %v4235 = vsel %vm3798, %v4212, 0
      %4237 = vmatprep.subr.mxu0 0.0
      %4238 = vmatpush1.msra.mxu0 %v3782
      %4239 = vmatprep.subr.mxu0 0.0
      %4240 = vmatpush1.msra.mxu0 %v3783
      %4241 = vmatprep.subr.mxu0 0.0
      %4242 = vmatpush1.msra.mxu0 %v3784
      %4243 = vmatprep.subr.mxu0 0.0
      %4244 = vmatpush1.msra.mxu0 %v3785
      %4245 = vmatprep.subr.mxu0 0.0
      %4246 = vmatpush1.msra.mxu0 %v3786
      %4247 = vmatprep.subr.mxu0 0.0
      %4248 = vmatpush1.msra.mxu0 %v3787
      %4249 = vmatprep.subr.mxu0 0.0
      %4250 = vmatpush1.msra.mxu0 %v3788
      %4251 = vmatprep.subr.mxu0 0.0
      %4252 = vmatpush1.msra.mxu0 %v3789
      %4253 = vmatprep.subr.mxu0 0.0
      %4254 = vmatpush1.msra.mxu0 0.0
      %4255 = vmatprep.subr.mxu0 0.0
      %4256 = vmatpush1.msra.mxu0 0.0
      %4257 = vmatprep.subr.mxu0 0.0
      %4258 = vmatpush1.msra.mxu0 0.0
      %4259 = vmatprep.subr.mxu0 0.0
      %4260 = vmatpush1.msra.mxu0 0.0
      %4261 = vmatprep.subr.mxu0 0.0
      %4262 = vmatpush1.msra.mxu0 0.0
      %4263 = vmatprep.subr.mxu0 0.0
      %4264 = vmatpush1.msra.mxu0 0.0
      %4265 = vmatprep.subr.mxu0 0.0
      %4266 = vmatpush1.msra.mxu0 0.0
      %4267 = vmatprep.subr.mxu0 0.0
      %4268 = vmatpush1.msra.mxu0 0.0
      %4269 = vmatprep.subr.mxu0 0.0
      %4270 = vmatpush1.msra.mxu0 0.0
      %4271 = vmatprep.subr.mxu0 0.0
      %4272 = vmatpush1.msra.mxu0 0.0
      %4273 = vmatprep.subr.mxu0 0.0
      %4274 = vmatpush1.msra.mxu0 0.0
      %4275 = vmatprep.subr.mxu0 0.0
      %4276 = vmatpush1.msra.mxu0 0.0
      %4277 = vmatprep.subr.mxu0 0.0
      %4278 = vmatpush1.msra.mxu0 0.0
      %4279 = vmatprep.subr.mxu0 0.0
      %4280 = vmatpush1.msra.mxu0 0.0
      %4281 = vmatprep.subr.mxu0 0.0
      %4282 = vmatpush1.msra.mxu0 0.0
      %4283 = vmatprep.subr.mxu0 0.0
      %4284 = vmatpush1.msra.mxu0 0.0
      %4285 = vmatprep.subr.mxu0 0.0
      %4286 = vmatpush1.msra.mxu0 0.0
      %4287 = vmatprep.subr.mxu0 0.0
      %4288 = vmatpush1.msra.mxu0 0.0
      %4289 = vmatprep.subr.mxu0 0.0
      %4290 = vmatpush1.msra.mxu0 0.0
      %4291 = vmatprep.subr.mxu0 0.0
      %4292 = vmatpush1.msra.mxu0 0.0
      %4293 = vmatprep.subr.mxu0 0.0
      %4294 = vmatpush1.msra.mxu0 0.0
      %4295 = vmatprep.subr.mxu0 0.0
      %4296 = vmatpush1.msra.mxu0 0.0
      %4297 = vmatprep.subr.mxu0 0.0
      %4298 = vmatpush1.msra.mxu0 0.0
      %4299 = vmatprep.subr.mxu0 0.0
      %4300 = vmatpush1.msra.mxu0 0.0
      %4301 = vmatprep.mubr.f32.mxu0 0.0
      %4302 = vmatmul.mubr.f32.gmra.mrb[0].mxu0 %v4214
      %v4303 = vpop.f32.mrb[0].mxu0
      %v4304 = vadd.f32 0.0, %v4303
      %v4305 = vpop.f32.mrb[0].mxu0
      %4306 = vmatprep.mubr.f32.mxu0 0.0
      %4307 = vmatmul.mubr.f32.gmra.mrb[0].mxu0 %v4217
      %v4308 = vpop.f32.mrb[0].mxu0
      %v4309 = vadd.f32 0.0, %v4308
      %v4310 = vpop.f32.mrb[0].mxu0
      %4311 = vmatprep.mubr.f32.mxu0 0.0
      %4312 = vmatmul.mubr.f32.gmra.mrb[0].mxu0 %v4220
      %v4313 = vpop.f32.mrb[0].mxu0
      %v4314 = vadd.f32 0.0, %v4313
      %v4315 = vpop.f32.mrb[0].mxu0
      %4316 = vmatprep.mubr.f32.mxu0 0.0
      %4317 = vmatmul.mubr.f32.gmra.mrb[0].mxu0 %v4223
      %v4318 = vpop.f32.mrb[0].mxu0
      %v4319 = vadd.f32 0.0, %v4318
      %v4320 = vpop.f32.mrb[0].mxu0
      %4321 = vmatprep.mubr.f32.mxu0 0.0
      %4322 = vmatmul.mubr.f32.gmra.mrb[0].mxu0 %v4226
      %v4323 = vpop.f32.mrb[0].mxu0
      %v4324 = vadd.f32 0.0, %v4323
      %v4325 = vpop.f32.mrb[0].mxu0
      %4326 = vmatprep.mubr.f32.mxu0 0.0
      %4327 = vmatmul.mubr.f32.gmra.mrb[0].mxu0 %v4229
      %v4328 = vpop.f32.mrb[0].mxu0
      %v4329 = vadd.f32 0.0, %v4328
      %v4330 = vpop.f32.mrb[0].mxu0
      %4331 = vmatprep.mubr.f32.mxu0 0.0
      %4332 = vmatmul.mubr.f32.gmra.mrb[0].mxu0 %v4232
      %v4333 = vpop.f32.mrb[0].mxu0
      %v4334 = vadd.f32 0.0, %v4333
      %v4335 = vpop.f32.mrb[0].mxu0
      %4336 = vmatprep.mubr.f32.mxu0 0.0
      %4337 = vmatmul.mubr.f32.gmra.mrb[0].mxu0 %v4235
      %v4338 = vpop.f32.mrb[0].mxu0
      %v4339 = vadd.f32 0.0, %v4338
      %v4340 = vpop.f32.mrb[0].mxu0
      %4341 = vdwg.mxu0
      %s4342 = scalar_lea.vmem %s6, 256
      %v4343 = vld [vmem:[%s4342] sm:$0xff]
      %v4344 = vld [vmem:[%s4342 + $0x8] sm:$0xff]
      %v4345 = vld [vmem:[%s4342 + $0x10] sm:$0xff]
      %v4346 = vld [vmem:[%s4342 + $0x18] sm:$0xff]
      %v4347 = vld [vmem:[%s4342 + $0x20] sm:$0xff]
      %v4348 = vld [vmem:[%s4342 + $0x28] sm:$0xff]
      %v4349 = vld [vmem:[%s4342 + $0x30] sm:$0xff]
      %v4350 = vld [vmem:[%s4342 + $0x38] sm:$0xff]
      %v4352 = vsel %vm3798, %v4343, 0
      %v4355 = vsel %vm3798, %v4344, 0
      %v4358 = vsel %vm3798, %v4345, 0
      %v4361 = vsel %vm3798, %v4346, 0
      %v4364 = vsel %vm3798, %v4347, 0
      %v4367 = vsel %vm3798, %v4348, 0
      %v4370 = vsel %vm3798, %v4349, 0
      %v4373 = vsel %vm3798, %v4350, 0
      %4375 = vmatprep.subr.mxu0 0.0
      %4376 = vmatpush1.msra.mxu0 %v3782
      %4377 = vmatprep.subr.mxu0 0.0
      %4378 = vmatpush1.msra.mxu0 %v3783
      %4379 = vmatprep.subr.mxu0 0.0
      %4380 = vmatpush1.msra.mxu0 %v3784
      %4381 = vmatprep.subr.mxu0 0.0
      %4382 = vmatpush1.msra.mxu0 %v3785
      %4383 = vmatprep.subr.mxu0 0.0
      %4384 = vmatpush1.msra.mxu0 %v3786
      %4385 = vmatprep.subr.mxu0 0.0
      %4386 = vmatpush1.msra.mxu0 %v3787
      %4387 = vmatprep.subr.mxu0 0.0
      %4388 = vmatpush1.msra.mxu0 %v3788
      %4389 = vmatprep.subr.mxu0 0.0
      %4390 = vmatpush1.msra.mxu0 %v3789
      %4391 = vmatprep.subr.mxu0 0.0
      %4392 = vmatpush1.msra.mxu0 0.0
      %4393 = vmatprep.subr.mxu0 0.0
      %4394 = vmatpush1.msra.mxu0 0.0
      %4395 = vmatprep.subr.mxu0 0.0
      %4396 = vmatpush1.msra.mxu0 0.0
      %4397 = vmatprep.subr.mxu0 0.0
      %4398 = vmatpush1.msra.mxu0 0.0
      %4399 = vmatprep.subr.mxu0 0.0
      %4400 = vmatpush1.msra.mxu0 0.0
      %4401 = vmatprep.subr.mxu0 0.0
      %4402 = vmatpush1.msra.mxu0 0.0
      %4403 = vmatprep.subr.mxu0 0.0
      %4404 = vmatpush1.msra.mxu0 0.0
      %4405 = vmatprep.subr.mxu0 0.0
      %4406 = vmatpush1.msra.mxu0 0.0
      %4407 = vmatprep.subr.mxu0 0.0
      %4408 = vmatpush1.msra.mxu0 0.0
      %4409 = vmatprep.subr.mxu0 0.0
      %4410 = vmatpush1.msra.mxu0 0.0
      %4411 = vmatprep.subr.mxu0 0.0
      %4412 = vmatpush1.msra.mxu0 0.0
      %4413 = vmatprep.subr.mxu0 0.0
      %4414 = vmatpush1.msra.mxu0 0.0
      %4415 = vmatprep.subr.mxu0 0.0
      %4416 = vmatpush1.msra.mxu0 0.0
      %4417 = vmatprep.subr.mxu0 0.0
      %4418 = vmatpush1.msra.mxu0 0.0
      %4419 = vmatprep.subr.mxu0 0.0
      %4420 = vmatpush1.msra.mxu0 0.0
      %4421 = vmatprep.subr.mxu0 0.0
      %4422 = vmatpush1.msra.mxu0 0.0
      %4423 = vmatprep.subr.mxu0 0.0
      %4424 = vmatpush1.msra.mxu0 0.0
      %4425 = vmatprep.subr.mxu0 0.0
      %4426 = vmatpush1.msra.mxu0 0.0
      %4427 = vmatprep.subr.mxu0 0.0
      %4428 = vmatpush1.msra.mxu0 0.0
      %4429 = vmatprep.subr.mxu0 0.0
      %4430 = vmatpush1.msra.mxu0 0.0
      %4431 = vmatprep.subr.mxu0 0.0
      %4432 = vmatpush1.msra.mxu0 0.0
      %4433 = vmatprep.subr.mxu0 0.0
      %4434 = vmatpush1.msra.mxu0 0.0
      %4435 = vmatprep.subr.mxu0 0.0
      %4436 = vmatpush1.msra.mxu0 0.0
      %4437 = vmatprep.subr.mxu0 0.0
      %4438 = vmatpush1.msra.mxu0 0.0
      %4439 = vmatprep.mubr.f32.mxu0 0.0
      %4440 = vmatmul.mubr.f32.gmra.mrb[0].mxu0 %v4352
      %v4441 = vpop.f32.mrb[0].mxu0
      %v4442 = vadd.f32 0.0, %v4441
      %v4443 = vpop.f32.mrb[0].mxu0
      %4444 = vmatprep.mubr.f32.mxu0 0.0
      %4445 = vmatmul.mubr.f32.gmra.mrb[0].mxu0 %v4355
      %v4446 = vpop.f32.mrb[0].mxu0
      %v4447 = vadd.f32 0.0, %v4446
      %v4448 = vpop.f32.mrb[0].mxu0
      %4449 = vmatprep.mubr.f32.mxu0 0.0
      %4450 = vmatmul.mubr.f32.gmra.mrb[0].mxu0 %v4358
      %v4451 = vpop.f32.mrb[0].mxu0
      %v4452 = vadd.f32 0.0, %v4451
      %v4453 = vpop.f32.mrb[0].mxu0
      %4454 = vmatprep.mubr.f32.mxu0 0.0
      %4455 = vmatmul.mubr.f32.gmra.mrb[0].mxu0 %v4361
      %v4456 = vpop.f32.mrb[0].mxu0
      %v4457 = vadd.f32 0.0, %v4456
      %v4458 = vpop.f32.mrb[0].mxu0
      %4459 = vmatprep.mubr.f32.mxu0 0.0
      %4460 = vmatmul.mubr.f32.gmra.mrb[0].mxu0 %v4364
      %v4461 = vpop.f32.mrb[0].mxu0
      %v4462 = vadd.f32 0.0, %v4461
      %v4463 = vpop.f32.mrb[0].mxu0
      %4464 = vmatprep.mubr.f32.mxu0 0.0
      %4465 = vmatmul.mubr.f32.gmra.mrb[0].mxu0 %v4367
      %v4466 = vpop.f32.mrb[0].mxu0
      %v4467 = vadd.f32 0.0, %v4466
      %v4468 = vpop.f32.mrb[0].mxu0
      %4469 = vmatprep.mubr.f32.mxu0 0.0
      %4470 = vmatmul.mubr.f32.gmra.mrb[0].mxu0 %v4370
      %v4471 = vpop.f32.mrb[0].mxu0
      %v4472 = vadd.f32 0.0, %v4471
      %v4473 = vpop.f32.mrb[0].mxu0
      %4474 = vmatprep.mubr.f32.mxu0 0.0
      %4475 = vmatmul.mubr.f32.gmra.mrb[0].mxu0 %v4373
      %v4476 = vpop.f32.mrb[0].mxu0
      %v4477 = vadd.f32 0.0, %v4476
      %v4478 = vpop.f32.mrb[0].mxu0
      %4479 = vdwg.mxu0
      %s4480 = scalar_lea.vmem %s6, 320
      %v4481 = vld [vmem:[%s4480] sm:$0xff]
      %v4482 = vld [vmem:[%s4480 + $0x8] sm:$0xff]
      %v4483 = vld [vmem:[%s4480 + $0x10] sm:$0xff]
      %v4484 = vld [vmem:[%s4480 + $0x18] sm:$0xff]
      %v4485 = vld [vmem:[%s4480 + $0x20] sm:$0xff]
      %v4486 = vld [vmem:[%s4480 + $0x28] sm:$0xff]
      %v4487 = vld [vmem:[%s4480 + $0x30] sm:$0xff]
      %v4488 = vld [vmem:[%s4480 + $0x38] sm:$0xff]
      %v4490 = vsel %vm3798, %v4481, 0
      %v4493 = vsel %vm3798, %v4482, 0
      %v4496 = vsel %vm3798, %v4483, 0
      %v4499 = vsel %vm3798, %v4484, 0
      %v4502 = vsel %vm3798, %v4485, 0
      %v4505 = vsel %vm3798, %v4486, 0
      %v4508 = vsel %vm3798, %v4487, 0
      %v4511 = vsel %vm3798, %v4488, 0
      %4513 = vmatprep.subr.mxu0 0.0
      %4514 = vmatpush1.msra.mxu0 %v3782
      %4515 = vmatprep.subr.mxu0 0.0
      %4516 = vmatpush1.msra.mxu0 %v3783
      %4517 = vmatprep.subr.mxu0 0.0
      %4518 = vmatpush1.msra.mxu0 %v3784
      %4519 = vmatprep.subr.mxu0 0.0
      %4520 = vmatpush1.msra.mxu0 %v3785
      %4521 = vmatprep.subr.mxu0 0.0
      %4522 = vmatpush1.msra.mxu0 %v3786
      %4523 = vmatprep.subr.mxu0 0.0
      %4524 = vmatpush1.msra.mxu0 %v3787
      %4525 = vmatprep.subr.mxu0 0.0
      %4526 = vmatpush1.msra.mxu0 %v3788
      %4527 = vmatprep.subr.mxu0 0.0
      %4528 = vmatpush1.msra.mxu0 %v3789
      %4529 = vmatprep.subr.mxu0 0.0
      %4530 = vmatpush1.msra.mxu0 0.0
      %4531 = vmatprep.subr.mxu0 0.0
      %4532 = vmatpush1.msra.mxu0 0.0
      %4533 = vmatprep.subr.mxu0 0.0
      %4534 = vmatpush1.msra.mxu0 0.0
      %4535 = vmatprep.subr.mxu0 0.0
      %4536 = vmatpush1.msra.mxu0 0.0
      %4537 = vmatprep.subr.mxu0 0.0
      %4538 = vmatpush1.msra.mxu0 0.0
      %4539 = vmatprep.subr.mxu0 0.0
      %4540 = vmatpush1.msra.mxu0 0.0
      %4541 = vmatprep.subr.mxu0 0.0
      %4542 = vmatpush1.msra.mxu0 0.0
      %4543 = vmatprep.subr.mxu0 0.0
      %4544 = vmatpush1.msra.mxu0 0.0
      %4545 = vmatprep.subr.mxu0 0.0
      %4546 = vmatpush1.msra.mxu0 0.0
      %4547 = vmatprep.subr.mxu0 0.0
      %4548 = vmatpush1.msra.mxu0 0.0
      %4549 = vmatprep.subr.mxu0 0.0
      %4550 = vmatpush1.msra.mxu0 0.0
      %4551 = vmatprep.subr.mxu0 0.0
      %4552 = vmatpush1.msra.mxu0 0.0
      %4553 = vmatprep.subr.mxu0 0.0
      %4554 = vmatpush1.msra.mxu0 0.0
      %4555 = vmatprep.subr.mxu0 0.0
      %4556 = vmatpush1.msra.mxu0 0.0
      %4557 = vmatprep.subr.mxu0 0.0
      %4558 = vmatpush1.msra.mxu0 0.0
      %4559 = vmatprep.subr.mxu0 0.0
      %4560 = vmatpush1.msra.mxu0 0.0
      %4561 = vmatprep.subr.mxu0 0.0
      %4562 = vmatpush1.msra.mxu0 0.0
      %4563 = vmatprep.subr.mxu0 0.0
      %4564 = vmatpush1.msra.mxu0 0.0
      %4565 = vmatprep.subr.mxu0 0.0
      %4566 = vmatpush1.msra.mxu0 0.0
      %4567 = vmatprep.subr.mxu0 0.0
      %4568 = vmatpush1.msra.mxu0 0.0
      %4569 = vmatprep.subr.mxu0 0.0
      %4570 = vmatpush1.msra.mxu0 0.0
      %4571 = vmatprep.subr.mxu0 0.0
      %4572 = vmatpush1.msra.mxu0 0.0
      %4573 = vmatprep.subr.mxu0 0.0
      %4574 = vmatpush1.msra.mxu0 0.0
      %4575 = vmatprep.subr.mxu0 0.0
      %4576 = vmatpush1.msra.mxu0 0.0
      %4577 = vmatprep.mubr.f32.mxu0 0.0
      %4578 = vmatmul.mubr.f32.gmra.mrb[0].mxu0 %v4490
      %v4579 = vpop.f32.mrb[0].mxu0
      %v4580 = vadd.f32 0.0, %v4579
      %v4581 = vpop.f32.mrb[0].mxu0
      %4582 = vmatprep.mubr.f32.mxu0 0.0
      %4583 = vmatmul.mubr.f32.gmra.mrb[0].mxu0 %v4493
      %v4584 = vpop.f32.mrb[0].mxu0
      %v4585 = vadd.f32 0.0, %v4584
      %v4586 = vpop.f32.mrb[0].mxu0
      %4587 = vmatprep.mubr.f32.mxu0 0.0
      %4588 = vmatmul.mubr.f32.gmra.mrb[0].mxu0 %v4496
      %v4589 = vpop.f32.mrb[0].mxu0
      %v4590 = vadd.f32 0.0, %v4589
      %v4591 = vpop.f32.mrb[0].mxu0
      %4592 = vmatprep.mubr.f32.mxu0 0.0
      %4593 = vmatmul.mubr.f32.gmra.mrb[0].mxu0 %v4499
      %v4594 = vpop.f32.mrb[0].mxu0
      %v4595 = vadd.f32 0.0, %v4594
      %v4596 = vpop.f32.mrb[0].mxu0
      %4597 = vmatprep.mubr.f32.mxu0 0.0
      %4598 = vmatmul.mubr.f32.gmra.mrb[0].mxu0 %v4502
      %v4599 = vpop.f32.mrb[0].mxu0
      %v4600 = vadd.f32 0.0, %v4599
      %v4601 = vpop.f32.mrb[0].mxu0
      %4602 = vmatprep.mubr.f32.mxu0 0.0
      %4603 = vmatmul.mubr.f32.gmra.mrb[0].mxu0 %v4505
      %v4604 = vpop.f32.mrb[0].mxu0
      %v4605 = vadd.f32 0.0, %v4604
      %v4606 = vpop.f32.mrb[0].mxu0
      %4607 = vmatprep.mubr.f32.mxu0 0.0
      %4608 = vmatmul.mubr.f32.gmra.mrb[0].mxu0 %v4508
      %v4609 = vpop.f32.mrb[0].mxu0
      %v4610 = vadd.f32 0.0, %v4609
      %v4611 = vpop.f32.mrb[0].mxu0
      %4612 = vmatprep.mubr.f32.mxu0 0.0
      %4613 = vmatmul.mubr.f32.gmra.mrb[0].mxu0 %v4511
      %v4614 = vpop.f32.mrb[0].mxu0
      %v4615 = vadd.f32 0.0, %v4614
      %v4616 = vpop.f32.mrb[0].mxu0
      %4617 = vdwg.mxu0
      %s4618 = scalar_lea.vmem %s6, 384
      %v4619 = vld [vmem:[%s4618] sm:$0xff]
      %v4620 = vld [vmem:[%s4618 + $0x8] sm:$0xff]
      %v4621 = vld [vmem:[%s4618 + $0x10] sm:$0xff]
      %v4622 = vld [vmem:[%s4618 + $0x18] sm:$0xff]
      %v4623 = vld [vmem:[%s4618 + $0x20] sm:$0xff]
      %v4624 = vld [vmem:[%s4618 + $0x28] sm:$0xff]
      %v4625 = vld [vmem:[%s4618 + $0x30] sm:$0xff]
      %v4626 = vld [vmem:[%s4618 + $0x38] sm:$0xff]
      %v4628 = vsel %vm3798, %v4619, 0
      %v4631 = vsel %vm3798, %v4620, 0
      %v4634 = vsel %vm3798, %v4621, 0
      %v4637 = vsel %vm3798, %v4622, 0
      %v4640 = vsel %vm3798, %v4623, 0
      %v4643 = vsel %vm3798, %v4624, 0
      %v4646 = vsel %vm3798, %v4625, 0
      %v4649 = vsel %vm3798, %v4626, 0
      %4651 = vmatprep.subr.mxu0 0.0
      %4652 = vmatpush1.msra.mxu0 %v3782
      %4653 = vmatprep.subr.mxu0 0.0
      %4654 = vmatpush1.msra.mxu0 %v3783
      %4655 = vmatprep.subr.mxu0 0.0
      %4656 = vmatpush1.msra.mxu0 %v3784
      %4657 = vmatprep.subr.mxu0 0.0
      %4658 = vmatpush1.msra.mxu0 %v3785
      %4659 = vmatprep.subr.mxu0 0.0
      %4660 = vmatpush1.msra.mxu0 %v3786
      %4661 = vmatprep.subr.mxu0 0.0
      %4662 = vmatpush1.msra.mxu0 %v3787
      %4663 = vmatprep.subr.mxu0 0.0
      %4664 = vmatpush1.msra.mxu0 %v3788
      %4665 = vmatprep.subr.mxu0 0.0
      %4666 = vmatpush1.msra.mxu0 %v3789
      %4667 = vmatprep.subr.mxu0 0.0
      %4668 = vmatpush1.msra.mxu0 0.0
      %4669 = vmatprep.subr.mxu0 0.0
      %4670 = vmatpush1.msra.mxu0 0.0
      %4671 = vmatprep.subr.mxu0 0.0
      %4672 = vmatpush1.msra.mxu0 0.0
      %4673 = vmatprep.subr.mxu0 0.0
      %4674 = vmatpush1.msra.mxu0 0.0
      %4675 = vmatprep.subr.mxu0 0.0
      %4676 = vmatpush1.msra.mxu0 0.0
      %4677 = vmatprep.subr.mxu0 0.0
      %4678 = vmatpush1.msra.mxu0 0.0
      %4679 = vmatprep.subr.mxu0 0.0
      %4680 = vmatpush1.msra.mxu0 0.0
      %4681 = vmatprep.subr.mxu0 0.0
      %4682 = vmatpush1.msra.mxu0 0.0
      %4683 = vmatprep.subr.mxu0 0.0
      %4684 = vmatpush1.msra.mxu0 0.0
      %4685 = vmatprep.subr.mxu0 0.0
      %4686 = vmatpush1.msra.mxu0 0.0
      %4687 = vmatprep.subr.mxu0 0.0
      %4688 = vmatpush1.msra.mxu0 0.0
      %4689 = vmatprep.subr.mxu0 0.0
      %4690 = vmatpush1.msra.mxu0 0.0
      %4691 = vmatprep.subr.mxu0 0.0
      %4692 = vmatpush1.msra.mxu0 0.0
      %4693 = vmatprep.subr.mxu0 0.0
      %4694 = vmatpush1.msra.mxu0 0.0
      %4695 = vmatprep.subr.mxu0 0.0
      %4696 = vmatpush1.msra.mxu0 0.0
      %4697 = vmatprep.subr.mxu0 0.0
      %4698 = vmatpush1.msra.mxu0 0.0
      %4699 = vmatprep.subr.mxu0 0.0
      %4700 = vmatpush1.msra.mxu0 0.0
      %4701 = vmatprep.subr.mxu0 0.0
      %4702 = vmatpush1.msra.mxu0 0.0
      %4703 = vmatprep.subr.mxu0 0.0
      %4704 = vmatpush1.msra.mxu0 0.0
      %4705 = vmatprep.subr.mxu0 0.0
      %4706 = vmatpush1.msra.mxu0 0.0
      %4707 = vmatprep.subr.mxu0 0.0
      %4708 = vmatpush1.msra.mxu0 0.0
      %4709 = vmatprep.subr.mxu0 0.0
      %4710 = vmatpush1.msra.mxu0 0.0
      %4711 = vmatprep.subr.mxu0 0.0
      %4712 = vmatpush1.msra.mxu0 0.0
      %4713 = vmatprep.subr.mxu0 0.0
      %4714 = vmatpush1.msra.mxu0 0.0
      %4715 = vmatprep.mubr.f32.mxu0 0.0
      %4716 = vmatmul.mubr.f32.gmra.mrb[0].mxu0 %v4628
      %v4717 = vpop.f32.mrb[0].mxu0
      %v4718 = vadd.f32 0.0, %v4717
      %v4719 = vpop.f32.mrb[0].mxu0
      %4720 = vmatprep.mubr.f32.mxu0 0.0
      %4721 = vmatmul.mubr.f32.gmra.mrb[0].mxu0 %v4631
      %v4722 = vpop.f32.mrb[0].mxu0
      %v4723 = vadd.f32 0.0, %v4722
      %v4724 = vpop.f32.mrb[0].mxu0
      %4725 = vmatprep.mubr.f32.mxu0 0.0
      %4726 = vmatmul.mubr.f32.gmra.mrb[0].mxu0 %v4634
      %v4727 = vpop.f32.mrb[0].mxu0
      %v4728 = vadd.f32 0.0, %v4727
      %v4729 = vpop.f32.mrb[0].mxu0
      %4730 = vmatprep.mubr.f32.mxu0 0.0
      %4731 = vmatmul.mubr.f32.gmra.mrb[0].mxu0 %v4637
      %v4732 = vpop.f32.mrb[0].mxu0
      %v4733 = vadd.f32 0.0, %v4732
      %v4734 = vpop.f32.mrb[0].mxu0
      %4735 = vmatprep.mubr.f32.mxu0 0.0
      %4736 = vmatmul.mubr.f32.gmra.mrb[0].mxu0 %v4640
      %v4737 = vpop.f32.mrb[0].mxu0
      %v4738 = vadd.f32 0.0, %v4737
      %v4739 = vpop.f32.mrb[0].mxu0
      %4740 = vmatprep.mubr.f32.mxu0 0.0
      %4741 = vmatmul.mubr.f32.gmra.mrb[0].mxu0 %v4643
      %v4742 = vpop.f32.mrb[0].mxu0
      %v4743 = vadd.f32 0.0, %v4742
      %v4744 = vpop.f32.mrb[0].mxu0
      %4745 = vmatprep.mubr.f32.mxu0 0.0
      %4746 = vmatmul.mubr.f32.gmra.mrb[0].mxu0 %v4646
      %v4747 = vpop.f32.mrb[0].mxu0
      %v4748 = vadd.f32 0.0, %v4747
      %v4749 = vpop.f32.mrb[0].mxu0
      %4750 = vmatprep.mubr.f32.mxu0 0.0
      %4751 = vmatmul.mubr.f32.gmra.mrb[0].mxu0 %v4649
      %v4752 = vpop.f32.mrb[0].mxu0
      %v4753 = vadd.f32 0.0, %v4752
      %v4754 = vpop.f32.mrb[0].mxu0
      %4755 = vdwg.mxu0
      %s4756 = scalar_lea.vmem %s6, 448
      %v4757 = vld [vmem:[%s4756] sm:$0xff]
      %v4758 = vld [vmem:[%s4756 + $0x8] sm:$0xff]
      %v4759 = vld [vmem:[%s4756 + $0x10] sm:$0xff]
      %v4760 = vld [vmem:[%s4756 + $0x18] sm:$0xff]
      %v4761 = vld [vmem:[%s4756 + $0x20] sm:$0xff]
      %v4762 = vld [vmem:[%s4756 + $0x28] sm:$0xff]
      %v4763 = vld [vmem:[%s4756 + $0x30] sm:$0xff]
      %v4764 = vld [vmem:[%s4756 + $0x38] sm:$0xff]
      %v4766 = vsel %vm3798, %v4757, 0
      %v4769 = vsel %vm3798, %v4758, 0
      %v4772 = vsel %vm3798, %v4759, 0
      %v4775 = vsel %vm3798, %v4760, 0
      %v4778 = vsel %vm3798, %v4761, 0
      %v4781 = vsel %vm3798, %v4762, 0
      %v4784 = vsel %vm3798, %v4763, 0
      %v4787 = vsel %vm3798, %v4764, 0
      %4789 = vmatprep.subr.mxu0 0.0
      %4790 = vmatpush1.msra.mxu0 %v3782
      %4791 = vmatprep.subr.mxu0 0.0
      %4792 = vmatpush1.msra.mxu0 %v3783
      %4793 = vmatprep.subr.mxu0 0.0
      %4794 = vmatpush1.msra.mxu0 %v3784
      %4795 = vmatprep.subr.mxu0 0.0
      %4796 = vmatpush1.msra.mxu0 %v3785
      %4797 = vmatprep.subr.mxu0 0.0
      %4798 = vmatpush1.msra.mxu0 %v3786
      %4799 = vmatprep.subr.mxu0 0.0
      %4800 = vmatpush1.msra.mxu0 %v3787
      %4801 = vmatprep.subr.mxu0 0.0
      %4802 = vmatpush1.msra.mxu0 %v3788
      %4803 = vmatprep.subr.mxu0 0.0
      %4804 = vmatpush1.msra.mxu0 %v3789
      %4805 = vmatprep.subr.mxu0 0.0
      %4806 = vmatpush1.msra.mxu0 0.0
      %4807 = vmatprep.subr.mxu0 0.0
      %4808 = vmatpush1.msra.mxu0 0.0
      %4809 = vmatprep.subr.mxu0 0.0
      %4810 = vmatpush1.msra.mxu0 0.0
      %4811 = vmatprep.subr.mxu0 0.0
      %4812 = vmatpush1.msra.mxu0 0.0
      %4813 = vmatprep.subr.mxu0 0.0
      %4814 = vmatpush1.msra.mxu0 0.0
      %4815 = vmatprep.subr.mxu0 0.0
      %4816 = vmatpush1.msra.mxu0 0.0
      %4817 = vmatprep.subr.mxu0 0.0
      %4818 = vmatpush1.msra.mxu0 0.0
      %4819 = vmatprep.subr.mxu0 0.0
      %4820 = vmatpush1.msra.mxu0 0.0
      %4821 = vmatprep.subr.mxu0 0.0
      %4822 = vmatpush1.msra.mxu0 0.0
      %4823 = vmatprep.subr.mxu0 0.0
      %4824 = vmatpush1.msra.mxu0 0.0
      %4825 = vmatprep.subr.mxu0 0.0
      %4826 = vmatpush1.msra.mxu0 0.0
      %4827 = vmatprep.subr.mxu0 0.0
      %4828 = vmatpush1.msra.mxu0 0.0
      %4829 = vmatprep.subr.mxu0 0.0
      %4830 = vmatpush1.msra.mxu0 0.0
      %4831 = vmatprep.subr.mxu0 0.0
      %4832 = vmatpush1.msra.mxu0 0.0
      %4833 = vmatprep.subr.mxu0 0.0
      %4834 = vmatpush1.msra.mxu0 0.0
      %4835 = vmatprep.subr.mxu0 0.0
      %4836 = vmatpush1.msra.mxu0 0.0
      %4837 = vmatprep.subr.mxu0 0.0
      %4838 = vmatpush1.msra.mxu0 0.0
      %4839 = vmatprep.subr.mxu0 0.0
      %4840 = vmatpush1.msra.mxu0 0.0
      %4841 = vmatprep.subr.mxu0 0.0
      %4842 = vmatpush1.msra.mxu0 0.0
      %4843 = vmatprep.subr.mxu0 0.0
      %4844 = vmatpush1.msra.mxu0 0.0
      %4845 = vmatprep.subr.mxu0 0.0
      %4846 = vmatpush1.msra.mxu0 0.0
      %4847 = vmatprep.subr.mxu0 0.0
      %4848 = vmatpush1.msra.mxu0 0.0
      %4849 = vmatprep.subr.mxu0 0.0
      %4850 = vmatpush1.msra.mxu0 0.0
      %4851 = vmatprep.subr.mxu0 0.0
      %4852 = vmatpush1.msra.mxu0 0.0
      %4853 = vmatprep.mubr.f32.mxu0 0.0
      %4854 = vmatmul.mubr.f32.gmra.mrb[0].mxu0 %v4766
      %v4855 = vpop.f32.mrb[0].mxu0
      %v4856 = vadd.f32 0.0, %v4855
      %v4857 = vpop.f32.mrb[0].mxu0
      %4858 = vmatprep.mubr.f32.mxu0 0.0
      %4859 = vmatmul.mubr.f32.gmra.mrb[0].mxu0 %v4769
      %v4860 = vpop.f32.mrb[0].mxu0
      %v4861 = vadd.f32 0.0, %v4860
      %v4862 = vpop.f32.mrb[0].mxu0
      %4863 = vmatprep.mubr.f32.mxu0 0.0
      %4864 = vmatmul.mubr.f32.gmra.mrb[0].mxu0 %v4772
      %v4865 = vpop.f32.mrb[0].mxu0
      %v4866 = vadd.f32 0.0, %v4865
      %v4867 = vpop.f32.mrb[0].mxu0
      %4868 = vmatprep.mubr.f32.mxu0 0.0
      %4869 = vmatmul.mubr.f32.gmra.mrb[0].mxu0 %v4775
      %v4870 = vpop.f32.mrb[0].mxu0
      %v4871 = vadd.f32 0.0, %v4870
      %v4872 = vpop.f32.mrb[0].mxu0
      %4873 = vmatprep.mubr.f32.mxu0 0.0
      %4874 = vmatmul.mubr.f32.gmra.mrb[0].mxu0 %v4778
      %v4875 = vpop.f32.mrb[0].mxu0
      %v4876 = vadd.f32 0.0, %v4875
      %v4877 = vpop.f32.mrb[0].mxu0
      %4878 = vmatprep.mubr.f32.mxu0 0.0
      %4879 = vmatmul.mubr.f32.gmra.mrb[0].mxu0 %v4781
      %v4880 = vpop.f32.mrb[0].mxu0
      %v4881 = vadd.f32 0.0, %v4880
      %v4882 = vpop.f32.mrb[0].mxu0
      %4883 = vmatprep.mubr.f32.mxu0 0.0
      %4884 = vmatmul.mubr.f32.gmra.mrb[0].mxu0 %v4784
      %v4885 = vpop.f32.mrb[0].mxu0
      %v4886 = vadd.f32 0.0, %v4885
      %v4887 = vpop.f32.mrb[0].mxu0
      %4888 = vmatprep.mubr.f32.mxu0 0.0
      %4889 = vmatmul.mubr.f32.gmra.mrb[0].mxu0 %v4787
      %v4890 = vpop.f32.mrb[0].mxu0
      %v4891 = vadd.f32 0.0, %v4890
      %v4892 = vpop.f32.mrb[0].mxu0
      %4893 = vdwg.mxu0
      %s4894 = scalar_lea.vmem %s6, 512
      %v4895 = vld [vmem:[%s4894] sm:$0xff]
      %v4896 = vld [vmem:[%s4894 + $0x8] sm:$0xff]
      %v4897 = vld [vmem:[%s4894 + $0x10] sm:$0xff]
      %v4898 = vld [vmem:[%s4894 + $0x18] sm:$0xff]
      %v4899 = vld [vmem:[%s4894 + $0x20] sm:$0xff]
      %v4900 = vld [vmem:[%s4894 + $0x28] sm:$0xff]
      %v4901 = vld [vmem:[%s4894 + $0x30] sm:$0xff]
      %v4902 = vld [vmem:[%s4894 + $0x38] sm:$0xff]
      %v4904 = vsel %vm3798, %v4895, 0
      %v4907 = vsel %vm3798, %v4896, 0
      %v4910 = vsel %vm3798, %v4897, 0
      %v4913 = vsel %vm3798, %v4898, 0
      %v4916 = vsel %vm3798, %v4899, 0
      %v4919 = vsel %vm3798, %v4900, 0
      %v4922 = vsel %vm3798, %v4901, 0
      %v4925 = vsel %vm3798, %v4902, 0
      %4927 = vmatprep.subr.mxu0 0.0
      %4928 = vmatpush1.msra.mxu0 %v3782
      %4929 = vmatprep.subr.mxu0 0.0
      %4930 = vmatpush1.msra.mxu0 %v3783
      %4931 = vmatprep.subr.mxu0 0.0
      %4932 = vmatpush1.msra.mxu0 %v3784
      %4933 = vmatprep.subr.mxu0 0.0
      %4934 = vmatpush1.msra.mxu0 %v3785
      %4935 = vmatprep.subr.mxu0 0.0
      %4936 = vmatpush1.msra.mxu0 %v3786
      %4937 = vmatprep.subr.mxu0 0.0
      %4938 = vmatpush1.msra.mxu0 %v3787
      %4939 = vmatprep.subr.mxu0 0.0
      %4940 = vmatpush1.msra.mxu0 %v3788
      %4941 = vmatprep.subr.mxu0 0.0
      %4942 = vmatpush1.msra.mxu0 %v3789
      %4943 = vmatprep.subr.mxu0 0.0
      %4944 = vmatpush1.msra.mxu0 0.0
      %4945 = vmatprep.subr.mxu0 0.0
      %4946 = vmatpush1.msra.mxu0 0.0
      %4947 = vmatprep.subr.mxu0 0.0
      %4948 = vmatpush1.msra.mxu0 0.0
      %4949 = vmatprep.subr.mxu0 0.0
      %4950 = vmatpush1.msra.mxu0 0.0
      %4951 = vmatprep.subr.mxu0 0.0
      %4952 = vmatpush1.msra.mxu0 0.0
      %4953 = vmatprep.subr.mxu0 0.0
      %4954 = vmatpush1.msra.mxu0 0.0
      %4955 = vmatprep.subr.mxu0 0.0
      %4956 = vmatpush1.msra.mxu0 0.0
      %4957 = vmatprep.subr.mxu0 0.0
      %4958 = vmatpush1.msra.mxu0 0.0
      %4959 = vmatprep.subr.mxu0 0.0
      %4960 = vmatpush1.msra.mxu0 0.0
      %4961 = vmatprep.subr.mxu0 0.0
      %4962 = vmatpush1.msra.mxu0 0.0
      %4963 = vmatprep.subr.mxu0 0.0
      %4964 = vmatpush1.msra.mxu0 0.0
      %4965 = vmatprep.subr.mxu0 0.0
      %4966 = vmatpush1.msra.mxu0 0.0
      %4967 = vmatprep.subr.mxu0 0.0
      %4968 = vmatpush1.msra.mxu0 0.0
      %4969 = vmatprep.subr.mxu0 0.0
      %4970 = vmatpush1.msra.mxu0 0.0
      %4971 = vmatprep.subr.mxu0 0.0
      %4972 = vmatpush1.msra.mxu0 0.0
      %4973 = vmatprep.subr.mxu0 0.0
      %4974 = vmatpush1.msra.mxu0 0.0
      %4975 = vmatprep.subr.mxu0 0.0
      %4976 = vmatpush1.msra.mxu0 0.0
      %4977 = vmatprep.subr.mxu0 0.0
      %4978 = vmatpush1.msra.mxu0 0.0
      %4979 = vmatprep.subr.mxu0 0.0
      %4980 = vmatpush1.msra.mxu0 0.0
      %4981 = vmatprep.subr.mxu0 0.0
      %4982 = vmatpush1.msra.mxu0 0.0
      %4983 = vmatprep.subr.mxu0 0.0
      %4984 = vmatpush1.msra.mxu0 0.0
      %4985 = vmatprep.subr.mxu0 0.0
      %4986 = vmatpush1.msra.mxu0 0.0
      %4987 = vmatprep.subr.mxu0 0.0
      %4988 = vmatpush1.msra.mxu0 0.0
      %4989 = vmatprep.subr.mxu0 0.0
      %4990 = vmatpush1.msra.mxu0 0.0
      %4991 = vmatprep.mubr.f32.mxu0 0.0
      %4992 = vmatmul.mubr.f32.gmra.mrb[0].mxu0 %v4904
      %v4993 = vpop.f32.mrb[0].mxu0
      %v4994 = vadd.f32 0.0, %v4993
      %v4995 = vpop.f32.mrb[0].mxu0
      %4996 = vmatprep.mubr.f32.mxu0 0.0
      %4997 = vmatmul.mubr.f32.gmra.mrb[0].mxu0 %v4907
      %v4998 = vpop.f32.mrb[0].mxu0
      %v4999 = vadd.f32 0.0, %v4998
      %v5000 = vpop.f32.mrb[0].mxu0
      %5001 = vmatprep.mubr.f32.mxu0 0.0
      %5002 = vmatmul.mubr.f32.gmra.mrb[0].mxu0 %v4910
      %v5003 = vpop.f32.mrb[0].mxu0
      %v5004 = vadd.f32 0.0, %v5003
      %v5005 = vpop.f32.mrb[0].mxu0
      %5006 = vmatprep.mubr.f32.mxu0 0.0
      %5007 = vmatmul.mubr.f32.gmra.mrb[0].mxu0 %v4913
      %v5008 = vpop.f32.mrb[0].mxu0
      %v5009 = vadd.f32 0.0, %v5008
      %v5010 = vpop.f32.mrb[0].mxu0
      %5011 = vmatprep.mubr.f32.mxu0 0.0
      %5012 = vmatmul.mubr.f32.gmra.mrb[0].mxu0 %v4916
      %v5013 = vpop.f32.mrb[0].mxu0
      %v5014 = vadd.f32 0.0, %v5013
      %v5015 = vpop.f32.mrb[0].mxu0
      %5016 = vmatprep.mubr.f32.mxu0 0.0
      %5017 = vmatmul.mubr.f32.gmra.mrb[0].mxu0 %v4919
      %v5018 = vpop.f32.mrb[0].mxu0
      %v5019 = vadd.f32 0.0, %v5018
      %v5020 = vpop.f32.mrb[0].mxu0
      %5021 = vmatprep.mubr.f32.mxu0 0.0
      %5022 = vmatmul.mubr.f32.gmra.mrb[0].mxu0 %v4922
      %v5023 = vpop.f32.mrb[0].mxu0
      %v5024 = vadd.f32 0.0, %v5023
      %v5025 = vpop.f32.mrb[0].mxu0
      %5026 = vmatprep.mubr.f32.mxu0 0.0
      %5027 = vmatmul.mubr.f32.gmra.mrb[0].mxu0 %v4925
      %v5028 = vpop.f32.mrb[0].mxu0
      %v5029 = vadd.f32 0.0, %v5028
      %v5030 = vpop.f32.mrb[0].mxu0
      %5031 = vdwg.mxu0
      %v5032 = vld [vmem:[%s7] sm:$0xff]
      %v5033 = vld [vmem:[%s7 + $0x8] sm:$0xff]
      %v5034 = vld [vmem:[%s7 + $0x10] sm:$0xff]
      %v5035 = vld [vmem:[%s7 + $0x18] sm:$0xff]
      %v5036 = vld [vmem:[%s7 + $0x20] sm:$0xff]
      %v5037 = vld [vmem:[%s7 + $0x28] sm:$0xff]
      %v5038 = vld [vmem:[%s7 + $0x30] sm:$0xff]
      %v5039 = vld [vmem:[%s7 + $0x38] sm:$0xff]
      %v5040 = vld [vmem:[%s7 + $0x40] sm:$0xff]
      %v5041 = vld [vmem:[%s7 + $0x48] sm:$0xff]
      %v5042 = vld [vmem:[%s7 + $0x50] sm:$0xff]
      %v5043 = vld [vmem:[%s7 + $0x58] sm:$0xff]
      %v5044 = vld [vmem:[%s7 + $0x60] sm:$0xff]
      %v5045 = vld [vmem:[%s7 + $0x68] sm:$0xff]
      %v5046 = vld [vmem:[%s7 + $0x70] sm:$0xff]
      %v5047 = vld [vmem:[%s7 + $0x78] sm:$0xff]
      %v5048 = vld [vmem:[%s7 + $0x80] sm:$0xff]
      %v5049 = vld [vmem:[%s7 + $0x88] sm:$0xff]
      %v5050 = vld [vmem:[%s7 + $0x90] sm:$0xff]
      %v5051 = vld [vmem:[%s7 + $0x98] sm:$0xff]
      %v5052 = vld [vmem:[%s7 + $0xa0] sm:$0xff]
      %v5053 = vld [vmem:[%s7 + $0xa8] sm:$0xff]
      %v5054 = vld [vmem:[%s7 + $0xb0] sm:$0xff]
      %v5055 = vld [vmem:[%s7 + $0xb8] sm:$0xff]
      %v5056 = vld [vmem:[%s7 + $0xc0] sm:$0xff]
      %v5057 = vld [vmem:[%s7 + $0xc8] sm:$0xff]
      %v5058 = vld [vmem:[%s7 + $0xd0] sm:$0xff]
      %v5059 = vld [vmem:[%s7 + $0xd8] sm:$0xff]
      %v5060 = vld [vmem:[%s7 + $0xe0] sm:$0xff]
      %v5061 = vld [vmem:[%s7 + $0xe8] sm:$0xff]
      %v5062 = vld [vmem:[%s7 + $0xf0] sm:$0xff]
      %v5063 = vld [vmem:[%s7 + $0xf8] sm:$0xff]
      %v5064 = vld [vmem:[%s7 + $0x100] sm:$0xff]
      %v5065 = vld [vmem:[%s7 + $0x108] sm:$0xff]
      %v5066 = vld [vmem:[%s7 + $0x110] sm:$0xff]
      %v5067 = vld [vmem:[%s7 + $0x118] sm:$0xff]
      %v5068 = vld [vmem:[%s7 + $0x120] sm:$0xff]
      %v5069 = vld [vmem:[%s7 + $0x128] sm:$0xff]
      %v5070 = vld [vmem:[%s7 + $0x130] sm:$0xff]
      %v5071 = vld [vmem:[%s7 + $0x138] sm:$0xff]
      %v5072 = vld [vmem:[%s7 + $0x140] sm:$0xff]
      %v5073 = vld [vmem:[%s7 + $0x148] sm:$0xff]
      %v5074 = vld [vmem:[%s7 + $0x150] sm:$0xff]
      %v5075 = vld [vmem:[%s7 + $0x158] sm:$0xff]
      %v5076 = vld [vmem:[%s7 + $0x160] sm:$0xff]
      %v5077 = vld [vmem:[%s7 + $0x168] sm:$0xff]
      %v5078 = vld [vmem:[%s7 + $0x170] sm:$0xff]
      %v5079 = vld [vmem:[%s7 + $0x178] sm:$0xff]
      %v5080 = vld [vmem:[%s7 + $0x180] sm:$0xff]
      %v5081 = vld [vmem:[%s7 + $0x188] sm:$0xff]
      %v5082 = vld [vmem:[%s7 + $0x190] sm:$0xff]
      %v5083 = vld [vmem:[%s7 + $0x198] sm:$0xff]
      %v5084 = vld [vmem:[%s7 + $0x1a0] sm:$0xff]
      %v5085 = vld [vmem:[%s7 + $0x1a8] sm:$0xff]
      %v5086 = vld [vmem:[%s7 + $0x1b0] sm:$0xff]
      %v5087 = vld [vmem:[%s7 + $0x1b8] sm:$0xff]
      %v5088 = vld [vmem:[%s7 + $0x1c0] sm:$0xff]
      %v5089 = vld [vmem:[%s7 + $0x1c8] sm:$0xff]
      %v5090 = vld [vmem:[%s7 + $0x1d0] sm:$0xff]
      %v5091 = vld [vmem:[%s7 + $0x1d8] sm:$0xff]
      %v5092 = vld [vmem:[%s7 + $0x1e0] sm:$0xff]
      %v5093 = vld [vmem:[%s7 + $0x1e8] sm:$0xff]
      %v5094 = vld [vmem:[%s7 + $0x1f0] sm:$0xff]
      %v5095 = vld [vmem:[%s7 + $0x1f8] sm:$0xff]
      %v5096 = vld [vmem:[%s7 + $0x200] sm:$0xff]
      %v5097 = vld [vmem:[%s7 + $0x208] sm:$0xff]
      %v5098 = vld [vmem:[%s7 + $0x210] sm:$0xff]
      %v5099 = vld [vmem:[%s7 + $0x218] sm:$0xff]
      %v5100 = vld [vmem:[%s7 + $0x220] sm:$0xff]
      %v5101 = vld [vmem:[%s7 + $0x228] sm:$0xff]
      %v5102 = vld [vmem:[%s7 + $0x230] sm:$0xff]
      %v5103 = vld [vmem:[%s7 + $0x238] sm:$0xff]
      %v5104 = vld [vmem:[%s7 + $0x240] sm:$0xff]
      %v5105 = vld [vmem:[%s7 + $0x248] sm:$0xff]
      %v5106 = vld [vmem:[%s7 + $0x250] sm:$0xff]
      %v5107 = vld [vmem:[%s7 + $0x258] sm:$0xff]
      %v5108 = vld [vmem:[%s7 + $0x260] sm:$0xff]
      %v5109 = vld [vmem:[%s7 + $0x268] sm:$0xff]
      %v5110 = vld [vmem:[%s7 + $0x270] sm:$0xff]
      %v5111 = vld [vmem:[%s7 + $0x278] sm:$0xff]
      %v5112 = vld [vmem:[%s7 + $0x280] sm:$0xff]
      %v5113 = vld [vmem:[%s7 + $0x288] sm:$0xff]
      %v5114 = vld [vmem:[%s7 + $0x290] sm:$0xff]
      %v5115 = vld [vmem:[%s7 + $0x298] sm:$0xff]
      %v5116 = vld [vmem:[%s7 + $0x2a0] sm:$0xff]
      %v5117 = vld [vmem:[%s7 + $0x2a8] sm:$0xff]
      %v5118 = vld [vmem:[%s7 + $0x2b0] sm:$0xff]
      %v5119 = vld [vmem:[%s7 + $0x2b8] sm:$0xff]
      %v5120 = vld [vmem:[%s7 + $0x2c0] sm:$0xff]
      %v5121 = vld [vmem:[%s7 + $0x2c8] sm:$0xff]
      %v5122 = vld [vmem:[%s7 + $0x2d0] sm:$0xff]
      %v5123 = vld [vmem:[%s7 + $0x2d8] sm:$0xff]
      %v5124 = vld [vmem:[%s7 + $0x2e0] sm:$0xff]
      %v5125 = vld [vmem:[%s7 + $0x2e8] sm:$0xff]
      %v5126 = vld [vmem:[%s7 + $0x2f0] sm:$0xff]
      %v5127 = vld [vmem:[%s7 + $0x2f8] sm:$0xff]
      %v5128 = vld [vmem:[%s7 + $0x300] sm:$0xff]
      %v5129 = vld [vmem:[%s7 + $0x308] sm:$0xff]
      %v5130 = vld [vmem:[%s7 + $0x310] sm:$0xff]
      %v5131 = vld [vmem:[%s7 + $0x318] sm:$0xff]
      %v5132 = vld [vmem:[%s7 + $0x320] sm:$0xff]
      %v5133 = vld [vmem:[%s7 + $0x328] sm:$0xff]
      %v5134 = vld [vmem:[%s7 + $0x330] sm:$0xff]
      %v5135 = vld [vmem:[%s7 + $0x338] sm:$0xff]
      %v5136 = vld [vmem:[%s7 + $0x340] sm:$0xff]
      %v5137 = vld [vmem:[%s7 + $0x348] sm:$0xff]
      %v5138 = vld [vmem:[%s7 + $0x350] sm:$0xff]
      %v5139 = vld [vmem:[%s7 + $0x358] sm:$0xff]
      %v5140 = vld [vmem:[%s7 + $0x360] sm:$0xff]
      %v5141 = vld [vmem:[%s7 + $0x368] sm:$0xff]
      %v5142 = vld [vmem:[%s7 + $0x370] sm:$0xff]
      %v5143 = vld [vmem:[%s7 + $0x378] sm:$0xff]
      %v5144 = vld [vmem:[%s7 + $0x380] sm:$0xff]
      %v5145 = vld [vmem:[%s7 + $0x388] sm:$0xff]
      %v5146 = vld [vmem:[%s7 + $0x390] sm:$0xff]
      %v5147 = vld [vmem:[%s7 + $0x398] sm:$0xff]
      %v5148 = vld [vmem:[%s7 + $0x3a0] sm:$0xff]
      %v5149 = vld [vmem:[%s7 + $0x3a8] sm:$0xff]
      %v5150 = vld [vmem:[%s7 + $0x3b0] sm:$0xff]
      %v5151 = vld [vmem:[%s7 + $0x3b8] sm:$0xff]
      %v5152 = vld [vmem:[%s7 + $0x3c0] sm:$0xff]
      %v5153 = vld [vmem:[%s7 + $0x3c8] sm:$0xff]
      %v5154 = vld [vmem:[%s7 + $0x3d0] sm:$0xff]
      %v5155 = vld [vmem:[%s7 + $0x3d8] sm:$0xff]
      %v5156 = vld [vmem:[%s7 + $0x3e0] sm:$0xff]
      %v5157 = vld [vmem:[%s7 + $0x3e8] sm:$0xff]
      %v5158 = vld [vmem:[%s7 + $0x3f0] sm:$0xff]
      %v5159 = vld [vmem:[%s7 + $0x3f8] sm:$0xff]
      %v5160 = vld [vmem:[%s7 + $0x400] sm:$0xff]
      %v5161 = vld [vmem:[%s7 + $0x408] sm:$0xff]
      %v5162 = vld [vmem:[%s7 + $0x410] sm:$0xff]
      %v5163 = vld [vmem:[%s7 + $0x418] sm:$0xff]
      %v5164 = vld [vmem:[%s7 + $0x420] sm:$0xff]
      %v5165 = vld [vmem:[%s7 + $0x428] sm:$0xff]
      %v5166 = vld [vmem:[%s7 + $0x430] sm:$0xff]
      %v5167 = vld [vmem:[%s7 + $0x438] sm:$0xff]
      %v5168 = vld [vmem:[%s7 + $0x440] sm:$0xff]
      %v5169 = vld [vmem:[%s7 + $0x448] sm:$0xff]
      %v5170 = vld [vmem:[%s7 + $0x450] sm:$0xff]
      %v5171 = vld [vmem:[%s7 + $0x458] sm:$0xff]
      %v5172 = vld [vmem:[%s7 + $0x460] sm:$0xff]
      %v5173 = vld [vmem:[%s7 + $0x468] sm:$0xff]
      %v5174 = vld [vmem:[%s7 + $0x470] sm:$0xff]
      %v5175 = vld [vmem:[%s7 + $0x478] sm:$0xff]
      %v5176 = vld [vmem:[%s8] sm:$0x1]
      %v5178 = vlaneseq
      %v5179 = vshrl.u32 %v5178, 7
      %v5180 = vsub.s32 0, %v5179
      %v5181 = vrot.slane %v5176, %v5180
      %5183 = vmatprep.subr.mxu0 0.0
      %5184 = vmatpush1.msra.mxu0 %v5032
      %5185 = vmatprep.subr.mxu0 0.0
      %5186 = vmatpush1.msra.mxu0 %v5033
      %5187 = vmatprep.subr.mxu0 0.0
      %5188 = vmatpush1.msra.mxu0 %v5034
      %5189 = vmatprep.subr.mxu0 0.0
      %5190 = vmatpush1.msra.mxu0 %v5035
      %5191 = vmatprep.subr.mxu0 0.0
      %5192 = vmatpush1.msra.mxu0 %v5036
      %5193 = vmatprep.subr.mxu0 0.0
      %5194 = vmatpush1.msra.mxu0 %v5037
      %5195 = vmatprep.subr.mxu0 0.0
      %5196 = vmatpush1.msra.mxu0 %v5038
      %5197 = vmatprep.subr.mxu0 0.0
      %5198 = vmatpush1.msra.mxu0 %v5039
      %5199 = vmatprep.subr.mxu0 0.0
      %5200 = vmatpush1.msra.mxu0 %v5040
      %5201 = vmatprep.subr.mxu0 0.0
      %5202 = vmatpush1.msra.mxu0 %v5041
      %5203 = vmatprep.subr.mxu0 0.0
      %5204 = vmatpush1.msra.mxu0 %v5042
      %5205 = vmatprep.subr.mxu0 0.0
      %5206 = vmatpush1.msra.mxu0 %v5043
      %5207 = vmatprep.subr.mxu0 0.0
      %5208 = vmatpush1.msra.mxu0 %v5044
      %5209 = vmatprep.subr.mxu0 0.0
      %5210 = vmatpush1.msra.mxu0 %v5045
      %5211 = vmatprep.subr.mxu0 0.0
      %5212 = vmatpush1.msra.mxu0 %v5046
      %5213 = vmatprep.subr.mxu0 0.0
      %5214 = vmatpush1.msra.mxu0 %v5047
      %5215 = vmatprep.subr.mxu0 0.0
      %5216 = vmatpush1.msra.mxu0 %v5048
      %5217 = vmatprep.subr.mxu0 0.0
      %5218 = vmatpush1.msra.mxu0 %v5049
      %5219 = vmatprep.subr.mxu0 0.0
      %5220 = vmatpush1.msra.mxu0 %v5050
      %5221 = vmatprep.subr.mxu0 0.0
      %5222 = vmatpush1.msra.mxu0 %v5051
      %5223 = vmatprep.subr.mxu0 0.0
      %5224 = vmatpush1.msra.mxu0 %v5052
      %5225 = vmatprep.subr.mxu0 0.0
      %5226 = vmatpush1.msra.mxu0 %v5053
      %5227 = vmatprep.subr.mxu0 0.0
      %5228 = vmatpush1.msra.mxu0 %v5054
      %5229 = vmatprep.subr.mxu0 0.0
      %5230 = vmatpush1.msra.mxu0 %v5055
      %5231 = vmatprep.subr.mxu0 0.0
      %5232 = vmatpush1.msra.mxu0 %v5056
      %5233 = vmatprep.subr.mxu0 0.0
      %5234 = vmatpush1.msra.mxu0 %v5057
      %5235 = vmatprep.subr.mxu0 0.0
      %5236 = vmatpush1.msra.mxu0 %v5058
      %5237 = vmatprep.subr.mxu0 0.0
      %5238 = vmatpush1.msra.mxu0 %v5059
      %5239 = vmatprep.subr.mxu0 0.0
      %5240 = vmatpush1.msra.mxu0 %v5060
      %5241 = vmatprep.subr.mxu0 0.0
      %5242 = vmatpush1.msra.mxu0 %v5061
      %5243 = vmatprep.subr.mxu0 0.0
      %5244 = vmatpush1.msra.mxu0 %v5062
      %5245 = vmatprep.subr.mxu0 0.0
      %5246 = vmatpush1.msra.mxu0 %v5063
      %5247 = vmatprep.mubr.f32.mxu0 %v4028
      %5248 = vmatmul.mubr.f32.gmra.mrb[0].mxu0 %v3890
      %v5249 = vpop.f32.mrb[0].mxu0
      %v5250 = vadd.f32 %v5181, %v5249
      %v5251 = vpop.f32.mrb[0].mxu0
      %5252 = vmatprep.mubr.f32.mxu0 %v4033
      %5253 = vmatmul.mubr.f32.gmra.mrb[0].mxu0 %v3895
      %v5254 = vpop.f32.mrb[0].mxu0
      %v5255 = vadd.f32 %v5181, %v5254
      %v5256 = vpop.f32.mrb[0].mxu0
      %5257 = vmatprep.mubr.f32.mxu0 %v4038
      %5258 = vmatmul.mubr.f32.gmra.mrb[0].mxu0 %v3900
      %v5259 = vpop.f32.mrb[0].mxu0
      %v5260 = vadd.f32 %v5181, %v5259
      %v5261 = vpop.f32.mrb[0].mxu0
      %5262 = vmatprep.mubr.f32.mxu0 %v4043
      %5263 = vmatmul.mubr.f32.gmra.mrb[0].mxu0 %v3905
      %v5264 = vpop.f32.mrb[0].mxu0
      %v5265 = vadd.f32 %v5181, %v5264
      %v5266 = vpop.f32.mrb[0].mxu0
      %5267 = vmatprep.mubr.f32.mxu0 %v4048
      %5268 = vmatmul.mubr.f32.gmra.mrb[0].mxu0 %v3910
      %v5269 = vpop.f32.mrb[0].mxu0
      %v5270 = vadd.f32 %v5181, %v5269
      %v5271 = vpop.f32.mrb[0].mxu0
      %5272 = vmatprep.mubr.f32.mxu0 %v4053
      %5273 = vmatmul.mubr.f32.gmra.mrb[0].mxu0 %v3915
      %v5274 = vpop.f32.mrb[0].mxu0
      %v5275 = vadd.f32 %v5181, %v5274
      %v5276 = vpop.f32.mrb[0].mxu0
      %5277 = vmatprep.mubr.f32.mxu0 %v4058
      %5278 = vmatmul.mubr.f32.gmra.mrb[0].mxu0 %v3920
      %v5279 = vpop.f32.mrb[0].mxu0
      %v5280 = vadd.f32 %v5181, %v5279
      %v5281 = vpop.f32.mrb[0].mxu0
      %5282 = vmatprep.mubr.f32.mxu0 %v4063
      %5283 = vmatmul.mubr.f32.gmra.mrb[0].mxu0 %v3925
      %v5284 = vpop.f32.mrb[0].mxu0
      %v5285 = vadd.f32 %v5181, %v5284
      %v5286 = vpop.f32.mrb[0].mxu0
      %5287 = vdwg.mxu0
      %5288 = vmatprep.subr.mxu0 0.0
      %5289 = vmatpush1.msra.mxu0 %v5064
      %5290 = vmatprep.subr.mxu0 0.0
      %5291 = vmatpush1.msra.mxu0 %v5065
      %5292 = vmatprep.subr.mxu0 0.0
      %5293 = vmatpush1.msra.mxu0 %v5066
      %5294 = vmatprep.subr.mxu0 0.0
      %5295 = vmatpush1.msra.mxu0 %v5067
      %5296 = vmatprep.subr.mxu0 0.0
      %5297 = vmatpush1.msra.mxu0 %v5068
      %5298 = vmatprep.subr.mxu0 0.0
      %5299 = vmatpush1.msra.mxu0 %v5069
      %5300 = vmatprep.subr.mxu0 0.0
      %5301 = vmatpush1.msra.mxu0 %v5070
      %5302 = vmatprep.subr.mxu0 0.0
      %5303 = vmatpush1.msra.mxu0 %v5071
      %5304 = vmatprep.subr.mxu0 0.0
      %5305 = vmatpush1.msra.mxu0 %v5072
      %5306 = vmatprep.subr.mxu0 0.0
      %5307 = vmatpush1.msra.mxu0 %v5073
      %5308 = vmatprep.subr.mxu0 0.0
      %5309 = vmatpush1.msra.mxu0 %v5074
      %5310 = vmatprep.subr.mxu0 0.0
      %5311 = vmatpush1.msra.mxu0 %v5075
      %5312 = vmatprep.subr.mxu0 0.0
      %5313 = vmatpush1.msra.mxu0 %v5076
      %5314 = vmatprep.subr.mxu0 0.0
      %5315 = vmatpush1.msra.mxu0 %v5077
      %5316 = vmatprep.subr.mxu0 0.0
      %5317 = vmatpush1.msra.mxu0 %v5078
      %5318 = vmatprep.subr.mxu0 0.0
      %5319 = vmatpush1.msra.mxu0 %v5079
      %5320 = vmatprep.subr.mxu0 0.0
      %5321 = vmatpush1.msra.mxu0 %v5080
      %5322 = vmatprep.subr.mxu0 0.0
      %5323 = vmatpush1.msra.mxu0 %v5081
      %5324 = vmatprep.subr.mxu0 0.0
      %5325 = vmatpush1.msra.mxu0 %v5082
      %5326 = vmatprep.subr.mxu0 0.0
      %5327 = vmatpush1.msra.mxu0 %v5083
      %5328 = vmatprep.subr.mxu0 0.0
      %5329 = vmatpush1.msra.mxu0 %v5084
      %5330 = vmatprep.subr.mxu0 0.0
      %5331 = vmatpush1.msra.mxu0 %v5085
      %5332 = vmatprep.subr.mxu0 0.0
      %5333 = vmatpush1.msra.mxu0 %v5086
      %5334 = vmatprep.subr.mxu0 0.0
      %5335 = vmatpush1.msra.mxu0 %v5087
      %5336 = vmatprep.subr.mxu0 0.0
      %5337 = vmatpush1.msra.mxu0 %v5088
      %5338 = vmatprep.subr.mxu0 0.0
      %5339 = vmatpush1.msra.mxu0 %v5089
      %5340 = vmatprep.subr.mxu0 0.0
      %5341 = vmatpush1.msra.mxu0 %v5090
      %5342 = vmatprep.subr.mxu0 0.0
      %5343 = vmatpush1.msra.mxu0 %v5091
      %5344 = vmatprep.subr.mxu0 0.0
      %5345 = vmatpush1.msra.mxu0 %v5092
      %5346 = vmatprep.subr.mxu0 0.0
      %5347 = vmatpush1.msra.mxu0 %v5093
      %5348 = vmatprep.subr.mxu0 0.0
      %5349 = vmatpush1.msra.mxu0 %v5094
      %5350 = vmatprep.subr.mxu0 0.0
      %5351 = vmatpush1.msra.mxu0 %v5095
      %5352 = vmatprep.mubr.f32.mxu0 %v4304
      %5353 = vmatmul.mubr.f32.gmra.mrb[0].mxu0 %v4166
      %v5354 = vpop.f32.mrb[0].mxu0
      %v5355 = vadd.f32 %v5250, %v5354
      %v5356 = vpop.f32.mrb[0].mxu0
      %5357 = vmatprep.mubr.f32.mxu0 %v4309
      %5358 = vmatmul.mubr.f32.gmra.mrb[0].mxu0 %v4171
      %v5359 = vpop.f32.mrb[0].mxu0
      %v5360 = vadd.f32 %v5255, %v5359
      %v5361 = vpop.f32.mrb[0].mxu0
      %5362 = vmatprep.mubr.f32.mxu0 %v4314
      %5363 = vmatmul.mubr.f32.gmra.mrb[0].mxu0 %v4176
      %v5364 = vpop.f32.mrb[0].mxu0
      %v5365 = vadd.f32 %v5260, %v5364
      %v5366 = vpop.f32.mrb[0].mxu0
      %5367 = vmatprep.mubr.f32.mxu0 %v4319
      %5368 = vmatmul.mubr.f32.gmra.mrb[0].mxu0 %v4181
      %v5369 = vpop.f32.mrb[0].mxu0
      %v5370 = vadd.f32 %v5265, %v5369
      %v5371 = vpop.f32.mrb[0].mxu0
      %5372 = vmatprep.mubr.f32.mxu0 %v4324
      %5373 = vmatmul.mubr.f32.gmra.mrb[0].mxu0 %v4186
      %v5374 = vpop.f32.mrb[0].mxu0
      %v5375 = vadd.f32 %v5270, %v5374
      %v5376 = vpop.f32.mrb[0].mxu0
      %5377 = vmatprep.mubr.f32.mxu0 %v4329
      %5378 = vmatmul.mubr.f32.gmra.mrb[0].mxu0 %v4191
      %v5379 = vpop.f32.mrb[0].mxu0
      %v5380 = vadd.f32 %v5275, %v5379
      %v5381 = vpop.f32.mrb[0].mxu0
      %5382 = vmatprep.mubr.f32.mxu0 %v4334
      %5383 = vmatmul.mubr.f32.gmra.mrb[0].mxu0 %v4196
      %v5384 = vpop.f32.mrb[0].mxu0
      %v5385 = vadd.f32 %v5280, %v5384
      %v5386 = vpop.f32.mrb[0].mxu0
      %5387 = vmatprep.mubr.f32.mxu0 %v4339
      %5388 = vmatmul.mubr.f32.gmra.mrb[0].mxu0 %v4201
      %v5389 = vpop.f32.mrb[0].mxu0
      %v5390 = vadd.f32 %v5285, %v5389
      %v5391 = vpop.f32.mrb[0].mxu0
      %5392 = vdwg.mxu0
      %5393 = vmatprep.subr.mxu0 0.0
      %5394 = vmatpush1.msra.mxu0 %v5096
      %5395 = vmatprep.subr.mxu0 0.0
      %5396 = vmatpush1.msra.mxu0 %v5097
      %5397 = vmatprep.subr.mxu0 0.0
      %5398 = vmatpush1.msra.mxu0 %v5098
      %5399 = vmatprep.subr.mxu0 0.0
      %5400 = vmatpush1.msra.mxu0 %v5099
      %5401 = vmatprep.subr.mxu0 0.0
      %5402 = vmatpush1.msra.mxu0 %v5100
      %5403 = vmatprep.subr.mxu0 0.0
      %5404 = vmatpush1.msra.mxu0 %v5101
      %5405 = vmatprep.subr.mxu0 0.0
      %5406 = vmatpush1.msra.mxu0 %v5102
      %5407 = vmatprep.subr.mxu0 0.0
      %5408 = vmatpush1.msra.mxu0 %v5103
      %5409 = vmatprep.subr.mxu0 0.0
      %5410 = vmatpush1.msra.mxu0 %v5104
      %5411 = vmatprep.subr.mxu0 0.0
      %5412 = vmatpush1.msra.mxu0 %v5105
      %5413 = vmatprep.subr.mxu0 0.0
      %5414 = vmatpush1.msra.mxu0 %v5106
      %5415 = vmatprep.subr.mxu0 0.0
      %5416 = vmatpush1.msra.mxu0 %v5107
      %5417 = vmatprep.subr.mxu0 0.0
      %5418 = vmatpush1.msra.mxu0 %v5108
      %5419 = vmatprep.subr.mxu0 0.0
      %5420 = vmatpush1.msra.mxu0 %v5109
      %5421 = vmatprep.subr.mxu0 0.0
      %5422 = vmatpush1.msra.mxu0 %v5110
      %5423 = vmatprep.subr.mxu0 0.0
      %5424 = vmatpush1.msra.mxu0 %v5111
      %5425 = vmatprep.subr.mxu0 0.0
      %5426 = vmatpush1.msra.mxu0 %v5112
      %5427 = vmatprep.subr.mxu0 0.0
      %5428 = vmatpush1.msra.mxu0 %v5113
      %5429 = vmatprep.subr.mxu0 0.0
      %5430 = vmatpush1.msra.mxu0 %v5114
      %5431 = vmatprep.subr.mxu0 0.0
      %5432 = vmatpush1.msra.mxu0 %v5115
      %5433 = vmatprep.subr.mxu0 0.0
      %5434 = vmatpush1.msra.mxu0 %v5116
      %5435 = vmatprep.subr.mxu0 0.0
      %5436 = vmatpush1.msra.mxu0 %v5117
      %5437 = vmatprep.subr.mxu0 0.0
      %5438 = vmatpush1.msra.mxu0 %v5118
      %5439 = vmatprep.subr.mxu0 0.0
      %5440 = vmatpush1.msra.mxu0 %v5119
      %5441 = vmatprep.subr.mxu0 0.0
      %5442 = vmatpush1.msra.mxu0 %v5120
      %5443 = vmatprep.subr.mxu0 0.0
      %5444 = vmatpush1.msra.mxu0 %v5121
      %5445 = vmatprep.subr.mxu0 0.0
      %5446 = vmatpush1.msra.mxu0 %v5122
      %5447 = vmatprep.subr.mxu0 0.0
      %5448 = vmatpush1.msra.mxu0 %v5123
      %5449 = vmatprep.subr.mxu0 0.0
      %5450 = vmatpush1.msra.mxu0 %v5124
      %5451 = vmatprep.subr.mxu0 0.0
      %5452 = vmatpush1.msra.mxu0 %v5125
      %5453 = vmatprep.subr.mxu0 0.0
      %5454 = vmatpush1.msra.mxu0 %v5126
      %5455 = vmatprep.subr.mxu0 0.0
      %5456 = vmatpush1.msra.mxu0 %v5127
      %5457 = vmatprep.mubr.f32.mxu0 %v4580
      %5458 = vmatmul.mubr.f32.gmra.mrb[0].mxu0 %v4442
      %v5459 = vpop.f32.mrb[0].mxu0
      %v5460 = vadd.f32 %v5355, %v5459
      %v5461 = vpop.f32.mrb[0].mxu0
      %5462 = vmatprep.mubr.f32.mxu0 %v4585
      %5463 = vmatmul.mubr.f32.gmra.mrb[0].mxu0 %v4447
      %v5464 = vpop.f32.mrb[0].mxu0
      %v5465 = vadd.f32 %v5360, %v5464
      %v5466 = vpop.f32.mrb[0].mxu0
      %5467 = vmatprep.mubr.f32.mxu0 %v4590
      %5468 = vmatmul.mubr.f32.gmra.mrb[0].mxu0 %v4452
      %v5469 = vpop.f32.mrb[0].mxu0
      %v5470 = vadd.f32 %v5365, %v5469
      %v5471 = vpop.f32.mrb[0].mxu0
      %5472 = vmatprep.mubr.f32.mxu0 %v4595
      %5473 = vmatmul.mubr.f32.gmra.mrb[0].mxu0 %v4457
      %v5474 = vpop.f32.mrb[0].mxu0
      %v5475 = vadd.f32 %v5370, %v5474
      %v5476 = vpop.f32.mrb[0].mxu0
      %5477 = vmatprep.mubr.f32.mxu0 %v4600
      %5478 = vmatmul.mubr.f32.gmra.mrb[0].mxu0 %v4462
      %v5479 = vpop.f32.mrb[0].mxu0
      %v5480 = vadd.f32 %v5375, %v5479
      %v5481 = vpop.f32.mrb[0].mxu0
      %5482 = vmatprep.mubr.f32.mxu0 %v4605
      %5483 = vmatmul.mubr.f32.gmra.mrb[0].mxu0 %v4467
      %v5484 = vpop.f32.mrb[0].mxu0
      %v5485 = vadd.f32 %v5380, %v5484
      %v5486 = vpop.f32.mrb[0].mxu0
      %5487 = vmatprep.mubr.f32.mxu0 %v4610
      %5488 = vmatmul.mubr.f32.gmra.mrb[0].mxu0 %v4472
      %v5489 = vpop.f32.mrb[0].mxu0
      %v5490 = vadd.f32 %v5385, %v5489
      %v5491 = vpop.f32.mrb[0].mxu0
      %5492 = vmatprep.mubr.f32.mxu0 %v4615
      %5493 = vmatmul.mubr.f32.gmra.mrb[0].mxu0 %v4477
      %v5494 = vpop.f32.mrb[0].mxu0
      %v5495 = vadd.f32 %v5390, %v5494
      %v5496 = vpop.f32.mrb[0].mxu0
      %5497 = vdwg.mxu0
      %5498 = vmatprep.subr.mxu0 0.0
      %5499 = vmatpush1.msra.mxu0 %v5128
      %5500 = vmatprep.subr.mxu0 0.0
      %5501 = vmatpush1.msra.mxu0 %v5129
      %5502 = vmatprep.subr.mxu0 0.0
      %5503 = vmatpush1.msra.mxu0 %v5130
      %5504 = vmatprep.subr.mxu0 0.0
      %5505 = vmatpush1.msra.mxu0 %v5131
      %5506 = vmatprep.subr.mxu0 0.0
      %5507 = vmatpush1.msra.mxu0 %v5132
      %5508 = vmatprep.subr.mxu0 0.0
      %5509 = vmatpush1.msra.mxu0 %v5133
      %5510 = vmatprep.subr.mxu0 0.0
      %5511 = vmatpush1.msra.mxu0 %v5134
      %5512 = vmatprep.subr.mxu0 0.0
      %5513 = vmatpush1.msra.mxu0 %v5135
      %5514 = vmatprep.subr.mxu0 0.0
      %5515 = vmatpush1.msra.mxu0 %v5136
      %5516 = vmatprep.subr.mxu0 0.0
      %5517 = vmatpush1.msra.mxu0 %v5137
      %5518 = vmatprep.subr.mxu0 0.0
      %5519 = vmatpush1.msra.mxu0 %v5138
      %5520 = vmatprep.subr.mxu0 0.0
      %5521 = vmatpush1.msra.mxu0 %v5139
      %5522 = vmatprep.subr.mxu0 0.0
      %5523 = vmatpush1.msra.mxu0 %v5140
      %5524 = vmatprep.subr.mxu0 0.0
      %5525 = vmatpush1.msra.mxu0 %v5141
      %5526 = vmatprep.subr.mxu0 0.0
      %5527 = vmatpush1.msra.mxu0 %v5142
      %5528 = vmatprep.subr.mxu0 0.0
      %5529 = vmatpush1.msra.mxu0 %v5143
      %5530 = vmatprep.subr.mxu0 0.0
      %5531 = vmatpush1.msra.mxu0 %v5144
      %5532 = vmatprep.subr.mxu0 0.0
      %5533 = vmatpush1.msra.mxu0 %v5145
      %5534 = vmatprep.subr.mxu0 0.0
      %5535 = vmatpush1.msra.mxu0 %v5146
      %5536 = vmatprep.subr.mxu0 0.0
      %5537 = vmatpush1.msra.mxu0 %v5147
      %5538 = vmatprep.subr.mxu0 0.0
      %5539 = vmatpush1.msra.mxu0 %v5148
      %5540 = vmatprep.subr.mxu0 0.0
      %5541 = vmatpush1.msra.mxu0 %v5149
      %5542 = vmatprep.subr.mxu0 0.0
      %5543 = vmatpush1.msra.mxu0 %v5150
      %5544 = vmatprep.subr.mxu0 0.0
      %5545 = vmatpush1.msra.mxu0 %v5151
      %5546 = vmatprep.subr.mxu0 0.0
      %5547 = vmatpush1.msra.mxu0 %v5152
      %5548 = vmatprep.subr.mxu0 0.0
      %5549 = vmatpush1.msra.mxu0 %v5153
      %5550 = vmatprep.subr.mxu0 0.0
      %5551 = vmatpush1.msra.mxu0 %v5154
      %5552 = vmatprep.subr.mxu0 0.0
      %5553 = vmatpush1.msra.mxu0 %v5155
      %5554 = vmatprep.subr.mxu0 0.0
      %5555 = vmatpush1.msra.mxu0 %v5156
      %5556 = vmatprep.subr.mxu0 0.0
      %5557 = vmatpush1.msra.mxu0 %v5157
      %5558 = vmatprep.subr.mxu0 0.0
      %5559 = vmatpush1.msra.mxu0 %v5158
      %5560 = vmatprep.subr.mxu0 0.0
      %5561 = vmatpush1.msra.mxu0 %v5159
      %5562 = vmatprep.mubr.f32.mxu0 %v4856
      %5563 = vmatmul.mubr.f32.gmra.mrb[0].mxu0 %v4718
      %v5564 = vpop.f32.mrb[0].mxu0
      %v5565 = vadd.f32 %v5460, %v5564
      %v5566 = vpop.f32.mrb[0].mxu0
      %5567 = vmatprep.mubr.f32.mxu0 %v4861
      %5568 = vmatmul.mubr.f32.gmra.mrb[0].mxu0 %v4723
      %v5569 = vpop.f32.mrb[0].mxu0
      %v5570 = vadd.f32 %v5465, %v5569
      %v5571 = vpop.f32.mrb[0].mxu0
      %5572 = vmatprep.mubr.f32.mxu0 %v4866
      %5573 = vmatmul.mubr.f32.gmra.mrb[0].mxu0 %v4728
      %v5574 = vpop.f32.mrb[0].mxu0
      %v5575 = vadd.f32 %v5470, %v5574
      %v5576 = vpop.f32.mrb[0].mxu0
      %5577 = vmatprep.mubr.f32.mxu0 %v4871
      %5578 = vmatmul.mubr.f32.gmra.mrb[0].mxu0 %v4733
      %v5579 = vpop.f32.mrb[0].mxu0
      %v5580 = vadd.f32 %v5475, %v5579
      %v5581 = vpop.f32.mrb[0].mxu0
      %5582 = vmatprep.mubr.f32.mxu0 %v4876
      %5583 = vmatmul.mubr.f32.gmra.mrb[0].mxu0 %v4738
      %v5584 = vpop.f32.mrb[0].mxu0
      %v5585 = vadd.f32 %v5480, %v5584
      %v5586 = vpop.f32.mrb[0].mxu0
      %5587 = vmatprep.mubr.f32.mxu0 %v4881
      %5588 = vmatmul.mubr.f32.gmra.mrb[0].mxu0 %v4743
      %v5589 = vpop.f32.mrb[0].mxu0
      %v5590 = vadd.f32 %v5485, %v5589
      %v5591 = vpop.f32.mrb[0].mxu0
      %5592 = vmatprep.mubr.f32.mxu0 %v4886
      %5593 = vmatmul.mubr.f32.gmra.mrb[0].mxu0 %v4748
      %v5594 = vpop.f32.mrb[0].mxu0
      %v5595 = vadd.f32 %v5490, %v5594
      %v5596 = vpop.f32.mrb[0].mxu0
      %5597 = vmatprep.mubr.f32.mxu0 %v4891
      %5598 = vmatmul.mubr.f32.gmra.mrb[0].mxu0 %v4753
      %v5599 = vpop.f32.mrb[0].mxu0
      %v5600 = vadd.f32 %v5495, %v5599
      %v5601 = vpop.f32.mrb[0].mxu0
      %5602 = vdwg.mxu0
      %5603 = vmatprep.subr.mxu0 0.0
      %5604 = vmatpush1.msra.mxu0 %v5160
      %5605 = vmatprep.subr.mxu0 0.0
      %5606 = vmatpush1.msra.mxu0 %v5161
      %5607 = vmatprep.subr.mxu0 0.0
      %5608 = vmatpush1.msra.mxu0 %v5162
      %5609 = vmatprep.subr.mxu0 0.0
      %5610 = vmatpush1.msra.mxu0 %v5163
      %5611 = vmatprep.subr.mxu0 0.0
      %5612 = vmatpush1.msra.mxu0 %v5164
      %5613 = vmatprep.subr.mxu0 0.0
      %5614 = vmatpush1.msra.mxu0 %v5165
      %5615 = vmatprep.subr.mxu0 0.0
      %5616 = vmatpush1.msra.mxu0 %v5166
      %5617 = vmatprep.subr.mxu0 0.0
      %5618 = vmatpush1.msra.mxu0 %v5167
      %5619 = vmatprep.subr.mxu0 0.0
      %5620 = vmatpush1.msra.mxu0 %v5168
      %5621 = vmatprep.subr.mxu0 0.0
      %5622 = vmatpush1.msra.mxu0 %v5169
      %5623 = vmatprep.subr.mxu0 0.0
      %5624 = vmatpush1.msra.mxu0 %v5170
      %5625 = vmatprep.subr.mxu0 0.0
      %5626 = vmatpush1.msra.mxu0 %v5171
      %5627 = vmatprep.subr.mxu0 0.0
      %5628 = vmatpush1.msra.mxu0 %v5172
      %5629 = vmatprep.subr.mxu0 0.0
      %5630 = vmatpush1.msra.mxu0 %v5173
      %5631 = vmatprep.subr.mxu0 0.0
      %5632 = vmatpush1.msra.mxu0 %v5174
      %5633 = vmatprep.subr.mxu0 0.0
      %5634 = vmatpush1.msra.mxu0 %v5175
      %5635 = vmatprep.subr.mxu0 0.0
      %5636 = vmatpush1.msra.mxu0 0.0
      %5637 = vmatprep.subr.mxu0 0.0
      %5638 = vmatpush1.msra.mxu0 0.0
      %5639 = vmatprep.subr.mxu0 0.0
      %5640 = vmatpush1.msra.mxu0 0.0
      %5641 = vmatprep.subr.mxu0 0.0
      %5642 = vmatpush1.msra.mxu0 0.0
      %5643 = vmatprep.subr.mxu0 0.0
      %5644 = vmatpush1.msra.mxu0 0.0
      %5645 = vmatprep.subr.mxu0 0.0
      %5646 = vmatpush1.msra.mxu0 0.0
      %5647 = vmatprep.subr.mxu0 0.0
      %5648 = vmatpush1.msra.mxu0 0.0
      %5649 = vmatprep.subr.mxu0 0.0
      %5650 = vmatpush1.msra.mxu0 0.0
      %5651 = vmatprep.subr.mxu0 0.0
      %5652 = vmatpush1.msra.mxu0 0.0
      %5653 = vmatprep.subr.mxu0 0.0
      %5654 = vmatpush1.msra.mxu0 0.0
      %5655 = vmatprep.subr.mxu0 0.0
      %5656 = vmatpush1.msra.mxu0 0.0
      %5657 = vmatprep.subr.mxu0 0.0
      %5658 = vmatpush1.msra.mxu0 0.0
      %5659 = vmatprep.subr.mxu0 0.0
      %5660 = vmatpush1.msra.mxu0 0.0
      %5661 = vmatprep.subr.mxu0 0.0
      %5662 = vmatpush1.msra.mxu0 0.0
      %5663 = vmatprep.subr.mxu0 0.0
      %5664 = vmatpush1.msra.mxu0 0.0
      %5665 = vmatprep.subr.mxu0 0.0
      %5666 = vmatpush1.msra.mxu0 0.0
      %5667 = vmatprep.mubr.f32.mxu0 0.0
      %5668 = vmatmul.mubr.f32.gmra.mrb[0].mxu0 %v4994
      %v5669 = vpop.f32.mrb[0].mxu0
      %v5670 = vadd.f32 %v5565, %v5669
      %v5671 = vpop.f32.mrb[0].mxu0
      %5672 = vmatprep.mubr.f32.mxu0 0.0
      %5673 = vmatmul.mubr.f32.gmra.mrb[0].mxu0 %v4999
      %v5674 = vpop.f32.mrb[0].mxu0
      %v5675 = vadd.f32 %v5570, %v5674
      %v5676 = vpop.f32.mrb[0].mxu0
      %5677 = vmatprep.mubr.f32.mxu0 0.0
      %5678 = vmatmul.mubr.f32.gmra.mrb[0].mxu0 %v5004
      %v5679 = vpop.f32.mrb[0].mxu0
      %v5680 = vadd.f32 %v5575, %v5679
      %v5681 = vpop.f32.mrb[0].mxu0
      %5682 = vmatprep.mubr.f32.mxu0 0.0
      %5683 = vmatmul.mubr.f32.gmra.mrb[0].mxu0 %v5009
      %v5684 = vpop.f32.mrb[0].mxu0
      %v5685 = vadd.f32 %v5580, %v5684
      %v5686 = vpop.f32.mrb[0].mxu0
      %5687 = vmatprep.mubr.f32.mxu0 0.0
      %5688 = vmatmul.mubr.f32.gmra.mrb[0].mxu0 %v5014
      %v5689 = vpop.f32.mrb[0].mxu0
      %v5690 = vadd.f32 %v5585, %v5689
      %v5691 = vpop.f32.mrb[0].mxu0
      %5692 = vmatprep.mubr.f32.mxu0 0.0
      %5693 = vmatmul.mubr.f32.gmra.mrb[0].mxu0 %v5019
      %v5694 = vpop.f32.mrb[0].mxu0
      %v5695 = vadd.f32 %v5590, %v5694
      %v5696 = vpop.f32.mrb[0].mxu0
      %5697 = vmatprep.mubr.f32.mxu0 0.0
      %5698 = vmatmul.mubr.f32.gmra.mrb[0].mxu0 %v5024
      %v5699 = vpop.f32.mrb[0].mxu0
      %v5700 = vadd.f32 %v5595, %v5699
      %v5701 = vpop.f32.mrb[0].mxu0
      %5702 = vmatprep.mubr.f32.mxu0 0.0
      %5703 = vmatmul.mubr.f32.gmra.mrb[0].mxu0 %v5029
      %v5704 = vpop.f32.mrb[0].mxu0
      %v5705 = vadd.f32 %v5600, %v5704
      %v5706 = vpop.f32.mrb[0].mxu0
      %5707 = vdwg.mxu0
      %5708 = vst [vmem:[%s334] sm:$0xff] %v5670
      %5709 = vst [vmem:[%s334 + $0x8] sm:$0xff] %v5675
      %5710 = vst [vmem:[%s334 + $0x10] sm:$0xff] %v5680
      %5711 = vst [vmem:[%s334 + $0x18] sm:$0xff] %v5685
      %5712 = vst [vmem:[%s334 + $0x20] sm:$0xff] %v5690
      %5713 = vst [vmem:[%s334 + $0x28] sm:$0xff] %v5695
      %5714 = vst [vmem:[%s334 + $0x30] sm:$0xff] %v5700
      %5715 = vst [vmem:[%s334 + $0x38] sm:$0xff] %v5705
      %s5716 = smul.u32 8, %s20
      %p5717 = scmp.lt.s32.totalorder %s5716, 31
      %s5718 = scalar_select %p5717, %s5716, 31
      %s5719 = smul.addr %s5718, 8
      %s5720 = scalar_lea.vmem %s9, %s5719
      // Predicated region
      $region57: #{forward.1} parent=55 // pred_check
        %p5721 = pneg %p232
      $region58: #{forward.1} parent=55 // pred_check_branch
        %5723 = sbr.rel (%p5721) target = $region60
      $region59: #{forward.1} parent=55 // pred_region
        %s5724 = smul.u32 8, %s20
      $region60: #{forward.1} parent=55 // pred_fallthru
        _
    $region56: #{forward.1} parent=5 // pred_fallthru
      _
    %p5725 = scmp.le.s32.totalorder 2, %s15
    // Predicated region
    $region61: #{forward.1} parent=5 // pred_check
      %p5726 = pneg %p5725
    $region62: #{forward.1} parent=5 // pred_check_branch
      %5728 = sbr.rel (%p5726) target = $region64
    $region63: #{forward.1} parent=5 // pred_region
      %s5729 = ssub.s32 %s15, 2
      // Predicated region
      $region65: #{forward.1} parent=63 // pred_check
        %p5730 = pneg %p238
      $region66: #{forward.1} parent=63 // pred_check_branch
        %5732 = sbr.rel (%p5730) target = $region68
      $region67: #{forward.1} parent=63 // pred_region
        %s5733 = smul.u32 8, %s21
        %p5734 = scmp.lt.s32.totalorder %s5733, 31
        %s5735 = scalar_select %p5734, %s5733, 31
        %s5736 = smul.addr %s5735, 8
        %s5737 = scalar_lea.vmem %s9, %s5736
      $region68: #{forward.1} parent=63 // pred_fallthru
        _
    $region64: #{forward.1} parent=5 // pred_fallthru
      _
  $region6: #{forward.1} parent=0 // loop_footer
    %s19 = sadd.s32 1, %s15
  $region7: #{forward.1} parent=0 // loop_footer_branch
    %14 = sbr.rel target = $region3
  $region8: #{forward.1} parent=0 // loop_exit
    _

</llo_original>
